<compile_context>
chip_gen: v6e
topology: v6e:2x2x1
jax: 0.10.0
libtpu: 0.0.40
codegen_flags: <defaults>
</compile_context>

<pallas_src>
import functools

import jax
import jax.numpy as jnp
from jax.experimental import pallas as pl
from jax.experimental.pallas import tpu as pltpu

T_IN = 4          # number of conditioning (input) timesteps
LATENT_C = 8      # latent channels fed to the ConvGRU
FORECAST_STEPS = 3

VMEM_LIMIT = 32 * 1024 * 1024   # explicit scoped-VMEM budget (fits v5e/v6e/v7x)


# ----------------------------------------------------------------------------
# Pallas kernels
# ----------------------------------------------------------------------------
def _conv_im2col_kernel(x_ref, w_ref, b_ref, o_ref, pat_ref, *, kh, kw, act):
    """Fused conv: in-VMEM im2col + one MXU matmul + bias + activation.

    x_ref  : (1, Hp, Wp, Cin)   bf16 pre-padded NHWC tile (one image per grid step)
    w_ref  : (kh*kw*Cin, Cout)  bf16 weights (constant index_map -> resident)
    b_ref  : (1, Cout)          f32 bias
    o_ref  : (1, Ho*Wo, Cout)   output tile (flattened spatial, channels on lanes)
    pat_ref: VMEM (Ho*Wo, kh*kw*Cin) f32 scratch -- patches never touch HBM
    """
    _, hp, wp, cin = x_ref.shape
    ho = hp - kh + 1
    wo = wp - kw + 1
    # ---- in-kernel im2col (VMEM only) ----
    for oh in range(ho):
        for i in range(kh):
            for j in range(kw):
                col = (i * kw + j) * cin
                pat_ref[oh * wo:(oh + 1) * wo, col:col + cin] = (
                    x_ref[0, oh + i, j:j + wo, :].astype(jnp.float32))
    # ---- single MXU matmul over all taps, f32 accumulation ----
    acc = jnp.dot(pat_ref[...].astype(jnp.bfloat16), w_ref[...],
                  preferred_element_type=jnp.float32)
    acc = acc + b_ref[...]
    if act == "relu":
        acc = jnp.maximum(acc, 0.0)
    elif act == "sigmoid":
        acc = jax.nn.sigmoid(acc)
    o_ref[0] = acc.astype(o_ref.dtype)


def _convgru_kernel(z_ref, h0_ref, wzu_ref, whu_ref, wzr_ref, whr_ref,
                    wzc_ref, whc_ref, bu_ref, br_ref, bc_ref,
                    hseq_ref, hflat_s, hpad_s, zpat_s, hpat_s,
                    *, hh, ww, cz, ch):
    """One fused ConvGRU step per grid point (batch, step).

    The f32 hidden state lives in VMEM scratch and is carried across the
    `step` ("arbitrary") grid axis.  Gate conv + sigmoid, r*h, candidate conv
    + tanh and the (1-u)*h + u*c update are all fused here, so the recurrent
    state never round-trips through HBM within a step and the weights stay
    resident across all forecast steps.
    """
    step = pl.program_id(1)
    kk = 3
    m = hh * ww

    @pl.when(step == 0)
    def _init():
        hflat_s[...] = h0_ref[0]
        hpad_s[...] = jnp.zeros_like(hpad_s)
        # latent patches are step-invariant -> build them once per batch item
        for oh in range(hh):
            for i in range(kk):
                for j in range(kk):
                    col = (i * kk + j) * cz
                    zpat_s[oh * ww:(oh + 1) * ww, col:col + cz] = (
                        z_ref[0, oh + i, j:j + ww, :].astype(jnp.float32))

    def scatter_interior(val):          # (m, ch) f32 -> interior of zero-padded buffer
        for oh in range(hh):
            hpad_s[1 + oh, 1:1 + ww, :] = val[oh * ww:(oh + 1) * ww, :]

    def gather_patches():               # im2col of the padded buffer into hpat_s
        for oh in range(hh):
            for i in range(kk):
                for j in range(kk):
                    col = (i * kk + j) * ch
                    hpat_s[oh * ww:(oh + 1) * ww, col:col + ch] = (
                        hpad_s[oh + i, j:j + ww, :])

    def mm(a, w_ref):
        return jnp.dot(a.astype(jnp.bfloat16), w_ref[...],
                       preferred_element_type=jnp.float32)

    h = hflat_s[...]                    # (m, ch) f32 carried state
    scatter_interior(h)
    gather_patches()
    zp = zpat_s[...]
    hp = hpat_s[...]
    u = jax.nn.sigmoid(mm(zp, wzu_ref) + mm(hp, whu_ref) + bu_ref[...])
    r = jax.nn.sigmoid(mm(zp, wzr_ref) + mm(hp, whr_ref) + br_ref[...])

    scatter_interior(r * h)
    gather_patches()
    cand = jnp.tanh(mm(zp, wzc_ref) + mm(hpat_s[...], whc_ref) + bc_ref[...])

    h_new = (1.0 - u) * h + u * cand
    hflat_s[...] = h_new
    hseq_ref[0, 0] = h_new.astype(hseq_ref.dtype)
    del m  # (documentational)


# ----------------------------------------------------------------------------
# Conv wrappers (grid over images; weights resident; bf16 at the boundary)
# ----------------------------------------------------------------------------
def _conv2d_s1(x, w, b, *, padding, act, out_dtype):
    kh, kw, cin, cout = w.shape
    if padding:
        x = jnp.pad(x, ((0, 0), (padding, padding), (padding, padding), (0, 0)))
    n, hp, wp, _ = x.shape
    ho, wo = hp - kh + 1, wp - kw + 1
    xb = x.astype(jnp.bfloat16)
    wmat = w.reshape(kh * kw * cin, cout).astype(jnp.bfloat16)
    b2 = b.reshape(1, cout).astype(jnp.float32)
    kernel = functools.partial(_conv_im2col_kernel, kh=kh, kw=kw, act=act)
    out = pl.pallas_call(
        kernel,
        grid=(n,),
        in_specs=[
            pl.BlockSpec((1, hp, wp, cin), lambda im: (im, 0, 0, 0)),
            pl.BlockSpec((kh * kw * cin, cout), lambda im: (0, 0)),   # resident weights
            pl.BlockSpec((1, cout), lambda im: (0, 0)),               # resident bias
        ],
        out_specs=pl.BlockSpec((1, ho * wo, cout), lambda im: (im, 0, 0)),
        out_shape=jax.ShapeDtypeStruct((n, ho * wo, cout), out_dtype),
        scratch_shapes=[pltpu.VMEM((ho * wo, kh * kw * cin), jnp.float32)],
        compiler_params=pltpu.CompilerParams(
            dimension_semantics=("parallel",), vmem_limit_bytes=VMEM_LIMIT),
    )(xb, wmat, b2)
    return out.reshape(n, ho, wo, cout)


def _space_to_depth(x, r):
    n, h, w, c = x.shape
    x = x.reshape(n, h // r, r, w // r, r, c)
    x = x.transpose(0, 1, 3, 2, 4, 5)
    return x.reshape(n, h // r, w // r, r * r * c)


def _stride2_weight(w):
    """Exact reformulation of a stride-2 3x3 pad-1 conv as a stride-1 2x2 conv
    on the space-to-depth input (keeps VMEM access un-strided in the kernel)."""
    kh, kw, cin, cout = w.shape
    assert kh == 3 and kw == 3
    wp = jnp.pad(w, ((0, 1), (0, 1), (0, 0), (0, 0)))       # (4,4,cin,cout)
    wp = wp.reshape(2, 2, 2, 2, cin, cout)                   # (di,py,dj,px,cin,cout)
    wp = wp.transpose(0, 2, 1, 3, 4, 5)                      # (di,dj,py,px,cin,cout)
    return wp.reshape(2, 2, 4 * cin, cout)


def conv2d(x, w, b, *, stride=1, padding=1, act="none", out_dtype=jnp.bfloat16):
    """x: (N, H, W, Cin) NHWC; w: (KH, KW, Cin, Cout) HWIO."""
    if stride == 1:
        return _conv2d_s1(x, w, b, padding=padding, act=act, out_dtype=out_dtype)
    assert stride == 2 and padding == 1 and w.shape[0] == 3 and w.shape[1] == 3
    xp = jnp.pad(x, ((0, 0), (1, 1), (1, 1), (0, 0)))
    z = _space_to_depth(xp, 2)
    return _conv2d_s1(z, _stride2_weight(w), b, padding=0, act=act,
                      out_dtype=out_dtype)


# ----------------------------------------------------------------------------
# Fused ConvGRU rollout over all forecast steps (single pallas_call)
# ----------------------------------------------------------------------------
def convgru_rollout(params, latent, h0, steps):
    """latent: (B, h, w, Cz); h0: (B, h, w, Ch) -> (B, steps, h, w, Ch)."""
    bsz, hh, ww, cz = latent.shape
    ch = h0.shape[-1]
    m = hh * ww
    zpad = jnp.pad(latent, ((0, 0), (1, 1), (1, 1), (0, 0))).astype(jnp.bfloat16)
    h0f = h0.reshape(bsz, m, ch).astype(jnp.float32)

    wg, bg = params["gru_gates"]        # (3,3,cz+ch,2*ch), (2*ch,)
    wc, bc = params["gru_cand"]         # (3,3,cz+ch,ch),   (ch,)

    def _w(ws):                         # (3,3,Ci,Co) -> (9*Ci, Co) bf16
        return ws.reshape(-1, ws.shape[-1]).astype(jnp.bfloat16)

    wzu = _w(wg[:, :, :cz, :ch]); whu = _w(wg[:, :, cz:, :ch])
    wzr = _w(wg[:, :, :cz, ch:]); whr = _w(wg[:, :, cz:, ch:])
    wzc = _w(wc[:, :, :cz, :]);   whc = _w(wc[:, :, cz:, :])
    bu = bg[:ch].reshape(1, ch).astype(jnp.float32)
    br = bg[ch:].reshape(1, ch).astype(jnp.float32)
    bcd = bc.reshape(1, ch).astype(jnp.float32)

    def _const(arr):
        return pl.BlockSpec(arr.shape, lambda bb, ss: (0, 0))

    kernel = functools.partial(_convgru_kernel, hh=hh, ww=ww, cz=cz, ch=ch)
    hseq = pl.pallas_call(
        kernel,
        grid=(bsz, steps),
        in_specs=[
            pl.BlockSpec((1, hh + 2, ww + 2, cz), lambda bb, ss: (bb, 0, 0, 0)),
            pl.BlockSpec((1, m, ch), lambda bb, ss: (bb, 0, 0)),
            _const(wzu), _const(whu), _const(wzr), _const(whr),
            _const(wzc), _const(whc), _const(bu), _const(br), _const(bcd),
        ],
        out_specs=pl.BlockSpec((1, 1, m, ch), lambda bb, ss: (bb, ss, 0, 0)),
        out_shape=jax.ShapeDtypeStruct((bsz, steps, m, ch), jnp.bfloat16),
        scratch_shapes=[
            pltpu.VMEM((m, ch), jnp.float32),                # f32 hidden state (carried)
            pltpu.VMEM((hh + 2, ww + 2, ch), jnp.float32),   # zero-padded h / r*h buffer
            pltpu.VMEM((m, 9 * cz), jnp.float32),            # latent im2col patches
            pltpu.VMEM((m, 9 * ch), jnp.float32),            # h / r*h im2col patches
        ],
        compiler_params=pltpu.CompilerParams(
            dimension_semantics=("parallel", "arbitrary"),
            vmem_limit_bytes=VMEM_LIMIT),
    )(zpad, h0f, wzu, whu, wzr, whr, wzc, whc, bu, br, bcd)
    return hseq.reshape(bsz, steps, hh, ww, ch)


# ----------------------------------------------------------------------------
# Pixel shuffle / unshuffle (pure layout plumbing, stays in XLA)
# ----------------------------------------------------------------------------
def pixel_unshuffle(x, r):
    n, h, w, c = x.shape
    x = x.reshape(n, h // r, r, w // r, r, c)
    x = x.transpose(0, 1, 3, 5, 2, 4)
    return x.reshape(n, h // r, w // r, c * r * r)


def pixel_shuffle(x, r):
    n, h, w, crr = x.shape
    c = crr // (r * r)
    x = x.reshape(n, h, w, c, r, r)
    x = x.transpose(0, 1, 4, 2, 5, 3)
    return x.reshape(n, h * r, w * r, c)


# ----------------------------------------------------------------------------
# Deterministic parameter init (synthetic weights; no checkpoint load)
# ----------------------------------------------------------------------------
def _init_conv(key, kh, kw, cin, cout):
    wkey, bkey = jax.random.split(key)
    scale = 1.0 / jnp.sqrt(kh * kw * cin)
    w = jax.random.uniform(wkey, (kh, kw, cin, cout), jnp.float32, -scale, scale)
    b = jax.random.uniform(bkey, (cout,), jnp.float32, -scale, scale)
    return w, b


def init_generator_params(key):
    # TODO(synk): spectral_norm parametrization of conv weights is not applied
    # (training-time weight reparametrization; weights here are synthetic).
    keys = jax.random.split(key, 9)
    p = {}
    # conditioning stack
    p["cs_conv1"] = _init_conv(keys[0], 3, 3, 4, 8)             # stride-2 DBlock-ish
    p["cs_conv2"] = _init_conv(keys[1], 3, 3, 8, 16)            # stride-2 DBlock-ish
    p["cs_mix1"] = _init_conv(keys[2], 3, 3, 8 * T_IN, 16)      # time-mix conv, scale H/4
    p["cs_mix2"] = _init_conv(keys[3], 3, 3, 16 * T_IN, 32)     # time-mix conv, scale H/8
    # sampler (ConvGRU + upsampling GBlocks)
    p["gru_gates"] = _init_conv(keys[4], 3, 3, LATENT_C + 32, 64)   # update + reset
    p["gru_cand"] = _init_conv(keys[5], 3, 3, LATENT_C + 32, 32)    # candidate
    p["up1"] = _init_conv(keys[6], 3, 3, 32, 64)   # -> pixel shuffle x2 -> 16 ch @ H/4
    p["up2"] = _init_conv(keys[7], 3, 3, 16, 32)   # -> pixel shuffle x2 ->  8 ch @ H/2
    p["out"] = _init_conv(keys[8], 3, 3, 8, 4)     # -> pixel shuffle x2 ->  1 ch @ H
    return p


# ----------------------------------------------------------------------------
# conditioning_stack(x) and sampler(conditioning_states)
# ----------------------------------------------------------------------------
def conditioning_stack(params, x):
    """x: (B, T, C, H, W) -> list of NHWC conditioning states [H/4, H/8 scales]."""
    bsz, t, c, h, w = x.shape
    y = x.transpose(0, 1, 3, 4, 2).reshape(bsz * t, h, w, c)     # NCHW -> NHWC
    y = pixel_unshuffle(y, 2)                                    # (B*T, H/2, W/2, 4C)
    d1 = conv2d(y, *params["cs_conv1"], stride=2, padding=1, act="relu")    # H/4
    d2 = conv2d(d1, *params["cs_conv2"], stride=2, padding=1, act="relu")   # H/8

    def stack_time(z):
        _, zh, zw, zc = z.shape
        return (z.reshape(bsz, t, zh, zw, zc)
                 .transpose(0, 2, 3, 1, 4)
                 .reshape(bsz, zh, zw, t * zc))

    s1 = conv2d(stack_time(d1), *params["cs_mix1"], stride=1, padding=1,
                act="relu", out_dtype=jnp.float32)
    s2 = conv2d(stack_time(d2), *params["cs_mix2"], stride=1, padding=1,
                act="relu", out_dtype=jnp.float32)
    return [s1, s2]


def sampler(params, conditioning_states, latent, forecast_steps):
    s1, s2 = conditioning_states
    # ConvGRU initialised from the coarsest conditioning state; the full
    # recurrence over all forecast steps runs in ONE fused pallas_call.
    h_seq = convgru_rollout(params, latent, s2, forecast_steps)   # (B,S,h/8,w/8,32)
    bsz, steps, hh, ww, ch = h_seq.shape

    # Decoder: all B*S frames processed together (larger M per conv call).
    y = h_seq.reshape(bsz * steps, hh, ww, ch)
    y = conv2d(y, *params["up1"], stride=1, padding=1, act="none")
    y = pixel_shuffle(y, 2)                                       # (B*S, H/4, W/4, 16)
    skip = jnp.broadcast_to(s1[:, None], (bsz, steps) + s1.shape[1:])
    skip = skip.reshape((bsz * steps,) + s1.shape[1:])
    y = jnp.maximum(y.astype(jnp.float32) + skip, 0.0)
    y = conv2d(y, *params["up2"], stride=1, padding=1, act="relu")
    y = pixel_shuffle(y, 2)                                       # (B*S, H/2, W/2, 8)
    y = conv2d(y, *params["out"], stride=1, padding=1, act="none",
               out_dtype=jnp.float32)
    y = pixel_shuffle(y, 2)                                       # (B*S, H, W, 1)
    y = y.reshape((bsz, steps) + y.shape[1:]).transpose(0, 1, 4, 2, 3)
    return y                                                      # (B, S, 1, H, W)


def generator_forward(params, x, latent, forecast_steps):
    """Exactly mirrors Generator.forward: sampler(conditioning_stack(x))."""
    conditioning_states = conditioning_stack(params, x)
    return sampler(params, conditioning_states, latent, forecast_steps)


# ----------------------------------------------------------------------------
if __name__ == "__main__":
    key = jax.random.PRNGKey(0)
    pkey, xkey, zkey = jax.random.split(key, 3)

    B, T, C, H, W = 2, T_IN, 1, 16, 16
    params = init_generator_params(pkey)
    x = jax.random.normal(xkey, (B, T, C, H, W), jnp.float32)
    latent = jax.random.normal(zkey, (B, H // 8, W // 8, LATENT_C), jnp.float32)

    fwd = jax.jit(functools.partial(generator_forward, forecast_steps=FORECAST_STEPS))
    out = fwd(params, x, latent)
    jax.block_until_ready(out)

    assert out.shape == (B, FORECAST_STEPS, 1, H, W), out.shape
    assert jnp.all(jnp.isfinite(out))
    print("KERNEL_OK")
</pallas_src>

<mosaic_0001>
module attributes {stable_mosaic.version = 11 : i64} {
  func.func @_conv_im2col_kernel(%arg0: i32, %arg1: memref<1x5x5x16xbf16, #tpu.memory_space<vmem>>, %arg2: memref<64x8xbf16, #tpu.memory_space<vmem>>, %arg3: memref<1x8xf32, #tpu.memory_space<vmem>>, %arg4: memref<1x16x8xbf16, #tpu.memory_space<vmem>>, %arg5: memref<16x64xf32, #tpu.memory_space<vmem>>) attributes {dimension_semantics = [#tpu.dimension_semantics<parallel>], iteration_bounds = array<i64: 8>, scalar_prefetch = 0 : i64, scratch_operands = 1 : i64, tpu.core_type = #tpu.core_type<tc>, window_params = [{transform_indices = @transform_0, window_bounds = array<i64: 1, 5, 5, 16>}, {pipeline_mode = #tpu.pipeline_mode<synchronous>, transform_indices = @transform_1, window_bounds = array<i64: 64, 8>}, {pipeline_mode = #tpu.pipeline_mode<synchronous>, transform_indices = @transform_2, window_bounds = array<i64: 1, 8>}, {transform_indices = @transform_3, window_bounds = array<i64: 1, 16, 8>}]} {
    %c0 = arith.constant 0 : index
    %c0_0 = arith.constant 0 : index
    %c0_1 = arith.constant 0 : index
    %c0_2 = arith.constant 0 : index
    %0 = vector.load %arg1[%c0, %c0_0, %c0_1, %c0_2] : memref<1x5x5x16xbf16, #tpu.memory_space<vmem>>, vector<1x1x4x16xbf16>
    %1 = vector.shape_cast %0 : vector<1x1x4x16xbf16> to vector<4x16xbf16>
    %2 = arith.extf %1 : vector<4x16xbf16> to vector<4x16xf32>
    %c0_3 = arith.constant 0 : index
    %c0_4 = arith.constant 0 : index
    %3 = vector.load %arg5[%c0_3, %c0_4] : memref<16x64xf32, #tpu.memory_space<vmem>>, vector<4x16xf32>
    tpu.vector_store %arg5[%c0_3, %c0_4], %2 {strides = array<i32>} : memref<16x64xf32, #tpu.memory_space<vmem>>, vector<4x16xf32>,
    %c0_5 = arith.constant 0 : index
    %c0_6 = arith.constant 0 : index
    %c1 = arith.constant 1 : index
    %c0_7 = arith.constant 0 : index
    %4 = vector.load %arg1[%c0_5, %c0_6, %c1, %c0_7] : memref<1x5x5x16xbf16, #tpu.memory_space<vmem>>, vector<1x1x4x16xbf16>
    %5 = vector.shape_cast %4 : vector<1x1x4x16xbf16> to vector<4x16xbf16>
    %6 = arith.extf %5 : vector<4x16xbf16> to vector<4x16xf32>
    %c0_8 = arith.constant 0 : index
    %c16 = arith.constant 16 : index
    %7 = vector.load %arg5[%c0_8, %c16] : memref<16x64xf32, #tpu.memory_space<vmem>>, vector<4x16xf32>
    tpu.vector_store %arg5[%c0_8, %c16], %6 {strides = array<i32>} : memref<16x64xf32, #tpu.memory_space<vmem>>, vector<4x16xf32>,
    %c0_9 = arith.constant 0 : index
    %c1_10 = arith.constant 1 : index
    %c0_11 = arith.constant 0 : index
    %c0_12 = arith.constant 0 : index
    %8 = vector.load %arg1[%c0_9, %c1_10, %c0_11, %c0_12] : memref<1x5x5x16xbf16, #tpu.memory_space<vmem>>, vector<1x1x4x16xbf16>
    %9 = vector.shape_cast %8 : vector<1x1x4x16xbf16> to vector<4x16xbf16>
    %10 = arith.extf %9 : vector<4x16xbf16> to vector<4x16xf32>
    %c0_13 = arith.constant 0 : index
    %c32 = arith.constant 32 : index
    %11 = vector.load %arg5[%c0_13, %c32] : memref<16x64xf32, #tpu.memory_space<vmem>>, vector<4x16xf32>
    tpu.vector_store %arg5[%c0_13, %c32], %10 {strides = array<i32>} : memref<16x64xf32, #tpu.memory_space<vmem>>, vector<4x16xf32>,
    %c0_14 = arith.constant 0 : index
    %c1_15 = arith.constant 1 : index
    %c1_16 = arith.constant 1 : index
    %c0_17 = arith.constant 0 : index
    %12 = vector.load %arg1[%c0_14, %c1_15, %c1_16, %c0_17] : memref<1x5x5x16xbf16, #tpu.memory_space<vmem>>, vector<1x1x4x16xbf16>
    %13 = vector.shape_cast %12 : vector<1x1x4x16xbf16> to vector<4x16xbf16>
    %14 = arith.extf %13 : vector<4x16xbf16> to vector<4x16xf32>
    %c0_18 = arith.constant 0 : index
    %c48 = arith.constant 48 : index
    %15 = vector.load %arg5[%c0_18, %c48] : memref<16x64xf32, #tpu.memory_space<vmem>>, vector<4x16xf32>
    tpu.vector_store %arg5[%c0_18, %c48], %14 {strides = array<i32>} : memref<16x64xf32, #tpu.memory_space<vmem>>, vector<4x16xf32>,
    %c0_19 = arith.constant 0 : index
    %c1_20 = arith.constant 1 : index
    %c0_21 = arith.constant 0 : index
    %c0_22 = arith.constant 0 : index
    %16 = vector.load %arg1[%c0_19, %c1_20, %c0_21, %c0_22] : memref<1x5x5x16xbf16, #tpu.memory_space<vmem>>, vector<1x1x4x16xbf16>
    %17 = vector.shape_cast %16 : vector<1x1x4x16xbf16> to vector<4x16xbf16>
    %18 = arith.extf %17 : vector<4x16xbf16> to vector<4x16xf32>
    %c4 = arith.constant 4 : index
    %c0_23 = arith.constant 0 : index
    %19 = vector.load %arg5[%c4, %c0_23] : memref<16x64xf32, #tpu.memory_space<vmem>>, vector<4x16xf32>
    tpu.vector_store %arg5[%c4, %c0_23], %18 {strides = array<i32>} : memref<16x64xf32, #tpu.memory_space<vmem>>, vector<4x16xf32>,
    %c0_24 = arith.constant 0 : index
    %c1_25 = arith.constant 1 : index
    %c1_26 = arith.constant 1 : index
    %c0_27 = arith.constant 0 : index
    %20 = vector.load %arg1[%c0_24, %c1_25, %c1_26, %c0_27] : memref<1x5x5x16xbf16, #tpu.memory_space<vmem>>, vector<1x1x4x16xbf16>
    %21 = vector.shape_cast %20 : vector<1x1x4x16xbf16> to vector<4x16xbf16>
    %22 = arith.extf %21 : vector<4x16xbf16> to vector<4x16xf32>
    %c4_28 = arith.constant 4 : index
    %c16_29 = arith.constant 16 : index
    %23 = vector.load %arg5[%c4_28, %c16_29] : memref<16x64xf32, #tpu.memory_space<vmem>>, vector<4x16xf32>
    tpu.vector_store %arg5[%c4_28, %c16_29], %22 {strides = array<i32>} : memref<16x64xf32, #tpu.memory_space<vmem>>, vector<4x16xf32>,
    %c0_30 = arith.constant 0 : index
    %c2 = arith.constant 2 : index
    %c0_31 = arith.constant 0 : index
    %c0_32 = arith.constant 0 : index
    %24 = vector.load %arg1[%c0_30, %c2, %c0_31, %c0_32] : memref<1x5x5x16xbf16, #tpu.memory_space<vmem>>, vector<1x1x4x16xbf16>
    %25 = vector.shape_cast %24 : vector<1x1x4x16xbf16> to vector<4x16xbf16>
    %26 = arith.extf %25 : vector<4x16xbf16> to vector<4x16xf32>
    %c4_33 = arith.constant 4 : index
    %c32_34 = arith.constant 32 : index
    %27 = vector.load %arg5[%c4_33, %c32_34] : memref<16x64xf32, #tpu.memory_space<vmem>>, vector<4x16xf32>
    tpu.vector_store %arg5[%c4_33, %c32_34], %26 {strides = array<i32>} : memref<16x64xf32, #tpu.memory_space<vmem>>, vector<4x16xf32>,
    %c0_35 = arith.constant 0 : index
    %c2_36 = arith.constant 2 : index
    %c1_37 = arith.constant 1 : index
    %c0_38 = arith.constant 0 : index
    %28 = vector.load %arg1[%c0_35, %c2_36, %c1_37, %c0_38] : memref<1x5x5x16xbf16, #tpu.memory_space<vmem>>, vector<1x1x4x16xbf16>
    %29 = vector.shape_cast %28 : vector<1x1x4x16xbf16> to vector<4x16xbf16>
    %30 = arith.extf %29 : vector<4x16xbf16> to vector<4x16xf32>
    %c4_39 = arith.constant 4 : index
    %c48_40 = arith.constant 48 : index
    %31 = vector.load %arg5[%c4_39, %c48_40] : memref<16x64xf32, #tpu.memory_space<vmem>>, vector<4x16xf32>
    tpu.vector_store %arg5[%c4_39, %c48_40], %30 {strides = array<i32>} : memref<16x64xf32, #tpu.memory_space<vmem>>, vector<4x16xf32>,
    %c0_41 = arith.constant 0 : index
    %c2_42 = arith.constant 2 : index
    %c0_43 = arith.constant 0 : index
    %c0_44 = arith.constant 0 : index
    %32 = vector.load %arg1[%c0_41, %c2_42, %c0_43, %c0_44] : memref<1x5x5x16xbf16, #tpu.memory_space<vmem>>, vector<1x1x4x16xbf16>
    %33 = vector.shape_cast %32 : vector<1x1x4x16xbf16> to vector<4x16xbf16>
    %34 = arith.extf %33 : vector<4x16xbf16> to vector<4x16xf32>
    %c8 = arith.constant 8 : index
    %c0_45 = arith.constant 0 : index
    %35 = vector.load %arg5[%c8, %c0_45] : memref<16x64xf32, #tpu.memory_space<vmem>>, vector<4x16xf32>
    tpu.vector_store %arg5[%c8, %c0_45], %34 {strides = array<i32>} : memref<16x64xf32, #tpu.memory_space<vmem>>, vector<4x16xf32>,
    %c0_46 = arith.constant 0 : index
    %c2_47 = arith.constant 2 : index
    %c1_48 = arith.constant 1 : index
    %c0_49 = arith.constant 0 : index
    %36 = vector.load %arg1[%c0_46, %c2_47, %c1_48, %c0_49] : memref<1x5x5x16xbf16, #tpu.memory_space<vmem>>, vector<1x1x4x16xbf16>
    %37 = vector.shape_cast %36 : vector<1x1x4x16xbf16> to vector<4x16xbf16>
    %38 = arith.extf %37 : vector<4x16xbf16> to vector<4x16xf32>
    %c8_50 = arith.constant 8 : index
    %c16_51 = arith.constant 16 : index
    %39 = vector.load %arg5[%c8_50, %c16_51] : memref<16x64xf32, #tpu.memory_space<vmem>>, vector<4x16xf32>
    tpu.vector_store %arg5[%c8_50, %c16_51], %38 {strides = array<i32>} : memref<16x64xf32, #tpu.memory_space<vmem>>, vector<4x16xf32>,
    %c0_52 = arith.constant 0 : index
    %c3 = arith.constant 3 : index
    %c0_53 = arith.constant 0 : index
    %c0_54 = arith.constant 0 : index
    %40 = vector.load %arg1[%c0_52, %c3, %c0_53, %c0_54] : memref<1x5x5x16xbf16, #tpu.memory_space<vmem>>, vector<1x1x4x16xbf16>
    %41 = vector.shape_cast %40 : vector<1x1x4x16xbf16> to vector<4x16xbf16>
    %42 = arith.extf %41 : vector<4x16xbf16> to vector<4x16xf32>
    %c8_55 = arith.constant 8 : index
    %c32_56 = arith.constant 32 : index
    %43 = vector.load %arg5[%c8_55, %c32_56] : memref<16x64xf32, #tpu.memory_space<vmem>>, vector<4x16xf32>
    tpu.vector_store %arg5[%c8_55, %c32_56], %42 {strides = array<i32>} : memref<16x64xf32, #tpu.memory_space<vmem>>, vector<4x16xf32>,
    %c0_57 = arith.constant 0 : index
    %c3_58 = arith.constant 3 : index
    %c1_59 = arith.constant 1 : index
    %c0_60 = arith.constant 0 : index
    %44 = vector.load %arg1[%c0_57, %c3_58, %c1_59, %c0_60] : memref<1x5x5x16xbf16, #tpu.memory_space<vmem>>, vector<1x1x4x16xbf16>
    %45 = vector.shape_cast %44 : vector<1x1x4x16xbf16> to vector<4x16xbf16>
    %46 = arith.extf %45 : vector<4x16xbf16> to vector<4x16xf32>
    %c8_61 = arith.constant 8 : index
    %c48_62 = arith.constant 48 : index
    %47 = vector.load %arg5[%c8_61, %c48_62] : memref<16x64xf32, #tpu.memory_space<vmem>>, vector<4x16xf32>
    tpu.vector_store %arg5[%c8_61, %c48_62], %46 {strides = array<i32>} : memref<16x64xf32, #tpu.memory_space<vmem>>, vector<4x16xf32>,
    %c0_63 = arith.constant 0 : index
    %c3_64 = arith.constant 3 : index
    %c0_65 = arith.constant 0 : index
    %c0_66 = arith.constant 0 : index
    %48 = vector.load %arg1[%c0_63, %c3_64, %c0_65, %c0_66] : memref<1x5x5x16xbf16, #tpu.memory_space<vmem>>, vector<1x1x4x16xbf16>
    %49 = vector.shape_cast %48 : vector<1x1x4x16xbf16> to vector<4x16xbf16>
    %50 = arith.extf %49 : vector<4x16xbf16> to vector<4x16xf32>
    %c12 = arith.constant 12 : index
    %c0_67 = arith.constant 0 : index
    %51 = vector.load %arg5[%c12, %c0_67] : memref<16x64xf32, #tpu.memory_space<vmem>>, vector<4x16xf32>
    tpu.vector_store %arg5[%c12, %c0_67], %50 {strides = array<i32>} : memref<16x64xf32, #tpu.memory_space<vmem>>, vector<4x16xf32>,
    %c0_68 = arith.constant 0 : index
    %c3_69 = arith.constant 3 : index
    %c1_70 = arith.constant 1 : index
    %c0_71 = arith.constant 0 : index
    %52 = vector.load %arg1[%c0_68, %c3_69, %c1_70, %c0_71] : memref<1x5x5x16xbf16, #tpu.memory_space<vmem>>, vector<1x1x4x16xbf16>
    %53 = vector.shape_cast %52 : vector<1x1x4x16xbf16> to vector<4x16xbf16>
    %54 = arith.extf %53 : vector<4x16xbf16> to vector<4x16xf32>
    %c12_72 = arith.constant 12 : index
    %c16_73 = arith.constant 16 : index
    %55 = vector.load %arg5[%c12_72, %c16_73] : memref<16x64xf32, #tpu.memory_space<vmem>>, vector<4x16xf32>
    tpu.vector_store %arg5[%c12_72, %c16_73], %54 {strides = array<i32>} : memref<16x64xf32, #tpu.memory_space<vmem>>, vector<4x16xf32>,
    %c0_74 = arith.constant 0 : index
    %c4_75 = arith.constant 4 : index
    %c0_76 = arith.constant 0 : index
    %c0_77 = arith.constant 0 : index
    %56 = vector.load %arg1[%c0_74, %c4_75, %c0_76, %c0_77] : memref<1x5x5x16xbf16, #tpu.memory_space<vmem>>, vector<1x1x4x16xbf16>
    %57 = vector.shape_cast %56 : vector<1x1x4x16xbf16> to vector<4x16xbf16>
    %58 = arith.extf %57 : vector<4x16xbf16> to vector<4x16xf32>
    %c12_78 = arith.constant 12 : index
    %c32_79 = arith.constant 32 : index
    %59 = vector.load %arg5[%c12_78, %c32_79] : memref<16x64xf32, #tpu.memory_space<vmem>>, vector<4x16xf32>
    tpu.vector_store %arg5[%c12_78, %c32_79], %58 {strides = array<i32>} : memref<16x64xf32, #tpu.memory_space<vmem>>, vector<4x16xf32>,
    %c0_80 = arith.constant 0 : index
    %c4_81 = arith.constant 4 : index
    %c1_82 = arith.constant 1 : index
    %c0_83 = arith.constant 0 : index
    %60 = vector.load %arg1[%c0_80, %c4_81, %c1_82, %c0_83] : memref<1x5x5x16xbf16, #tpu.memory_space<vmem>>, vector<1x1x4x16xbf16>
    %61 = vector.shape_cast %60 : vector<1x1x4x16xbf16> to vector<4x16xbf16>
    %62 = arith.extf %61 : vector<4x16xbf16> to vector<4x16xf32>
    %c12_84 = arith.constant 12 : index
    %c48_85 = arith.constant 48 : index
    %63 = vector.load %arg5[%c12_84, %c48_85] : memref<16x64xf32, #tpu.memory_space<vmem>>, vector<4x16xf32>
    tpu.vector_store %arg5[%c12_84, %c48_85], %62 {strides = array<i32>} : memref<16x64xf32, #tpu.memory_space<vmem>>, vector<4x16xf32>,
    %c0_86 = arith.constant 0 : index
    %c0_87 = arith.constant 0 : index
    %64 = vector.load %arg5[%c0_86, %c0_87] : memref<16x64xf32, #tpu.memory_space<vmem>>, vector<16x64xf32>
    %65 = arith.truncf %64 : vector<16x64xf32> to vector<16x64xbf16>
    %c0_88 = arith.constant 0 : index
    %c0_89 = arith.constant 0 : index
    %66 = vector.load %arg2[%c0_88, %c0_89] : memref<64x8xbf16, #tpu.memory_space<vmem>>, vector<64x8xbf16>
    %cst = arith.constant dense<0.000000e+00> : vector<16x8xf32>
    %67 = tpu.matmul %65, %66, %cst {dimension_numbers = #tpu.dot_dimension_numbers<[1], [0], [0], [1], [0, 0, 1, 1], [], []>} : vector<16x64xbf16>, vector<64x8xbf16>, vector<16x8xf32> -> vector<16x8xf32>
    %c0_90 = arith.constant 0 : index
    %c0_91 = arith.constant 0 : index
    %68 = vector.load %arg3[%c0_90, %c0_91] : memref<1x8xf32, #tpu.memory_space<vmem>>, vector<1x8xf32>
    %69 = vector.broadcast %68 : vector<1x8xf32> to vector<16x8xf32>
    %70 = arith.addf %67, %69 : vector<16x8xf32>
    %cst_92 = arith.constant 0.000000e+00 : f32
    %71 = vector.broadcast %cst_92 : f32 to vector<16x8xf32>
    %72 = arith.maximumf %70, %71 : vector<16x8xf32>
    %73 = arith.truncf %72 : vector<16x8xf32> to vector<16x8xbf16>
    %c0_93 = arith.constant 0 : index
    %c0_94 = arith.constant 0 : index
    %c0_95 = arith.constant 0 : index
    %74 = vector.load %arg4[%c0_93, %c0_94, %c0_95] : memref<1x16x8xbf16, #tpu.memory_space<vmem>>, vector<1x16x8xbf16>
    %75 = vector.shape_cast %74 : vector<1x16x8xbf16> to vector<16x8xbf16>
    %76 = vector.shape_cast %73 : vector<16x8xbf16> to vector<1x16x8xbf16>
    tpu.vector_store %arg4[%c0_93, %c0_94, %c0_95], %76 {strides = array<i32>} : memref<1x16x8xbf16, #tpu.memory_space<vmem>>, vector<1x16x8xbf16>,
    return
  }
  func.func @transform_0(%arg0: i32) -> (i32, i32, i32, i32) {
    %c0_i32 = arith.constant 0 : i32
    %c0_i32_0 = arith.constant 0 : i32
    %c0_i32_1 = arith.constant 0 : i32
    %c0_i32_2 = arith.constant 0 : i32
    return %arg0, %c0_i32, %c0_i32_0, %c0_i32_1 : i32, i32, i32, i32
  }
  func.func @transform_1(%arg0: i32) -> (i32, i32) {
    %c0_i32 = arith.constant 0 : i32
    %c0_i32_0 = arith.constant 0 : i32
    %c0_i32_1 = arith.constant 0 : i32
    return %c0_i32, %c0_i32_0 : i32, i32
  }
  func.func @transform_2(%arg0: i32) -> (i32, i32) {
    %c0_i32 = arith.constant 0 : i32
    %c0_i32_0 = arith.constant 0 : i32
    %c0_i32_1 = arith.constant 0 : i32
    return %c0_i32, %c0_i32_0 : i32, i32
  }
  func.func @transform_3(%arg0: i32) -> (i32, i32, i32) {
    %c0_i32 = arith.constant 0 : i32
    %c0_i32_0 = arith.constant 0 : i32
    %c0_i32_1 = arith.constant 0 : i32
    return %arg0, %c0_i32, %c0_i32_0 : i32, i32, i32
  }
}

module attributes {stable_mosaic.version = 11 : i64} {
  func.func @_conv_im2col_kernel(%arg0: i32, %arg1: memref<1x3x3x32xbf16, #tpu.memory_space<vmem>>, %arg2: memref<128x16xbf16, #tpu.memory_space<vmem>>, %arg3: memref<1x16xf32, #tpu.memory_space<vmem>>, %arg4: memref<1x4x16xbf16, #tpu.memory_space<vmem>>, %arg5: memref<4x128xf32, #tpu.memory_space<vmem>>) attributes {dimension_semantics = [#tpu.dimension_semantics<parallel>], iteration_bounds = array<i64: 8>, scalar_prefetch = 0 : i64, scratch_operands = 1 : i64, tpu.core_type = #tpu.core_type<tc>, window_params = [{transform_indices = @transform_0, window_bounds = array<i64: 1, 3, 3, 32>}, {pipeline_mode = #tpu.pipeline_mode<synchronous>, transform_indices = @transform_1, window_bounds = array<i64: 128, 16>}, {pipeline_mode = #tpu.pipeline_mode<synchronous>, transform_indices = @transform_2, window_bounds = array<i64: 1, 16>}, {transform_indices = @transform_3, window_bounds = array<i64: 1, 4, 16>}]} {
    %c0 = arith.constant 0 : index
    %c0_0 = arith.constant 0 : index
    %c0_1 = arith.constant 0 : index
    %c0_2 = arith.constant 0 : index
    %0 = vector.load %arg1[%c0, %c0_0, %c0_1, %c0_2] : memref<1x3x3x32xbf16, #tpu.memory_space<vmem>>, vector<1x1x2x32xbf16>
    %1 = vector.shape_cast %0 : vector<1x1x2x32xbf16> to vector<2x32xbf16>
    %2 = arith.extf %1 : vector<2x32xbf16> to vector<2x32xf32>
    %c0_3 = arith.constant 0 : index
    %c0_4 = arith.constant 0 : index
    %3 = vector.load %arg5[%c0_3, %c0_4] : memref<4x128xf32, #tpu.memory_space<vmem>>, vector<2x32xf32>
    tpu.vector_store %arg5[%c0_3, %c0_4], %2 {strides = array<i32>} : memref<4x128xf32, #tpu.memory_space<vmem>>, vector<2x32xf32>,
    %c0_5 = arith.constant 0 : index
    %c0_6 = arith.constant 0 : index
    %c1 = arith.constant 1 : index
    %c0_7 = arith.constant 0 : index
    %4 = vector.load %arg1[%c0_5, %c0_6, %c1, %c0_7] : memref<1x3x3x32xbf16, #tpu.memory_space<vmem>>, vector<1x1x2x32xbf16>
    %5 = vector.shape_cast %4 : vector<1x1x2x32xbf16> to vector<2x32xbf16>
    %6 = arith.extf %5 : vector<2x32xbf16> to vector<2x32xf32>
    %c0_8 = arith.constant 0 : index
    %c32 = arith.constant 32 : index
    %7 = vector.load %arg5[%c0_8, %c32] : memref<4x128xf32, #tpu.memory_space<vmem>>, vector<2x32xf32>
    tpu.vector_store %arg5[%c0_8, %c32], %6 {strides = array<i32>} : memref<4x128xf32, #tpu.memory_space<vmem>>, vector<2x32xf32>,
    %c0_9 = arith.constant 0 : index
    %c1_10 = arith.constant 1 : index
    %c0_11 = arith.constant 0 : index
    %c0_12 = arith.constant 0 : index
    %8 = vector.load %arg1[%c0_9, %c1_10, %c0_11, %c0_12] : memref<1x3x3x32xbf16, #tpu.memory_space<vmem>>, vector<1x1x2x32xbf16>
    %9 = vector.shape_cast %8 : vector<1x1x2x32xbf16> to vector<2x32xbf16>
    %10 = arith.extf %9 : vector<2x32xbf16> to vector<2x32xf32>
    %c0_13 = arith.constant 0 : index
    %c64 = arith.constant 64 : index
    %11 = vector.load %arg5[%c0_13, %c64] : memref<4x128xf32, #tpu.memory_space<vmem>>, vector<2x32xf32>
    tpu.vector_store %arg5[%c0_13, %c64], %10 {strides = array<i32>} : memref<4x128xf32, #tpu.memory_space<vmem>>, vector<2x32xf32>,
    %c0_14 = arith.constant 0 : index
    %c1_15 = arith.constant 1 : index
    %c1_16 = arith.constant 1 : index
    %c0_17 = arith.constant 0 : index
    %12 = vector.load %arg1[%c0_14, %c1_15, %c1_16, %c0_17] : memref<1x3x3x32xbf16, #tpu.memory_space<vmem>>, vector<1x1x2x32xbf16>
    %13 = vector.shape_cast %12 : vector<1x1x2x32xbf16> to vector<2x32xbf16>
    %14 = arith.extf %13 : vector<2x32xbf16> to vector<2x32xf32>
    %c0_18 = arith.constant 0 : index
    %c96 = arith.constant 96 : index
    %15 = vector.load %arg5[%c0_18, %c96] : memref<4x128xf32, #tpu.memory_space<vmem>>, vector<2x32xf32>
    tpu.vector_store %arg5[%c0_18, %c96], %14 {strides = array<i32>} : memref<4x128xf32, #tpu.memory_space<vmem>>, vector<2x32xf32>,
    %c0_19 = arith.constant 0 : index
    %c1_20 = arith.constant 1 : index
    %c0_21 = arith.constant 0 : index
    %c0_22 = arith.constant 0 : index
    %16 = vector.load %arg1[%c0_19, %c1_20, %c0_21, %c0_22] : memref<1x3x3x32xbf16, #tpu.memory_space<vmem>>, vector<1x1x2x32xbf16>
    %17 = vector.shape_cast %16 : vector<1x1x2x32xbf16> to vector<2x32xbf16>
    %18 = arith.extf %17 : vector<2x32xbf16> to vector<2x32xf32>
    %c2 = arith.constant 2 : index
    %c0_23 = arith.constant 0 : index
    %19 = vector.load %arg5[%c2, %c0_23] : memref<4x128xf32, #tpu.memory_space<vmem>>, vector<2x32xf32>
    tpu.vector_store %arg5[%c2, %c0_23], %18 {strides = array<i32>} : memref<4x128xf32, #tpu.memory_space<vmem>>, vector<2x32xf32>,
    %c0_24 = arith.constant 0 : index
    %c1_25 = arith.constant 1 : index
    %c1_26 = arith.constant 1 : index
    %c0_27 = arith.constant 0 : index
    %20 = vector.load %arg1[%c0_24, %c1_25, %c1_26, %c0_27] : memref<1x3x3x32xbf16, #tpu.memory_space<vmem>>, vector<1x1x2x32xbf16>
    %21 = vector.shape_cast %20 : vector<1x1x2x32xbf16> to vector<2x32xbf16>
    %22 = arith.extf %21 : vector<2x32xbf16> to vector<2x32xf32>
    %c2_28 = arith.constant 2 : index
    %c32_29 = arith.constant 32 : index
    %23 = vector.load %arg5[%c2_28, %c32_29] : memref<4x128xf32, #tpu.memory_space<vmem>>, vector<2x32xf32>
    tpu.vector_store %arg5[%c2_28, %c32_29], %22 {strides = array<i32>} : memref<4x128xf32, #tpu.memory_space<vmem>>, vector<2x32xf32>,
    %c0_30 = arith.constant 0 : index
    %c2_31 = arith.constant 2 : index
    %c0_32 = arith.constant 0 : index
    %c0_33 = arith.constant 0 : index
    %24 = vector.load %arg1[%c0_30, %c2_31, %c0_32, %c0_33] : memref<1x3x3x32xbf16, #tpu.memory_space<vmem>>, vector<1x1x2x32xbf16>
    %25 = vector.shape_cast %24 : vector<1x1x2x32xbf16> to vector<2x32xbf16>
    %26 = arith.extf %25 : vector<2x32xbf16> to vector<2x32xf32>
    %c2_34 = arith.constant 2 : index
    %c64_35 = arith.constant 64 : index
    %27 = vector.load %arg5[%c2_34, %c64_35] : memref<4x128xf32, #tpu.memory_space<vmem>>, vector<2x32xf32>
    tpu.vector_store %arg5[%c2_34, %c64_35], %26 {strides = array<i32>} : memref<4x128xf32, #tpu.memory_space<vmem>>, vector<2x32xf32>,
    %c0_36 = arith.constant 0 : index
    %c2_37 = arith.constant 2 : index
    %c1_38 = arith.constant 1 : index
    %c0_39 = arith.constant 0 : index
    %28 = vector.load %arg1[%c0_36, %c2_37, %c1_38, %c0_39] : memref<1x3x3x32xbf16, #tpu.memory_space<vmem>>, vector<1x1x2x32xbf16>
    %29 = vector.shape_cast %28 : vector<1x1x2x32xbf16> to vector<2x32xbf16>
    %30 = arith.extf %29 : vector<2x32xbf16> to vector<2x32xf32>
    %c2_40 = arith.constant 2 : index
    %c96_41 = arith.constant 96 : index
    %31 = vector.load %arg5[%c2_40, %c96_41] : memref<4x128xf32, #tpu.memory_space<vmem>>, vector<2x32xf32>
    tpu.vector_store %arg5[%c2_40, %c96_41], %30 {strides = array<i32>} : memref<4x128xf32, #tpu.memory_space<vmem>>, vector<2x32xf32>,
    %c0_42 = arith.constant 0 : index
    %c0_43 = arith.constant 0 : index
    %32 = vector.load %arg5[%c0_42, %c0_43] : memref<4x128xf32, #tpu.memory_space<vmem>>, vector<4x128xf32>
    %33 = arith.truncf %32 : vector<4x128xf32> to vector<4x128xbf16>
    %c0_44 = arith.constant 0 : index
    %c0_45 = arith.constant 0 : index
    %34 = vector.load %arg2[%c0_44, %c0_45] : memref<128x16xbf16, #tpu.memory_space<vmem>>, vector<128x16xbf16>
    %cst = arith.constant dense<0.000000e+00> : vector<4x16xf32>
    %35 = tpu.matmul %33, %34, %cst {dimension_numbers = #tpu.dot_dimension_numbers<[1], [0], [0], [1], [0, 0, 1, 1], [], []>} : vector<4x128xbf16>, vector<128x16xbf16>, vector<4x16xf32> -> vector<4x16xf32>
    %c0_46 = arith.constant 0 : index
    %c0_47 = arith.constant 0 : index
    %36 = vector.load %arg3[%c0_46, %c0_47] : memref<1x16xf32, #tpu.memory_space<vmem>>, vector<1x16xf32>
    %37 = vector.broadcast %36 : vector<1x16xf32> to vector<4x16xf32>
    %38 = arith.addf %35, %37 : vector<4x16xf32>
    %cst_48 = arith.constant 0.000000e+00 : f32
    %39 = vector.broadcast %cst_48 : f32 to vector<4x16xf32>
    %40 = arith.maximumf %38, %39 : vector<4x16xf32>
    %41 = arith.truncf %40 : vector<4x16xf32> to vector<4x16xbf16>
    %c0_49 = arith.constant 0 : index
    %c0_50 = arith.constant 0 : index
    %c0_51 = arith.constant 0 : index
    %42 = vector.load %arg4[%c0_49, %c0_50, %c0_51] : memref<1x4x16xbf16, #tpu.memory_space<vmem>>, vector<1x4x16xbf16>
    %43 = vector.shape_cast %42 : vector<1x4x16xbf16> to vector<4x16xbf16>
    %44 = vector.shape_cast %41 : vector<4x16xbf16> to vector<1x4x16xbf16>
    tpu.vector_store %arg4[%c0_49, %c0_50, %c0_51], %44 {strides = array<i32>} : memref<1x4x16xbf16, #tpu.memory_space<vmem>>, vector<1x4x16xbf16>,
    return
  }
  func.func @transform_0(%arg0: i32) -> (i32, i32, i32, i32) {
    %c0_i32 = arith.constant 0 : i32
    %c0_i32_0 = arith.constant 0 : i32
    %c0_i32_1 = arith.constant 0 : i32
    %c0_i32_2 = arith.constant 0 : i32
    return %arg0, %c0_i32, %c0_i32_0, %c0_i32_1 : i32, i32, i32, i32
  }
  func.func @transform_1(%arg0: i32) -> (i32, i32) {
    %c0_i32 = arith.constant 0 : i32
    %c0_i32_0 = arith.constant 0 : i32
    %c0_i32_1 = arith.constant 0 : i32
    return %c0_i32, %c0_i32_0 : i32, i32
  }
  func.func @transform_2(%arg0: i32) -> (i32, i32) {
    %c0_i32 = arith.constant 0 : i32
    %c0_i32_0 = arith.constant 0 : i32
    %c0_i32_1 = arith.constant 0 : i32
    return %c0_i32, %c0_i32_0 : i32, i32
  }
  func.func @transform_3(%arg0: i32) -> (i32, i32, i32) {
    %c0_i32 = arith.constant 0 : i32
    %c0_i32_0 = arith.constant 0 : i32
    %c0_i32_1 = arith.constant 0 : i32
    return %arg0, %c0_i32, %c0_i32_0 : i32, i32, i32
  }
}

module attributes {stable_mosaic.version = 11 : i64} {
  func.func @_conv_im2col_kernel(%arg0: i32, %arg1: memref<1x4x4x64xbf16, #tpu.memory_space<vmem>>, %arg2: memref<576x32xbf16, #tpu.memory_space<vmem>>, %arg3: memref<1x32xf32, #tpu.memory_space<vmem>>, %arg4: memref<1x4x32xf32, #tpu.memory_space<vmem>>, %arg5: memref<4x576xf32, #tpu.memory_space<vmem>>) attributes {dimension_semantics = [#tpu.dimension_semantics<parallel>], iteration_bounds = array<i64: 2>, scalar_prefetch = 0 : i64, scratch_operands = 1 : i64, tpu.core_type = #tpu.core_type<tc>, window_params = [{transform_indices = @transform_0, window_bounds = array<i64: 1, 4, 4, 64>}, {pipeline_mode = #tpu.pipeline_mode<synchronous>, transform_indices = @transform_1, window_bounds = array<i64: 576, 32>}, {pipeline_mode = #tpu.pipeline_mode<synchronous>, transform_indices = @transform_2, window_bounds = array<i64: 1, 32>}, {transform_indices = @transform_3, window_bounds = array<i64: 1, 4, 32>}]} {
    %c0 = arith.constant 0 : index
    %c0_0 = arith.constant 0 : index
    %c0_1 = arith.constant 0 : index
    %c0_2 = arith.constant 0 : index
    %0 = vector.load %arg1[%c0, %c0_0, %c0_1, %c0_2] : memref<1x4x4x64xbf16, #tpu.memory_space<vmem>>, vector<1x1x2x64xbf16>
    %1 = vector.shape_cast %0 : vector<1x1x2x64xbf16> to vector<2x64xbf16>
    %2 = arith.extf %1 : vector<2x64xbf16> to vector<2x64xf32>
    %c0_3 = arith.constant 0 : index
    %c0_4 = arith.constant 0 : index
    %3 = vector.load %arg5[%c0_3, %c0_4] : memref<4x576xf32, #tpu.memory_space<vmem>>, vector<2x64xf32>
    tpu.vector_store %arg5[%c0_3, %c0_4], %2 {strides = array<i32>} : memref<4x576xf32, #tpu.memory_space<vmem>>, vector<2x64xf32>,
    %c0_5 = arith.constant 0 : index
    %c0_6 = arith.constant 0 : index
    %c1 = arith.constant 1 : index
    %c0_7 = arith.constant 0 : index
    %4 = vector.load %arg1[%c0_5, %c0_6, %c1, %c0_7] : memref<1x4x4x64xbf16, #tpu.memory_space<vmem>>, vector<1x1x2x64xbf16>
    %5 = vector.shape_cast %4 : vector<1x1x2x64xbf16> to vector<2x64xbf16>
    %6 = arith.extf %5 : vector<2x64xbf16> to vector<2x64xf32>
    %c0_8 = arith.constant 0 : index
    %c64 = arith.constant 64 : index
    %7 = vector.load %arg5[%c0_8, %c64] : memref<4x576xf32, #tpu.memory_space<vmem>>, vector<2x64xf32>
    tpu.vector_store %arg5[%c0_8, %c64], %6 {strides = array<i32>} : memref<4x576xf32, #tpu.memory_space<vmem>>, vector<2x64xf32>,
    %c0_9 = arith.constant 0 : index
    %c0_10 = arith.constant 0 : index
    %c2 = arith.constant 2 : index
    %c0_11 = arith.constant 0 : index
    %8 = vector.load %arg1[%c0_9, %c0_10, %c2, %c0_11] : memref<1x4x4x64xbf16, #tpu.memory_space<vmem>>, vector<1x1x2x64xbf16>
    %9 = vector.shape_cast %8 : vector<1x1x2x64xbf16> to vector<2x64xbf16>
    %10 = arith.extf %9 : vector<2x64xbf16> to vector<2x64xf32>
    %c0_12 = arith.constant 0 : index
    %c128 = arith.constant 128 : index
    %11 = vector.load %arg5[%c0_12, %c128] : memref<4x576xf32, #tpu.memory_space<vmem>>, vector<2x64xf32>
    tpu.vector_store %arg5[%c0_12, %c128], %10 {strides = array<i32>} : memref<4x576xf32, #tpu.memory_space<vmem>>, vector<2x64xf32>,
    %c0_13 = arith.constant 0 : index
    %c1_14 = arith.constant 1 : index
    %c0_15 = arith.constant 0 : index
    %c0_16 = arith.constant 0 : index
    %12 = vector.load %arg1[%c0_13, %c1_14, %c0_15, %c0_16] : memref<1x4x4x64xbf16, #tpu.memory_space<vmem>>, vector<1x1x2x64xbf16>
    %13 = vector.shape_cast %12 : vector<1x1x2x64xbf16> to vector<2x64xbf16>
    %14 = arith.extf %13 : vector<2x64xbf16> to vector<2x64xf32>
    %c0_17 = arith.constant 0 : index
    %c192 = arith.constant 192 : index
    %15 = vector.load %arg5[%c0_17, %c192] : memref<4x576xf32, #tpu.memory_space<vmem>>, vector<2x64xf32>
    tpu.vector_store %arg5[%c0_17, %c192], %14 {strides = array<i32>} : memref<4x576xf32, #tpu.memory_space<vmem>>, vector<2x64xf32>,
    %c0_18 = arith.constant 0 : index
    %c1_19 = arith.constant 1 : index
    %c1_20 = arith.constant 1 : index
    %c0_21 = arith.constant 0 : index
    %16 = vector.load %arg1[%c0_18, %c1_19, %c1_20, %c0_21] : memref<1x4x4x64xbf16, #tpu.memory_space<vmem>>, vector<1x1x2x64xbf16>
    %17 = vector.shape_cast %16 : vector<1x1x2x64xbf16> to vector<2x64xbf16>
    %18 = arith.extf %17 : vector<2x64xbf16> to vector<2x64xf32>
    %c0_22 = arith.constant 0 : index
    %c256 = arith.constant 256 : index
    %19 = vector.load %arg5[%c0_22, %c256] : memref<4x576xf32, #tpu.memory_space<vmem>>, vector<2x64xf32>
    tpu.vector_store %arg5[%c0_22, %c256], %18 {strides = array<i32>} : memref<4x576xf32, #tpu.memory_space<vmem>>, vector<2x64xf32>,
    %c0_23 = arith.constant 0 : index
    %c1_24 = arith.constant 1 : index
    %c2_25 = arith.constant 2 : index
    %c0_26 = arith.constant 0 : index
    %20 = vector.load %arg1[%c0_23, %c1_24, %c2_25, %c0_26] : memref<1x4x4x64xbf16, #tpu.memory_space<vmem>>, vector<1x1x2x64xbf16>
    %21 = vector.shape_cast %20 : vector<1x1x2x64xbf16> to vector<2x64xbf16>
    %22 = arith.extf %21 : vector<2x64xbf16> to vector<2x64xf32>
    %c0_27 = arith.constant 0 : index
    %c320 = arith.constant 320 : index
    %23 = vector.load %arg5[%c0_27, %c320] : memref<4x576xf32, #tpu.memory_space<vmem>>, vector<2x64xf32>
    tpu.vector_store %arg5[%c0_27, %c320], %22 {strides = array<i32>} : memref<4x576xf32, #tpu.memory_space<vmem>>, vector<2x64xf32>,
    %c0_28 = arith.constant 0 : index
    %c2_29 = arith.constant 2 : index
    %c0_30 = arith.constant 0 : index
    %c0_31 = arith.constant 0 : index
    %24 = vector.load %arg1[%c0_28, %c2_29, %c0_30, %c0_31] : memref<1x4x4x64xbf16, #tpu.memory_space<vmem>>, vector<1x1x2x64xbf16>
    %25 = vector.shape_cast %24 : vector<1x1x2x64xbf16> to vector<2x64xbf16>
    %26 = arith.extf %25 : vector<2x64xbf16> to vector<2x64xf32>
    %c0_32 = arith.constant 0 : index
    %c384 = arith.constant 384 : index
    %27 = vector.load %arg5[%c0_32, %c384] : memref<4x576xf32, #tpu.memory_space<vmem>>, vector<2x64xf32>
    tpu.vector_store %arg5[%c0_32, %c384], %26 {strides = array<i32>} : memref<4x576xf32, #tpu.memory_space<vmem>>, vector<2x64xf32>,
    %c0_33 = arith.constant 0 : index
    %c2_34 = arith.constant 2 : index
    %c1_35 = arith.constant 1 : index
    %c0_36 = arith.constant 0 : index
    %28 = vector.load %arg1[%c0_33, %c2_34, %c1_35, %c0_36] : memref<1x4x4x64xbf16, #tpu.memory_space<vmem>>, vector<1x1x2x64xbf16>
    %29 = vector.shape_cast %28 : vector<1x1x2x64xbf16> to vector<2x64xbf16>
    %30 = arith.extf %29 : vector<2x64xbf16> to vector<2x64xf32>
    %c0_37 = arith.constant 0 : index
    %c448 = arith.constant 448 : index
    %31 = vector.load %arg5[%c0_37, %c448] : memref<4x576xf32, #tpu.memory_space<vmem>>, vector<2x64xf32>
    tpu.vector_store %arg5[%c0_37, %c448], %30 {strides = array<i32>} : memref<4x576xf32, #tpu.memory_space<vmem>>, vector<2x64xf32>,
    %c0_38 = arith.constant 0 : index
    %c2_39 = arith.constant 2 : index
    %c2_40 = arith.constant 2 : index
    %c0_41 = arith.constant 0 : index
    %32 = vector.load %arg1[%c0_38, %c2_39, %c2_40, %c0_41] : memref<1x4x4x64xbf16, #tpu.memory_space<vmem>>, vector<1x1x2x64xbf16>
    %33 = vector.shape_cast %32 : vector<1x1x2x64xbf16> to vector<2x64xbf16>
    %34 = arith.extf %33 : vector<2x64xbf16> to vector<2x64xf32>
    %c0_42 = arith.constant 0 : index
    %c512 = arith.constant 512 : index
    %35 = vector.load %arg5[%c0_42, %c512] : memref<4x576xf32, #tpu.memory_space<vmem>>, vector<2x64xf32>
    tpu.vector_store %arg5[%c0_42, %c512], %34 {strides = array<i32>} : memref<4x576xf32, #tpu.memory_space<vmem>>, vector<2x64xf32>,
    %c0_43 = arith.constant 0 : index
    %c1_44 = arith.constant 1 : index
    %c0_45 = arith.constant 0 : index
    %c0_46 = arith.constant 0 : index
    %36 = vector.load %arg1[%c0_43, %c1_44, %c0_45, %c0_46] : memref<1x4x4x64xbf16, #tpu.memory_space<vmem>>, vector<1x1x2x64xbf16>
    %37 = vector.shape_cast %36 : vector<1x1x2x64xbf16> to vector<2x64xbf16>
    %38 = arith.extf %37 : vector<2x64xbf16> to vector<2x64xf32>
    %c2_47 = arith.constant 2 : index
    %c0_48 = arith.constant 0 : index
    %39 = vector.load %arg5[%c2_47, %c0_48] : memref<4x576xf32, #tpu.memory_space<vmem>>, vector<2x64xf32>
    tpu.vector_store %arg5[%c2_47, %c0_48], %38 {strides = array<i32>} : memref<4x576xf32, #tpu.memory_space<vmem>>, vector<2x64xf32>,
    %c0_49 = arith.constant 0 : index
    %c1_50 = arith.constant 1 : index
    %c1_51 = arith.constant 1 : index
    %c0_52 = arith.constant 0 : index
    %40 = vector.load %arg1[%c0_49, %c1_50, %c1_51, %c0_52] : memref<1x4x4x64xbf16, #tpu.memory_space<vmem>>, vector<1x1x2x64xbf16>
    %41 = vector.shape_cast %40 : vector<1x1x2x64xbf16> to vector<2x64xbf16>
    %42 = arith.extf %41 : vector<2x64xbf16> to vector<2x64xf32>
    %c2_53 = arith.constant 2 : index
    %c64_54 = arith.constant 64 : index
    %43 = vector.load %arg5[%c2_53, %c64_54] : memref<4x576xf32, #tpu.memory_space<vmem>>, vector<2x64xf32>
    tpu.vector_store %arg5[%c2_53, %c64_54], %42 {strides = array<i32>} : memref<4x576xf32, #tpu.memory_space<vmem>>, vector<2x64xf32>,
    %c0_55 = arith.constant 0 : index
    %c1_56 = arith.constant 1 : index
    %c2_57 = arith.constant 2 : index
    %c0_58 = arith.constant 0 : index
    %44 = vector.load %arg1[%c0_55, %c1_56, %c2_57, %c0_58] : memref<1x4x4x64xbf16, #tpu.memory_space<vmem>>, vector<1x1x2x64xbf16>
    %45 = vector.shape_cast %44 : vector<1x1x2x64xbf16> to vector<2x64xbf16>
    %46 = arith.extf %45 : vector<2x64xbf16> to vector<2x64xf32>
    %c2_59 = arith.constant 2 : index
    %c128_60 = arith.constant 128 : index
    %47 = vector.load %arg5[%c2_59, %c128_60] : memref<4x576xf32, #tpu.memory_space<vmem>>, vector<2x64xf32>
    tpu.vector_store %arg5[%c2_59, %c128_60], %46 {strides = array<i32>} : memref<4x576xf32, #tpu.memory_space<vmem>>, vector<2x64xf32>,
    %c0_61 = arith.constant 0 : index
    %c2_62 = arith.constant 2 : index
    %c0_63 = arith.constant 0 : index
    %c0_64 = arith.constant 0 : index
    %48 = vector.load %arg1[%c0_61, %c2_62, %c0_63, %c0_64] : memref<1x4x4x64xbf16, #tpu.memory_space<vmem>>, vector<1x1x2x64xbf16>
    %49 = vector.shape_cast %48 : vector<1x1x2x64xbf16> to vector<2x64xbf16>
    %50 = arith.extf %49 : vector<2x64xbf16> to vector<2x64xf32>
    %c2_65 = arith.constant 2 : index
    %c192_66 = arith.constant 192 : index
    %51 = vector.load %arg5[%c2_65, %c192_66] : memref<4x576xf32, #tpu.memory_space<vmem>>, vector<2x64xf32>
    tpu.vector_store %arg5[%c2_65, %c192_66], %50 {strides = array<i32>} : memref<4x576xf32, #tpu.memory_space<vmem>>, vector<2x64xf32>,
    %c0_67 = arith.constant 0 : index
    %c2_68 = arith.constant 2 : index
    %c1_69 = arith.constant 1 : index
    %c0_70 = arith.constant 0 : index
    %52 = vector.load %arg1[%c0_67, %c2_68, %c1_69, %c0_70] : memref<1x4x4x64xbf16, #tpu.memory_space<vmem>>, vector<1x1x2x64xbf16>
    %53 = vector.shape_cast %52 : vector<1x1x2x64xbf16> to vector<2x64xbf16>
    %54 = arith.extf %53 : vector<2x64xbf16> to vector<2x64xf32>
    %c2_71 = arith.constant 2 : index
    %c256_72 = arith.constant 256 : index
    %55 = vector.load %arg5[%c2_71, %c256_72] : memref<4x576xf32, #tpu.memory_space<vmem>>, vector<2x64xf32>
    tpu.vector_store %arg5[%c2_71, %c256_72], %54 {strides = array<i32>} : memref<4x576xf32, #tpu.memory_space<vmem>>, vector<2x64xf32>,
    %c0_73 = arith.constant 0 : index
    %c2_74 = arith.constant 2 : index
    %c2_75 = arith.constant 2 : index
    %c0_76 = arith.constant 0 : index
    %56 = vector.load %arg1[%c0_73, %c2_74, %c2_75, %c0_76] : memref<1x4x4x64xbf16, #tpu.memory_space<vmem>>, vector<1x1x2x64xbf16>
    %57 = vector.shape_cast %56 : vector<1x1x2x64xbf16> to vector<2x64xbf16>
    %58 = arith.extf %57 : vector<2x64xbf16> to vector<2x64xf32>
    %c2_77 = arith.constant 2 : index
    %c320_78 = arith.constant 320 : index
    %59 = vector.load %arg5[%c2_77, %c320_78] : memref<4x576xf32, #tpu.memory_space<vmem>>, vector<2x64xf32>
    tpu.vector_store %arg5[%c2_77, %c320_78], %58 {strides = array<i32>} : memref<4x576xf32, #tpu.memory_space<vmem>>, vector<2x64xf32>,
    %c0_79 = arith.constant 0 : index
    %c3 = arith.constant 3 : index
    %c0_80 = arith.constant 0 : index
    %c0_81 = arith.constant 0 : index
    %60 = vector.load %arg1[%c0_79, %c3, %c0_80, %c0_81] : memref<1x4x4x64xbf16, #tpu.memory_space<vmem>>, vector<1x1x2x64xbf16>
    %61 = vector.shape_cast %60 : vector<1x1x2x64xbf16> to vector<2x64xbf16>
    %62 = arith.extf %61 : vector<2x64xbf16> to vector<2x64xf32>
    %c2_82 = arith.constant 2 : index
    %c384_83 = arith.constant 384 : index
    %63 = vector.load %arg5[%c2_82, %c384_83] : memref<4x576xf32, #tpu.memory_space<vmem>>, vector<2x64xf32>
    tpu.vector_store %arg5[%c2_82, %c384_83], %62 {strides = array<i32>} : memref<4x576xf32, #tpu.memory_space<vmem>>, vector<2x64xf32>,
    %c0_84 = arith.constant 0 : index
    %c3_85 = arith.constant 3 : index
    %c1_86 = arith.constant 1 : index
    %c0_87 = arith.constant 0 : index
    %64 = vector.load %arg1[%c0_84, %c3_85, %c1_86, %c0_87] : memref<1x4x4x64xbf16, #tpu.memory_space<vmem>>, vector<1x1x2x64xbf16>
    %65 = vector.shape_cast %64 : vector<1x1x2x64xbf16> to vector<2x64xbf16>
    %66 = arith.extf %65 : vector<2x64xbf16> to vector<2x64xf32>
    %c2_88 = arith.constant 2 : index
    %c448_89 = arith.constant 448 : index
    %67 = vector.load %arg5[%c2_88, %c448_89] : memref<4x576xf32, #tpu.memory_space<vmem>>, vector<2x64xf32>
    tpu.vector_store %arg5[%c2_88, %c448_89], %66 {strides = array<i32>} : memref<4x576xf32, #tpu.memory_space<vmem>>, vector<2x64xf32>,
    %c0_90 = arith.constant 0 : index
    %c3_91 = arith.constant 3 : index
    %c2_92 = arith.constant 2 : index
    %c0_93 = arith.constant 0 : index
    %68 = vector.load %arg1[%c0_90, %c3_91, %c2_92, %c0_93] : memref<1x4x4x64xbf16, #tpu.memory_space<vmem>>, vector<1x1x2x64xbf16>
    %69 = vector.shape_cast %68 : vector<1x1x2x64xbf16> to vector<2x64xbf16>
    %70 = arith.extf %69 : vector<2x64xbf16> to vector<2x64xf32>
    %c2_94 = arith.constant 2 : index
    %c512_95 = arith.constant 512 : index
    %71 = vector.load %arg5[%c2_94, %c512_95] : memref<4x576xf32, #tpu.memory_space<vmem>>, vector<2x64xf32>
    tpu.vector_store %arg5[%c2_94, %c512_95], %70 {strides = array<i32>} : memref<4x576xf32, #tpu.memory_space<vmem>>, vector<2x64xf32>,
    %c0_96 = arith.constant 0 : index
    %c0_97 = arith.constant 0 : index
    %72 = vector.load %arg5[%c0_96, %c0_97] : memref<4x576xf32, #tpu.memory_space<vmem>>, vector<4x576xf32>
    %73 = arith.truncf %72 : vector<4x576xf32> to vector<4x576xbf16>
    %c0_98 = arith.constant 0 : index
    %c0_99 = arith.constant 0 : index
    %74 = vector.load %arg2[%c0_98, %c0_99] : memref<576x32xbf16, #tpu.memory_space<vmem>>, vector<576x32xbf16>
    %cst = arith.constant dense<0.000000e+00> : vector<4x32xf32>
    %75 = tpu.matmul %73, %74, %cst {dimension_numbers = #tpu.dot_dimension_numbers<[1], [0], [0], [1], [0, 0, 1, 1], [], []>} : vector<4x576xbf16>, vector<576x32xbf16>, vector<4x32xf32> -> vector<4x32xf32>
    %c0_100 = arith.constant 0 : index
    %c0_101 = arith.constant 0 : index
    %76 = vector.load %arg3[%c0_100, %c0_101] : memref<1x32xf32, #tpu.memory_space<vmem>>, vector<1x32xf32>
    %77 = vector.broadcast %76 : vector<1x32xf32> to vector<4x32xf32>
    %78 = arith.addf %75, %77 : vector<4x32xf32>
    %cst_102 = arith.constant 0.000000e+00 : f32
    %79 = vector.broadcast %cst_102 : f32 to vector<4x32xf32>
    %80 = arith.maximumf %78, %79 : vector<4x32xf32>
    %c0_103 = arith.constant 0 : index
    %c0_104 = arith.constant 0 : index
    %c0_105 = arith.constant 0 : index
    %81 = vector.load %arg4[%c0_103, %c0_104, %c0_105] : memref<1x4x32xf32, #tpu.memory_space<vmem>>, vector<1x4x32xf32>
    %82 = vector.shape_cast %81 : vector<1x4x32xf32> to vector<4x32xf32>
    %83 = vector.shape_cast %80 : vector<4x32xf32> to vector<1x4x32xf32>
    tpu.vector_store %arg4[%c0_103, %c0_104, %c0_105], %83 {strides = array<i32>} : memref<1x4x32xf32, #tpu.memory_space<vmem>>, vector<1x4x32xf32>,
    return
  }
  func.func @transform_0(%arg0: i32) -> (i32, i32, i32, i32) {
    %c0_i32 = arith.constant 0 : i32
    %c0_i32_0 = arith.constant 0 : i32
    %c0_i32_1 = arith.constant 0 : i32
    %c0_i32_2 = arith.constant 0 : i32
    return %arg0, %c0_i32, %c0_i32_0, %c0_i32_1 : i32, i32, i32, i32
  }
  func.func @transform_1(%arg0: i32) -> (i32, i32) {
    %c0_i32 = arith.constant 0 : i32
    %c0_i32_0 = arith.constant 0 : i32
    %c0_i32_1 = arith.constant 0 : i32
    return %c0_i32, %c0_i32_0 : i32, i32
  }
  func.func @transform_2(%arg0: i32) -> (i32, i32) {
    %c0_i32 = arith.constant 0 : i32
    %c0_i32_0 = arith.constant 0 : i32
    %c0_i32_1 = arith.constant 0 : i32
    return %c0_i32, %c0_i32_0 : i32, i32
  }
  func.func @transform_3(%arg0: i32) -> (i32, i32, i32) {
    %c0_i32 = arith.constant 0 : i32
    %c0_i32_0 = arith.constant 0 : i32
    %c0_i32_1 = arith.constant 0 : i32
    return %arg0, %c0_i32, %c0_i32_0 : i32, i32, i32
  }
}

module attributes {stable_mosaic.version = 11 : i64} {
  func.func @_convgru_kernel(%arg0: i32, %arg1: i32, %arg2: memref<1x4x4x8xbf16, #tpu.memory_space<vmem>>, %arg3: memref<1x4x32xf32, #tpu.memory_space<vmem>>, %arg4: memref<72x32xbf16, #tpu.memory_space<vmem>>, %arg5: memref<288x32xbf16, #tpu.memory_space<vmem>>, %arg6: memref<72x32xbf16, #tpu.memory_space<vmem>>, %arg7: memref<288x32xbf16, #tpu.memory_space<vmem>>, %arg8: memref<72x32xbf16, #tpu.memory_space<vmem>>, %arg9: memref<288x32xbf16, #tpu.memory_space<vmem>>, %arg10: memref<1x32xf32, #tpu.memory_space<vmem>>, %arg11: memref<1x32xf32, #tpu.memory_space<vmem>>, %arg12: memref<1x32xf32, #tpu.memory_space<vmem>>, %arg13: memref<1x1x4x32xbf16, #tpu.memory_space<vmem>>, %arg14: memref<4x32xf32, #tpu.memory_space<vmem>>, %arg15: memref<4x4x32xf32, #tpu.memory_space<vmem>>, %arg16: memref<4x72xf32, #tpu.memory_space<vmem>>, %arg17: memref<4x288xf32, #tpu.memory_space<vmem>>) attributes {dimension_semantics = [#tpu.dimension_semantics<parallel>, #tpu.dimension_semantics<arbitrary>], iteration_bounds = array<i64: 2, 3>, scalar_prefetch = 0 : i64, scratch_operands = 4 : i64, tpu.core_type = #tpu.core_type<tc>, window_params = [{transform_indices = @transform_0, window_bounds = array<i64: 1, 4, 4, 8>}, {transform_indices = @transform_1, window_bounds = array<i64: 1, 4, 32>}, {pipeline_mode = #tpu.pipeline_mode<synchronous>, transform_indices = @transform_2, window_bounds = array<i64: 72, 32>}, {pipeline_mode = #tpu.pipeline_mode<synchronous>, transform_indices = @transform_3, window_bounds = array<i64: 288, 32>}, {pipeline_mode = #tpu.pipeline_mode<synchronous>, transform_indices = @transform_4, window_bounds = array<i64: 72, 32>}, {pipeline_mode = #tpu.pipeline_mode<synchronous>, transform_indices = @transform_5, window_bounds = array<i64: 288, 32>}, {pipeline_mode = #tpu.pipeline_mode<synchronous>, transform_indices = @transform_6, window_bounds = array<i64: 72, 32>}, {pipeline_mode = #tpu.pipeline_mode<synchronous>, transform_indices = @transform_7, window_bounds = array<i64: 288, 32>}, {pipeline_mode = #tpu.pipeline_mode<synchronous>, transform_indices = @transform_8, window_bounds = array<i64: 1, 32>}, {pipeline_mode = #tpu.pipeline_mode<synchronous>, transform_indices = @transform_9, window_bounds = array<i64: 1, 32>}, {pipeline_mode = #tpu.pipeline_mode<synchronous>, transform_indices = @transform_10, window_bounds = array<i64: 1, 32>}, {transform_indices = @transform_11, window_bounds = array<i64: 1, 1, 4, 32>}]} {
    %c0_i32 = arith.constant 0 : i32
    %0 = arith.cmpi eq, %arg1, %c0_i32 : i32
    %1 = arith.extui %0 : i1 to i32
    %c0_i32_0 = arith.constant 0 : i32
    %2 = arith.cmpi ne, %1, %c0_i32_0 : i32
    scf.if %2 {
      %c0_221 = arith.constant 0 : index
      %c0_222 = arith.constant 0 : index
      %c0_223 = arith.constant 0 : index
      %183 = vector.load %arg3[%c0_221, %c0_222, %c0_223] : memref<1x4x32xf32, #tpu.memory_space<vmem>>, vector<1x4x32xf32>
      %184 = vector.shape_cast %183 : vector<1x4x32xf32> to vector<4x32xf32>
      %c0_224 = arith.constant 0 : index
      %c0_225 = arith.constant 0 : index
      %185 = vector.load %arg14[%c0_224, %c0_225] : memref<4x32xf32, #tpu.memory_space<vmem>>, vector<4x32xf32>
      tpu.vector_store %arg14[%c0_224, %c0_225], %184 {strides = array<i32>} : memref<4x32xf32, #tpu.memory_space<vmem>>, vector<4x32xf32>,
      %cst_226 = arith.constant 0.000000e+00 : f32
      %186 = vector.broadcast %cst_226 : f32 to vector<4x4x32xf32>
      %c0_227 = arith.constant 0 : index
      %c0_228 = arith.constant 0 : index
      %c0_229 = arith.constant 0 : index
      %187 = vector.load %arg15[%c0_227, %c0_228, %c0_229] : memref<4x4x32xf32, #tpu.memory_space<vmem>>, vector<4x4x32xf32>
      tpu.vector_store %arg15[%c0_227, %c0_228, %c0_229], %186 {strides = array<i32>} : memref<4x4x32xf32, #tpu.memory_space<vmem>>, vector<4x4x32xf32>,
      %c0_230 = arith.constant 0 : index
      %c0_231 = arith.constant 0 : index
      %c0_232 = arith.constant 0 : index
      %c0_233 = arith.constant 0 : index
      %188 = vector.load %arg2[%c0_230, %c0_231, %c0_232, %c0_233] : memref<1x4x4x8xbf16, #tpu.memory_space<vmem>>, vector<1x1x2x8xbf16>
      %189 = vector.shape_cast %188 : vector<1x1x2x8xbf16> to vector<2x8xbf16>
      %190 = arith.extf %189 : vector<2x8xbf16> to vector<2x8xf32>
      %c0_234 = arith.constant 0 : index
      %c0_235 = arith.constant 0 : index
      %191 = vector.load %arg16[%c0_234, %c0_235] : memref<4x72xf32, #tpu.memory_space<vmem>>, vector<2x8xf32>
      tpu.vector_store %arg16[%c0_234, %c0_235], %190 {strides = array<i32>} : memref<4x72xf32, #tpu.memory_space<vmem>>, vector<2x8xf32>,
      %c0_236 = arith.constant 0 : index
      %c0_237 = arith.constant 0 : index
      %c1_238 = arith.constant 1 : index
      %c0_239 = arith.constant 0 : index
      %192 = vector.load %arg2[%c0_236, %c0_237, %c1_238, %c0_239] : memref<1x4x4x8xbf16, #tpu.memory_space<vmem>>, vector<1x1x2x8xbf16>
      %193 = vector.shape_cast %192 : vector<1x1x2x8xbf16> to vector<2x8xbf16>
      %194 = arith.extf %193 : vector<2x8xbf16> to vector<2x8xf32>
      %c0_240 = arith.constant 0 : index
      %c8 = arith.constant 8 : index
      %195 = vector.load %arg16[%c0_240, %c8] : memref<4x72xf32, #tpu.memory_space<vmem>>, vector<2x8xf32>
      tpu.vector_store %arg16[%c0_240, %c8], %194 {strides = array<i32>} : memref<4x72xf32, #tpu.memory_space<vmem>>, vector<2x8xf32>,
      %c0_241 = arith.constant 0 : index
      %c0_242 = arith.constant 0 : index
      %c2_243 = arith.constant 2 : index
      %c0_244 = arith.constant 0 : index
      %196 = vector.load %arg2[%c0_241, %c0_242, %c2_243, %c0_244] : memref<1x4x4x8xbf16, #tpu.memory_space<vmem>>, vector<1x1x2x8xbf16>
      %197 = vector.shape_cast %196 : vector<1x1x2x8xbf16> to vector<2x8xbf16>
      %198 = arith.extf %197 : vector<2x8xbf16> to vector<2x8xf32>
      %c0_245 = arith.constant 0 : index
      %c16 = arith.constant 16 : index
      %199 = vector.load %arg16[%c0_245, %c16] : memref<4x72xf32, #tpu.memory_space<vmem>>, vector<2x8xf32>
      tpu.vector_store %arg16[%c0_245, %c16], %198 {strides = array<i32>} : memref<4x72xf32, #tpu.memory_space<vmem>>, vector<2x8xf32>,
      %c0_246 = arith.constant 0 : index
      %c1_247 = arith.constant 1 : index
      %c0_248 = arith.constant 0 : index
      %c0_249 = arith.constant 0 : index
      %200 = vector.load %arg2[%c0_246, %c1_247, %c0_248, %c0_249] : memref<1x4x4x8xbf16, #tpu.memory_space<vmem>>, vector<1x1x2x8xbf16>
      %201 = vector.shape_cast %200 : vector<1x1x2x8xbf16> to vector<2x8xbf16>
      %202 = arith.extf %201 : vector<2x8xbf16> to vector<2x8xf32>
      %c0_250 = arith.constant 0 : index
      %c24 = arith.constant 24 : index
      %203 = vector.load %arg16[%c0_250, %c24] : memref<4x72xf32, #tpu.memory_space<vmem>>, vector<2x8xf32>
      tpu.vector_store %arg16[%c0_250, %c24], %202 {strides = array<i32>} : memref<4x72xf32, #tpu.memory_space<vmem>>, vector<2x8xf32>,
      %c0_251 = arith.constant 0 : index
      %c1_252 = arith.constant 1 : index
      %c1_253 = arith.constant 1 : index
      %c0_254 = arith.constant 0 : index
      %204 = vector.load %arg2[%c0_251, %c1_252, %c1_253, %c0_254] : memref<1x4x4x8xbf16, #tpu.memory_space<vmem>>, vector<1x1x2x8xbf16>
      %205 = vector.shape_cast %204 : vector<1x1x2x8xbf16> to vector<2x8xbf16>
      %206 = arith.extf %205 : vector<2x8xbf16> to vector<2x8xf32>
      %c0_255 = arith.constant 0 : index
      %c32_256 = arith.constant 32 : index
      %207 = vector.load %arg16[%c0_255, %c32_256] : memref<4x72xf32, #tpu.memory_space<vmem>>, vector<2x8xf32>
      tpu.vector_store %arg16[%c0_255, %c32_256], %206 {strides = array<i32>} : memref<4x72xf32, #tpu.memory_space<vmem>>, vector<2x8xf32>,
      %c0_257 = arith.constant 0 : index
      %c1_258 = arith.constant 1 : index
      %c2_259 = arith.constant 2 : index
      %c0_260 = arith.constant 0 : index
      %208 = vector.load %arg2[%c0_257, %c1_258, %c2_259, %c0_260] : memref<1x4x4x8xbf16, #tpu.memory_space<vmem>>, vector<1x1x2x8xbf16>
      %209 = vector.shape_cast %208 : vector<1x1x2x8xbf16> to vector<2x8xbf16>
      %210 = arith.extf %209 : vector<2x8xbf16> to vector<2x8xf32>
      %c0_261 = arith.constant 0 : index
      %c40 = arith.constant 40 : index
      %211 = vector.load %arg16[%c0_261, %c40] : memref<4x72xf32, #tpu.memory_space<vmem>>, vector<2x8xf32>
      tpu.vector_store %arg16[%c0_261, %c40], %210 {strides = array<i32>} : memref<4x72xf32, #tpu.memory_space<vmem>>, vector<2x8xf32>,
      %c0_262 = arith.constant 0 : index
      %c2_263 = arith.constant 2 : index
      %c0_264 = arith.constant 0 : index
      %c0_265 = arith.constant 0 : index
      %212 = vector.load %arg2[%c0_262, %c2_263, %c0_264, %c0_265] : memref<1x4x4x8xbf16, #tpu.memory_space<vmem>>, vector<1x1x2x8xbf16>
      %213 = vector.shape_cast %212 : vector<1x1x2x8xbf16> to vector<2x8xbf16>
      %214 = arith.extf %213 : vector<2x8xbf16> to vector<2x8xf32>
      %c0_266 = arith.constant 0 : index
      %c48 = arith.constant 48 : index
      %215 = vector.load %arg16[%c0_266, %c48] : memref<4x72xf32, #tpu.memory_space<vmem>>, vector<2x8xf32>
      tpu.vector_store %arg16[%c0_266, %c48], %214 {strides = array<i32>} : memref<4x72xf32, #tpu.memory_space<vmem>>, vector<2x8xf32>,
      %c0_267 = arith.constant 0 : index
      %c2_268 = arith.constant 2 : index
      %c1_269 = arith.constant 1 : index
      %c0_270 = arith.constant 0 : index
      %216 = vector.load %arg2[%c0_267, %c2_268, %c1_269, %c0_270] : memref<1x4x4x8xbf16, #tpu.memory_space<vmem>>, vector<1x1x2x8xbf16>
      %217 = vector.shape_cast %216 : vector<1x1x2x8xbf16> to vector<2x8xbf16>
      %218 = arith.extf %217 : vector<2x8xbf16> to vector<2x8xf32>
      %c0_271 = arith.constant 0 : index
      %c56 = arith.constant 56 : index
      %219 = vector.load %arg16[%c0_271, %c56] : memref<4x72xf32, #tpu.memory_space<vmem>>, vector<2x8xf32>
      tpu.vector_store %arg16[%c0_271, %c56], %218 {strides = array<i32>} : memref<4x72xf32, #tpu.memory_space<vmem>>, vector<2x8xf32>,
      %c0_272 = arith.constant 0 : index
      %c2_273 = arith.constant 2 : index
      %c2_274 = arith.constant 2 : index
      %c0_275 = arith.constant 0 : index
      %220 = vector.load %arg2[%c0_272, %c2_273, %c2_274, %c0_275] : memref<1x4x4x8xbf16, #tpu.memory_space<vmem>>, vector<1x1x2x8xbf16>
      %221 = vector.shape_cast %220 : vector<1x1x2x8xbf16> to vector<2x8xbf16>
      %222 = arith.extf %221 : vector<2x8xbf16> to vector<2x8xf32>
      %c0_276 = arith.constant 0 : index
      %c64_277 = arith.constant 64 : index
      %223 = vector.load %arg16[%c0_276, %c64_277] : memref<4x72xf32, #tpu.memory_space<vmem>>, vector<2x8xf32>
      tpu.vector_store %arg16[%c0_276, %c64_277], %222 {strides = array<i32>} : memref<4x72xf32, #tpu.memory_space<vmem>>, vector<2x8xf32>,
      %c0_278 = arith.constant 0 : index
      %c1_279 = arith.constant 1 : index
      %c0_280 = arith.constant 0 : index
      %c0_281 = arith.constant 0 : index
      %224 = vector.load %arg2[%c0_278, %c1_279, %c0_280, %c0_281] : memref<1x4x4x8xbf16, #tpu.memory_space<vmem>>, vector<1x1x2x8xbf16>
      %225 = vector.shape_cast %224 : vector<1x1x2x8xbf16> to vector<2x8xbf16>
      %226 = arith.extf %225 : vector<2x8xbf16> to vector<2x8xf32>
      %c2_282 = arith.constant 2 : index
      %c0_283 = arith.constant 0 : index
      %227 = vector.load %arg16[%c2_282, %c0_283] : memref<4x72xf32, #tpu.memory_space<vmem>>, vector<2x8xf32>
      tpu.vector_store %arg16[%c2_282, %c0_283], %226 {strides = array<i32>} : memref<4x72xf32, #tpu.memory_space<vmem>>, vector<2x8xf32>,
      %c0_284 = arith.constant 0 : index
      %c1_285 = arith.constant 1 : index
      %c1_286 = arith.constant 1 : index
      %c0_287 = arith.constant 0 : index
      %228 = vector.load %arg2[%c0_284, %c1_285, %c1_286, %c0_287] : memref<1x4x4x8xbf16, #tpu.memory_space<vmem>>, vector<1x1x2x8xbf16>
      %229 = vector.shape_cast %228 : vector<1x1x2x8xbf16> to vector<2x8xbf16>
      %230 = arith.extf %229 : vector<2x8xbf16> to vector<2x8xf32>
      %c2_288 = arith.constant 2 : index
      %c8_289 = arith.constant 8 : index
      %231 = vector.load %arg16[%c2_288, %c8_289] : memref<4x72xf32, #tpu.memory_space<vmem>>, vector<2x8xf32>
      tpu.vector_store %arg16[%c2_288, %c8_289], %230 {strides = array<i32>} : memref<4x72xf32, #tpu.memory_space<vmem>>, vector<2x8xf32>,
      %c0_290 = arith.constant 0 : index
      %c1_291 = arith.constant 1 : index
      %c2_292 = arith.constant 2 : index
      %c0_293 = arith.constant 0 : index
      %232 = vector.load %arg2[%c0_290, %c1_291, %c2_292, %c0_293] : memref<1x4x4x8xbf16, #tpu.memory_space<vmem>>, vector<1x1x2x8xbf16>
      %233 = vector.shape_cast %232 : vector<1x1x2x8xbf16> to vector<2x8xbf16>
      %234 = arith.extf %233 : vector<2x8xbf16> to vector<2x8xf32>
      %c2_294 = arith.constant 2 : index
      %c16_295 = arith.constant 16 : index
      %235 = vector.load %arg16[%c2_294, %c16_295] : memref<4x72xf32, #tpu.memory_space<vmem>>, vector<2x8xf32>
      tpu.vector_store %arg16[%c2_294, %c16_295], %234 {strides = array<i32>} : memref<4x72xf32, #tpu.memory_space<vmem>>, vector<2x8xf32>,
      %c0_296 = arith.constant 0 : index
      %c2_297 = arith.constant 2 : index
      %c0_298 = arith.constant 0 : index
      %c0_299 = arith.constant 0 : index
      %236 = vector.load %arg2[%c0_296, %c2_297, %c0_298, %c0_299] : memref<1x4x4x8xbf16, #tpu.memory_space<vmem>>, vector<1x1x2x8xbf16>
      %237 = vector.shape_cast %236 : vector<1x1x2x8xbf16> to vector<2x8xbf16>
      %238 = arith.extf %237 : vector<2x8xbf16> to vector<2x8xf32>
      %c2_300 = arith.constant 2 : index
      %c24_301 = arith.constant 24 : index
      %239 = vector.load %arg16[%c2_300, %c24_301] : memref<4x72xf32, #tpu.memory_space<vmem>>, vector<2x8xf32>
      tpu.vector_store %arg16[%c2_300, %c24_301], %238 {strides = array<i32>} : memref<4x72xf32, #tpu.memory_space<vmem>>, vector<2x8xf32>,
      %c0_302 = arith.constant 0 : index
      %c2_303 = arith.constant 2 : index
      %c1_304 = arith.constant 1 : index
      %c0_305 = arith.constant 0 : index
      %240 = vector.load %arg2[%c0_302, %c2_303, %c1_304, %c0_305] : memref<1x4x4x8xbf16, #tpu.memory_space<vmem>>, vector<1x1x2x8xbf16>
      %241 = vector.shape_cast %240 : vector<1x1x2x8xbf16> to vector<2x8xbf16>
      %242 = arith.extf %241 : vector<2x8xbf16> to vector<2x8xf32>
      %c2_306 = arith.constant 2 : index
      %c32_307 = arith.constant 32 : index
      %243 = vector.load %arg16[%c2_306, %c32_307] : memref<4x72xf32, #tpu.memory_space<vmem>>, vector<2x8xf32>
      tpu.vector_store %arg16[%c2_306, %c32_307], %242 {strides = array<i32>} : memref<4x72xf32, #tpu.memory_space<vmem>>, vector<2x8xf32>,
      %c0_308 = arith.constant 0 : index
      %c2_309 = arith.constant 2 : index
      %c2_310 = arith.constant 2 : index
      %c0_311 = arith.constant 0 : index
      %244 = vector.load %arg2[%c0_308, %c2_309, %c2_310, %c0_311] : memref<1x4x4x8xbf16, #tpu.memory_space<vmem>>, vector<1x1x2x8xbf16>
      %245 = vector.shape_cast %244 : vector<1x1x2x8xbf16> to vector<2x8xbf16>
      %246 = arith.extf %245 : vector<2x8xbf16> to vector<2x8xf32>
      %c2_312 = arith.constant 2 : index
      %c40_313 = arith.constant 40 : index
      %247 = vector.load %arg16[%c2_312, %c40_313] : memref<4x72xf32, #tpu.memory_space<vmem>>, vector<2x8xf32>
      tpu.vector_store %arg16[%c2_312, %c40_313], %246 {strides = array<i32>} : memref<4x72xf32, #tpu.memory_space<vmem>>, vector<2x8xf32>,
      %c0_314 = arith.constant 0 : index
      %c3_315 = arith.constant 3 : index
      %c0_316 = arith.constant 0 : index
      %c0_317 = arith.constant 0 : index
      %248 = vector.load %arg2[%c0_314, %c3_315, %c0_316, %c0_317] : memref<1x4x4x8xbf16, #tpu.memory_space<vmem>>, vector<1x1x2x8xbf16>
      %249 = vector.shape_cast %248 : vector<1x1x2x8xbf16> to vector<2x8xbf16>
      %250 = arith.extf %249 : vector<2x8xbf16> to vector<2x8xf32>
      %c2_318 = arith.constant 2 : index
      %c48_319 = arith.constant 48 : index
      %251 = vector.load %arg16[%c2_318, %c48_319] : memref<4x72xf32, #tpu.memory_space<vmem>>, vector<2x8xf32>
      tpu.vector_store %arg16[%c2_318, %c48_319], %250 {strides = array<i32>} : memref<4x72xf32, #tpu.memory_space<vmem>>, vector<2x8xf32>,
      %c0_320 = arith.constant 0 : index
      %c3_321 = arith.constant 3 : index
      %c1_322 = arith.constant 1 : index
      %c0_323 = arith.constant 0 : index
      %252 = vector.load %arg2[%c0_320, %c3_321, %c1_322, %c0_323] : memref<1x4x4x8xbf16, #tpu.memory_space<vmem>>, vector<1x1x2x8xbf16>
      %253 = vector.shape_cast %252 : vector<1x1x2x8xbf16> to vector<2x8xbf16>
      %254 = arith.extf %253 : vector<2x8xbf16> to vector<2x8xf32>
      %c2_324 = arith.constant 2 : index
      %c56_325 = arith.constant 56 : index
      %255 = vector.load %arg16[%c2_324, %c56_325] : memref<4x72xf32, #tpu.memory_space<vmem>>, vector<2x8xf32>
      tpu.vector_store %arg16[%c2_324, %c56_325], %254 {strides = array<i32>} : memref<4x72xf32, #tpu.memory_space<vmem>>, vector<2x8xf32>,
      %c0_326 = arith.constant 0 : index
      %c3_327 = arith.constant 3 : index
      %c2_328 = arith.constant 2 : index
      %c0_329 = arith.constant 0 : index
      %256 = vector.load %arg2[%c0_326, %c3_327, %c2_328, %c0_329] : memref<1x4x4x8xbf16, #tpu.memory_space<vmem>>, vector<1x1x2x8xbf16>
      %257 = vector.shape_cast %256 : vector<1x1x2x8xbf16> to vector<2x8xbf16>
      %258 = arith.extf %257 : vector<2x8xbf16> to vector<2x8xf32>
      %c2_330 = arith.constant 2 : index
      %c64_331 = arith.constant 64 : index
      %259 = vector.load %arg16[%c2_330, %c64_331] : memref<4x72xf32, #tpu.memory_space<vmem>>, vector<2x8xf32>
      tpu.vector_store %arg16[%c2_330, %c64_331], %258 {strides = array<i32>} : memref<4x72xf32, #tpu.memory_space<vmem>>, vector<2x8xf32>,
    } else {
    }
    %c0 = arith.constant 0 : index
    %c0_1 = arith.constant 0 : index
    %3 = vector.load %arg14[%c0, %c0_1] : memref<4x32xf32, #tpu.memory_space<vmem>>, vector<4x32xf32>
    %4 = vector.extract_strided_slice %3 {offsets = [0, 0], sizes = [2, 32], strides = [1, 1]} : vector<4x32xf32> to vector<2x32xf32>
    %c1 = arith.constant 1 : index
    %c1_2 = arith.constant 1 : index
    %c0_3 = arith.constant 0 : index
    %5 = vector.load %arg15[%c1, %c1_2, %c0_3] : memref<4x4x32xf32, #tpu.memory_space<vmem>>, vector<1x2x32xf32>
    %6 = vector.shape_cast %5 : vector<1x2x32xf32> to vector<2x32xf32>
    %7 = vector.shape_cast %4 : vector<2x32xf32> to vector<1x2x32xf32>
    tpu.vector_store %arg15[%c1, %c1_2, %c0_3], %7 {strides = array<i32>} : memref<4x4x32xf32, #tpu.memory_space<vmem>>, vector<1x2x32xf32>,
    %8 = vector.extract_strided_slice %3 {offsets = [2, 0], sizes = [2, 32], strides = [1, 1]} : vector<4x32xf32> to vector<2x32xf32>
    %c2 = arith.constant 2 : index
    %c1_4 = arith.constant 1 : index
    %c0_5 = arith.constant 0 : index
    %9 = vector.load %arg15[%c2, %c1_4, %c0_5] : memref<4x4x32xf32, #tpu.memory_space<vmem>>, vector<1x2x32xf32>
    %10 = vector.shape_cast %9 : vector<1x2x32xf32> to vector<2x32xf32>
    %11 = vector.shape_cast %8 : vector<2x32xf32> to vector<1x2x32xf32>
    tpu.vector_store %arg15[%c2, %c1_4, %c0_5], %11 {strides = array<i32>} : memref<4x4x32xf32, #tpu.memory_space<vmem>>, vector<1x2x32xf32>,
    %c0_6 = arith.constant 0 : index
    %c0_7 = arith.constant 0 : index
    %c0_8 = arith.constant 0 : index
    %12 = vector.load %arg15[%c0_6, %c0_7, %c0_8] : memref<4x4x32xf32, #tpu.memory_space<vmem>>, vector<1x2x32xf32>
    %13 = vector.shape_cast %12 : vector<1x2x32xf32> to vector<2x32xf32>
    %c0_9 = arith.constant 0 : index
    %c0_10 = arith.constant 0 : index
    %14 = vector.load %arg17[%c0_9, %c0_10] : memref<4x288xf32, #tpu.memory_space<vmem>>, vector<2x32xf32>
    tpu.vector_store %arg17[%c0_9, %c0_10], %13 {strides = array<i32>} : memref<4x288xf32, #tpu.memory_space<vmem>>, vector<2x32xf32>,
    %c0_11 = arith.constant 0 : index
    %c1_12 = arith.constant 1 : index
    %c0_13 = arith.constant 0 : index
    %15 = vector.load %arg15[%c0_11, %c1_12, %c0_13] : memref<4x4x32xf32, #tpu.memory_space<vmem>>, vector<1x2x32xf32>
    %16 = vector.shape_cast %15 : vector<1x2x32xf32> to vector<2x32xf32>
    %c0_14 = arith.constant 0 : index
    %c32 = arith.constant 32 : index
    %17 = vector.load %arg17[%c0_14, %c32] : memref<4x288xf32, #tpu.memory_space<vmem>>, vector<2x32xf32>
    tpu.vector_store %arg17[%c0_14, %c32], %16 {strides = array<i32>} : memref<4x288xf32, #tpu.memory_space<vmem>>, vector<2x32xf32>,
    %c0_15 = arith.constant 0 : index
    %c2_16 = arith.constant 2 : index
    %c0_17 = arith.constant 0 : index
    %18 = vector.load %arg15[%c0_15, %c2_16, %c0_17] : memref<4x4x32xf32, #tpu.memory_space<vmem>>, vector<1x2x32xf32>
    %19 = vector.shape_cast %18 : vector<1x2x32xf32> to vector<2x32xf32>
    %c0_18 = arith.constant 0 : index
    %c64 = arith.constant 64 : index
    %20 = vector.load %arg17[%c0_18, %c64] : memref<4x288xf32, #tpu.memory_space<vmem>>, vector<2x32xf32>
    tpu.vector_store %arg17[%c0_18, %c64], %19 {strides = array<i32>} : memref<4x288xf32, #tpu.memory_space<vmem>>, vector<2x32xf32>,
    %c1_19 = arith.constant 1 : index
    %c0_20 = arith.constant 0 : index
    %c0_21 = arith.constant 0 : index
    %21 = vector.load %arg15[%c1_19, %c0_20, %c0_21] : memref<4x4x32xf32, #tpu.memory_space<vmem>>, vector<1x2x32xf32>
    %22 = vector.shape_cast %21 : vector<1x2x32xf32> to vector<2x32xf32>
    %c0_22 = arith.constant 0 : index
    %c96 = arith.constant 96 : index
    %23 = vector.load %arg17[%c0_22, %c96] : memref<4x288xf32, #tpu.memory_space<vmem>>, vector<2x32xf32>
    tpu.vector_store %arg17[%c0_22, %c96], %22 {strides = array<i32>} : memref<4x288xf32, #tpu.memory_space<vmem>>, vector<2x32xf32>,
    %c1_23 = arith.constant 1 : index
    %c1_24 = arith.constant 1 : index
    %c0_25 = arith.constant 0 : index
    %24 = vector.load %arg15[%c1_23, %c1_24, %c0_25] : memref<4x4x32xf32, #tpu.memory_space<vmem>>, vector<1x2x32xf32>
    %25 = vector.shape_cast %24 : vector<1x2x32xf32> to vector<2x32xf32>
    %c0_26 = arith.constant 0 : index
    %c128 = arith.constant 128 : index
    %26 = vector.load %arg17[%c0_26, %c128] : memref<4x288xf32, #tpu.memory_space<vmem>>, vector<2x32xf32>
    tpu.vector_store %arg17[%c0_26, %c128], %25 {strides = array<i32>} : memref<4x288xf32, #tpu.memory_space<vmem>>, vector<2x32xf32>,
    %c1_27 = arith.constant 1 : index
    %c2_28 = arith.constant 2 : index
    %c0_29 = arith.constant 0 : index
    %27 = vector.load %arg15[%c1_27, %c2_28, %c0_29] : memref<4x4x32xf32, #tpu.memory_space<vmem>>, vector<1x2x32xf32>
    %28 = vector.shape_cast %27 : vector<1x2x32xf32> to vector<2x32xf32>
    %c0_30 = arith.constant 0 : index
    %c160 = arith.constant 160 : index
    %29 = vector.load %arg17[%c0_30, %c160] : memref<4x288xf32, #tpu.memory_space<vmem>>, vector<2x32xf32>
    tpu.vector_store %arg17[%c0_30, %c160], %28 {strides = array<i32>} : memref<4x288xf32, #tpu.memory_space<vmem>>, vector<2x32xf32>,
    %c2_31 = arith.constant 2 : index
    %c0_32 = arith.constant 0 : index
    %c0_33 = arith.constant 0 : index
    %30 = vector.load %arg15[%c2_31, %c0_32, %c0_33] : memref<4x4x32xf32, #tpu.memory_space<vmem>>, vector<1x2x32xf32>
    %31 = vector.shape_cast %30 : vector<1x2x32xf32> to vector<2x32xf32>
    %c0_34 = arith.constant 0 : index
    %c192 = arith.constant 192 : index
    %32 = vector.load %arg17[%c0_34, %c192] : memref<4x288xf32, #tpu.memory_space<vmem>>, vector<2x32xf32>
    tpu.vector_store %arg17[%c0_34, %c192], %31 {strides = array<i32>} : memref<4x288xf32, #tpu.memory_space<vmem>>, vector<2x32xf32>,
    %c2_35 = arith.constant 2 : index
    %c1_36 = arith.constant 1 : index
    %c0_37 = arith.constant 0 : index
    %33 = vector.load %arg15[%c2_35, %c1_36, %c0_37] : memref<4x4x32xf32, #tpu.memory_space<vmem>>, vector<1x2x32xf32>
    %34 = vector.shape_cast %33 : vector<1x2x32xf32> to vector<2x32xf32>
    %c0_38 = arith.constant 0 : index
    %c224 = arith.constant 224 : index
    %35 = vector.load %arg17[%c0_38, %c224] : memref<4x288xf32, #tpu.memory_space<vmem>>, vector<2x32xf32>
    tpu.vector_store %arg17[%c0_38, %c224], %34 {strides = array<i32>} : memref<4x288xf32, #tpu.memory_space<vmem>>, vector<2x32xf32>,
    %c2_39 = arith.constant 2 : index
    %c2_40 = arith.constant 2 : index
    %c0_41 = arith.constant 0 : index
    %36 = vector.load %arg15[%c2_39, %c2_40, %c0_41] : memref<4x4x32xf32, #tpu.memory_space<vmem>>, vector<1x2x32xf32>
    %37 = vector.shape_cast %36 : vector<1x2x32xf32> to vector<2x32xf32>
    %c0_42 = arith.constant 0 : index
    %c256 = arith.constant 256 : index
    %38 = vector.load %arg17[%c0_42, %c256] : memref<4x288xf32, #tpu.memory_space<vmem>>, vector<2x32xf32>
    tpu.vector_store %arg17[%c0_42, %c256], %37 {strides = array<i32>} : memref<4x288xf32, #tpu.memory_space<vmem>>, vector<2x32xf32>,
    %c1_43 = arith.constant 1 : index
    %c0_44 = arith.constant 0 : index
    %c0_45 = arith.constant 0 : index
    %39 = vector.load %arg15[%c1_43, %c0_44, %c0_45] : memref<4x4x32xf32, #tpu.memory_space<vmem>>, vector<1x2x32xf32>
    %40 = vector.shape_cast %39 : vector<1x2x32xf32> to vector<2x32xf32>
    %c2_46 = arith.constant 2 : index
    %c0_47 = arith.constant 0 : index
    %41 = vector.load %arg17[%c2_46, %c0_47] : memref<4x288xf32, #tpu.memory_space<vmem>>, vector<2x32xf32>
    tpu.vector_store %arg17[%c2_46, %c0_47], %40 {strides = array<i32>} : memref<4x288xf32, #tpu.memory_space<vmem>>, vector<2x32xf32>,
    %c1_48 = arith.constant 1 : index
    %c1_49 = arith.constant 1 : index
    %c0_50 = arith.constant 0 : index
    %42 = vector.load %arg15[%c1_48, %c1_49, %c0_50] : memref<4x4x32xf32, #tpu.memory_space<vmem>>, vector<1x2x32xf32>
    %43 = vector.shape_cast %42 : vector<1x2x32xf32> to vector<2x32xf32>
    %c2_51 = arith.constant 2 : index
    %c32_52 = arith.constant 32 : index
    %44 = vector.load %arg17[%c2_51, %c32_52] : memref<4x288xf32, #tpu.memory_space<vmem>>, vector<2x32xf32>
    tpu.vector_store %arg17[%c2_51, %c32_52], %43 {strides = array<i32>} : memref<4x288xf32, #tpu.memory_space<vmem>>, vector<2x32xf32>,
    %c1_53 = arith.constant 1 : index
    %c2_54 = arith.constant 2 : index
    %c0_55 = arith.constant 0 : index
    %45 = vector.load %arg15[%c1_53, %c2_54, %c0_55] : memref<4x4x32xf32, #tpu.memory_space<vmem>>, vector<1x2x32xf32>
    %46 = vector.shape_cast %45 : vector<1x2x32xf32> to vector<2x32xf32>
    %c2_56 = arith.constant 2 : index
    %c64_57 = arith.constant 64 : index
    %47 = vector.load %arg17[%c2_56, %c64_57] : memref<4x288xf32, #tpu.memory_space<vmem>>, vector<2x32xf32>
    tpu.vector_store %arg17[%c2_56, %c64_57], %46 {strides = array<i32>} : memref<4x288xf32, #tpu.memory_space<vmem>>, vector<2x32xf32>,
    %c2_58 = arith.constant 2 : index
    %c0_59 = arith.constant 0 : index
    %c0_60 = arith.constant 0 : index
    %48 = vector.load %arg15[%c2_58, %c0_59, %c0_60] : memref<4x4x32xf32, #tpu.memory_space<vmem>>, vector<1x2x32xf32>
    %49 = vector.shape_cast %48 : vector<1x2x32xf32> to vector<2x32xf32>
    %c2_61 = arith.constant 2 : index
    %c96_62 = arith.constant 96 : index
    %50 = vector.load %arg17[%c2_61, %c96_62] : memref<4x288xf32, #tpu.memory_space<vmem>>, vector<2x32xf32>
    tpu.vector_store %arg17[%c2_61, %c96_62], %49 {strides = array<i32>} : memref<4x288xf32, #tpu.memory_space<vmem>>, vector<2x32xf32>,
    %c2_63 = arith.constant 2 : index
    %c1_64 = arith.constant 1 : index
    %c0_65 = arith.constant 0 : index
    %51 = vector.load %arg15[%c2_63, %c1_64, %c0_65] : memref<4x4x32xf32, #tpu.memory_space<vmem>>, vector<1x2x32xf32>
    %52 = vector.shape_cast %51 : vector<1x2x32xf32> to vector<2x32xf32>
    %c2_66 = arith.constant 2 : index
    %c128_67 = arith.constant 128 : index
    %53 = vector.load %arg17[%c2_66, %c128_67] : memref<4x288xf32, #tpu.memory_space<vmem>>, vector<2x32xf32>
    tpu.vector_store %arg17[%c2_66, %c128_67], %52 {strides = array<i32>} : memref<4x288xf32, #tpu.memory_space<vmem>>, vector<2x32xf32>,
    %c2_68 = arith.constant 2 : index
    %c2_69 = arith.constant 2 : index
    %c0_70 = arith.constant 0 : index
    %54 = vector.load %arg15[%c2_68, %c2_69, %c0_70] : memref<4x4x32xf32, #tpu.memory_space<vmem>>, vector<1x2x32xf32>
    %55 = vector.shape_cast %54 : vector<1x2x32xf32> to vector<2x32xf32>
    %c2_71 = arith.constant 2 : index
    %c160_72 = arith.constant 160 : index
    %56 = vector.load %arg17[%c2_71, %c160_72] : memref<4x288xf32, #tpu.memory_space<vmem>>, vector<2x32xf32>
    tpu.vector_store %arg17[%c2_71, %c160_72], %55 {strides = array<i32>} : memref<4x288xf32, #tpu.memory_space<vmem>>, vector<2x32xf32>,
    %c3 = arith.constant 3 : index
    %c0_73 = arith.constant 0 : index
    %c0_74 = arith.constant 0 : index
    %57 = vector.load %arg15[%c3, %c0_73, %c0_74] : memref<4x4x32xf32, #tpu.memory_space<vmem>>, vector<1x2x32xf32>
    %58 = vector.shape_cast %57 : vector<1x2x32xf32> to vector<2x32xf32>
    %c2_75 = arith.constant 2 : index
    %c192_76 = arith.constant 192 : index
    %59 = vector.load %arg17[%c2_75, %c192_76] : memref<4x288xf32, #tpu.memory_space<vmem>>, vector<2x32xf32>
    tpu.vector_store %arg17[%c2_75, %c192_76], %58 {strides = array<i32>} : memref<4x288xf32, #tpu.memory_space<vmem>>, vector<2x32xf32>,
    %c3_77 = arith.constant 3 : index
    %c1_78 = arith.constant 1 : index
    %c0_79 = arith.constant 0 : index
    %60 = vector.load %arg15[%c3_77, %c1_78, %c0_79] : memref<4x4x32xf32, #tpu.memory_space<vmem>>, vector<1x2x32xf32>
    %61 = vector.shape_cast %60 : vector<1x2x32xf32> to vector<2x32xf32>
    %c2_80 = arith.constant 2 : index
    %c224_81 = arith.constant 224 : index
    %62 = vector.load %arg17[%c2_80, %c224_81] : memref<4x288xf32, #tpu.memory_space<vmem>>, vector<2x32xf32>
    tpu.vector_store %arg17[%c2_80, %c224_81], %61 {strides = array<i32>} : memref<4x288xf32, #tpu.memory_space<vmem>>, vector<2x32xf32>,
    %c3_82 = arith.constant 3 : index
    %c2_83 = arith.constant 2 : index
    %c0_84 = arith.constant 0 : index
    %63 = vector.load %arg15[%c3_82, %c2_83, %c0_84] : memref<4x4x32xf32, #tpu.memory_space<vmem>>, vector<1x2x32xf32>
    %64 = vector.shape_cast %63 : vector<1x2x32xf32> to vector<2x32xf32>
    %c2_85 = arith.constant 2 : index
    %c256_86 = arith.constant 256 : index
    %65 = vector.load %arg17[%c2_85, %c256_86] : memref<4x288xf32, #tpu.memory_space<vmem>>, vector<2x32xf32>
    tpu.vector_store %arg17[%c2_85, %c256_86], %64 {strides = array<i32>} : memref<4x288xf32, #tpu.memory_space<vmem>>, vector<2x32xf32>,
    %c0_87 = arith.constant 0 : index
    %c0_88 = arith.constant 0 : index
    %66 = vector.load %arg16[%c0_87, %c0_88] : memref<4x72xf32, #tpu.memory_space<vmem>>, vector<4x72xf32>
    %c0_89 = arith.constant 0 : index
    %c0_90 = arith.constant 0 : index
    %67 = vector.load %arg17[%c0_89, %c0_90] : memref<4x288xf32, #tpu.memory_space<vmem>>, vector<4x288xf32>
    %68 = arith.truncf %66 : vector<4x72xf32> to vector<4x72xbf16>
    %c0_91 = arith.constant 0 : index
    %c0_92 = arith.constant 0 : index
    %69 = vector.load %arg4[%c0_91, %c0_92] : memref<72x32xbf16, #tpu.memory_space<vmem>>, vector<72x32xbf16>
    %cst = arith.constant dense<0.000000e+00> : vector<4x32xf32>
    %70 = tpu.matmul %68, %69, %cst {dimension_numbers = #tpu.dot_dimension_numbers<[1], [0], [0], [1], [0, 0, 1, 1], [], []>} : vector<4x72xbf16>, vector<72x32xbf16>, vector<4x32xf32> -> vector<4x32xf32>
    %71 = arith.truncf %67 : vector<4x288xf32> to vector<4x288xbf16>
    %c0_93 = arith.constant 0 : index
    %c0_94 = arith.constant 0 : index
    %72 = vector.load %arg5[%c0_93, %c0_94] : memref<288x32xbf16, #tpu.memory_space<vmem>>, vector<288x32xbf16>
    %cst_95 = arith.constant dense<0.000000e+00> : vector<4x32xf32>
    %73 = tpu.matmul %71, %72, %cst_95 {dimension_numbers = #tpu.dot_dimension_numbers<[1], [0], [0], [1], [0, 0, 1, 1], [], []>} : vector<4x288xbf16>, vector<288x32xbf16>, vector<4x32xf32> -> vector<4x32xf32>
    %74 = arith.addf %70, %73 : vector<4x32xf32>
    %c0_96 = arith.constant 0 : index
    %c0_97 = arith.constant 0 : index
    %75 = vector.load %arg10[%c0_96, %c0_97] : memref<1x32xf32, #tpu.memory_space<vmem>>, vector<1x32xf32>
    %76 = vector.broadcast %75 : vector<1x32xf32> to vector<4x32xf32>
    %77 = arith.addf %74, %76 : vector<4x32xf32>
    %78 = arith.negf %77 : vector<4x32xf32>
    %79 = math.exp %78 : vector<4x32xf32>
    %cst_98 = arith.constant 1.000000e+00 : f32
    %80 = vector.broadcast %cst_98 : f32 to vector<4x32xf32>
    %81 = arith.addf %80, %79 : vector<4x32xf32>
    %82 = arith.divf %80, %81 : vector<4x32xf32>
    %83 = arith.truncf %66 : vector<4x72xf32> to vector<4x72xbf16>
    %c0_99 = arith.constant 0 : index
    %c0_100 = arith.constant 0 : index
    %84 = vector.load %arg6[%c0_99, %c0_100] : memref<72x32xbf16, #tpu.memory_space<vmem>>, vector<72x32xbf16>
    %cst_101 = arith.constant dense<0.000000e+00> : vector<4x32xf32>
    %85 = tpu.matmul %83, %84, %cst_101 {dimension_numbers = #tpu.dot_dimension_numbers<[1], [0], [0], [1], [0, 0, 1, 1], [], []>} : vector<4x72xbf16>, vector<72x32xbf16>, vector<4x32xf32> -> vector<4x32xf32>
    %86 = arith.truncf %67 : vector<4x288xf32> to vector<4x288xbf16>
    %c0_102 = arith.constant 0 : index
    %c0_103 = arith.constant 0 : index
    %87 = vector.load %arg7[%c0_102, %c0_103] : memref<288x32xbf16, #tpu.memory_space<vmem>>, vector<288x32xbf16>
    %cst_104 = arith.constant dense<0.000000e+00> : vector<4x32xf32>
    %88 = tpu.matmul %86, %87, %cst_104 {dimension_numbers = #tpu.dot_dimension_numbers<[1], [0], [0], [1], [0, 0, 1, 1], [], []>} : vector<4x288xbf16>, vector<288x32xbf16>, vector<4x32xf32> -> vector<4x32xf32>
    %89 = arith.addf %85, %88 : vector<4x32xf32>
    %c0_105 = arith.constant 0 : index
    %c0_106 = arith.constant 0 : index
    %90 = vector.load %arg11[%c0_105, %c0_106] : memref<1x32xf32, #tpu.memory_space<vmem>>, vector<1x32xf32>
    %91 = vector.broadcast %90 : vector<1x32xf32> to vector<4x32xf32>
    %92 = arith.addf %89, %91 : vector<4x32xf32>
    %93 = arith.negf %92 : vector<4x32xf32>
    %94 = math.exp %93 : vector<4x32xf32>
    %cst_107 = arith.constant 1.000000e+00 : f32
    %95 = vector.broadcast %cst_107 : f32 to vector<4x32xf32>
    %96 = arith.addf %95, %94 : vector<4x32xf32>
    %97 = arith.divf %95, %96 : vector<4x32xf32>
    %98 = arith.mulf %97, %3 : vector<4x32xf32>
    %99 = vector.extract_strided_slice %98 {offsets = [0, 0], sizes = [2, 32], strides = [1, 1]} : vector<4x32xf32> to vector<2x32xf32>
    %c1_108 = arith.constant 1 : index
    %c1_109 = arith.constant 1 : index
    %c0_110 = arith.constant 0 : index
    %100 = vector.load %arg15[%c1_108, %c1_109, %c0_110] : memref<4x4x32xf32, #tpu.memory_space<vmem>>, vector<1x2x32xf32>
    %101 = vector.shape_cast %100 : vector<1x2x32xf32> to vector<2x32xf32>
    %102 = vector.shape_cast %99 : vector<2x32xf32> to vector<1x2x32xf32>
    tpu.vector_store %arg15[%c1_108, %c1_109, %c0_110], %102 {strides = array<i32>} : memref<4x4x32xf32, #tpu.memory_space<vmem>>, vector<1x2x32xf32>,
    %103 = vector.extract_strided_slice %98 {offsets = [2, 0], sizes = [2, 32], strides = [1, 1]} : vector<4x32xf32> to vector<2x32xf32>
    %c2_111 = arith.constant 2 : index
    %c1_112 = arith.constant 1 : index
    %c0_113 = arith.constant 0 : index
    %104 = vector.load %arg15[%c2_111, %c1_112, %c0_113] : memref<4x4x32xf32, #tpu.memory_space<vmem>>, vector<1x2x32xf32>
    %105 = vector.shape_cast %104 : vector<1x2x32xf32> to vector<2x32xf32>
    %106 = vector.shape_cast %103 : vector<2x32xf32> to vector<1x2x32xf32>
    tpu.vector_store %arg15[%c2_111, %c1_112, %c0_113], %106 {strides = array<i32>} : memref<4x4x32xf32, #tpu.memory_space<vmem>>, vector<1x2x32xf32>,
    %c0_114 = arith.constant 0 : index
    %c0_115 = arith.constant 0 : index
    %c0_116 = arith.constant 0 : index
    %107 = vector.load %arg15[%c0_114, %c0_115, %c0_116] : memref<4x4x32xf32, #tpu.memory_space<vmem>>, vector<1x2x32xf32>
    %108 = vector.shape_cast %107 : vector<1x2x32xf32> to vector<2x32xf32>
    %c0_117 = arith.constant 0 : index
    %c0_118 = arith.constant 0 : index
    %109 = vector.load %arg17[%c0_117, %c0_118] : memref<4x288xf32, #tpu.memory_space<vmem>>, vector<2x32xf32>
    tpu.vector_store %arg17[%c0_117, %c0_118], %108 {strides = array<i32>} : memref<4x288xf32, #tpu.memory_space<vmem>>, vector<2x32xf32>,
    %c0_119 = arith.constant 0 : index
    %c1_120 = arith.constant 1 : index
    %c0_121 = arith.constant 0 : index
    %110 = vector.load %arg15[%c0_119, %c1_120, %c0_121] : memref<4x4x32xf32, #tpu.memory_space<vmem>>, vector<1x2x32xf32>
    %111 = vector.shape_cast %110 : vector<1x2x32xf32> to vector<2x32xf32>
    %c0_122 = arith.constant 0 : index
    %c32_123 = arith.constant 32 : index
    %112 = vector.load %arg17[%c0_122, %c32_123] : memref<4x288xf32, #tpu.memory_space<vmem>>, vector<2x32xf32>
    tpu.vector_store %arg17[%c0_122, %c32_123], %111 {strides = array<i32>} : memref<4x288xf32, #tpu.memory_space<vmem>>, vector<2x32xf32>,
    %c0_124 = arith.constant 0 : index
    %c2_125 = arith.constant 2 : index
    %c0_126 = arith.constant 0 : index
    %113 = vector.load %arg15[%c0_124, %c2_125, %c0_126] : memref<4x4x32xf32, #tpu.memory_space<vmem>>, vector<1x2x32xf32>
    %114 = vector.shape_cast %113 : vector<1x2x32xf32> to vector<2x32xf32>
    %c0_127 = arith.constant 0 : index
    %c64_128 = arith.constant 64 : index
    %115 = vector.load %arg17[%c0_127, %c64_128] : memref<4x288xf32, #tpu.memory_space<vmem>>, vector<2x32xf32>
    tpu.vector_store %arg17[%c0_127, %c64_128], %114 {strides = array<i32>} : memref<4x288xf32, #tpu.memory_space<vmem>>, vector<2x32xf32>,
    %c1_129 = arith.constant 1 : index
    %c0_130 = arith.constant 0 : index
    %c0_131 = arith.constant 0 : index
    %116 = vector.load %arg15[%c1_129, %c0_130, %c0_131] : memref<4x4x32xf32, #tpu.memory_space<vmem>>, vector<1x2x32xf32>
    %117 = vector.shape_cast %116 : vector<1x2x32xf32> to vector<2x32xf32>
    %c0_132 = arith.constant 0 : index
    %c96_133 = arith.constant 96 : index
    %118 = vector.load %arg17[%c0_132, %c96_133] : memref<4x288xf32, #tpu.memory_space<vmem>>, vector<2x32xf32>
    tpu.vector_store %arg17[%c0_132, %c96_133], %117 {strides = array<i32>} : memref<4x288xf32, #tpu.memory_space<vmem>>, vector<2x32xf32>,
    %c1_134 = arith.constant 1 : index
    %c1_135 = arith.constant 1 : index
    %c0_136 = arith.constant 0 : index
    %119 = vector.load %arg15[%c1_134, %c1_135, %c0_136] : memref<4x4x32xf32, #tpu.memory_space<vmem>>, vector<1x2x32xf32>
    %120 = vector.shape_cast %119 : vector<1x2x32xf32> to vector<2x32xf32>
    %c0_137 = arith.constant 0 : index
    %c128_138 = arith.constant 128 : index
    %121 = vector.load %arg17[%c0_137, %c128_138] : memref<4x288xf32, #tpu.memory_space<vmem>>, vector<2x32xf32>
    tpu.vector_store %arg17[%c0_137, %c128_138], %120 {strides = array<i32>} : memref<4x288xf32, #tpu.memory_space<vmem>>, vector<2x32xf32>,
    %c1_139 = arith.constant 1 : index
    %c2_140 = arith.constant 2 : index
    %c0_141 = arith.constant 0 : index
    %122 = vector.load %arg15[%c1_139, %c2_140, %c0_141] : memref<4x4x32xf32, #tpu.memory_space<vmem>>, vector<1x2x32xf32>
    %123 = vector.shape_cast %122 : vector<1x2x32xf32> to vector<2x32xf32>
    %c0_142 = arith.constant 0 : index
    %c160_143 = arith.constant 160 : index
    %124 = vector.load %arg17[%c0_142, %c160_143] : memref<4x288xf32, #tpu.memory_space<vmem>>, vector<2x32xf32>
    tpu.vector_store %arg17[%c0_142, %c160_143], %123 {strides = array<i32>} : memref<4x288xf32, #tpu.memory_space<vmem>>, vector<2x32xf32>,
    %c2_144 = arith.constant 2 : index
    %c0_145 = arith.constant 0 : index
    %c0_146 = arith.constant 0 : index
    %125 = vector.load %arg15[%c2_144, %c0_145, %c0_146] : memref<4x4x32xf32, #tpu.memory_space<vmem>>, vector<1x2x32xf32>
    %126 = vector.shape_cast %125 : vector<1x2x32xf32> to vector<2x32xf32>
    %c0_147 = arith.constant 0 : index
    %c192_148 = arith.constant 192 : index
    %127 = vector.load %arg17[%c0_147, %c192_148] : memref<4x288xf32, #tpu.memory_space<vmem>>, vector<2x32xf32>
    tpu.vector_store %arg17[%c0_147, %c192_148], %126 {strides = array<i32>} : memref<4x288xf32, #tpu.memory_space<vmem>>, vector<2x32xf32>,
    %c2_149 = arith.constant 2 : index
    %c1_150 = arith.constant 1 : index
    %c0_151 = arith.constant 0 : index
    %128 = vector.load %arg15[%c2_149, %c1_150, %c0_151] : memref<4x4x32xf32, #tpu.memory_space<vmem>>, vector<1x2x32xf32>
    %129 = vector.shape_cast %128 : vector<1x2x32xf32> to vector<2x32xf32>
    %c0_152 = arith.constant 0 : index
    %c224_153 = arith.constant 224 : index
    %130 = vector.load %arg17[%c0_152, %c224_153] : memref<4x288xf32, #tpu.memory_space<vmem>>, vector<2x32xf32>
    tpu.vector_store %arg17[%c0_152, %c224_153], %129 {strides = array<i32>} : memref<4x288xf32, #tpu.memory_space<vmem>>, vector<2x32xf32>,
    %c2_154 = arith.constant 2 : index
    %c2_155 = arith.constant 2 : index
    %c0_156 = arith.constant 0 : index
    %131 = vector.load %arg15[%c2_154, %c2_155, %c0_156] : memref<4x4x32xf32, #tpu.memory_space<vmem>>, vector<1x2x32xf32>
    %132 = vector.shape_cast %131 : vector<1x2x32xf32> to vector<2x32xf32>
    %c0_157 = arith.constant 0 : index
    %c256_158 = arith.constant 256 : index
    %133 = vector.load %arg17[%c0_157, %c256_158] : memref<4x288xf32, #tpu.memory_space<vmem>>, vector<2x32xf32>
    tpu.vector_store %arg17[%c0_157, %c256_158], %132 {strides = array<i32>} : memref<4x288xf32, #tpu.memory_space<vmem>>, vector<2x32xf32>,
    %c1_159 = arith.constant 1 : index
    %c0_160 = arith.constant 0 : index
    %c0_161 = arith.constant 0 : index
    %134 = vector.load %arg15[%c1_159, %c0_160, %c0_161] : memref<4x4x32xf32, #tpu.memory_space<vmem>>, vector<1x2x32xf32>
    %135 = vector.shape_cast %134 : vector<1x2x32xf32> to vector<2x32xf32>
    %c2_162 = arith.constant 2 : index
    %c0_163 = arith.constant 0 : index
    %136 = vector.load %arg17[%c2_162, %c0_163] : memref<4x288xf32, #tpu.memory_space<vmem>>, vector<2x32xf32>
    tpu.vector_store %arg17[%c2_162, %c0_163], %135 {strides = array<i32>} : memref<4x288xf32, #tpu.memory_space<vmem>>, vector<2x32xf32>,
    %c1_164 = arith.constant 1 : index
    %c1_165 = arith.constant 1 : index
    %c0_166 = arith.constant 0 : index
    %137 = vector.load %arg15[%c1_164, %c1_165, %c0_166] : memref<4x4x32xf32, #tpu.memory_space<vmem>>, vector<1x2x32xf32>
    %138 = vector.shape_cast %137 : vector<1x2x32xf32> to vector<2x32xf32>
    %c2_167 = arith.constant 2 : index
    %c32_168 = arith.constant 32 : index
    %139 = vector.load %arg17[%c2_167, %c32_168] : memref<4x288xf32, #tpu.memory_space<vmem>>, vector<2x32xf32>
    tpu.vector_store %arg17[%c2_167, %c32_168], %138 {strides = array<i32>} : memref<4x288xf32, #tpu.memory_space<vmem>>, vector<2x32xf32>,
    %c1_169 = arith.constant 1 : index
    %c2_170 = arith.constant 2 : index
    %c0_171 = arith.constant 0 : index
    %140 = vector.load %arg15[%c1_169, %c2_170, %c0_171] : memref<4x4x32xf32, #tpu.memory_space<vmem>>, vector<1x2x32xf32>
    %141 = vector.shape_cast %140 : vector<1x2x32xf32> to vector<2x32xf32>
    %c2_172 = arith.constant 2 : index
    %c64_173 = arith.constant 64 : index
    %142 = vector.load %arg17[%c2_172, %c64_173] : memref<4x288xf32, #tpu.memory_space<vmem>>, vector<2x32xf32>
    tpu.vector_store %arg17[%c2_172, %c64_173], %141 {strides = array<i32>} : memref<4x288xf32, #tpu.memory_space<vmem>>, vector<2x32xf32>,
    %c2_174 = arith.constant 2 : index
    %c0_175 = arith.constant 0 : index
    %c0_176 = arith.constant 0 : index
    %143 = vector.load %arg15[%c2_174, %c0_175, %c0_176] : memref<4x4x32xf32, #tpu.memory_space<vmem>>, vector<1x2x32xf32>
    %144 = vector.shape_cast %143 : vector<1x2x32xf32> to vector<2x32xf32>
    %c2_177 = arith.constant 2 : index
    %c96_178 = arith.constant 96 : index
    %145 = vector.load %arg17[%c2_177, %c96_178] : memref<4x288xf32, #tpu.memory_space<vmem>>, vector<2x32xf32>
    tpu.vector_store %arg17[%c2_177, %c96_178], %144 {strides = array<i32>} : memref<4x288xf32, #tpu.memory_space<vmem>>, vector<2x32xf32>,
    %c2_179 = arith.constant 2 : index
    %c1_180 = arith.constant 1 : index
    %c0_181 = arith.constant 0 : index
    %146 = vector.load %arg15[%c2_179, %c1_180, %c0_181] : memref<4x4x32xf32, #tpu.memory_space<vmem>>, vector<1x2x32xf32>
    %147 = vector.shape_cast %146 : vector<1x2x32xf32> to vector<2x32xf32>
    %c2_182 = arith.constant 2 : index
    %c128_183 = arith.constant 128 : index
    %148 = vector.load %arg17[%c2_182, %c128_183] : memref<4x288xf32, #tpu.memory_space<vmem>>, vector<2x32xf32>
    tpu.vector_store %arg17[%c2_182, %c128_183], %147 {strides = array<i32>} : memref<4x288xf32, #tpu.memory_space<vmem>>, vector<2x32xf32>,
    %c2_184 = arith.constant 2 : index
    %c2_185 = arith.constant 2 : index
    %c0_186 = arith.constant 0 : index
    %149 = vector.load %arg15[%c2_184, %c2_185, %c0_186] : memref<4x4x32xf32, #tpu.memory_space<vmem>>, vector<1x2x32xf32>
    %150 = vector.shape_cast %149 : vector<1x2x32xf32> to vector<2x32xf32>
    %c2_187 = arith.constant 2 : index
    %c160_188 = arith.constant 160 : index
    %151 = vector.load %arg17[%c2_187, %c160_188] : memref<4x288xf32, #tpu.memory_space<vmem>>, vector<2x32xf32>
    tpu.vector_store %arg17[%c2_187, %c160_188], %150 {strides = array<i32>} : memref<4x288xf32, #tpu.memory_space<vmem>>, vector<2x32xf32>,
    %c3_189 = arith.constant 3 : index
    %c0_190 = arith.constant 0 : index
    %c0_191 = arith.constant 0 : index
    %152 = vector.load %arg15[%c3_189, %c0_190, %c0_191] : memref<4x4x32xf32, #tpu.memory_space<vmem>>, vector<1x2x32xf32>
    %153 = vector.shape_cast %152 : vector<1x2x32xf32> to vector<2x32xf32>
    %c2_192 = arith.constant 2 : index
    %c192_193 = arith.constant 192 : index
    %154 = vector.load %arg17[%c2_192, %c192_193] : memref<4x288xf32, #tpu.memory_space<vmem>>, vector<2x32xf32>
    tpu.vector_store %arg17[%c2_192, %c192_193], %153 {strides = array<i32>} : memref<4x288xf32, #tpu.memory_space<vmem>>, vector<2x32xf32>,
    %c3_194 = arith.constant 3 : index
    %c1_195 = arith.constant 1 : index
    %c0_196 = arith.constant 0 : index
    %155 = vector.load %arg15[%c3_194, %c1_195, %c0_196] : memref<4x4x32xf32, #tpu.memory_space<vmem>>, vector<1x2x32xf32>
    %156 = vector.shape_cast %155 : vector<1x2x32xf32> to vector<2x32xf32>
    %c2_197 = arith.constant 2 : index
    %c224_198 = arith.constant 224 : index
    %157 = vector.load %arg17[%c2_197, %c224_198] : memref<4x288xf32, #tpu.memory_space<vmem>>, vector<2x32xf32>
    tpu.vector_store %arg17[%c2_197, %c224_198], %156 {strides = array<i32>} : memref<4x288xf32, #tpu.memory_space<vmem>>, vector<2x32xf32>,
    %c3_199 = arith.constant 3 : index
    %c2_200 = arith.constant 2 : index
    %c0_201 = arith.constant 0 : index
    %158 = vector.load %arg15[%c3_199, %c2_200, %c0_201] : memref<4x4x32xf32, #tpu.memory_space<vmem>>, vector<1x2x32xf32>
    %159 = vector.shape_cast %158 : vector<1x2x32xf32> to vector<2x32xf32>
    %c2_202 = arith.constant 2 : index
    %c256_203 = arith.constant 256 : index
    %160 = vector.load %arg17[%c2_202, %c256_203] : memref<4x288xf32, #tpu.memory_space<vmem>>, vector<2x32xf32>
    tpu.vector_store %arg17[%c2_202, %c256_203], %159 {strides = array<i32>} : memref<4x288xf32, #tpu.memory_space<vmem>>, vector<2x32xf32>,
    %161 = arith.truncf %66 : vector<4x72xf32> to vector<4x72xbf16>
    %c0_204 = arith.constant 0 : index
    %c0_205 = arith.constant 0 : index
    %162 = vector.load %arg8[%c0_204, %c0_205] : memref<72x32xbf16, #tpu.memory_space<vmem>>, vector<72x32xbf16>
    %cst_206 = arith.constant dense<0.000000e+00> : vector<4x32xf32>
    %163 = tpu.matmul %161, %162, %cst_206 {dimension_numbers = #tpu.dot_dimension_numbers<[1], [0], [0], [1], [0, 0, 1, 1], [], []>} : vector<4x72xbf16>, vector<72x32xbf16>, vector<4x32xf32> -> vector<4x32xf32>
    %c0_207 = arith.constant 0 : index
    %c0_208 = arith.constant 0 : index
    %164 = vector.load %arg17[%c0_207, %c0_208] : memref<4x288xf32, #tpu.memory_space<vmem>>, vector<4x288xf32>
    %165 = arith.truncf %164 : vector<4x288xf32> to vector<4x288xbf16>
    %c0_209 = arith.constant 0 : index
    %c0_210 = arith.constant 0 : index
    %166 = vector.load %arg9[%c0_209, %c0_210] : memref<288x32xbf16, #tpu.memory_space<vmem>>, vector<288x32xbf16>
    %cst_211 = arith.constant dense<0.000000e+00> : vector<4x32xf32>
    %167 = tpu.matmul %165, %166, %cst_211 {dimension_numbers = #tpu.dot_dimension_numbers<[1], [0], [0], [1], [0, 0, 1, 1], [], []>} : vector<4x288xbf16>, vector<288x32xbf16>, vector<4x32xf32> -> vector<4x32xf32>
    %168 = arith.addf %163, %167 : vector<4x32xf32>
    %c0_212 = arith.constant 0 : index
    %c0_213 = arith.constant 0 : index
    %169 = vector.load %arg12[%c0_212, %c0_213] : memref<1x32xf32, #tpu.memory_space<vmem>>, vector<1x32xf32>
    %170 = vector.broadcast %169 : vector<1x32xf32> to vector<4x32xf32>
    %171 = arith.addf %168, %170 : vector<4x32xf32>
    %172 = math.tanh %171 : vector<4x32xf32>
    %cst_214 = arith.constant 1.000000e+00 : f32
    %173 = vector.broadcast %cst_214 : f32 to vector<4x32xf32>
    %174 = arith.subf %173, %82 : vector<4x32xf32>
    %175 = arith.mulf %174, %3 : vector<4x32xf32>
    %176 = arith.mulf %82, %172 : vector<4x32xf32>
    %177 = arith.addf %175, %176 : vector<4x32xf32>
    %c0_215 = arith.constant 0 : index
    %c0_216 = arith.constant 0 : index
    %178 = vector.load %arg14[%c0_215, %c0_216] : memref<4x32xf32, #tpu.memory_space<vmem>>, vector<4x32xf32>
    tpu.vector_store %arg14[%c0_215, %c0_216], %177 {strides = array<i32>} : memref<4x32xf32, #tpu.memory_space<vmem>>, vector<4x32xf32>,
    %179 = arith.truncf %177 : vector<4x32xf32> to vector<4x32xbf16>
    %c0_217 = arith.constant 0 : index
    %c0_218 = arith.constant 0 : index
    %c0_219 = arith.constant 0 : index
    %c0_220 = arith.constant 0 : index
    %180 = vector.load %arg13[%c0_217, %c0_218, %c0_219, %c0_220] : memref<1x1x4x32xbf16, #tpu.memory_space<vmem>>, vector<1x1x4x32xbf16>
    %181 = vector.shape_cast %180 : vector<1x1x4x32xbf16> to vector<4x32xbf16>
    %182 = vector.shape_cast %179 : vector<4x32xbf16> to vector<1x1x4x32xbf16>
    tpu.vector_store %arg13[%c0_217, %c0_218, %c0_219, %c0_220], %182 {strides = array<i32>} : memref<1x1x4x32xbf16, #tpu.memory_space<vmem>>, vector<1x1x4x32xbf16>,
    return
  }
  func.func @transform_0(%arg0: i32, %arg1: i32) -> (i32, i32, i32, i32) {
    %c0_i32 = arith.constant 0 : i32
    %c0_i32_0 = arith.constant 0 : i32
    %c0_i32_1 = arith.constant 0 : i32
    %c0_i32_2 = arith.constant 0 : i32
    return %arg0, %c0_i32, %c0_i32_0, %c0_i32_1 : i32, i32, i32, i32
  }
  func.func @transform_1(%arg0: i32, %arg1: i32) -> (i32, i32, i32) {
    %c0_i32 = arith.constant 0 : i32
    %c0_i32_0 = arith.constant 0 : i32
    %c0_i32_1 = arith.constant 0 : i32
    return %arg0, %c0_i32, %c0_i32_0 : i32, i32, i32
  }
  func.func @transform_2(%arg0: i32, %arg1: i32) -> (i32, i32) {
    %c0_i32 = arith.constant 0 : i32
    %c0_i32_0 = arith.constant 0 : i32
    %c0_i32_1 = arith.constant 0 : i32
    return %c0_i32, %c0_i32_0 : i32, i32
  }
  func.func @transform_3(%arg0: i32, %arg1: i32) -> (i32, i32) {
    %c0_i32 = arith.constant 0 : i32
    %c0_i32_0 = arith.constant 0 : i32
    %c0_i32_1 = arith.constant 0 : i32
    return %c0_i32, %c0_i32_0 : i32, i32
  }
  func.func @transform_4(%arg0: i32, %arg1: i32) -> (i32, i32) {
    %c0_i32 = arith.constant 0 : i32
    %c0_i32_0 = arith.constant 0 : i32
    %c0_i32_1 = arith.constant 0 : i32
    return %c0_i32, %c0_i32_0 : i32, i32
  }
  func.func @transform_5(%arg0: i32, %arg1: i32) -> (i32, i32) {
    %c0_i32 = arith.constant 0 : i32
    %c0_i32_0 = arith.constant 0 : i32
    %c0_i32_1 = arith.constant 0 : i32
    return %c0_i32, %c0_i32_0 : i32, i32
  }
  func.func @transform_6(%arg0: i32, %arg1: i32) -> (i32, i32) {
    %c0_i32 = arith.constant 0 : i32
    %c0_i32_0 = arith.constant 0 : i32
    %c0_i32_1 = arith.constant 0 : i32
    return %c0_i32, %c0_i32_0 : i32, i32
  }
  func.func @transform_7(%arg0: i32, %arg1: i32) -> (i32, i32) {
    %c0_i32 = arith.constant 0 : i32
    %c0_i32_0 = arith.constant 0 : i32
    %c0_i32_1 = arith.constant 0 : i32
    return %c0_i32, %c0_i32_0 : i32, i32
  }
  func.func @transform_8(%arg0: i32, %arg1: i32) -> (i32, i32) {
    %c0_i32 = arith.constant 0 : i32
    %c0_i32_0 = arith.constant 0 : i32
    %c0_i32_1 = arith.constant 0 : i32
    return %c0_i32, %c0_i32_0 : i32, i32
  }
  func.func @transform_9(%arg0: i32, %arg1: i32) -> (i32, i32) {
    %c0_i32 = arith.constant 0 : i32
    %c0_i32_0 = arith.constant 0 : i32
    %c0_i32_1 = arith.constant 0 : i32
    return %c0_i32, %c0_i32_0 : i32, i32
  }
  func.func @transform_10(%arg0: i32, %arg1: i32) -> (i32, i32) {
    %c0_i32 = arith.constant 0 : i32
    %c0_i32_0 = arith.constant 0 : i32
    %c0_i32_1 = arith.constant 0 : i32
    return %c0_i32, %c0_i32_0 : i32, i32
  }
  func.func @transform_11(%arg0: i32, %arg1: i32) -> (i32, i32, i32, i32) {
    %c0_i32 = arith.constant 0 : i32
    %c0_i32_0 = arith.constant 0 : i32
    %c0_i32_1 = arith.constant 0 : i32
    return %arg0, %arg1, %c0_i32, %c0_i32_0 : i32, i32, i32, i32
  }
}

module attributes {stable_mosaic.version = 11 : i64} {
  func.func @_conv_im2col_kernel(%arg0: i32, %arg1: memref<1x4x4x32xbf16, #tpu.memory_space<vmem>>, %arg2: memref<288x64xbf16, #tpu.memory_space<vmem>>, %arg3: memref<1x64xf32, #tpu.memory_space<vmem>>, %arg4: memref<1x4x64xbf16, #tpu.memory_space<vmem>>, %arg5: memref<4x288xf32, #tpu.memory_space<vmem>>) attributes {dimension_semantics = [#tpu.dimension_semantics<parallel>], iteration_bounds = array<i64: 6>, scalar_prefetch = 0 : i64, scratch_operands = 1 : i64, tpu.core_type = #tpu.core_type<tc>, window_params = [{transform_indices = @transform_0, window_bounds = array<i64: 1, 4, 4, 32>}, {pipeline_mode = #tpu.pipeline_mode<synchronous>, transform_indices = @transform_1, window_bounds = array<i64: 288, 64>}, {pipeline_mode = #tpu.pipeline_mode<synchronous>, transform_indices = @transform_2, window_bounds = array<i64: 1, 64>}, {transform_indices = @transform_3, window_bounds = array<i64: 1, 4, 64>}]} {
    %c0 = arith.constant 0 : index
    %c0_0 = arith.constant 0 : index
    %c0_1 = arith.constant 0 : index
    %c0_2 = arith.constant 0 : index
    %0 = vector.load %arg1[%c0, %c0_0, %c0_1, %c0_2] : memref<1x4x4x32xbf16, #tpu.memory_space<vmem>>, vector<1x1x2x32xbf16>
    %1 = vector.shape_cast %0 : vector<1x1x2x32xbf16> to vector<2x32xbf16>
    %2 = arith.extf %1 : vector<2x32xbf16> to vector<2x32xf32>
    %c0_3 = arith.constant 0 : index
    %c0_4 = arith.constant 0 : index
    %3 = vector.load %arg5[%c0_3, %c0_4] : memref<4x288xf32, #tpu.memory_space<vmem>>, vector<2x32xf32>
    tpu.vector_store %arg5[%c0_3, %c0_4], %2 {strides = array<i32>} : memref<4x288xf32, #tpu.memory_space<vmem>>, vector<2x32xf32>,
    %c0_5 = arith.constant 0 : index
    %c0_6 = arith.constant 0 : index
    %c1 = arith.constant 1 : index
    %c0_7 = arith.constant 0 : index
    %4 = vector.load %arg1[%c0_5, %c0_6, %c1, %c0_7] : memref<1x4x4x32xbf16, #tpu.memory_space<vmem>>, vector<1x1x2x32xbf16>
    %5 = vector.shape_cast %4 : vector<1x1x2x32xbf16> to vector<2x32xbf16>
    %6 = arith.extf %5 : vector<2x32xbf16> to vector<2x32xf32>
    %c0_8 = arith.constant 0 : index
    %c32 = arith.constant 32 : index
    %7 = vector.load %arg5[%c0_8, %c32] : memref<4x288xf32, #tpu.memory_space<vmem>>, vector<2x32xf32>
    tpu.vector_store %arg5[%c0_8, %c32], %6 {strides = array<i32>} : memref<4x288xf32, #tpu.memory_space<vmem>>, vector<2x32xf32>,
    %c0_9 = arith.constant 0 : index
    %c0_10 = arith.constant 0 : index
    %c2 = arith.constant 2 : index
    %c0_11 = arith.constant 0 : index
    %8 = vector.load %arg1[%c0_9, %c0_10, %c2, %c0_11] : memref<1x4x4x32xbf16, #tpu.memory_space<vmem>>, vector<1x1x2x32xbf16>
    %9 = vector.shape_cast %8 : vector<1x1x2x32xbf16> to vector<2x32xbf16>
    %10 = arith.extf %9 : vector<2x32xbf16> to vector<2x32xf32>
    %c0_12 = arith.constant 0 : index
    %c64 = arith.constant 64 : index
    %11 = vector.load %arg5[%c0_12, %c64] : memref<4x288xf32, #tpu.memory_space<vmem>>, vector<2x32xf32>
    tpu.vector_store %arg5[%c0_12, %c64], %10 {strides = array<i32>} : memref<4x288xf32, #tpu.memory_space<vmem>>, vector<2x32xf32>,
    %c0_13 = arith.constant 0 : index
    %c1_14 = arith.constant 1 : index
    %c0_15 = arith.constant 0 : index
    %c0_16 = arith.constant 0 : index
    %12 = vector.load %arg1[%c0_13, %c1_14, %c0_15, %c0_16] : memref<1x4x4x32xbf16, #tpu.memory_space<vmem>>, vector<1x1x2x32xbf16>
    %13 = vector.shape_cast %12 : vector<1x1x2x32xbf16> to vector<2x32xbf16>
    %14 = arith.extf %13 : vector<2x32xbf16> to vector<2x32xf32>
    %c0_17 = arith.constant 0 : index
    %c96 = arith.constant 96 : index
    %15 = vector.load %arg5[%c0_17, %c96] : memref<4x288xf32, #tpu.memory_space<vmem>>, vector<2x32xf32>
    tpu.vector_store %arg5[%c0_17, %c96], %14 {strides = array<i32>} : memref<4x288xf32, #tpu.memory_space<vmem>>, vector<2x32xf32>,
    %c0_18 = arith.constant 0 : index
    %c1_19 = arith.constant 1 : index
    %c1_20 = arith.constant 1 : index
    %c0_21 = arith.constant 0 : index
    %16 = vector.load %arg1[%c0_18, %c1_19, %c1_20, %c0_21] : memref<1x4x4x32xbf16, #tpu.memory_space<vmem>>, vector<1x1x2x32xbf16>
    %17 = vector.shape_cast %16 : vector<1x1x2x32xbf16> to vector<2x32xbf16>
    %18 = arith.extf %17 : vector<2x32xbf16> to vector<2x32xf32>
    %c0_22 = arith.constant 0 : index
    %c128 = arith.constant 128 : index
    %19 = vector.load %arg5[%c0_22, %c128] : memref<4x288xf32, #tpu.memory_space<vmem>>, vector<2x32xf32>
    tpu.vector_store %arg5[%c0_22, %c128], %18 {strides = array<i32>} : memref<4x288xf32, #tpu.memory_space<vmem>>, vector<2x32xf32>,
    %c0_23 = arith.constant 0 : index
    %c1_24 = arith.constant 1 : index
    %c2_25 = arith.constant 2 : index
    %c0_26 = arith.constant 0 : index
    %20 = vector.load %arg1[%c0_23, %c1_24, %c2_25, %c0_26] : memref<1x4x4x32xbf16, #tpu.memory_space<vmem>>, vector<1x1x2x32xbf16>
    %21 = vector.shape_cast %20 : vector<1x1x2x32xbf16> to vector<2x32xbf16>
    %22 = arith.extf %21 : vector<2x32xbf16> to vector<2x32xf32>
    %c0_27 = arith.constant 0 : index
    %c160 = arith.constant 160 : index
    %23 = vector.load %arg5[%c0_27, %c160] : memref<4x288xf32, #tpu.memory_space<vmem>>, vector<2x32xf32>
    tpu.vector_store %arg5[%c0_27, %c160], %22 {strides = array<i32>} : memref<4x288xf32, #tpu.memory_space<vmem>>, vector<2x32xf32>,
    %c0_28 = arith.constant 0 : index
    %c2_29 = arith.constant 2 : index
    %c0_30 = arith.constant 0 : index
    %c0_31 = arith.constant 0 : index
    %24 = vector.load %arg1[%c0_28, %c2_29, %c0_30, %c0_31] : memref<1x4x4x32xbf16, #tpu.memory_space<vmem>>, vector<1x1x2x32xbf16>
    %25 = vector.shape_cast %24 : vector<1x1x2x32xbf16> to vector<2x32xbf16>
    %26 = arith.extf %25 : vector<2x32xbf16> to vector<2x32xf32>
    %c0_32 = arith.constant 0 : index
    %c192 = arith.constant 192 : index
    %27 = vector.load %arg5[%c0_32, %c192] : memref<4x288xf32, #tpu.memory_space<vmem>>, vector<2x32xf32>
    tpu.vector_store %arg5[%c0_32, %c192], %26 {strides = array<i32>} : memref<4x288xf32, #tpu.memory_space<vmem>>, vector<2x32xf32>,
    %c0_33 = arith.constant 0 : index
    %c2_34 = arith.constant 2 : index
    %c1_35 = arith.constant 1 : index
    %c0_36 = arith.constant 0 : index
    %28 = vector.load %arg1[%c0_33, %c2_34, %c1_35, %c0_36] : memref<1x4x4x32xbf16, #tpu.memory_space<vmem>>, vector<1x1x2x32xbf16>
    %29 = vector.shape_cast %28 : vector<1x1x2x32xbf16> to vector<2x32xbf16>
    %30 = arith.extf %29 : vector<2x32xbf16> to vector<2x32xf32>
    %c0_37 = arith.constant 0 : index
    %c224 = arith.constant 224 : index
    %31 = vector.load %arg5[%c0_37, %c224] : memref<4x288xf32, #tpu.memory_space<vmem>>, vector<2x32xf32>
    tpu.vector_store %arg5[%c0_37, %c224], %30 {strides = array<i32>} : memref<4x288xf32, #tpu.memory_space<vmem>>, vector<2x32xf32>,
    %c0_38 = arith.constant 0 : index
    %c2_39 = arith.constant 2 : index
    %c2_40 = arith.constant 2 : index
    %c0_41 = arith.constant 0 : index
    %32 = vector.load %arg1[%c0_38, %c2_39, %c2_40, %c0_41] : memref<1x4x4x32xbf16, #tpu.memory_space<vmem>>, vector<1x1x2x32xbf16>
    %33 = vector.shape_cast %32 : vector<1x1x2x32xbf16> to vector<2x32xbf16>
    %34 = arith.extf %33 : vector<2x32xbf16> to vector<2x32xf32>
    %c0_42 = arith.constant 0 : index
    %c256 = arith.constant 256 : index
    %35 = vector.load %arg5[%c0_42, %c256] : memref<4x288xf32, #tpu.memory_space<vmem>>, vector<2x32xf32>
    tpu.vector_store %arg5[%c0_42, %c256], %34 {strides = array<i32>} : memref<4x288xf32, #tpu.memory_space<vmem>>, vector<2x32xf32>,
    %c0_43 = arith.constant 0 : index
    %c1_44 = arith.constant 1 : index
    %c0_45 = arith.constant 0 : index
    %c0_46 = arith.constant 0 : index
    %36 = vector.load %arg1[%c0_43, %c1_44, %c0_45, %c0_46] : memref<1x4x4x32xbf16, #tpu.memory_space<vmem>>, vector<1x1x2x32xbf16>
    %37 = vector.shape_cast %36 : vector<1x1x2x32xbf16> to vector<2x32xbf16>
    %38 = arith.extf %37 : vector<2x32xbf16> to vector<2x32xf32>
    %c2_47 = arith.constant 2 : index
    %c0_48 = arith.constant 0 : index
    %39 = vector.load %arg5[%c2_47, %c0_48] : memref<4x288xf32, #tpu.memory_space<vmem>>, vector<2x32xf32>
    tpu.vector_store %arg5[%c2_47, %c0_48], %38 {strides = array<i32>} : memref<4x288xf32, #tpu.memory_space<vmem>>, vector<2x32xf32>,
    %c0_49 = arith.constant 0 : index
    %c1_50 = arith.constant 1 : index
    %c1_51 = arith.constant 1 : index
    %c0_52 = arith.constant 0 : index
    %40 = vector.load %arg1[%c0_49, %c1_50, %c1_51, %c0_52] : memref<1x4x4x32xbf16, #tpu.memory_space<vmem>>, vector<1x1x2x32xbf16>
    %41 = vector.shape_cast %40 : vector<1x1x2x32xbf16> to vector<2x32xbf16>
    %42 = arith.extf %41 : vector<2x32xbf16> to vector<2x32xf32>
    %c2_53 = arith.constant 2 : index
    %c32_54 = arith.constant 32 : index
    %43 = vector.load %arg5[%c2_53, %c32_54] : memref<4x288xf32, #tpu.memory_space<vmem>>, vector<2x32xf32>
    tpu.vector_store %arg5[%c2_53, %c32_54], %42 {strides = array<i32>} : memref<4x288xf32, #tpu.memory_space<vmem>>, vector<2x32xf32>,
    %c0_55 = arith.constant 0 : index
    %c1_56 = arith.constant 1 : index
    %c2_57 = arith.constant 2 : index
    %c0_58 = arith.constant 0 : index
    %44 = vector.load %arg1[%c0_55, %c1_56, %c2_57, %c0_58] : memref<1x4x4x32xbf16, #tpu.memory_space<vmem>>, vector<1x1x2x32xbf16>
    %45 = vector.shape_cast %44 : vector<1x1x2x32xbf16> to vector<2x32xbf16>
    %46 = arith.extf %45 : vector<2x32xbf16> to vector<2x32xf32>
    %c2_59 = arith.constant 2 : index
    %c64_60 = arith.constant 64 : index
    %47 = vector.load %arg5[%c2_59, %c64_60] : memref<4x288xf32, #tpu.memory_space<vmem>>, vector<2x32xf32>
    tpu.vector_store %arg5[%c2_59, %c64_60], %46 {strides = array<i32>} : memref<4x288xf32, #tpu.memory_space<vmem>>, vector<2x32xf32>,
    %c0_61 = arith.constant 0 : index
    %c2_62 = arith.constant 2 : index
    %c0_63 = arith.constant 0 : index
    %c0_64 = arith.constant 0 : index
    %48 = vector.load %arg1[%c0_61, %c2_62, %c0_63, %c0_64] : memref<1x4x4x32xbf16, #tpu.memory_space<vmem>>, vector<1x1x2x32xbf16>
    %49 = vector.shape_cast %48 : vector<1x1x2x32xbf16> to vector<2x32xbf16>
    %50 = arith.extf %49 : vector<2x32xbf16> to vector<2x32xf32>
    %c2_65 = arith.constant 2 : index
    %c96_66 = arith.constant 96 : index
    %51 = vector.load %arg5[%c2_65, %c96_66] : memref<4x288xf32, #tpu.memory_space<vmem>>, vector<2x32xf32>
    tpu.vector_store %arg5[%c2_65, %c96_66], %50 {strides = array<i32>} : memref<4x288xf32, #tpu.memory_space<vmem>>, vector<2x32xf32>,
    %c0_67 = arith.constant 0 : index
    %c2_68 = arith.constant 2 : index
    %c1_69 = arith.constant 1 : index
    %c0_70 = arith.constant 0 : index
    %52 = vector.load %arg1[%c0_67, %c2_68, %c1_69, %c0_70] : memref<1x4x4x32xbf16, #tpu.memory_space<vmem>>, vector<1x1x2x32xbf16>
    %53 = vector.shape_cast %52 : vector<1x1x2x32xbf16> to vector<2x32xbf16>
    %54 = arith.extf %53 : vector<2x32xbf16> to vector<2x32xf32>
    %c2_71 = arith.constant 2 : index
    %c128_72 = arith.constant 128 : index
    %55 = vector.load %arg5[%c2_71, %c128_72] : memref<4x288xf32, #tpu.memory_space<vmem>>, vector<2x32xf32>
    tpu.vector_store %arg5[%c2_71, %c128_72], %54 {strides = array<i32>} : memref<4x288xf32, #tpu.memory_space<vmem>>, vector<2x32xf32>,
    %c0_73 = arith.constant 0 : index
    %c2_74 = arith.constant 2 : index
    %c2_75 = arith.constant 2 : index
    %c0_76 = arith.constant 0 : index
    %56 = vector.load %arg1[%c0_73, %c2_74, %c2_75, %c0_76] : memref<1x4x4x32xbf16, #tpu.memory_space<vmem>>, vector<1x1x2x32xbf16>
    %57 = vector.shape_cast %56 : vector<1x1x2x32xbf16> to vector<2x32xbf16>
    %58 = arith.extf %57 : vector<2x32xbf16> to vector<2x32xf32>
    %c2_77 = arith.constant 2 : index
    %c160_78 = arith.constant 160 : index
    %59 = vector.load %arg5[%c2_77, %c160_78] : memref<4x288xf32, #tpu.memory_space<vmem>>, vector<2x32xf32>
    tpu.vector_store %arg5[%c2_77, %c160_78], %58 {strides = array<i32>} : memref<4x288xf32, #tpu.memory_space<vmem>>, vector<2x32xf32>,
    %c0_79 = arith.constant 0 : index
    %c3 = arith.constant 3 : index
    %c0_80 = arith.constant 0 : index
    %c0_81 = arith.constant 0 : index
    %60 = vector.load %arg1[%c0_79, %c3, %c0_80, %c0_81] : memref<1x4x4x32xbf16, #tpu.memory_space<vmem>>, vector<1x1x2x32xbf16>
    %61 = vector.shape_cast %60 : vector<1x1x2x32xbf16> to vector<2x32xbf16>
    %62 = arith.extf %61 : vector<2x32xbf16> to vector<2x32xf32>
    %c2_82 = arith.constant 2 : index
    %c192_83 = arith.constant 192 : index
    %63 = vector.load %arg5[%c2_82, %c192_83] : memref<4x288xf32, #tpu.memory_space<vmem>>, vector<2x32xf32>
    tpu.vector_store %arg5[%c2_82, %c192_83], %62 {strides = array<i32>} : memref<4x288xf32, #tpu.memory_space<vmem>>, vector<2x32xf32>,
    %c0_84 = arith.constant 0 : index
    %c3_85 = arith.constant 3 : index
    %c1_86 = arith.constant 1 : index
    %c0_87 = arith.constant 0 : index
    %64 = vector.load %arg1[%c0_84, %c3_85, %c1_86, %c0_87] : memref<1x4x4x32xbf16, #tpu.memory_space<vmem>>, vector<1x1x2x32xbf16>
    %65 = vector.shape_cast %64 : vector<1x1x2x32xbf16> to vector<2x32xbf16>
    %66 = arith.extf %65 : vector<2x32xbf16> to vector<2x32xf32>
    %c2_88 = arith.constant 2 : index
    %c224_89 = arith.constant 224 : index
    %67 = vector.load %arg5[%c2_88, %c224_89] : memref<4x288xf32, #tpu.memory_space<vmem>>, vector<2x32xf32>
    tpu.vector_store %arg5[%c2_88, %c224_89], %66 {strides = array<i32>} : memref<4x288xf32, #tpu.memory_space<vmem>>, vector<2x32xf32>,
    %c0_90 = arith.constant 0 : index
    %c3_91 = arith.constant 3 : index
    %c2_92 = arith.constant 2 : index
    %c0_93 = arith.constant 0 : index
    %68 = vector.load %arg1[%c0_90, %c3_91, %c2_92, %c0_93] : memref<1x4x4x32xbf16, #tpu.memory_space<vmem>>, vector<1x1x2x32xbf16>
    %69 = vector.shape_cast %68 : vector<1x1x2x32xbf16> to vector<2x32xbf16>
    %70 = arith.extf %69 : vector<2x32xbf16> to vector<2x32xf32>
    %c2_94 = arith.constant 2 : index
    %c256_95 = arith.constant 256 : index
    %71 = vector.load %arg5[%c2_94, %c256_95] : memref<4x288xf32, #tpu.memory_space<vmem>>, vector<2x32xf32>
    tpu.vector_store %arg5[%c2_94, %c256_95], %70 {strides = array<i32>} : memref<4x288xf32, #tpu.memory_space<vmem>>, vector<2x32xf32>,
    %c0_96 = arith.constant 0 : index
    %c0_97 = arith.constant 0 : index
    %72 = vector.load %arg5[%c0_96, %c0_97] : memref<4x288xf32, #tpu.memory_space<vmem>>, vector<4x288xf32>
    %73 = arith.truncf %72 : vector<4x288xf32> to vector<4x288xbf16>
    %c0_98 = arith.constant 0 : index
    %c0_99 = arith.constant 0 : index
    %74 = vector.load %arg2[%c0_98, %c0_99] : memref<288x64xbf16, #tpu.memory_space<vmem>>, vector<288x64xbf16>
    %cst = arith.constant dense<0.000000e+00> : vector<4x64xf32>
    %75 = tpu.matmul %73, %74, %cst {dimension_numbers = #tpu.dot_dimension_numbers<[1], [0], [0], [1], [0, 0, 1, 1], [], []>} : vector<4x288xbf16>, vector<288x64xbf16>, vector<4x64xf32> -> vector<4x64xf32>
    %c0_100 = arith.constant 0 : index
    %c0_101 = arith.constant 0 : index
    %76 = vector.load %arg3[%c0_100, %c0_101] : memref<1x64xf32, #tpu.memory_space<vmem>>, vector<1x64xf32>
    %77 = vector.broadcast %76 : vector<1x64xf32> to vector<4x64xf32>
    %78 = arith.addf %75, %77 : vector<4x64xf32>
    %79 = arith.truncf %78 : vector<4x64xf32> to vector<4x64xbf16>
    %c0_102 = arith.constant 0 : index
    %c0_103 = arith.constant 0 : index
    %c0_104 = arith.constant 0 : index
    %80 = vector.load %arg4[%c0_102, %c0_103, %c0_104] : memref<1x4x64xbf16, #tpu.memory_space<vmem>>, vector<1x4x64xbf16>
    %81 = vector.shape_cast %80 : vector<1x4x64xbf16> to vector<4x64xbf16>
    %82 = vector.shape_cast %79 : vector<4x64xbf16> to vector<1x4x64xbf16>
    tpu.vector_store %arg4[%c0_102, %c0_103, %c0_104], %82 {strides = array<i32>} : memref<1x4x64xbf16, #tpu.memory_space<vmem>>, vector<1x4x64xbf16>,
    return
  }
  func.func @transform_0(%arg0: i32) -> (i32, i32, i32, i32) {
    %c0_i32 = arith.constant 0 : i32
    %c0_i32_0 = arith.constant 0 : i32
    %c0_i32_1 = arith.constant 0 : i32
    %c0_i32_2 = arith.constant 0 : i32
    return %arg0, %c0_i32, %c0_i32_0, %c0_i32_1 : i32, i32, i32, i32
  }
  func.func @transform_1(%arg0: i32) -> (i32, i32) {
    %c0_i32 = arith.constant 0 : i32
    %c0_i32_0 = arith.constant 0 : i32
    %c0_i32_1 = arith.constant 0 : i32
    return %c0_i32, %c0_i32_0 : i32, i32
  }
  func.func @transform_2(%arg0: i32) -> (i32, i32) {
    %c0_i32 = arith.constant 0 : i32
    %c0_i32_0 = arith.constant 0 : i32
    %c0_i32_1 = arith.constant 0 : i32
    return %c0_i32, %c0_i32_0 : i32, i32
  }
  func.func @transform_3(%arg0: i32) -> (i32, i32, i32) {
    %c0_i32 = arith.constant 0 : i32
    %c0_i32_0 = arith.constant 0 : i32
    %c0_i32_1 = arith.constant 0 : i32
    return %arg0, %c0_i32, %c0_i32_0 : i32, i32, i32
  }
}

module attributes {stable_mosaic.version = 11 : i64} {
  func.func @_conv_im2col_kernel(%arg0: i32, %arg1: memref<1x6x6x32xbf16, #tpu.memory_space<vmem>>, %arg2: memref<288x16xbf16, #tpu.memory_space<vmem>>, %arg3: memref<1x16xf32, #tpu.memory_space<vmem>>, %arg4: memref<1x16x16xf32, #tpu.memory_space<vmem>>, %arg5: memref<16x288xf32, #tpu.memory_space<vmem>>) attributes {dimension_semantics = [#tpu.dimension_semantics<parallel>], iteration_bounds = array<i64: 2>, scalar_prefetch = 0 : i64, scratch_operands = 1 : i64, tpu.core_type = #tpu.core_type<tc>, window_params = [{transform_indices = @transform_0, window_bounds = array<i64: 1, 6, 6, 32>}, {pipeline_mode = #tpu.pipeline_mode<synchronous>, transform_indices = @transform_1, window_bounds = array<i64: 288, 16>}, {pipeline_mode = #tpu.pipeline_mode<synchronous>, transform_indices = @transform_2, window_bounds = array<i64: 1, 16>}, {transform_indices = @transform_3, window_bounds = array<i64: 1, 16, 16>}]} {
    %c0 = arith.constant 0 : index
    %c0_0 = arith.constant 0 : index
    %c0_1 = arith.constant 0 : index
    %c0_2 = arith.constant 0 : index
    %0 = vector.load %arg1[%c0, %c0_0, %c0_1, %c0_2] : memref<1x6x6x32xbf16, #tpu.memory_space<vmem>>, vector<1x1x4x32xbf16>
    %1 = vector.shape_cast %0 : vector<1x1x4x32xbf16> to vector<4x32xbf16>
    %2 = arith.extf %1 : vector<4x32xbf16> to vector<4x32xf32>
    %c0_3 = arith.constant 0 : index
    %c0_4 = arith.constant 0 : index
    %3 = vector.load %arg5[%c0_3, %c0_4] : memref<16x288xf32, #tpu.memory_space<vmem>>, vector<4x32xf32>
    tpu.vector_store %arg5[%c0_3, %c0_4], %2 {strides = array<i32>} : memref<16x288xf32, #tpu.memory_space<vmem>>, vector<4x32xf32>,
    %c0_5 = arith.constant 0 : index
    %c0_6 = arith.constant 0 : index
    %c1 = arith.constant 1 : index
    %c0_7 = arith.constant 0 : index
    %4 = vector.load %arg1[%c0_5, %c0_6, %c1, %c0_7] : memref<1x6x6x32xbf16, #tpu.memory_space<vmem>>, vector<1x1x4x32xbf16>
    %5 = vector.shape_cast %4 : vector<1x1x4x32xbf16> to vector<4x32xbf16>
    %6 = arith.extf %5 : vector<4x32xbf16> to vector<4x32xf32>
    %c0_8 = arith.constant 0 : index
    %c32 = arith.constant 32 : index
    %7 = vector.load %arg5[%c0_8, %c32] : memref<16x288xf32, #tpu.memory_space<vmem>>, vector<4x32xf32>
    tpu.vector_store %arg5[%c0_8, %c32], %6 {strides = array<i32>} : memref<16x288xf32, #tpu.memory_space<vmem>>, vector<4x32xf32>,
    %c0_9 = arith.constant 0 : index
    %c0_10 = arith.constant 0 : index
    %c2 = arith.constant 2 : index
    %c0_11 = arith.constant 0 : index
    %8 = vector.load %arg1[%c0_9, %c0_10, %c2, %c0_11] : memref<1x6x6x32xbf16, #tpu.memory_space<vmem>>, vector<1x1x4x32xbf16>
    %9 = vector.shape_cast %8 : vector<1x1x4x32xbf16> to vector<4x32xbf16>
    %10 = arith.extf %9 : vector<4x32xbf16> to vector<4x32xf32>
    %c0_12 = arith.constant 0 : index
    %c64 = arith.constant 64 : index
    %11 = vector.load %arg5[%c0_12, %c64] : memref<16x288xf32, #tpu.memory_space<vmem>>, vector<4x32xf32>
    tpu.vector_store %arg5[%c0_12, %c64], %10 {strides = array<i32>} : memref<16x288xf32, #tpu.memory_space<vmem>>, vector<4x32xf32>,
    %c0_13 = arith.constant 0 : index
    %c1_14 = arith.constant 1 : index
    %c0_15 = arith.constant 0 : index
    %c0_16 = arith.constant 0 : index
    %12 = vector.load %arg1[%c0_13, %c1_14, %c0_15, %c0_16] : memref<1x6x6x32xbf16, #tpu.memory_space<vmem>>, vector<1x1x4x32xbf16>
    %13 = vector.shape_cast %12 : vector<1x1x4x32xbf16> to vector<4x32xbf16>
    %14 = arith.extf %13 : vector<4x32xbf16> to vector<4x32xf32>
    %c0_17 = arith.constant 0 : index
    %c96 = arith.constant 96 : index
    %15 = vector.load %arg5[%c0_17, %c96] : memref<16x288xf32, #tpu.memory_space<vmem>>, vector<4x32xf32>
    tpu.vector_store %arg5[%c0_17, %c96], %14 {strides = array<i32>} : memref<16x288xf32, #tpu.memory_space<vmem>>, vector<4x32xf32>,
    %c0_18 = arith.constant 0 : index
    %c1_19 = arith.constant 1 : index
    %c1_20 = arith.constant 1 : index
    %c0_21 = arith.constant 0 : index
    %16 = vector.load %arg1[%c0_18, %c1_19, %c1_20, %c0_21] : memref<1x6x6x32xbf16, #tpu.memory_space<vmem>>, vector<1x1x4x32xbf16>
    %17 = vector.shape_cast %16 : vector<1x1x4x32xbf16> to vector<4x32xbf16>
    %18 = arith.extf %17 : vector<4x32xbf16> to vector<4x32xf32>
    %c0_22 = arith.constant 0 : index
    %c128 = arith.constant 128 : index
    %19 = vector.load %arg5[%c0_22, %c128] : memref<16x288xf32, #tpu.memory_space<vmem>>, vector<4x32xf32>
    tpu.vector_store %arg5[%c0_22, %c128], %18 {strides = array<i32>} : memref<16x288xf32, #tpu.memory_space<vmem>>, vector<4x32xf32>,
    %c0_23 = arith.constant 0 : index
    %c1_24 = arith.constant 1 : index
    %c2_25 = arith.constant 2 : index
    %c0_26 = arith.constant 0 : index
    %20 = vector.load %arg1[%c0_23, %c1_24, %c2_25, %c0_26] : memref<1x6x6x32xbf16, #tpu.memory_space<vmem>>, vector<1x1x4x32xbf16>
    %21 = vector.shape_cast %20 : vector<1x1x4x32xbf16> to vector<4x32xbf16>
    %22 = arith.extf %21 : vector<4x32xbf16> to vector<4x32xf32>
    %c0_27 = arith.constant 0 : index
    %c160 = arith.constant 160 : index
    %23 = vector.load %arg5[%c0_27, %c160] : memref<16x288xf32, #tpu.memory_space<vmem>>, vector<4x32xf32>
    tpu.vector_store %arg5[%c0_27, %c160], %22 {strides = array<i32>} : memref<16x288xf32, #tpu.memory_space<vmem>>, vector<4x32xf32>,
    %c0_28 = arith.constant 0 : index
    %c2_29 = arith.constant 2 : index
    %c0_30 = arith.constant 0 : index
    %c0_31 = arith.constant 0 : index
    %24 = vector.load %arg1[%c0_28, %c2_29, %c0_30, %c0_31] : memref<1x6x6x32xbf16, #tpu.memory_space<vmem>>, vector<1x1x4x32xbf16>
    %25 = vector.shape_cast %24 : vector<1x1x4x32xbf16> to vector<4x32xbf16>
    %26 = arith.extf %25 : vector<4x32xbf16> to vector<4x32xf32>
    %c0_32 = arith.constant 0 : index
    %c192 = arith.constant 192 : index
    %27 = vector.load %arg5[%c0_32, %c192] : memref<16x288xf32, #tpu.memory_space<vmem>>, vector<4x32xf32>
    tpu.vector_store %arg5[%c0_32, %c192], %26 {strides = array<i32>} : memref<16x288xf32, #tpu.memory_space<vmem>>, vector<4x32xf32>,
    %c0_33 = arith.constant 0 : index
    %c2_34 = arith.constant 2 : index
    %c1_35 = arith.constant 1 : index
    %c0_36 = arith.constant 0 : index
    %28 = vector.load %arg1[%c0_33, %c2_34, %c1_35, %c0_36] : memref<1x6x6x32xbf16, #tpu.memory_space<vmem>>, vector<1x1x4x32xbf16>
    %29 = vector.shape_cast %28 : vector<1x1x4x32xbf16> to vector<4x32xbf16>
    %30 = arith.extf %29 : vector<4x32xbf16> to vector<4x32xf32>
    %c0_37 = arith.constant 0 : index
    %c224 = arith.constant 224 : index
    %31 = vector.load %arg5[%c0_37, %c224] : memref<16x288xf32, #tpu.memory_space<vmem>>, vector<4x32xf32>
    tpu.vector_store %arg5[%c0_37, %c224], %30 {strides = array<i32>} : memref<16x288xf32, #tpu.memory_space<vmem>>, vector<4x32xf32>,
    %c0_38 = arith.constant 0 : index
    %c2_39 = arith.constant 2 : index
    %c2_40 = arith.constant 2 : index
    %c0_41 = arith.constant 0 : index
    %32 = vector.load %arg1[%c0_38, %c2_39, %c2_40, %c0_41] : memref<1x6x6x32xbf16, #tpu.memory_space<vmem>>, vector<1x1x4x32xbf16>
    %33 = vector.shape_cast %32 : vector<1x1x4x32xbf16> to vector<4x32xbf16>
    %34 = arith.extf %33 : vector<4x32xbf16> to vector<4x32xf32>
    %c0_42 = arith.constant 0 : index
    %c256 = arith.constant 256 : index
    %35 = vector.load %arg5[%c0_42, %c256] : memref<16x288xf32, #tpu.memory_space<vmem>>, vector<4x32xf32>
    tpu.vector_store %arg5[%c0_42, %c256], %34 {strides = array<i32>} : memref<16x288xf32, #tpu.memory_space<vmem>>, vector<4x32xf32>,
    %c0_43 = arith.constant 0 : index
    %c1_44 = arith.constant 1 : index
    %c0_45 = arith.constant 0 : index
    %c0_46 = arith.constant 0 : index
    %36 = vector.load %arg1[%c0_43, %c1_44, %c0_45, %c0_46] : memref<1x6x6x32xbf16, #tpu.memory_space<vmem>>, vector<1x1x4x32xbf16>
    %37 = vector.shape_cast %36 : vector<1x1x4x32xbf16> to vector<4x32xbf16>
    %38 = arith.extf %37 : vector<4x32xbf16> to vector<4x32xf32>
    %c4 = arith.constant 4 : index
    %c0_47 = arith.constant 0 : index
    %39 = vector.load %arg5[%c4, %c0_47] : memref<16x288xf32, #tpu.memory_space<vmem>>, vector<4x32xf32>
    tpu.vector_store %arg5[%c4, %c0_47], %38 {strides = array<i32>} : memref<16x288xf32, #tpu.memory_space<vmem>>, vector<4x32xf32>,
    %c0_48 = arith.constant 0 : index
    %c1_49 = arith.constant 1 : index
    %c1_50 = arith.constant 1 : index
    %c0_51 = arith.constant 0 : index
    %40 = vector.load %arg1[%c0_48, %c1_49, %c1_50, %c0_51] : memref<1x6x6x32xbf16, #tpu.memory_space<vmem>>, vector<1x1x4x32xbf16>
    %41 = vector.shape_cast %40 : vector<1x1x4x32xbf16> to vector<4x32xbf16>
    %42 = arith.extf %41 : vector<4x32xbf16> to vector<4x32xf32>
    %c4_52 = arith.constant 4 : index
    %c32_53 = arith.constant 32 : index
    %43 = vector.load %arg5[%c4_52, %c32_53] : memref<16x288xf32, #tpu.memory_space<vmem>>, vector<4x32xf32>
    tpu.vector_store %arg5[%c4_52, %c32_53], %42 {strides = array<i32>} : memref<16x288xf32, #tpu.memory_space<vmem>>, vector<4x32xf32>,
    %c0_54 = arith.constant 0 : index
    %c1_55 = arith.constant 1 : index
    %c2_56 = arith.constant 2 : index
    %c0_57 = arith.constant 0 : index
    %44 = vector.load %arg1[%c0_54, %c1_55, %c2_56, %c0_57] : memref<1x6x6x32xbf16, #tpu.memory_space<vmem>>, vector<1x1x4x32xbf16>
    %45 = vector.shape_cast %44 : vector<1x1x4x32xbf16> to vector<4x32xbf16>
    %46 = arith.extf %45 : vector<4x32xbf16> to vector<4x32xf32>
    %c4_58 = arith.constant 4 : index
    %c64_59 = arith.constant 64 : index
    %47 = vector.load %arg5[%c4_58, %c64_59] : memref<16x288xf32, #tpu.memory_space<vmem>>, vector<4x32xf32>
    tpu.vector_store %arg5[%c4_58, %c64_59], %46 {strides = array<i32>} : memref<16x288xf32, #tpu.memory_space<vmem>>, vector<4x32xf32>,
    %c0_60 = arith.constant 0 : index
    %c2_61 = arith.constant 2 : index
    %c0_62 = arith.constant 0 : index
    %c0_63 = arith.constant 0 : index
    %48 = vector.load %arg1[%c0_60, %c2_61, %c0_62, %c0_63] : memref<1x6x6x32xbf16, #tpu.memory_space<vmem>>, vector<1x1x4x32xbf16>
    %49 = vector.shape_cast %48 : vector<1x1x4x32xbf16> to vector<4x32xbf16>
    %50 = arith.extf %49 : vector<4x32xbf16> to vector<4x32xf32>
    %c4_64 = arith.constant 4 : index
    %c96_65 = arith.constant 96 : index
    %51 = vector.load %arg5[%c4_64, %c96_65] : memref<16x288xf32, #tpu.memory_space<vmem>>, vector<4x32xf32>
    tpu.vector_store %arg5[%c4_64, %c96_65], %50 {strides = array<i32>} : memref<16x288xf32, #tpu.memory_space<vmem>>, vector<4x32xf32>,
    %c0_66 = arith.constant 0 : index
    %c2_67 = arith.constant 2 : index
    %c1_68 = arith.constant 1 : index
    %c0_69 = arith.constant 0 : index
    %52 = vector.load %arg1[%c0_66, %c2_67, %c1_68, %c0_69] : memref<1x6x6x32xbf16, #tpu.memory_space<vmem>>, vector<1x1x4x32xbf16>
    %53 = vector.shape_cast %52 : vector<1x1x4x32xbf16> to vector<4x32xbf16>
    %54 = arith.extf %53 : vector<4x32xbf16> to vector<4x32xf32>
    %c4_70 = arith.constant 4 : index
    %c128_71 = arith.constant 128 : index
    %55 = vector.load %arg5[%c4_70, %c128_71] : memref<16x288xf32, #tpu.memory_space<vmem>>, vector<4x32xf32>
    tpu.vector_store %arg5[%c4_70, %c128_71], %54 {strides = array<i32>} : memref<16x288xf32, #tpu.memory_space<vmem>>, vector<4x32xf32>,
    %c0_72 = arith.constant 0 : index
    %c2_73 = arith.constant 2 : index
    %c2_74 = arith.constant 2 : index
    %c0_75 = arith.constant 0 : index
    %56 = vector.load %arg1[%c0_72, %c2_73, %c2_74, %c0_75] : memref<1x6x6x32xbf16, #tpu.memory_space<vmem>>, vector<1x1x4x32xbf16>
    %57 = vector.shape_cast %56 : vector<1x1x4x32xbf16> to vector<4x32xbf16>
    %58 = arith.extf %57 : vector<4x32xbf16> to vector<4x32xf32>
    %c4_76 = arith.constant 4 : index
    %c160_77 = arith.constant 160 : index
    %59 = vector.load %arg5[%c4_76, %c160_77] : memref<16x288xf32, #tpu.memory_space<vmem>>, vector<4x32xf32>
    tpu.vector_store %arg5[%c4_76, %c160_77], %58 {strides = array<i32>} : memref<16x288xf32, #tpu.memory_space<vmem>>, vector<4x32xf32>,
    %c0_78 = arith.constant 0 : index
    %c3 = arith.constant 3 : index
    %c0_79 = arith.constant 0 : index
    %c0_80 = arith.constant 0 : index
    %60 = vector.load %arg1[%c0_78, %c3, %c0_79, %c0_80] : memref<1x6x6x32xbf16, #tpu.memory_space<vmem>>, vector<1x1x4x32xbf16>
    %61 = vector.shape_cast %60 : vector<1x1x4x32xbf16> to vector<4x32xbf16>
    %62 = arith.extf %61 : vector<4x32xbf16> to vector<4x32xf32>
    %c4_81 = arith.constant 4 : index
    %c192_82 = arith.constant 192 : index
    %63 = vector.load %arg5[%c4_81, %c192_82] : memref<16x288xf32, #tpu.memory_space<vmem>>, vector<4x32xf32>
    tpu.vector_store %arg5[%c4_81, %c192_82], %62 {strides = array<i32>} : memref<16x288xf32, #tpu.memory_space<vmem>>, vector<4x32xf32>,
    %c0_83 = arith.constant 0 : index
    %c3_84 = arith.constant 3 : index
    %c1_85 = arith.constant 1 : index
    %c0_86 = arith.constant 0 : index
    %64 = vector.load %arg1[%c0_83, %c3_84, %c1_85, %c0_86] : memref<1x6x6x32xbf16, #tpu.memory_space<vmem>>, vector<1x1x4x32xbf16>
    %65 = vector.shape_cast %64 : vector<1x1x4x32xbf16> to vector<4x32xbf16>
    %66 = arith.extf %65 : vector<4x32xbf16> to vector<4x32xf32>
    %c4_87 = arith.constant 4 : index
    %c224_88 = arith.constant 224 : index
    %67 = vector.load %arg5[%c4_87, %c224_88] : memref<16x288xf32, #tpu.memory_space<vmem>>, vector<4x32xf32>
    tpu.vector_store %arg5[%c4_87, %c224_88], %66 {strides = array<i32>} : memref<16x288xf32, #tpu.memory_space<vmem>>, vector<4x32xf32>,
    %c0_89 = arith.constant 0 : index
    %c3_90 = arith.constant 3 : index
    %c2_91 = arith.constant 2 : index
    %c0_92 = arith.constant 0 : index
    %68 = vector.load %arg1[%c0_89, %c3_90, %c2_91, %c0_92] : memref<1x6x6x32xbf16, #tpu.memory_space<vmem>>, vector<1x1x4x32xbf16>
    %69 = vector.shape_cast %68 : vector<1x1x4x32xbf16> to vector<4x32xbf16>
    %70 = arith.extf %69 : vector<4x32xbf16> to vector<4x32xf32>
    %c4_93 = arith.constant 4 : index
    %c256_94 = arith.constant 256 : index
    %71 = vector.load %arg5[%c4_93, %c256_94] : memref<16x288xf32, #tpu.memory_space<vmem>>, vector<4x32xf32>
    tpu.vector_store %arg5[%c4_93, %c256_94], %70 {strides = array<i32>} : memref<16x288xf32, #tpu.memory_space<vmem>>, vector<4x32xf32>,
    %c0_95 = arith.constant 0 : index
    %c2_96 = arith.constant 2 : index
    %c0_97 = arith.constant 0 : index
    %c0_98 = arith.constant 0 : index
    %72 = vector.load %arg1[%c0_95, %c2_96, %c0_97, %c0_98] : memref<1x6x6x32xbf16, #tpu.memory_space<vmem>>, vector<1x1x4x32xbf16>
    %73 = vector.shape_cast %72 : vector<1x1x4x32xbf16> to vector<4x32xbf16>
    %74 = arith.extf %73 : vector<4x32xbf16> to vector<4x32xf32>
    %c8 = arith.constant 8 : index
    %c0_99 = arith.constant 0 : index
    %75 = vector.load %arg5[%c8, %c0_99] : memref<16x288xf32, #tpu.memory_space<vmem>>, vector<4x32xf32>
    tpu.vector_store %arg5[%c8, %c0_99], %74 {strides = array<i32>} : memref<16x288xf32, #tpu.memory_space<vmem>>, vector<4x32xf32>,
    %c0_100 = arith.constant 0 : index
    %c2_101 = arith.constant 2 : index
    %c1_102 = arith.constant 1 : index
    %c0_103 = arith.constant 0 : index
    %76 = vector.load %arg1[%c0_100, %c2_101, %c1_102, %c0_103] : memref<1x6x6x32xbf16, #tpu.memory_space<vmem>>, vector<1x1x4x32xbf16>
    %77 = vector.shape_cast %76 : vector<1x1x4x32xbf16> to vector<4x32xbf16>
    %78 = arith.extf %77 : vector<4x32xbf16> to vector<4x32xf32>
    %c8_104 = arith.constant 8 : index
    %c32_105 = arith.constant 32 : index
    %79 = vector.load %arg5[%c8_104, %c32_105] : memref<16x288xf32, #tpu.memory_space<vmem>>, vector<4x32xf32>
    tpu.vector_store %arg5[%c8_104, %c32_105], %78 {strides = array<i32>} : memref<16x288xf32, #tpu.memory_space<vmem>>, vector<4x32xf32>,
    %c0_106 = arith.constant 0 : index
    %c2_107 = arith.constant 2 : index
    %c2_108 = arith.constant 2 : index
    %c0_109 = arith.constant 0 : index
    %80 = vector.load %arg1[%c0_106, %c2_107, %c2_108, %c0_109] : memref<1x6x6x32xbf16, #tpu.memory_space<vmem>>, vector<1x1x4x32xbf16>
    %81 = vector.shape_cast %80 : vector<1x1x4x32xbf16> to vector<4x32xbf16>
    %82 = arith.extf %81 : vector<4x32xbf16> to vector<4x32xf32>
    %c8_110 = arith.constant 8 : index
    %c64_111 = arith.constant 64 : index
    %83 = vector.load %arg5[%c8_110, %c64_111] : memref<16x288xf32, #tpu.memory_space<vmem>>, vector<4x32xf32>
    tpu.vector_store %arg5[%c8_110, %c64_111], %82 {strides = array<i32>} : memref<16x288xf32, #tpu.memory_space<vmem>>, vector<4x32xf32>,
    %c0_112 = arith.constant 0 : index
    %c3_113 = arith.constant 3 : index
    %c0_114 = arith.constant 0 : index
    %c0_115 = arith.constant 0 : index
    %84 = vector.load %arg1[%c0_112, %c3_113, %c0_114, %c0_115] : memref<1x6x6x32xbf16, #tpu.memory_space<vmem>>, vector<1x1x4x32xbf16>
    %85 = vector.shape_cast %84 : vector<1x1x4x32xbf16> to vector<4x32xbf16>
    %86 = arith.extf %85 : vector<4x32xbf16> to vector<4x32xf32>
    %c8_116 = arith.constant 8 : index
    %c96_117 = arith.constant 96 : index
    %87 = vector.load %arg5[%c8_116, %c96_117] : memref<16x288xf32, #tpu.memory_space<vmem>>, vector<4x32xf32>
    tpu.vector_store %arg5[%c8_116, %c96_117], %86 {strides = array<i32>} : memref<16x288xf32, #tpu.memory_space<vmem>>, vector<4x32xf32>,
    %c0_118 = arith.constant 0 : index
    %c3_119 = arith.constant 3 : index
    %c1_120 = arith.constant 1 : index
    %c0_121 = arith.constant 0 : index
    %88 = vector.load %arg1[%c0_118, %c3_119, %c1_120, %c0_121] : memref<1x6x6x32xbf16, #tpu.memory_space<vmem>>, vector<1x1x4x32xbf16>
    %89 = vector.shape_cast %88 : vector<1x1x4x32xbf16> to vector<4x32xbf16>
    %90 = arith.extf %89 : vector<4x32xbf16> to vector<4x32xf32>
    %c8_122 = arith.constant 8 : index
    %c128_123 = arith.constant 128 : index
    %91 = vector.load %arg5[%c8_122, %c128_123] : memref<16x288xf32, #tpu.memory_space<vmem>>, vector<4x32xf32>
    tpu.vector_store %arg5[%c8_122, %c128_123], %90 {strides = array<i32>} : memref<16x288xf32, #tpu.memory_space<vmem>>, vector<4x32xf32>,
    %c0_124 = arith.constant 0 : index
    %c3_125 = arith.constant 3 : index
    %c2_126 = arith.constant 2 : index
    %c0_127 = arith.constant 0 : index
    %92 = vector.load %arg1[%c0_124, %c3_125, %c2_126, %c0_127] : memref<1x6x6x32xbf16, #tpu.memory_space<vmem>>, vector<1x1x4x32xbf16>
    %93 = vector.shape_cast %92 : vector<1x1x4x32xbf16> to vector<4x32xbf16>
    %94 = arith.extf %93 : vector<4x32xbf16> to vector<4x32xf32>
    %c8_128 = arith.constant 8 : index
    %c160_129 = arith.constant 160 : index
    %95 = vector.load %arg5[%c8_128, %c160_129] : memref<16x288xf32, #tpu.memory_space<vmem>>, vector<4x32xf32>
    tpu.vector_store %arg5[%c8_128, %c160_129], %94 {strides = array<i32>} : memref<16x288xf32, #tpu.memory_space<vmem>>, vector<4x32xf32>,
    %c0_130 = arith.constant 0 : index
    %c4_131 = arith.constant 4 : index
    %c0_132 = arith.constant 0 : index
    %c0_133 = arith.constant 0 : index
    %96 = vector.load %arg1[%c0_130, %c4_131, %c0_132, %c0_133] : memref<1x6x6x32xbf16, #tpu.memory_space<vmem>>, vector<1x1x4x32xbf16>
    %97 = vector.shape_cast %96 : vector<1x1x4x32xbf16> to vector<4x32xbf16>
    %98 = arith.extf %97 : vector<4x32xbf16> to vector<4x32xf32>
    %c8_134 = arith.constant 8 : index
    %c192_135 = arith.constant 192 : index
    %99 = vector.load %arg5[%c8_134, %c192_135] : memref<16x288xf32, #tpu.memory_space<vmem>>, vector<4x32xf32>
    tpu.vector_store %arg5[%c8_134, %c192_135], %98 {strides = array<i32>} : memref<16x288xf32, #tpu.memory_space<vmem>>, vector<4x32xf32>,
    %c0_136 = arith.constant 0 : index
    %c4_137 = arith.constant 4 : index
    %c1_138 = arith.constant 1 : index
    %c0_139 = arith.constant 0 : index
    %100 = vector.load %arg1[%c0_136, %c4_137, %c1_138, %c0_139] : memref<1x6x6x32xbf16, #tpu.memory_space<vmem>>, vector<1x1x4x32xbf16>
    %101 = vector.shape_cast %100 : vector<1x1x4x32xbf16> to vector<4x32xbf16>
    %102 = arith.extf %101 : vector<4x32xbf16> to vector<4x32xf32>
    %c8_140 = arith.constant 8 : index
    %c224_141 = arith.constant 224 : index
    %103 = vector.load %arg5[%c8_140, %c224_141] : memref<16x288xf32, #tpu.memory_space<vmem>>, vector<4x32xf32>
    tpu.vector_store %arg5[%c8_140, %c224_141], %102 {strides = array<i32>} : memref<16x288xf32, #tpu.memory_space<vmem>>, vector<4x32xf32>,
    %c0_142 = arith.constant 0 : index
    %c4_143 = arith.constant 4 : index
    %c2_144 = arith.constant 2 : index
    %c0_145 = arith.constant 0 : index
    %104 = vector.load %arg1[%c0_142, %c4_143, %c2_144, %c0_145] : memref<1x6x6x32xbf16, #tpu.memory_space<vmem>>, vector<1x1x4x32xbf16>
    %105 = vector.shape_cast %104 : vector<1x1x4x32xbf16> to vector<4x32xbf16>
    %106 = arith.extf %105 : vector<4x32xbf16> to vector<4x32xf32>
    %c8_146 = arith.constant 8 : index
    %c256_147 = arith.constant 256 : index
    %107 = vector.load %arg5[%c8_146, %c256_147] : memref<16x288xf32, #tpu.memory_space<vmem>>, vector<4x32xf32>
    tpu.vector_store %arg5[%c8_146, %c256_147], %106 {strides = array<i32>} : memref<16x288xf32, #tpu.memory_space<vmem>>, vector<4x32xf32>,
    %c0_148 = arith.constant 0 : index
    %c3_149 = arith.constant 3 : index
    %c0_150 = arith.constant 0 : index
    %c0_151 = arith.constant 0 : index
    %108 = vector.load %arg1[%c0_148, %c3_149, %c0_150, %c0_151] : memref<1x6x6x32xbf16, #tpu.memory_space<vmem>>, vector<1x1x4x32xbf16>
    %109 = vector.shape_cast %108 : vector<1x1x4x32xbf16> to vector<4x32xbf16>
    %110 = arith.extf %109 : vector<4x32xbf16> to vector<4x32xf32>
    %c12 = arith.constant 12 : index
    %c0_152 = arith.constant 0 : index
    %111 = vector.load %arg5[%c12, %c0_152] : memref<16x288xf32, #tpu.memory_space<vmem>>, vector<4x32xf32>
    tpu.vector_store %arg5[%c12, %c0_152], %110 {strides = array<i32>} : memref<16x288xf32, #tpu.memory_space<vmem>>, vector<4x32xf32>,
    %c0_153 = arith.constant 0 : index
    %c3_154 = arith.constant 3 : index
    %c1_155 = arith.constant 1 : index
    %c0_156 = arith.constant 0 : index
    %112 = vector.load %arg1[%c0_153, %c3_154, %c1_155, %c0_156] : memref<1x6x6x32xbf16, #tpu.memory_space<vmem>>, vector<1x1x4x32xbf16>
    %113 = vector.shape_cast %112 : vector<1x1x4x32xbf16> to vector<4x32xbf16>
    %114 = arith.extf %113 : vector<4x32xbf16> to vector<4x32xf32>
    %c12_157 = arith.constant 12 : index
    %c32_158 = arith.constant 32 : index
    %115 = vector.load %arg5[%c12_157, %c32_158] : memref<16x288xf32, #tpu.memory_space<vmem>>, vector<4x32xf32>
    tpu.vector_store %arg5[%c12_157, %c32_158], %114 {strides = array<i32>} : memref<16x288xf32, #tpu.memory_space<vmem>>, vector<4x32xf32>,
    %c0_159 = arith.constant 0 : index
    %c3_160 = arith.constant 3 : index
    %c2_161 = arith.constant 2 : index
    %c0_162 = arith.constant 0 : index
    %116 = vector.load %arg1[%c0_159, %c3_160, %c2_161, %c0_162] : memref<1x6x6x32xbf16, #tpu.memory_space<vmem>>, vector<1x1x4x32xbf16>
    %117 = vector.shape_cast %116 : vector<1x1x4x32xbf16> to vector<4x32xbf16>
    %118 = arith.extf %117 : vector<4x32xbf16> to vector<4x32xf32>
    %c12_163 = arith.constant 12 : index
    %c64_164 = arith.constant 64 : index
    %119 = vector.load %arg5[%c12_163, %c64_164] : memref<16x288xf32, #tpu.memory_space<vmem>>, vector<4x32xf32>
    tpu.vector_store %arg5[%c12_163, %c64_164], %118 {strides = array<i32>} : memref<16x288xf32, #tpu.memory_space<vmem>>, vector<4x32xf32>,
    %c0_165 = arith.constant 0 : index
    %c4_166 = arith.constant 4 : index
    %c0_167 = arith.constant 0 : index
    %c0_168 = arith.constant 0 : index
    %120 = vector.load %arg1[%c0_165, %c4_166, %c0_167, %c0_168] : memref<1x6x6x32xbf16, #tpu.memory_space<vmem>>, vector<1x1x4x32xbf16>
    %121 = vector.shape_cast %120 : vector<1x1x4x32xbf16> to vector<4x32xbf16>
    %122 = arith.extf %121 : vector<4x32xbf16> to vector<4x32xf32>
    %c12_169 = arith.constant 12 : index
    %c96_170 = arith.constant 96 : index
    %123 = vector.load %arg5[%c12_169, %c96_170] : memref<16x288xf32, #tpu.memory_space<vmem>>, vector<4x32xf32>
    tpu.vector_store %arg5[%c12_169, %c96_170], %122 {strides = array<i32>} : memref<16x288xf32, #tpu.memory_space<vmem>>, vector<4x32xf32>,
    %c0_171 = arith.constant 0 : index
    %c4_172 = arith.constant 4 : index
    %c1_173 = arith.constant 1 : index
    %c0_174 = arith.constant 0 : index
    %124 = vector.load %arg1[%c0_171, %c4_172, %c1_173, %c0_174] : memref<1x6x6x32xbf16, #tpu.memory_space<vmem>>, vector<1x1x4x32xbf16>
    %125 = vector.shape_cast %124 : vector<1x1x4x32xbf16> to vector<4x32xbf16>
    %126 = arith.extf %125 : vector<4x32xbf16> to vector<4x32xf32>
    %c12_175 = arith.constant 12 : index
    %c128_176 = arith.constant 128 : index
    %127 = vector.load %arg5[%c12_175, %c128_176] : memref<16x288xf32, #tpu.memory_space<vmem>>, vector<4x32xf32>
    tpu.vector_store %arg5[%c12_175, %c128_176], %126 {strides = array<i32>} : memref<16x288xf32, #tpu.memory_space<vmem>>, vector<4x32xf32>,
    %c0_177 = arith.constant 0 : index
    %c4_178 = arith.constant 4 : index
    %c2_179 = arith.constant 2 : index
    %c0_180 = arith.constant 0 : index
    %128 = vector.load %arg1[%c0_177, %c4_178, %c2_179, %c0_180] : memref<1x6x6x32xbf16, #tpu.memory_space<vmem>>, vector<1x1x4x32xbf16>
    %129 = vector.shape_cast %128 : vector<1x1x4x32xbf16> to vector<4x32xbf16>
    %130 = arith.extf %129 : vector<4x32xbf16> to vector<4x32xf32>
    %c12_181 = arith.constant 12 : index
    %c160_182 = arith.constant 160 : index
    %131 = vector.load %arg5[%c12_181, %c160_182] : memref<16x288xf32, #tpu.memory_space<vmem>>, vector<4x32xf32>
    tpu.vector_store %arg5[%c12_181, %c160_182], %130 {strides = array<i32>} : memref<16x288xf32, #tpu.memory_space<vmem>>, vector<4x32xf32>,
    %c0_183 = arith.constant 0 : index
    %c5 = arith.constant 5 : index
    %c0_184 = arith.constant 0 : index
    %c0_185 = arith.constant 0 : index
    %132 = vector.load %arg1[%c0_183, %c5, %c0_184, %c0_185] : memref<1x6x6x32xbf16, #tpu.memory_space<vmem>>, vector<1x1x4x32xbf16>
    %133 = vector.shape_cast %132 : vector<1x1x4x32xbf16> to vector<4x32xbf16>
    %134 = arith.extf %133 : vector<4x32xbf16> to vector<4x32xf32>
    %c12_186 = arith.constant 12 : index
    %c192_187 = arith.constant 192 : index
    %135 = vector.load %arg5[%c12_186, %c192_187] : memref<16x288xf32, #tpu.memory_space<vmem>>, vector<4x32xf32>
    tpu.vector_store %arg5[%c12_186, %c192_187], %134 {strides = array<i32>} : memref<16x288xf32, #tpu.memory_space<vmem>>, vector<4x32xf32>,
    %c0_188 = arith.constant 0 : index
    %c5_189 = arith.constant 5 : index
    %c1_190 = arith.constant 1 : index
    %c0_191 = arith.constant 0 : index
    %136 = vector.load %arg1[%c0_188, %c5_189, %c1_190, %c0_191] : memref<1x6x6x32xbf16, #tpu.memory_space<vmem>>, vector<1x1x4x32xbf16>
    %137 = vector.shape_cast %136 : vector<1x1x4x32xbf16> to vector<4x32xbf16>
    %138 = arith.extf %137 : vector<4x32xbf16> to vector<4x32xf32>
    %c12_192 = arith.constant 12 : index
    %c224_193 = arith.constant 224 : index
    %139 = vector.load %arg5[%c12_192, %c224_193] : memref<16x288xf32, #tpu.memory_space<vmem>>, vector<4x32xf32>
    tpu.vector_store %arg5[%c12_192, %c224_193], %138 {strides = array<i32>} : memref<16x288xf32, #tpu.memory_space<vmem>>, vector<4x32xf32>,
    %c0_194 = arith.constant 0 : index
    %c5_195 = arith.constant 5 : index
    %c2_196 = arith.constant 2 : index
    %c0_197 = arith.constant 0 : index
    %140 = vector.load %arg1[%c0_194, %c5_195, %c2_196, %c0_197] : memref<1x6x6x32xbf16, #tpu.memory_space<vmem>>, vector<1x1x4x32xbf16>
    %141 = vector.shape_cast %140 : vector<1x1x4x32xbf16> to vector<4x32xbf16>
    %142 = arith.extf %141 : vector<4x32xbf16> to vector<4x32xf32>
    %c12_198 = arith.constant 12 : index
    %c256_199 = arith.constant 256 : index
    %143 = vector.load %arg5[%c12_198, %c256_199] : memref<16x288xf32, #tpu.memory_space<vmem>>, vector<4x32xf32>
    tpu.vector_store %arg5[%c12_198, %c256_199], %142 {strides = array<i32>} : memref<16x288xf32, #tpu.memory_space<vmem>>, vector<4x32xf32>,
    %c0_200 = arith.constant 0 : index
    %c0_201 = arith.constant 0 : index
    %144 = vector.load %arg5[%c0_200, %c0_201] : memref<16x288xf32, #tpu.memory_space<vmem>>, vector<16x288xf32>
    %145 = arith.truncf %144 : vector<16x288xf32> to vector<16x288xbf16>
    %c0_202 = arith.constant 0 : index
    %c0_203 = arith.constant 0 : index
    %146 = vector.load %arg2[%c0_202, %c0_203] : memref<288x16xbf16, #tpu.memory_space<vmem>>, vector<288x16xbf16>
    %cst = arith.constant dense<0.000000e+00> : vector<16x16xf32>
    %147 = tpu.matmul %145, %146, %cst {dimension_numbers = #tpu.dot_dimension_numbers<[1], [0], [0], [1], [0, 0, 1, 1], [], []>} : vector<16x288xbf16>, vector<288x16xbf16>, vector<16x16xf32> -> vector<16x16xf32>
    %c0_204 = arith.constant 0 : index
    %c0_205 = arith.constant 0 : index
    %148 = vector.load %arg3[%c0_204, %c0_205] : memref<1x16xf32, #tpu.memory_space<vmem>>, vector<1x16xf32>
    %149 = vector.broadcast %148 : vector<1x16xf32> to vector<16x16xf32>
    %150 = arith.addf %147, %149 : vector<16x16xf32>
    %cst_206 = arith.constant 0.000000e+00 : f32
    %151 = vector.broadcast %cst_206 : f32 to vector<16x16xf32>
    %152 = arith.maximumf %150, %151 : vector<16x16xf32>
    %c0_207 = arith.constant 0 : index
    %c0_208 = arith.constant 0 : index
    %c0_209 = arith.constant 0 : index
    %153 = vector.load %arg4[%c0_207, %c0_208, %c0_209] : memref<1x16x16xf32, #tpu.memory_space<vmem>>, vector<1x16x16xf32>
    %154 = vector.shape_cast %153 : vector<1x16x16xf32> to vector<16x16xf32>
    %155 = vector.shape_cast %152 : vector<16x16xf32> to vector<1x16x16xf32>
    tpu.vector_store %arg4[%c0_207, %c0_208, %c0_209], %155 {strides = array<i32>} : memref<1x16x16xf32, #tpu.memory_space<vmem>>, vector<1x16x16xf32>,
    return
  }
  func.func @transform_0(%arg0: i32) -> (i32, i32, i32, i32) {
    %c0_i32 = arith.constant 0 : i32
    %c0_i32_0 = arith.constant 0 : i32
    %c0_i32_1 = arith.constant 0 : i32
    %c0_i32_2 = arith.constant 0 : i32
    return %arg0, %c0_i32, %c0_i32_0, %c0_i32_1 : i32, i32, i32, i32
  }
  func.func @transform_1(%arg0: i32) -> (i32, i32) {
    %c0_i32 = arith.constant 0 : i32
    %c0_i32_0 = arith.constant 0 : i32
    %c0_i32_1 = arith.constant 0 : i32
    return %c0_i32, %c0_i32_0 : i32, i32
  }
  func.func @transform_2(%arg0: i32) -> (i32, i32) {
    %c0_i32 = arith.constant 0 : i32
    %c0_i32_0 = arith.constant 0 : i32
    %c0_i32_1 = arith.constant 0 : i32
    return %c0_i32, %c0_i32_0 : i32, i32
  }
  func.func @transform_3(%arg0: i32) -> (i32, i32, i32) {
    %c0_i32 = arith.constant 0 : i32
    %c0_i32_0 = arith.constant 0 : i32
    %c0_i32_1 = arith.constant 0 : i32
    return %arg0, %c0_i32, %c0_i32_0 : i32, i32, i32
  }
}

module attributes {stable_mosaic.version = 11 : i64} {
  func.func @_conv_im2col_kernel(%arg0: i32, %arg1: memref<1x6x6x16xbf16, #tpu.memory_space<vmem>>, %arg2: memref<144x32xbf16, #tpu.memory_space<vmem>>, %arg3: memref<1x32xf32, #tpu.memory_space<vmem>>, %arg4: memref<1x16x32xbf16, #tpu.memory_space<vmem>>, %arg5: memref<16x144xf32, #tpu.memory_space<vmem>>) attributes {dimension_semantics = [#tpu.dimension_semantics<parallel>], iteration_bounds = array<i64: 6>, scalar_prefetch = 0 : i64, scratch_operands = 1 : i64, tpu.core_type = #tpu.core_type<tc>, window_params = [{transform_indices = @transform_0, window_bounds = array<i64: 1, 6, 6, 16>}, {pipeline_mode = #tpu.pipeline_mode<synchronous>, transform_indices = @transform_1, window_bounds = array<i64: 144, 32>}, {pipeline_mode = #tpu.pipeline_mode<synchronous>, transform_indices = @transform_2, window_bounds = array<i64: 1, 32>}, {transform_indices = @transform_3, window_bounds = array<i64: 1, 16, 32>}]} {
    %c0 = arith.constant 0 : index
    %c0_0 = arith.constant 0 : index
    %c0_1 = arith.constant 0 : index
    %c0_2 = arith.constant 0 : index
    %0 = vector.load %arg1[%c0, %c0_0, %c0_1, %c0_2] : memref<1x6x6x16xbf16, #tpu.memory_space<vmem>>, vector<1x1x4x16xbf16>
    %1 = vector.shape_cast %0 : vector<1x1x4x16xbf16> to vector<4x16xbf16>
    %2 = arith.extf %1 : vector<4x16xbf16> to vector<4x16xf32>
    %c0_3 = arith.constant 0 : index
    %c0_4 = arith.constant 0 : index
    %3 = vector.load %arg5[%c0_3, %c0_4] : memref<16x144xf32, #tpu.memory_space<vmem>>, vector<4x16xf32>
    tpu.vector_store %arg5[%c0_3, %c0_4], %2 {strides = array<i32>} : memref<16x144xf32, #tpu.memory_space<vmem>>, vector<4x16xf32>,
    %c0_5 = arith.constant 0 : index
    %c0_6 = arith.constant 0 : index
    %c1 = arith.constant 1 : index
    %c0_7 = arith.constant 0 : index
    %4 = vector.load %arg1[%c0_5, %c0_6, %c1, %c0_7] : memref<1x6x6x16xbf16, #tpu.memory_space<vmem>>, vector<1x1x4x16xbf16>
    %5 = vector.shape_cast %4 : vector<1x1x4x16xbf16> to vector<4x16xbf16>
    %6 = arith.extf %5 : vector<4x16xbf16> to vector<4x16xf32>
    %c0_8 = arith.constant 0 : index
    %c16 = arith.constant 16 : index
    %7 = vector.load %arg5[%c0_8, %c16] : memref<16x144xf32, #tpu.memory_space<vmem>>, vector<4x16xf32>
    tpu.vector_store %arg5[%c0_8, %c16], %6 {strides = array<i32>} : memref<16x144xf32, #tpu.memory_space<vmem>>, vector<4x16xf32>,
    %c0_9 = arith.constant 0 : index
    %c0_10 = arith.constant 0 : index
    %c2 = arith.constant 2 : index
    %c0_11 = arith.constant 0 : index
    %8 = vector.load %arg1[%c0_9, %c0_10, %c2, %c0_11] : memref<1x6x6x16xbf16, #tpu.memory_space<vmem>>, vector<1x1x4x16xbf16>
    %9 = vector.shape_cast %8 : vector<1x1x4x16xbf16> to vector<4x16xbf16>
    %10 = arith.extf %9 : vector<4x16xbf16> to vector<4x16xf32>
    %c0_12 = arith.constant 0 : index
    %c32 = arith.constant 32 : index
    %11 = vector.load %arg5[%c0_12, %c32] : memref<16x144xf32, #tpu.memory_space<vmem>>, vector<4x16xf32>
    tpu.vector_store %arg5[%c0_12, %c32], %10 {strides = array<i32>} : memref<16x144xf32, #tpu.memory_space<vmem>>, vector<4x16xf32>,
    %c0_13 = arith.constant 0 : index
    %c1_14 = arith.constant 1 : index
    %c0_15 = arith.constant 0 : index
    %c0_16 = arith.constant 0 : index
    %12 = vector.load %arg1[%c0_13, %c1_14, %c0_15, %c0_16] : memref<1x6x6x16xbf16, #tpu.memory_space<vmem>>, vector<1x1x4x16xbf16>
    %13 = vector.shape_cast %12 : vector<1x1x4x16xbf16> to vector<4x16xbf16>
    %14 = arith.extf %13 : vector<4x16xbf16> to vector<4x16xf32>
    %c0_17 = arith.constant 0 : index
    %c48 = arith.constant 48 : index
    %15 = vector.load %arg5[%c0_17, %c48] : memref<16x144xf32, #tpu.memory_space<vmem>>, vector<4x16xf32>
    tpu.vector_store %arg5[%c0_17, %c48], %14 {strides = array<i32>} : memref<16x144xf32, #tpu.memory_space<vmem>>, vector<4x16xf32>,
    %c0_18 = arith.constant 0 : index
    %c1_19 = arith.constant 1 : index
    %c1_20 = arith.constant 1 : index
    %c0_21 = arith.constant 0 : index
    %16 = vector.load %arg1[%c0_18, %c1_19, %c1_20, %c0_21] : memref<1x6x6x16xbf16, #tpu.memory_space<vmem>>, vector<1x1x4x16xbf16>
    %17 = vector.shape_cast %16 : vector<1x1x4x16xbf16> to vector<4x16xbf16>
    %18 = arith.extf %17 : vector<4x16xbf16> to vector<4x16xf32>
    %c0_22 = arith.constant 0 : index
    %c64 = arith.constant 64 : index
    %19 = vector.load %arg5[%c0_22, %c64] : memref<16x144xf32, #tpu.memory_space<vmem>>, vector<4x16xf32>
    tpu.vector_store %arg5[%c0_22, %c64], %18 {strides = array<i32>} : memref<16x144xf32, #tpu.memory_space<vmem>>, vector<4x16xf32>,
    %c0_23 = arith.constant 0 : index
    %c1_24 = arith.constant 1 : index
    %c2_25 = arith.constant 2 : index
    %c0_26 = arith.constant 0 : index
    %20 = vector.load %arg1[%c0_23, %c1_24, %c2_25, %c0_26] : memref<1x6x6x16xbf16, #tpu.memory_space<vmem>>, vector<1x1x4x16xbf16>
    %21 = vector.shape_cast %20 : vector<1x1x4x16xbf16> to vector<4x16xbf16>
    %22 = arith.extf %21 : vector<4x16xbf16> to vector<4x16xf32>
    %c0_27 = arith.constant 0 : index
    %c80 = arith.constant 80 : index
    %23 = vector.load %arg5[%c0_27, %c80] : memref<16x144xf32, #tpu.memory_space<vmem>>, vector<4x16xf32>
    tpu.vector_store %arg5[%c0_27, %c80], %22 {strides = array<i32>} : memref<16x144xf32, #tpu.memory_space<vmem>>, vector<4x16xf32>,
    %c0_28 = arith.constant 0 : index
    %c2_29 = arith.constant 2 : index
    %c0_30 = arith.constant 0 : index
    %c0_31 = arith.constant 0 : index
    %24 = vector.load %arg1[%c0_28, %c2_29, %c0_30, %c0_31] : memref<1x6x6x16xbf16, #tpu.memory_space<vmem>>, vector<1x1x4x16xbf16>
    %25 = vector.shape_cast %24 : vector<1x1x4x16xbf16> to vector<4x16xbf16>
    %26 = arith.extf %25 : vector<4x16xbf16> to vector<4x16xf32>
    %c0_32 = arith.constant 0 : index
    %c96 = arith.constant 96 : index
    %27 = vector.load %arg5[%c0_32, %c96] : memref<16x144xf32, #tpu.memory_space<vmem>>, vector<4x16xf32>
    tpu.vector_store %arg5[%c0_32, %c96], %26 {strides = array<i32>} : memref<16x144xf32, #tpu.memory_space<vmem>>, vector<4x16xf32>,
    %c0_33 = arith.constant 0 : index
    %c2_34 = arith.constant 2 : index
    %c1_35 = arith.constant 1 : index
    %c0_36 = arith.constant 0 : index
    %28 = vector.load %arg1[%c0_33, %c2_34, %c1_35, %c0_36] : memref<1x6x6x16xbf16, #tpu.memory_space<vmem>>, vector<1x1x4x16xbf16>
    %29 = vector.shape_cast %28 : vector<1x1x4x16xbf16> to vector<4x16xbf16>
    %30 = arith.extf %29 : vector<4x16xbf16> to vector<4x16xf32>
    %c0_37 = arith.constant 0 : index
    %c112 = arith.constant 112 : index
    %31 = vector.load %arg5[%c0_37, %c112] : memref<16x144xf32, #tpu.memory_space<vmem>>, vector<4x16xf32>
    tpu.vector_store %arg5[%c0_37, %c112], %30 {strides = array<i32>} : memref<16x144xf32, #tpu.memory_space<vmem>>, vector<4x16xf32>,
    %c0_38 = arith.constant 0 : index
    %c2_39 = arith.constant 2 : index
    %c2_40 = arith.constant 2 : index
    %c0_41 = arith.constant 0 : index
    %32 = vector.load %arg1[%c0_38, %c2_39, %c2_40, %c0_41] : memref<1x6x6x16xbf16, #tpu.memory_space<vmem>>, vector<1x1x4x16xbf16>
    %33 = vector.shape_cast %32 : vector<1x1x4x16xbf16> to vector<4x16xbf16>
    %34 = arith.extf %33 : vector<4x16xbf16> to vector<4x16xf32>
    %c0_42 = arith.constant 0 : index
    %c128 = arith.constant 128 : index
    %35 = vector.load %arg5[%c0_42, %c128] : memref<16x144xf32, #tpu.memory_space<vmem>>, vector<4x16xf32>
    tpu.vector_store %arg5[%c0_42, %c128], %34 {strides = array<i32>} : memref<16x144xf32, #tpu.memory_space<vmem>>, vector<4x16xf32>,
    %c0_43 = arith.constant 0 : index
    %c1_44 = arith.constant 1 : index
    %c0_45 = arith.constant 0 : index
    %c0_46 = arith.constant 0 : index
    %36 = vector.load %arg1[%c0_43, %c1_44, %c0_45, %c0_46] : memref<1x6x6x16xbf16, #tpu.memory_space<vmem>>, vector<1x1x4x16xbf16>
    %37 = vector.shape_cast %36 : vector<1x1x4x16xbf16> to vector<4x16xbf16>
    %38 = arith.extf %37 : vector<4x16xbf16> to vector<4x16xf32>
    %c4 = arith.constant 4 : index
    %c0_47 = arith.constant 0 : index
    %39 = vector.load %arg5[%c4, %c0_47] : memref<16x144xf32, #tpu.memory_space<vmem>>, vector<4x16xf32>
    tpu.vector_store %arg5[%c4, %c0_47], %38 {strides = array<i32>} : memref<16x144xf32, #tpu.memory_space<vmem>>, vector<4x16xf32>,
    %c0_48 = arith.constant 0 : index
    %c1_49 = arith.constant 1 : index
    %c1_50 = arith.constant 1 : index
    %c0_51 = arith.constant 0 : index
    %40 = vector.load %arg1[%c0_48, %c1_49, %c1_50, %c0_51] : memref<1x6x6x16xbf16, #tpu.memory_space<vmem>>, vector<1x1x4x16xbf16>
    %41 = vector.shape_cast %40 : vector<1x1x4x16xbf16> to vector<4x16xbf16>
    %42 = arith.extf %41 : vector<4x16xbf16> to vector<4x16xf32>
    %c4_52 = arith.constant 4 : index
    %c16_53 = arith.constant 16 : index
    %43 = vector.load %arg5[%c4_52, %c16_53] : memref<16x144xf32, #tpu.memory_space<vmem>>, vector<4x16xf32>
    tpu.vector_store %arg5[%c4_52, %c16_53], %42 {strides = array<i32>} : memref<16x144xf32, #tpu.memory_space<vmem>>, vector<4x16xf32>,
    %c0_54 = arith.constant 0 : index
    %c1_55 = arith.constant 1 : index
    %c2_56 = arith.constant 2 : index
    %c0_57 = arith.constant 0 : index
    %44 = vector.load %arg1[%c0_54, %c1_55, %c2_56, %c0_57] : memref<1x6x6x16xbf16, #tpu.memory_space<vmem>>, vector<1x1x4x16xbf16>
    %45 = vector.shape_cast %44 : vector<1x1x4x16xbf16> to vector<4x16xbf16>
    %46 = arith.extf %45 : vector<4x16xbf16> to vector<4x16xf32>
    %c4_58 = arith.constant 4 : index
    %c32_59 = arith.constant 32 : index
    %47 = vector.load %arg5[%c4_58, %c32_59] : memref<16x144xf32, #tpu.memory_space<vmem>>, vector<4x16xf32>
    tpu.vector_store %arg5[%c4_58, %c32_59], %46 {strides = array<i32>} : memref<16x144xf32, #tpu.memory_space<vmem>>, vector<4x16xf32>,
    %c0_60 = arith.constant 0 : index
    %c2_61 = arith.constant 2 : index
    %c0_62 = arith.constant 0 : index
    %c0_63 = arith.constant 0 : index
    %48 = vector.load %arg1[%c0_60, %c2_61, %c0_62, %c0_63] : memref<1x6x6x16xbf16, #tpu.memory_space<vmem>>, vector<1x1x4x16xbf16>
    %49 = vector.shape_cast %48 : vector<1x1x4x16xbf16> to vector<4x16xbf16>
    %50 = arith.extf %49 : vector<4x16xbf16> to vector<4x16xf32>
    %c4_64 = arith.constant 4 : index
    %c48_65 = arith.constant 48 : index
    %51 = vector.load %arg5[%c4_64, %c48_65] : memref<16x144xf32, #tpu.memory_space<vmem>>, vector<4x16xf32>
    tpu.vector_store %arg5[%c4_64, %c48_65], %50 {strides = array<i32>} : memref<16x144xf32, #tpu.memory_space<vmem>>, vector<4x16xf32>,
    %c0_66 = arith.constant 0 : index
    %c2_67 = arith.constant 2 : index
    %c1_68 = arith.constant 1 : index
    %c0_69 = arith.constant 0 : index
    %52 = vector.load %arg1[%c0_66, %c2_67, %c1_68, %c0_69] : memref<1x6x6x16xbf16, #tpu.memory_space<vmem>>, vector<1x1x4x16xbf16>
    %53 = vector.shape_cast %52 : vector<1x1x4x16xbf16> to vector<4x16xbf16>
    %54 = arith.extf %53 : vector<4x16xbf16> to vector<4x16xf32>
    %c4_70 = arith.constant 4 : index
    %c64_71 = arith.constant 64 : index
    %55 = vector.load %arg5[%c4_70, %c64_71] : memref<16x144xf32, #tpu.memory_space<vmem>>, vector<4x16xf32>
    tpu.vector_store %arg5[%c4_70, %c64_71], %54 {strides = array<i32>} : memref<16x144xf32, #tpu.memory_space<vmem>>, vector<4x16xf32>,
    %c0_72 = arith.constant 0 : index
    %c2_73 = arith.constant 2 : index
    %c2_74 = arith.constant 2 : index
    %c0_75 = arith.constant 0 : index
    %56 = vector.load %arg1[%c0_72, %c2_73, %c2_74, %c0_75] : memref<1x6x6x16xbf16, #tpu.memory_space<vmem>>, vector<1x1x4x16xbf16>
    %57 = vector.shape_cast %56 : vector<1x1x4x16xbf16> to vector<4x16xbf16>
    %58 = arith.extf %57 : vector<4x16xbf16> to vector<4x16xf32>
    %c4_76 = arith.constant 4 : index
    %c80_77 = arith.constant 80 : index
    %59 = vector.load %arg5[%c4_76, %c80_77] : memref<16x144xf32, #tpu.memory_space<vmem>>, vector<4x16xf32>
    tpu.vector_store %arg5[%c4_76, %c80_77], %58 {strides = array<i32>} : memref<16x144xf32, #tpu.memory_space<vmem>>, vector<4x16xf32>,
    %c0_78 = arith.constant 0 : index
    %c3 = arith.constant 3 : index
    %c0_79 = arith.constant 0 : index
    %c0_80 = arith.constant 0 : index
    %60 = vector.load %arg1[%c0_78, %c3, %c0_79, %c0_80] : memref<1x6x6x16xbf16, #tpu.memory_space<vmem>>, vector<1x1x4x16xbf16>
    %61 = vector.shape_cast %60 : vector<1x1x4x16xbf16> to vector<4x16xbf16>
    %62 = arith.extf %61 : vector<4x16xbf16> to vector<4x16xf32>
    %c4_81 = arith.constant 4 : index
    %c96_82 = arith.constant 96 : index
    %63 = vector.load %arg5[%c4_81, %c96_82] : memref<16x144xf32, #tpu.memory_space<vmem>>, vector<4x16xf32>
    tpu.vector_store %arg5[%c4_81, %c96_82], %62 {strides = array<i32>} : memref<16x144xf32, #tpu.memory_space<vmem>>, vector<4x16xf32>,
    %c0_83 = arith.constant 0 : index
    %c3_84 = arith.constant 3 : index
    %c1_85 = arith.constant 1 : index
    %c0_86 = arith.constant 0 : index
    %64 = vector.load %arg1[%c0_83, %c3_84, %c1_85, %c0_86] : memref<1x6x6x16xbf16, #tpu.memory_space<vmem>>, vector<1x1x4x16xbf16>
    %65 = vector.shape_cast %64 : vector<1x1x4x16xbf16> to vector<4x16xbf16>
    %66 = arith.extf %65 : vector<4x16xbf16> to vector<4x16xf32>
    %c4_87 = arith.constant 4 : index
    %c112_88 = arith.constant 112 : index
    %67 = vector.load %arg5[%c4_87, %c112_88] : memref<16x144xf32, #tpu.memory_space<vmem>>, vector<4x16xf32>
    tpu.vector_store %arg5[%c4_87, %c112_88], %66 {strides = array<i32>} : memref<16x144xf32, #tpu.memory_space<vmem>>, vector<4x16xf32>,
    %c0_89 = arith.constant 0 : index
    %c3_90 = arith.constant 3 : index
    %c2_91 = arith.constant 2 : index
    %c0_92 = arith.constant 0 : index
    %68 = vector.load %arg1[%c0_89, %c3_90, %c2_91, %c0_92] : memref<1x6x6x16xbf16, #tpu.memory_space<vmem>>, vector<1x1x4x16xbf16>
    %69 = vector.shape_cast %68 : vector<1x1x4x16xbf16> to vector<4x16xbf16>
    %70 = arith.extf %69 : vector<4x16xbf16> to vector<4x16xf32>
    %c4_93 = arith.constant 4 : index
    %c128_94 = arith.constant 128 : index
    %71 = vector.load %arg5[%c4_93, %c128_94] : memref<16x144xf32, #tpu.memory_space<vmem>>, vector<4x16xf32>
    tpu.vector_store %arg5[%c4_93, %c128_94], %70 {strides = array<i32>} : memref<16x144xf32, #tpu.memory_space<vmem>>, vector<4x16xf32>,
    %c0_95 = arith.constant 0 : index
    %c2_96 = arith.constant 2 : index
    %c0_97 = arith.constant 0 : index
    %c0_98 = arith.constant 0 : index
    %72 = vector.load %arg1[%c0_95, %c2_96, %c0_97, %c0_98] : memref<1x6x6x16xbf16, #tpu.memory_space<vmem>>, vector<1x1x4x16xbf16>
    %73 = vector.shape_cast %72 : vector<1x1x4x16xbf16> to vector<4x16xbf16>
    %74 = arith.extf %73 : vector<4x16xbf16> to vector<4x16xf32>
    %c8 = arith.constant 8 : index
    %c0_99 = arith.constant 0 : index
    %75 = vector.load %arg5[%c8, %c0_99] : memref<16x144xf32, #tpu.memory_space<vmem>>, vector<4x16xf32>
    tpu.vector_store %arg5[%c8, %c0_99], %74 {strides = array<i32>} : memref<16x144xf32, #tpu.memory_space<vmem>>, vector<4x16xf32>,
    %c0_100 = arith.constant 0 : index
    %c2_101 = arith.constant 2 : index
    %c1_102 = arith.constant 1 : index
    %c0_103 = arith.constant 0 : index
    %76 = vector.load %arg1[%c0_100, %c2_101, %c1_102, %c0_103] : memref<1x6x6x16xbf16, #tpu.memory_space<vmem>>, vector<1x1x4x16xbf16>
    %77 = vector.shape_cast %76 : vector<1x1x4x16xbf16> to vector<4x16xbf16>
    %78 = arith.extf %77 : vector<4x16xbf16> to vector<4x16xf32>
    %c8_104 = arith.constant 8 : index
    %c16_105 = arith.constant 16 : index
    %79 = vector.load %arg5[%c8_104, %c16_105] : memref<16x144xf32, #tpu.memory_space<vmem>>, vector<4x16xf32>
    tpu.vector_store %arg5[%c8_104, %c16_105], %78 {strides = array<i32>} : memref<16x144xf32, #tpu.memory_space<vmem>>, vector<4x16xf32>,
    %c0_106 = arith.constant 0 : index
    %c2_107 = arith.constant 2 : index
    %c2_108 = arith.constant 2 : index
    %c0_109 = arith.constant 0 : index
    %80 = vector.load %arg1[%c0_106, %c2_107, %c2_108, %c0_109] : memref<1x6x6x16xbf16, #tpu.memory_space<vmem>>, vector<1x1x4x16xbf16>
    %81 = vector.shape_cast %80 : vector<1x1x4x16xbf16> to vector<4x16xbf16>
    %82 = arith.extf %81 : vector<4x16xbf16> to vector<4x16xf32>
    %c8_110 = arith.constant 8 : index
    %c32_111 = arith.constant 32 : index
    %83 = vector.load %arg5[%c8_110, %c32_111] : memref<16x144xf32, #tpu.memory_space<vmem>>, vector<4x16xf32>
    tpu.vector_store %arg5[%c8_110, %c32_111], %82 {strides = array<i32>} : memref<16x144xf32, #tpu.memory_space<vmem>>, vector<4x16xf32>,
    %c0_112 = arith.constant 0 : index
    %c3_113 = arith.constant 3 : index
    %c0_114 = arith.constant 0 : index
    %c0_115 = arith.constant 0 : index
    %84 = vector.load %arg1[%c0_112, %c3_113, %c0_114, %c0_115] : memref<1x6x6x16xbf16, #tpu.memory_space<vmem>>, vector<1x1x4x16xbf16>
    %85 = vector.shape_cast %84 : vector<1x1x4x16xbf16> to vector<4x16xbf16>
    %86 = arith.extf %85 : vector<4x16xbf16> to vector<4x16xf32>
    %c8_116 = arith.constant 8 : index
    %c48_117 = arith.constant 48 : index
    %87 = vector.load %arg5[%c8_116, %c48_117] : memref<16x144xf32, #tpu.memory_space<vmem>>, vector<4x16xf32>
    tpu.vector_store %arg5[%c8_116, %c48_117], %86 {strides = array<i32>} : memref<16x144xf32, #tpu.memory_space<vmem>>, vector<4x16xf32>,
    %c0_118 = arith.constant 0 : index
    %c3_119 = arith.constant 3 : index
    %c1_120 = arith.constant 1 : index
    %c0_121 = arith.constant 0 : index
    %88 = vector.load %arg1[%c0_118, %c3_119, %c1_120, %c0_121] : memref<1x6x6x16xbf16, #tpu.memory_space<vmem>>, vector<1x1x4x16xbf16>
    %89 = vector.shape_cast %88 : vector<1x1x4x16xbf16> to vector<4x16xbf16>
    %90 = arith.extf %89 : vector<4x16xbf16> to vector<4x16xf32>
    %c8_122 = arith.constant 8 : index
    %c64_123 = arith.constant 64 : index
    %91 = vector.load %arg5[%c8_122, %c64_123] : memref<16x144xf32, #tpu.memory_space<vmem>>, vector<4x16xf32>
    tpu.vector_store %arg5[%c8_122, %c64_123], %90 {strides = array<i32>} : memref<16x144xf32, #tpu.memory_space<vmem>>, vector<4x16xf32>,
    %c0_124 = arith.constant 0 : index
    %c3_125 = arith.constant 3 : index
    %c2_126 = arith.constant 2 : index
    %c0_127 = arith.constant 0 : index
    %92 = vector.load %arg1[%c0_124, %c3_125, %c2_126, %c0_127] : memref<1x6x6x16xbf16, #tpu.memory_space<vmem>>, vector<1x1x4x16xbf16>
    %93 = vector.shape_cast %92 : vector<1x1x4x16xbf16> to vector<4x16xbf16>
    %94 = arith.extf %93 : vector<4x16xbf16> to vector<4x16xf32>
    %c8_128 = arith.constant 8 : index
    %c80_129 = arith.constant 80 : index
    %95 = vector.load %arg5[%c8_128, %c80_129] : memref<16x144xf32, #tpu.memory_space<vmem>>, vector<4x16xf32>
    tpu.vector_store %arg5[%c8_128, %c80_129], %94 {strides = array<i32>} : memref<16x144xf32, #tpu.memory_space<vmem>>, vector<4x16xf32>,
    %c0_130 = arith.constant 0 : index
    %c4_131 = arith.constant 4 : index
    %c0_132 = arith.constant 0 : index
    %c0_133 = arith.constant 0 : index
    %96 = vector.load %arg1[%c0_130, %c4_131, %c0_132, %c0_133] : memref<1x6x6x16xbf16, #tpu.memory_space<vmem>>, vector<1x1x4x16xbf16>
    %97 = vector.shape_cast %96 : vector<1x1x4x16xbf16> to vector<4x16xbf16>
    %98 = arith.extf %97 : vector<4x16xbf16> to vector<4x16xf32>
    %c8_134 = arith.constant 8 : index
    %c96_135 = arith.constant 96 : index
    %99 = vector.load %arg5[%c8_134, %c96_135] : memref<16x144xf32, #tpu.memory_space<vmem>>, vector<4x16xf32>
    tpu.vector_store %arg5[%c8_134, %c96_135], %98 {strides = array<i32>} : memref<16x144xf32, #tpu.memory_space<vmem>>, vector<4x16xf32>,
    %c0_136 = arith.constant 0 : index
    %c4_137 = arith.constant 4 : index
    %c1_138 = arith.constant 1 : index
    %c0_139 = arith.constant 0 : index
    %100 = vector.load %arg1[%c0_136, %c4_137, %c1_138, %c0_139] : memref<1x6x6x16xbf16, #tpu.memory_space<vmem>>, vector<1x1x4x16xbf16>
    %101 = vector.shape_cast %100 : vector<1x1x4x16xbf16> to vector<4x16xbf16>
    %102 = arith.extf %101 : vector<4x16xbf16> to vector<4x16xf32>
    %c8_140 = arith.constant 8 : index
    %c112_141 = arith.constant 112 : index
    %103 = vector.load %arg5[%c8_140, %c112_141] : memref<16x144xf32, #tpu.memory_space<vmem>>, vector<4x16xf32>
    tpu.vector_store %arg5[%c8_140, %c112_141], %102 {strides = array<i32>} : memref<16x144xf32, #tpu.memory_space<vmem>>, vector<4x16xf32>,
    %c0_142 = arith.constant 0 : index
    %c4_143 = arith.constant 4 : index
    %c2_144 = arith.constant 2 : index
    %c0_145 = arith.constant 0 : index
    %104 = vector.load %arg1[%c0_142, %c4_143, %c2_144, %c0_145] : memref<1x6x6x16xbf16, #tpu.memory_space<vmem>>, vector<1x1x4x16xbf16>
    %105 = vector.shape_cast %104 : vector<1x1x4x16xbf16> to vector<4x16xbf16>
    %106 = arith.extf %105 : vector<4x16xbf16> to vector<4x16xf32>
    %c8_146 = arith.constant 8 : index
    %c128_147 = arith.constant 128 : index
    %107 = vector.load %arg5[%c8_146, %c128_147] : memref<16x144xf32, #tpu.memory_space<vmem>>, vector<4x16xf32>
    tpu.vector_store %arg5[%c8_146, %c128_147], %106 {strides = array<i32>} : memref<16x144xf32, #tpu.memory_space<vmem>>, vector<4x16xf32>,
    %c0_148 = arith.constant 0 : index
    %c3_149 = arith.constant 3 : index
    %c0_150 = arith.constant 0 : index
    %c0_151 = arith.constant 0 : index
    %108 = vector.load %arg1[%c0_148, %c3_149, %c0_150, %c0_151] : memref<1x6x6x16xbf16, #tpu.memory_space<vmem>>, vector<1x1x4x16xbf16>
    %109 = vector.shape_cast %108 : vector<1x1x4x16xbf16> to vector<4x16xbf16>
    %110 = arith.extf %109 : vector<4x16xbf16> to vector<4x16xf32>
    %c12 = arith.constant 12 : index
    %c0_152 = arith.constant 0 : index
    %111 = vector.load %arg5[%c12, %c0_152] : memref<16x144xf32, #tpu.memory_space<vmem>>, vector<4x16xf32>
    tpu.vector_store %arg5[%c12, %c0_152], %110 {strides = array<i32>} : memref<16x144xf32, #tpu.memory_space<vmem>>, vector<4x16xf32>,
    %c0_153 = arith.constant 0 : index
    %c3_154 = arith.constant 3 : index
    %c1_155 = arith.constant 1 : index
    %c0_156 = arith.constant 0 : index
    %112 = vector.load %arg1[%c0_153, %c3_154, %c1_155, %c0_156] : memref<1x6x6x16xbf16, #tpu.memory_space<vmem>>, vector<1x1x4x16xbf16>
    %113 = vector.shape_cast %112 : vector<1x1x4x16xbf16> to vector<4x16xbf16>
    %114 = arith.extf %113 : vector<4x16xbf16> to vector<4x16xf32>
    %c12_157 = arith.constant 12 : index
    %c16_158 = arith.constant 16 : index
    %115 = vector.load %arg5[%c12_157, %c16_158] : memref<16x144xf32, #tpu.memory_space<vmem>>, vector<4x16xf32>
    tpu.vector_store %arg5[%c12_157, %c16_158], %114 {strides = array<i32>} : memref<16x144xf32, #tpu.memory_space<vmem>>, vector<4x16xf32>,
    %c0_159 = arith.constant 0 : index
    %c3_160 = arith.constant 3 : index
    %c2_161 = arith.constant 2 : index
    %c0_162 = arith.constant 0 : index
    %116 = vector.load %arg1[%c0_159, %c3_160, %c2_161, %c0_162] : memref<1x6x6x16xbf16, #tpu.memory_space<vmem>>, vector<1x1x4x16xbf16>
    %117 = vector.shape_cast %116 : vector<1x1x4x16xbf16> to vector<4x16xbf16>
    %118 = arith.extf %117 : vector<4x16xbf16> to vector<4x16xf32>
    %c12_163 = arith.constant 12 : index
    %c32_164 = arith.constant 32 : index
    %119 = vector.load %arg5[%c12_163, %c32_164] : memref<16x144xf32, #tpu.memory_space<vmem>>, vector<4x16xf32>
    tpu.vector_store %arg5[%c12_163, %c32_164], %118 {strides = array<i32>} : memref<16x144xf32, #tpu.memory_space<vmem>>, vector<4x16xf32>,
    %c0_165 = arith.constant 0 : index
    %c4_166 = arith.constant 4 : index
    %c0_167 = arith.constant 0 : index
    %c0_168 = arith.constant 0 : index
    %120 = vector.load %arg1[%c0_165, %c4_166, %c0_167, %c0_168] : memref<1x6x6x16xbf16, #tpu.memory_space<vmem>>, vector<1x1x4x16xbf16>
    %121 = vector.shape_cast %120 : vector<1x1x4x16xbf16> to vector<4x16xbf16>
    %122 = arith.extf %121 : vector<4x16xbf16> to vector<4x16xf32>
    %c12_169 = arith.constant 12 : index
    %c48_170 = arith.constant 48 : index
    %123 = vector.load %arg5[%c12_169, %c48_170] : memref<16x144xf32, #tpu.memory_space<vmem>>, vector<4x16xf32>
    tpu.vector_store %arg5[%c12_169, %c48_170], %122 {strides = array<i32>} : memref<16x144xf32, #tpu.memory_space<vmem>>, vector<4x16xf32>,
    %c0_171 = arith.constant 0 : index
    %c4_172 = arith.constant 4 : index
    %c1_173 = arith.constant 1 : index
    %c0_174 = arith.constant 0 : index
    %124 = vector.load %arg1[%c0_171, %c4_172, %c1_173, %c0_174] : memref<1x6x6x16xbf16, #tpu.memory_space<vmem>>, vector<1x1x4x16xbf16>
    %125 = vector.shape_cast %124 : vector<1x1x4x16xbf16> to vector<4x16xbf16>
    %126 = arith.extf %125 : vector<4x16xbf16> to vector<4x16xf32>
    %c12_175 = arith.constant 12 : index
    %c64_176 = arith.constant 64 : index
    %127 = vector.load %arg5[%c12_175, %c64_176] : memref<16x144xf32, #tpu.memory_space<vmem>>, vector<4x16xf32>
    tpu.vector_store %arg5[%c12_175, %c64_176], %126 {strides = array<i32>} : memref<16x144xf32, #tpu.memory_space<vmem>>, vector<4x16xf32>,
    %c0_177 = arith.constant 0 : index
    %c4_178 = arith.constant 4 : index
    %c2_179 = arith.constant 2 : index
    %c0_180 = arith.constant 0 : index
    %128 = vector.load %arg1[%c0_177, %c4_178, %c2_179, %c0_180] : memref<1x6x6x16xbf16, #tpu.memory_space<vmem>>, vector<1x1x4x16xbf16>
    %129 = vector.shape_cast %128 : vector<1x1x4x16xbf16> to vector<4x16xbf16>
    %130 = arith.extf %129 : vector<4x16xbf16> to vector<4x16xf32>
    %c12_181 = arith.constant 12 : index
    %c80_182 = arith.constant 80 : index
    %131 = vector.load %arg5[%c12_181, %c80_182] : memref<16x144xf32, #tpu.memory_space<vmem>>, vector<4x16xf32>
    tpu.vector_store %arg5[%c12_181, %c80_182], %130 {strides = array<i32>} : memref<16x144xf32, #tpu.memory_space<vmem>>, vector<4x16xf32>,
    %c0_183 = arith.constant 0 : index
    %c5 = arith.constant 5 : index
    %c0_184 = arith.constant 0 : index
    %c0_185 = arith.constant 0 : index
    %132 = vector.load %arg1[%c0_183, %c5, %c0_184, %c0_185] : memref<1x6x6x16xbf16, #tpu.memory_space<vmem>>, vector<1x1x4x16xbf16>
    %133 = vector.shape_cast %132 : vector<1x1x4x16xbf16> to vector<4x16xbf16>
    %134 = arith.extf %133 : vector<4x16xbf16> to vector<4x16xf32>
    %c12_186 = arith.constant 12 : index
    %c96_187 = arith.constant 96 : index
    %135 = vector.load %arg5[%c12_186, %c96_187] : memref<16x144xf32, #tpu.memory_space<vmem>>, vector<4x16xf32>
    tpu.vector_store %arg5[%c12_186, %c96_187], %134 {strides = array<i32>} : memref<16x144xf32, #tpu.memory_space<vmem>>, vector<4x16xf32>,
    %c0_188 = arith.constant 0 : index
    %c5_189 = arith.constant 5 : index
    %c1_190 = arith.constant 1 : index
    %c0_191 = arith.constant 0 : index
    %136 = vector.load %arg1[%c0_188, %c5_189, %c1_190, %c0_191] : memref<1x6x6x16xbf16, #tpu.memory_space<vmem>>, vector<1x1x4x16xbf16>
    %137 = vector.shape_cast %136 : vector<1x1x4x16xbf16> to vector<4x16xbf16>
    %138 = arith.extf %137 : vector<4x16xbf16> to vector<4x16xf32>
    %c12_192 = arith.constant 12 : index
    %c112_193 = arith.constant 112 : index
    %139 = vector.load %arg5[%c12_192, %c112_193] : memref<16x144xf32, #tpu.memory_space<vmem>>, vector<4x16xf32>
    tpu.vector_store %arg5[%c12_192, %c112_193], %138 {strides = array<i32>} : memref<16x144xf32, #tpu.memory_space<vmem>>, vector<4x16xf32>,
    %c0_194 = arith.constant 0 : index
    %c5_195 = arith.constant 5 : index
    %c2_196 = arith.constant 2 : index
    %c0_197 = arith.constant 0 : index
    %140 = vector.load %arg1[%c0_194, %c5_195, %c2_196, %c0_197] : memref<1x6x6x16xbf16, #tpu.memory_space<vmem>>, vector<1x1x4x16xbf16>
    %141 = vector.shape_cast %140 : vector<1x1x4x16xbf16> to vector<4x16xbf16>
    %142 = arith.extf %141 : vector<4x16xbf16> to vector<4x16xf32>
    %c12_198 = arith.constant 12 : index
    %c128_199 = arith.constant 128 : index
    %143 = vector.load %arg5[%c12_198, %c128_199] : memref<16x144xf32, #tpu.memory_space<vmem>>, vector<4x16xf32>
    tpu.vector_store %arg5[%c12_198, %c128_199], %142 {strides = array<i32>} : memref<16x144xf32, #tpu.memory_space<vmem>>, vector<4x16xf32>,
    %c0_200 = arith.constant 0 : index
    %c0_201 = arith.constant 0 : index
    %144 = vector.load %arg5[%c0_200, %c0_201] : memref<16x144xf32, #tpu.memory_space<vmem>>, vector<16x144xf32>
    %145 = arith.truncf %144 : vector<16x144xf32> to vector<16x144xbf16>
    %c0_202 = arith.constant 0 : index
    %c0_203 = arith.constant 0 : index
    %146 = vector.load %arg2[%c0_202, %c0_203] : memref<144x32xbf16, #tpu.memory_space<vmem>>, vector<144x32xbf16>
    %cst = arith.constant dense<0.000000e+00> : vector<16x32xf32>
    %147 = tpu.matmul %145, %146, %cst {dimension_numbers = #tpu.dot_dimension_numbers<[1], [0], [0], [1], [0, 0, 1, 1], [], []>} : vector<16x144xbf16>, vector<144x32xbf16>, vector<16x32xf32> -> vector<16x32xf32>
    %c0_204 = arith.constant 0 : index
    %c0_205 = arith.constant 0 : index
    %148 = vector.load %arg3[%c0_204, %c0_205] : memref<1x32xf32, #tpu.memory_space<vmem>>, vector<1x32xf32>
    %149 = vector.broadcast %148 : vector<1x32xf32> to vector<16x32xf32>
    %150 = arith.addf %147, %149 : vector<16x32xf32>
    %cst_206 = arith.constant 0.000000e+00 : f32
    %151 = vector.broadcast %cst_206 : f32 to vector<16x32xf32>
    %152 = arith.maximumf %150, %151 : vector<16x32xf32>
    %153 = arith.truncf %152 : vector<16x32xf32> to vector<16x32xbf16>
    %c0_207 = arith.constant 0 : index
    %c0_208 = arith.constant 0 : index
    %c0_209 = arith.constant 0 : index
    %154 = vector.load %arg4[%c0_207, %c0_208, %c0_209] : memref<1x16x32xbf16, #tpu.memory_space<vmem>>, vector<1x16x32xbf16>
    %155 = vector.shape_cast %154 : vector<1x16x32xbf16> to vector<16x32xbf16>
    %156 = vector.shape_cast %153 : vector<16x32xbf16> to vector<1x16x32xbf16>
    tpu.vector_store %arg4[%c0_207, %c0_208, %c0_209], %156 {strides = array<i32>} : memref<1x16x32xbf16, #tpu.memory_space<vmem>>, vector<1x16x32xbf16>,
    return
  }
  func.func @transform_0(%arg0: i32) -> (i32, i32, i32, i32) {
    %c0_i32 = arith.constant 0 : i32
    %c0_i32_0 = arith.constant 0 : i32
    %c0_i32_1 = arith.constant 0 : i32
    %c0_i32_2 = arith.constant 0 : i32
    return %arg0, %c0_i32, %c0_i32_0, %c0_i32_1 : i32, i32, i32, i32
  }
  func.func @transform_1(%arg0: i32) -> (i32, i32) {
    %c0_i32 = arith.constant 0 : i32
    %c0_i32_0 = arith.constant 0 : i32
    %c0_i32_1 = arith.constant 0 : i32
    return %c0_i32, %c0_i32_0 : i32, i32
  }
  func.func @transform_2(%arg0: i32) -> (i32, i32) {
    %c0_i32 = arith.constant 0 : i32
    %c0_i32_0 = arith.constant 0 : i32
    %c0_i32_1 = arith.constant 0 : i32
    return %c0_i32, %c0_i32_0 : i32, i32
  }
  func.func @transform_3(%arg0: i32) -> (i32, i32, i32) {
    %c0_i32 = arith.constant 0 : i32
    %c0_i32_0 = arith.constant 0 : i32
    %c0_i32_1 = arith.constant 0 : i32
    return %arg0, %c0_i32, %c0_i32_0 : i32, i32, i32
  }
}

module attributes {stable_mosaic.version = 11 : i64} {
  func.func @_conv_im2col_kernel(%arg0: i32, %arg1: memref<1x10x10x8xbf16, #tpu.memory_space<vmem>>, %arg2: memref<72x4xbf16, #tpu.memory_space<vmem>>, %arg3: memref<1x4xf32, #tpu.memory_space<vmem>>, %arg4: memref<1x64x4xf32, #tpu.memory_space<vmem>>, %arg5: memref<64x72xf32, #tpu.memory_space<vmem>>) attributes {dimension_semantics = [#tpu.dimension_semantics<parallel>], iteration_bounds = array<i64: 6>, scalar_prefetch = 0 : i64, scratch_operands = 1 : i64, tpu.core_type = #tpu.core_type<tc>, window_params = [{transform_indices = @transform_0, window_bounds = array<i64: 1, 10, 10, 8>}, {pipeline_mode = #tpu.pipeline_mode<synchronous>, transform_indices = @transform_1, window_bounds = array<i64: 72, 4>}, {pipeline_mode = #tpu.pipeline_mode<synchronous>, transform_indices = @transform_2, window_bounds = array<i64: 1, 4>}, {transform_indices = @transform_3, window_bounds = array<i64: 1, 64, 4>}]} {
    %c0 = arith.constant 0 : index
    %c0_0 = arith.constant 0 : index
    %c0_1 = arith.constant 0 : index
    %c0_2 = arith.constant 0 : index
    %0 = vector.load %arg1[%c0, %c0_0, %c0_1, %c0_2] : memref<1x10x10x8xbf16, #tpu.memory_space<vmem>>, vector<1x1x8x8xbf16>
    %1 = vector.shape_cast %0 : vector<1x1x8x8xbf16> to vector<8x8xbf16>
    %2 = arith.extf %1 : vector<8x8xbf16> to vector<8x8xf32>
    %c0_3 = arith.constant 0 : index
    %c0_4 = arith.constant 0 : index
    %3 = vector.load %arg5[%c0_3, %c0_4] : memref<64x72xf32, #tpu.memory_space<vmem>>, vector<8x8xf32>
    tpu.vector_store %arg5[%c0_3, %c0_4], %2 {strides = array<i32>} : memref<64x72xf32, #tpu.memory_space<vmem>>, vector<8x8xf32>,
    %c0_5 = arith.constant 0 : index
    %c0_6 = arith.constant 0 : index
    %c1 = arith.constant 1 : index
    %c0_7 = arith.constant 0 : index
    %4 = vector.load %arg1[%c0_5, %c0_6, %c1, %c0_7] : memref<1x10x10x8xbf16, #tpu.memory_space<vmem>>, vector<1x1x8x8xbf16>
    %5 = vector.shape_cast %4 : vector<1x1x8x8xbf16> to vector<8x8xbf16>
    %6 = arith.extf %5 : vector<8x8xbf16> to vector<8x8xf32>
    %c0_8 = arith.constant 0 : index
    %c8 = arith.constant 8 : index
    %7 = vector.load %arg5[%c0_8, %c8] : memref<64x72xf32, #tpu.memory_space<vmem>>, vector<8x8xf32>
    tpu.vector_store %arg5[%c0_8, %c8], %6 {strides = array<i32>} : memref<64x72xf32, #tpu.memory_space<vmem>>, vector<8x8xf32>,
    %c0_9 = arith.constant 0 : index
    %c0_10 = arith.constant 0 : index
    %c2 = arith.constant 2 : index
    %c0_11 = arith.constant 0 : index
    %8 = vector.load %arg1[%c0_9, %c0_10, %c2, %c0_11] : memref<1x10x10x8xbf16, #tpu.memory_space<vmem>>, vector<1x1x8x8xbf16>
    %9 = vector.shape_cast %8 : vector<1x1x8x8xbf16> to vector<8x8xbf16>
    %10 = arith.extf %9 : vector<8x8xbf16> to vector<8x8xf32>
    %c0_12 = arith.constant 0 : index
    %c16 = arith.constant 16 : index
    %11 = vector.load %arg5[%c0_12, %c16] : memref<64x72xf32, #tpu.memory_space<vmem>>, vector<8x8xf32>
    tpu.vector_store %arg5[%c0_12, %c16], %10 {strides = array<i32>} : memref<64x72xf32, #tpu.memory_space<vmem>>, vector<8x8xf32>,
    %c0_13 = arith.constant 0 : index
    %c1_14 = arith.constant 1 : index
    %c0_15 = arith.constant 0 : index
    %c0_16 = arith.constant 0 : index
    %12 = vector.load %arg1[%c0_13, %c1_14, %c0_15, %c0_16] : memref<1x10x10x8xbf16, #tpu.memory_space<vmem>>, vector<1x1x8x8xbf16>
    %13 = vector.shape_cast %12 : vector<1x1x8x8xbf16> to vector<8x8xbf16>
    %14 = arith.extf %13 : vector<8x8xbf16> to vector<8x8xf32>
    %c0_17 = arith.constant 0 : index
    %c24 = arith.constant 24 : index
    %15 = vector.load %arg5[%c0_17, %c24] : memref<64x72xf32, #tpu.memory_space<vmem>>, vector<8x8xf32>
    tpu.vector_store %arg5[%c0_17, %c24], %14 {strides = array<i32>} : memref<64x72xf32, #tpu.memory_space<vmem>>, vector<8x8xf32>,
    %c0_18 = arith.constant 0 : index
    %c1_19 = arith.constant 1 : index
    %c1_20 = arith.constant 1 : index
    %c0_21 = arith.constant 0 : index
    %16 = vector.load %arg1[%c0_18, %c1_19, %c1_20, %c0_21] : memref<1x10x10x8xbf16, #tpu.memory_space<vmem>>, vector<1x1x8x8xbf16>
    %17 = vector.shape_cast %16 : vector<1x1x8x8xbf16> to vector<8x8xbf16>
    %18 = arith.extf %17 : vector<8x8xbf16> to vector<8x8xf32>
    %c0_22 = arith.constant 0 : index
    %c32 = arith.constant 32 : index
    %19 = vector.load %arg5[%c0_22, %c32] : memref<64x72xf32, #tpu.memory_space<vmem>>, vector<8x8xf32>
    tpu.vector_store %arg5[%c0_22, %c32], %18 {strides = array<i32>} : memref<64x72xf32, #tpu.memory_space<vmem>>, vector<8x8xf32>,
    %c0_23 = arith.constant 0 : index
    %c1_24 = arith.constant 1 : index
    %c2_25 = arith.constant 2 : index
    %c0_26 = arith.constant 0 : index
    %20 = vector.load %arg1[%c0_23, %c1_24, %c2_25, %c0_26] : memref<1x10x10x8xbf16, #tpu.memory_space<vmem>>, vector<1x1x8x8xbf16>
    %21 = vector.shape_cast %20 : vector<1x1x8x8xbf16> to vector<8x8xbf16>
    %22 = arith.extf %21 : vector<8x8xbf16> to vector<8x8xf32>
    %c0_27 = arith.constant 0 : index
    %c40 = arith.constant 40 : index
    %23 = vector.load %arg5[%c0_27, %c40] : memref<64x72xf32, #tpu.memory_space<vmem>>, vector<8x8xf32>
    tpu.vector_store %arg5[%c0_27, %c40], %22 {strides = array<i32>} : memref<64x72xf32, #tpu.memory_space<vmem>>, vector<8x8xf32>,
    %c0_28 = arith.constant 0 : index
    %c2_29 = arith.constant 2 : index
    %c0_30 = arith.constant 0 : index
    %c0_31 = arith.constant 0 : index
    %24 = vector.load %arg1[%c0_28, %c2_29, %c0_30, %c0_31] : memref<1x10x10x8xbf16, #tpu.memory_space<vmem>>, vector<1x1x8x8xbf16>
    %25 = vector.shape_cast %24 : vector<1x1x8x8xbf16> to vector<8x8xbf16>
    %26 = arith.extf %25 : vector<8x8xbf16> to vector<8x8xf32>
    %c0_32 = arith.constant 0 : index
    %c48 = arith.constant 48 : index
    %27 = vector.load %arg5[%c0_32, %c48] : memref<64x72xf32, #tpu.memory_space<vmem>>, vector<8x8xf32>
    tpu.vector_store %arg5[%c0_32, %c48], %26 {strides = array<i32>} : memref<64x72xf32, #tpu.memory_space<vmem>>, vector<8x8xf32>,
    %c0_33 = arith.constant 0 : index
    %c2_34 = arith.constant 2 : index
    %c1_35 = arith.constant 1 : index
    %c0_36 = arith.constant 0 : index
    %28 = vector.load %arg1[%c0_33, %c2_34, %c1_35, %c0_36] : memref<1x10x10x8xbf16, #tpu.memory_space<vmem>>, vector<1x1x8x8xbf16>
    %29 = vector.shape_cast %28 : vector<1x1x8x8xbf16> to vector<8x8xbf16>
    %30 = arith.extf %29 : vector<8x8xbf16> to vector<8x8xf32>
    %c0_37 = arith.constant 0 : index
    %c56 = arith.constant 56 : index
    %31 = vector.load %arg5[%c0_37, %c56] : memref<64x72xf32, #tpu.memory_space<vmem>>, vector<8x8xf32>
    tpu.vector_store %arg5[%c0_37, %c56], %30 {strides = array<i32>} : memref<64x72xf32, #tpu.memory_space<vmem>>, vector<8x8xf32>,
    %c0_38 = arith.constant 0 : index
    %c2_39 = arith.constant 2 : index
    %c2_40 = arith.constant 2 : index
    %c0_41 = arith.constant 0 : index
    %32 = vector.load %arg1[%c0_38, %c2_39, %c2_40, %c0_41] : memref<1x10x10x8xbf16, #tpu.memory_space<vmem>>, vector<1x1x8x8xbf16>
    %33 = vector.shape_cast %32 : vector<1x1x8x8xbf16> to vector<8x8xbf16>
    %34 = arith.extf %33 : vector<8x8xbf16> to vector<8x8xf32>
    %c0_42 = arith.constant 0 : index
    %c64 = arith.constant 64 : index
    %35 = vector.load %arg5[%c0_42, %c64] : memref<64x72xf32, #tpu.memory_space<vmem>>, vector<8x8xf32>
    tpu.vector_store %arg5[%c0_42, %c64], %34 {strides = array<i32>} : memref<64x72xf32, #tpu.memory_space<vmem>>, vector<8x8xf32>,
    %c0_43 = arith.constant 0 : index
    %c1_44 = arith.constant 1 : index
    %c0_45 = arith.constant 0 : index
    %c0_46 = arith.constant 0 : index
    %36 = vector.load %arg1[%c0_43, %c1_44, %c0_45, %c0_46] : memref<1x10x10x8xbf16, #tpu.memory_space<vmem>>, vector<1x1x8x8xbf16>
    %37 = vector.shape_cast %36 : vector<1x1x8x8xbf16> to vector<8x8xbf16>
    %38 = arith.extf %37 : vector<8x8xbf16> to vector<8x8xf32>
    %c8_47 = arith.constant 8 : index
    %c0_48 = arith.constant 0 : index
    %39 = vector.load %arg5[%c8_47, %c0_48] : memref<64x72xf32, #tpu.memory_space<vmem>>, vector<8x8xf32>
    tpu.vector_store %arg5[%c8_47, %c0_48], %38 {strides = array<i32>} : memref<64x72xf32, #tpu.memory_space<vmem>>, vector<8x8xf32>,
    %c0_49 = arith.constant 0 : index
    %c1_50 = arith.constant 1 : index
    %c1_51 = arith.constant 1 : index
    %c0_52 = arith.constant 0 : index
    %40 = vector.load %arg1[%c0_49, %c1_50, %c1_51, %c0_52] : memref<1x10x10x8xbf16, #tpu.memory_space<vmem>>, vector<1x1x8x8xbf16>
    %41 = vector.shape_cast %40 : vector<1x1x8x8xbf16> to vector<8x8xbf16>
    %42 = arith.extf %41 : vector<8x8xbf16> to vector<8x8xf32>
    %c8_53 = arith.constant 8 : index
    %c8_54 = arith.constant 8 : index
    %43 = vector.load %arg5[%c8_53, %c8_54] : memref<64x72xf32, #tpu.memory_space<vmem>>, vector<8x8xf32>
    tpu.vector_store %arg5[%c8_53, %c8_54], %42 {strides = array<i32>} : memref<64x72xf32, #tpu.memory_space<vmem>>, vector<8x8xf32>,
    %c0_55 = arith.constant 0 : index
    %c1_56 = arith.constant 1 : index
    %c2_57 = arith.constant 2 : index
    %c0_58 = arith.constant 0 : index
    %44 = vector.load %arg1[%c0_55, %c1_56, %c2_57, %c0_58] : memref<1x10x10x8xbf16, #tpu.memory_space<vmem>>, vector<1x1x8x8xbf16>
    %45 = vector.shape_cast %44 : vector<1x1x8x8xbf16> to vector<8x8xbf16>
    %46 = arith.extf %45 : vector<8x8xbf16> to vector<8x8xf32>
    %c8_59 = arith.constant 8 : index
    %c16_60 = arith.constant 16 : index
    %47 = vector.load %arg5[%c8_59, %c16_60] : memref<64x72xf32, #tpu.memory_space<vmem>>, vector<8x8xf32>
    tpu.vector_store %arg5[%c8_59, %c16_60], %46 {strides = array<i32>} : memref<64x72xf32, #tpu.memory_space<vmem>>, vector<8x8xf32>,
    %c0_61 = arith.constant 0 : index
    %c2_62 = arith.constant 2 : index
    %c0_63 = arith.constant 0 : index
    %c0_64 = arith.constant 0 : index
    %48 = vector.load %arg1[%c0_61, %c2_62, %c0_63, %c0_64] : memref<1x10x10x8xbf16, #tpu.memory_space<vmem>>, vector<1x1x8x8xbf16>
    %49 = vector.shape_cast %48 : vector<1x1x8x8xbf16> to vector<8x8xbf16>
    %50 = arith.extf %49 : vector<8x8xbf16> to vector<8x8xf32>
    %c8_65 = arith.constant 8 : index
    %c24_66 = arith.constant 24 : index
    %51 = vector.load %arg5[%c8_65, %c24_66] : memref<64x72xf32, #tpu.memory_space<vmem>>, vector<8x8xf32>
    tpu.vector_store %arg5[%c8_65, %c24_66], %50 {strides = array<i32>} : memref<64x72xf32, #tpu.memory_space<vmem>>, vector<8x8xf32>,
    %c0_67 = arith.constant 0 : index
    %c2_68 = arith.constant 2 : index
    %c1_69 = arith.constant 1 : index
    %c0_70 = arith.constant 0 : index
    %52 = vector.load %arg1[%c0_67, %c2_68, %c1_69, %c0_70] : memref<1x10x10x8xbf16, #tpu.memory_space<vmem>>, vector<1x1x8x8xbf16>
    %53 = vector.shape_cast %52 : vector<1x1x8x8xbf16> to vector<8x8xbf16>
    %54 = arith.extf %53 : vector<8x8xbf16> to vector<8x8xf32>
    %c8_71 = arith.constant 8 : index
    %c32_72 = arith.constant 32 : index
    %55 = vector.load %arg5[%c8_71, %c32_72] : memref<64x72xf32, #tpu.memory_space<vmem>>, vector<8x8xf32>
    tpu.vector_store %arg5[%c8_71, %c32_72], %54 {strides = array<i32>} : memref<64x72xf32, #tpu.memory_space<vmem>>, vector<8x8xf32>,
    %c0_73 = arith.constant 0 : index
    %c2_74 = arith.constant 2 : index
    %c2_75 = arith.constant 2 : index
    %c0_76 = arith.constant 0 : index
    %56 = vector.load %arg1[%c0_73, %c2_74, %c2_75, %c0_76] : memref<1x10x10x8xbf16, #tpu.memory_space<vmem>>, vector<1x1x8x8xbf16>
    %57 = vector.shape_cast %56 : vector<1x1x8x8xbf16> to vector<8x8xbf16>
    %58 = arith.extf %57 : vector<8x8xbf16> to vector<8x8xf32>
    %c8_77 = arith.constant 8 : index
    %c40_78 = arith.constant 40 : index
    %59 = vector.load %arg5[%c8_77, %c40_78] : memref<64x72xf32, #tpu.memory_space<vmem>>, vector<8x8xf32>
    tpu.vector_store %arg5[%c8_77, %c40_78], %58 {strides = array<i32>} : memref<64x72xf32, #tpu.memory_space<vmem>>, vector<8x8xf32>,
    %c0_79 = arith.constant 0 : index
    %c3 = arith.constant 3 : index
    %c0_80 = arith.constant 0 : index
    %c0_81 = arith.constant 0 : index
    %60 = vector.load %arg1[%c0_79, %c3, %c0_80, %c0_81] : memref<1x10x10x8xbf16, #tpu.memory_space<vmem>>, vector<1x1x8x8xbf16>
    %61 = vector.shape_cast %60 : vector<1x1x8x8xbf16> to vector<8x8xbf16>
    %62 = arith.extf %61 : vector<8x8xbf16> to vector<8x8xf32>
    %c8_82 = arith.constant 8 : index
    %c48_83 = arith.constant 48 : index
    %63 = vector.load %arg5[%c8_82, %c48_83] : memref<64x72xf32, #tpu.memory_space<vmem>>, vector<8x8xf32>
    tpu.vector_store %arg5[%c8_82, %c48_83], %62 {strides = array<i32>} : memref<64x72xf32, #tpu.memory_space<vmem>>, vector<8x8xf32>,
    %c0_84 = arith.constant 0 : index
    %c3_85 = arith.constant 3 : index
    %c1_86 = arith.constant 1 : index
    %c0_87 = arith.constant 0 : index
    %64 = vector.load %arg1[%c0_84, %c3_85, %c1_86, %c0_87] : memref<1x10x10x8xbf16, #tpu.memory_space<vmem>>, vector<1x1x8x8xbf16>
    %65 = vector.shape_cast %64 : vector<1x1x8x8xbf16> to vector<8x8xbf16>
    %66 = arith.extf %65 : vector<8x8xbf16> to vector<8x8xf32>
    %c8_88 = arith.constant 8 : index
    %c56_89 = arith.constant 56 : index
    %67 = vector.load %arg5[%c8_88, %c56_89] : memref<64x72xf32, #tpu.memory_space<vmem>>, vector<8x8xf32>
    tpu.vector_store %arg5[%c8_88, %c56_89], %66 {strides = array<i32>} : memref<64x72xf32, #tpu.memory_space<vmem>>, vector<8x8xf32>,
    %c0_90 = arith.constant 0 : index
    %c3_91 = arith.constant 3 : index
    %c2_92 = arith.constant 2 : index
    %c0_93 = arith.constant 0 : index
    %68 = vector.load %arg1[%c0_90, %c3_91, %c2_92, %c0_93] : memref<1x10x10x8xbf16, #tpu.memory_space<vmem>>, vector<1x1x8x8xbf16>
    %69 = vector.shape_cast %68 : vector<1x1x8x8xbf16> to vector<8x8xbf16>
    %70 = arith.extf %69 : vector<8x8xbf16> to vector<8x8xf32>
    %c8_94 = arith.constant 8 : index
    %c64_95 = arith.constant 64 : index
    %71 = vector.load %arg5[%c8_94, %c64_95] : memref<64x72xf32, #tpu.memory_space<vmem>>, vector<8x8xf32>
    tpu.vector_store %arg5[%c8_94, %c64_95], %70 {strides = array<i32>} : memref<64x72xf32, #tpu.memory_space<vmem>>, vector<8x8xf32>,
    %c0_96 = arith.constant 0 : index
    %c2_97 = arith.constant 2 : index
    %c0_98 = arith.constant 0 : index
    %c0_99 = arith.constant 0 : index
    %72 = vector.load %arg1[%c0_96, %c2_97, %c0_98, %c0_99] : memref<1x10x10x8xbf16, #tpu.memory_space<vmem>>, vector<1x1x8x8xbf16>
    %73 = vector.shape_cast %72 : vector<1x1x8x8xbf16> to vector<8x8xbf16>
    %74 = arith.extf %73 : vector<8x8xbf16> to vector<8x8xf32>
    %c16_100 = arith.constant 16 : index
    %c0_101 = arith.constant 0 : index
    %75 = vector.load %arg5[%c16_100, %c0_101] : memref<64x72xf32, #tpu.memory_space<vmem>>, vector<8x8xf32>
    tpu.vector_store %arg5[%c16_100, %c0_101], %74 {strides = array<i32>} : memref<64x72xf32, #tpu.memory_space<vmem>>, vector<8x8xf32>,
    %c0_102 = arith.constant 0 : index
    %c2_103 = arith.constant 2 : index
    %c1_104 = arith.constant 1 : index
    %c0_105 = arith.constant 0 : index
    %76 = vector.load %arg1[%c0_102, %c2_103, %c1_104, %c0_105] : memref<1x10x10x8xbf16, #tpu.memory_space<vmem>>, vector<1x1x8x8xbf16>
    %77 = vector.shape_cast %76 : vector<1x1x8x8xbf16> to vector<8x8xbf16>
    %78 = arith.extf %77 : vector<8x8xbf16> to vector<8x8xf32>
    %c16_106 = arith.constant 16 : index
    %c8_107 = arith.constant 8 : index
    %79 = vector.load %arg5[%c16_106, %c8_107] : memref<64x72xf32, #tpu.memory_space<vmem>>, vector<8x8xf32>
    tpu.vector_store %arg5[%c16_106, %c8_107], %78 {strides = array<i32>} : memref<64x72xf32, #tpu.memory_space<vmem>>, vector<8x8xf32>,
    %c0_108 = arith.constant 0 : index
    %c2_109 = arith.constant 2 : index
    %c2_110 = arith.constant 2 : index
    %c0_111 = arith.constant 0 : index
    %80 = vector.load %arg1[%c0_108, %c2_109, %c2_110, %c0_111] : memref<1x10x10x8xbf16, #tpu.memory_space<vmem>>, vector<1x1x8x8xbf16>
    %81 = vector.shape_cast %80 : vector<1x1x8x8xbf16> to vector<8x8xbf16>
    %82 = arith.extf %81 : vector<8x8xbf16> to vector<8x8xf32>
    %c16_112 = arith.constant 16 : index
    %c16_113 = arith.constant 16 : index
    %83 = vector.load %arg5[%c16_112, %c16_113] : memref<64x72xf32, #tpu.memory_space<vmem>>, vector<8x8xf32>
    tpu.vector_store %arg5[%c16_112, %c16_113], %82 {strides = array<i32>} : memref<64x72xf32, #tpu.memory_space<vmem>>, vector<8x8xf32>,
    %c0_114 = arith.constant 0 : index
    %c3_115 = arith.constant 3 : index
    %c0_116 = arith.constant 0 : index
    %c0_117 = arith.constant 0 : index
    %84 = vector.load %arg1[%c0_114, %c3_115, %c0_116, %c0_117] : memref<1x10x10x8xbf16, #tpu.memory_space<vmem>>, vector<1x1x8x8xbf16>
    %85 = vector.shape_cast %84 : vector<1x1x8x8xbf16> to vector<8x8xbf16>
    %86 = arith.extf %85 : vector<8x8xbf16> to vector<8x8xf32>
    %c16_118 = arith.constant 16 : index
    %c24_119 = arith.constant 24 : index
    %87 = vector.load %arg5[%c16_118, %c24_119] : memref<64x72xf32, #tpu.memory_space<vmem>>, vector<8x8xf32>
    tpu.vector_store %arg5[%c16_118, %c24_119], %86 {strides = array<i32>} : memref<64x72xf32, #tpu.memory_space<vmem>>, vector<8x8xf32>,
    %c0_120 = arith.constant 0 : index
    %c3_121 = arith.constant 3 : index
    %c1_122 = arith.constant 1 : index
    %c0_123 = arith.constant 0 : index
    %88 = vector.load %arg1[%c0_120, %c3_121, %c1_122, %c0_123] : memref<1x10x10x8xbf16, #tpu.memory_space<vmem>>, vector<1x1x8x8xbf16>
    %89 = vector.shape_cast %88 : vector<1x1x8x8xbf16> to vector<8x8xbf16>
    %90 = arith.extf %89 : vector<8x8xbf16> to vector<8x8xf32>
    %c16_124 = arith.constant 16 : index
    %c32_125 = arith.constant 32 : index
    %91 = vector.load %arg5[%c16_124, %c32_125] : memref<64x72xf32, #tpu.memory_space<vmem>>, vector<8x8xf32>
    tpu.vector_store %arg5[%c16_124, %c32_125], %90 {strides = array<i32>} : memref<64x72xf32, #tpu.memory_space<vmem>>, vector<8x8xf32>,
    %c0_126 = arith.constant 0 : index
    %c3_127 = arith.constant 3 : index
    %c2_128 = arith.constant 2 : index
    %c0_129 = arith.constant 0 : index
    %92 = vector.load %arg1[%c0_126, %c3_127, %c2_128, %c0_129] : memref<1x10x10x8xbf16, #tpu.memory_space<vmem>>, vector<1x1x8x8xbf16>
    %93 = vector.shape_cast %92 : vector<1x1x8x8xbf16> to vector<8x8xbf16>
    %94 = arith.extf %93 : vector<8x8xbf16> to vector<8x8xf32>
    %c16_130 = arith.constant 16 : index
    %c40_131 = arith.constant 40 : index
    %95 = vector.load %arg5[%c16_130, %c40_131] : memref<64x72xf32, #tpu.memory_space<vmem>>, vector<8x8xf32>
    tpu.vector_store %arg5[%c16_130, %c40_131], %94 {strides = array<i32>} : memref<64x72xf32, #tpu.memory_space<vmem>>, vector<8x8xf32>,
    %c0_132 = arith.constant 0 : index
    %c4 = arith.constant 4 : index
    %c0_133 = arith.constant 0 : index
    %c0_134 = arith.constant 0 : index
    %96 = vector.load %arg1[%c0_132, %c4, %c0_133, %c0_134] : memref<1x10x10x8xbf16, #tpu.memory_space<vmem>>, vector<1x1x8x8xbf16>
    %97 = vector.shape_cast %96 : vector<1x1x8x8xbf16> to vector<8x8xbf16>
    %98 = arith.extf %97 : vector<8x8xbf16> to vector<8x8xf32>
    %c16_135 = arith.constant 16 : index
    %c48_136 = arith.constant 48 : index
    %99 = vector.load %arg5[%c16_135, %c48_136] : memref<64x72xf32, #tpu.memory_space<vmem>>, vector<8x8xf32>
    tpu.vector_store %arg5[%c16_135, %c48_136], %98 {strides = array<i32>} : memref<64x72xf32, #tpu.memory_space<vmem>>, vector<8x8xf32>,
    %c0_137 = arith.constant 0 : index
    %c4_138 = arith.constant 4 : index
    %c1_139 = arith.constant 1 : index
    %c0_140 = arith.constant 0 : index
    %100 = vector.load %arg1[%c0_137, %c4_138, %c1_139, %c0_140] : memref<1x10x10x8xbf16, #tpu.memory_space<vmem>>, vector<1x1x8x8xbf16>
    %101 = vector.shape_cast %100 : vector<1x1x8x8xbf16> to vector<8x8xbf16>
    %102 = arith.extf %101 : vector<8x8xbf16> to vector<8x8xf32>
    %c16_141 = arith.constant 16 : index
    %c56_142 = arith.constant 56 : index
    %103 = vector.load %arg5[%c16_141, %c56_142] : memref<64x72xf32, #tpu.memory_space<vmem>>, vector<8x8xf32>
    tpu.vector_store %arg5[%c16_141, %c56_142], %102 {strides = array<i32>} : memref<64x72xf32, #tpu.memory_space<vmem>>, vector<8x8xf32>,
    %c0_143 = arith.constant 0 : index
    %c4_144 = arith.constant 4 : index
    %c2_145 = arith.constant 2 : index
    %c0_146 = arith.constant 0 : index
    %104 = vector.load %arg1[%c0_143, %c4_144, %c2_145, %c0_146] : memref<1x10x10x8xbf16, #tpu.memory_space<vmem>>, vector<1x1x8x8xbf16>
    %105 = vector.shape_cast %104 : vector<1x1x8x8xbf16> to vector<8x8xbf16>
    %106 = arith.extf %105 : vector<8x8xbf16> to vector<8x8xf32>
    %c16_147 = arith.constant 16 : index
    %c64_148 = arith.constant 64 : index
    %107 = vector.load %arg5[%c16_147, %c64_148] : memref<64x72xf32, #tpu.memory_space<vmem>>, vector<8x8xf32>
    tpu.vector_store %arg5[%c16_147, %c64_148], %106 {strides = array<i32>} : memref<64x72xf32, #tpu.memory_space<vmem>>, vector<8x8xf32>,
    %c0_149 = arith.constant 0 : index
    %c3_150 = arith.constant 3 : index
    %c0_151 = arith.constant 0 : index
    %c0_152 = arith.constant 0 : index
    %108 = vector.load %arg1[%c0_149, %c3_150, %c0_151, %c0_152] : memref<1x10x10x8xbf16, #tpu.memory_space<vmem>>, vector<1x1x8x8xbf16>
    %109 = vector.shape_cast %108 : vector<1x1x8x8xbf16> to vector<8x8xbf16>
    %110 = arith.extf %109 : vector<8x8xbf16> to vector<8x8xf32>
    %c24_153 = arith.constant 24 : index
    %c0_154 = arith.constant 0 : index
    %111 = vector.load %arg5[%c24_153, %c0_154] : memref<64x72xf32, #tpu.memory_space<vmem>>, vector<8x8xf32>
    tpu.vector_store %arg5[%c24_153, %c0_154], %110 {strides = array<i32>} : memref<64x72xf32, #tpu.memory_space<vmem>>, vector<8x8xf32>,
    %c0_155 = arith.constant 0 : index
    %c3_156 = arith.constant 3 : index
    %c1_157 = arith.constant 1 : index
    %c0_158 = arith.constant 0 : index
    %112 = vector.load %arg1[%c0_155, %c3_156, %c1_157, %c0_158] : memref<1x10x10x8xbf16, #tpu.memory_space<vmem>>, vector<1x1x8x8xbf16>
    %113 = vector.shape_cast %112 : vector<1x1x8x8xbf16> to vector<8x8xbf16>
    %114 = arith.extf %113 : vector<8x8xbf16> to vector<8x8xf32>
    %c24_159 = arith.constant 24 : index
    %c8_160 = arith.constant 8 : index
    %115 = vector.load %arg5[%c24_159, %c8_160] : memref<64x72xf32, #tpu.memory_space<vmem>>, vector<8x8xf32>
    tpu.vector_store %arg5[%c24_159, %c8_160], %114 {strides = array<i32>} : memref<64x72xf32, #tpu.memory_space<vmem>>, vector<8x8xf32>,
    %c0_161 = arith.constant 0 : index
    %c3_162 = arith.constant 3 : index
    %c2_163 = arith.constant 2 : index
    %c0_164 = arith.constant 0 : index
    %116 = vector.load %arg1[%c0_161, %c3_162, %c2_163, %c0_164] : memref<1x10x10x8xbf16, #tpu.memory_space<vmem>>, vector<1x1x8x8xbf16>
    %117 = vector.shape_cast %116 : vector<1x1x8x8xbf16> to vector<8x8xbf16>
    %118 = arith.extf %117 : vector<8x8xbf16> to vector<8x8xf32>
    %c24_165 = arith.constant 24 : index
    %c16_166 = arith.constant 16 : index
    %119 = vector.load %arg5[%c24_165, %c16_166] : memref<64x72xf32, #tpu.memory_space<vmem>>, vector<8x8xf32>
    tpu.vector_store %arg5[%c24_165, %c16_166], %118 {strides = array<i32>} : memref<64x72xf32, #tpu.memory_space<vmem>>, vector<8x8xf32>,
    %c0_167 = arith.constant 0 : index
    %c4_168 = arith.constant 4 : index
    %c0_169 = arith.constant 0 : index
    %c0_170 = arith.constant 0 : index
    %120 = vector.load %arg1[%c0_167, %c4_168, %c0_169, %c0_170] : memref<1x10x10x8xbf16, #tpu.memory_space<vmem>>, vector<1x1x8x8xbf16>
    %121 = vector.shape_cast %120 : vector<1x1x8x8xbf16> to vector<8x8xbf16>
    %122 = arith.extf %121 : vector<8x8xbf16> to vector<8x8xf32>
    %c24_171 = arith.constant 24 : index
    %c24_172 = arith.constant 24 : index
    %123 = vector.load %arg5[%c24_171, %c24_172] : memref<64x72xf32, #tpu.memory_space<vmem>>, vector<8x8xf32>
    tpu.vector_store %arg5[%c24_171, %c24_172], %122 {strides = array<i32>} : memref<64x72xf32, #tpu.memory_space<vmem>>, vector<8x8xf32>,
    %c0_173 = arith.constant 0 : index
    %c4_174 = arith.constant 4 : index
    %c1_175 = arith.constant 1 : index
    %c0_176 = arith.constant 0 : index
    %124 = vector.load %arg1[%c0_173, %c4_174, %c1_175, %c0_176] : memref<1x10x10x8xbf16, #tpu.memory_space<vmem>>, vector<1x1x8x8xbf16>
    %125 = vector.shape_cast %124 : vector<1x1x8x8xbf16> to vector<8x8xbf16>
    %126 = arith.extf %125 : vector<8x8xbf16> to vector<8x8xf32>
    %c24_177 = arith.constant 24 : index
    %c32_178 = arith.constant 32 : index
    %127 = vector.load %arg5[%c24_177, %c32_178] : memref<64x72xf32, #tpu.memory_space<vmem>>, vector<8x8xf32>
    tpu.vector_store %arg5[%c24_177, %c32_178], %126 {strides = array<i32>} : memref<64x72xf32, #tpu.memory_space<vmem>>, vector<8x8xf32>,
    %c0_179 = arith.constant 0 : index
    %c4_180 = arith.constant 4 : index
    %c2_181 = arith.constant 2 : index
    %c0_182 = arith.constant 0 : index
    %128 = vector.load %arg1[%c0_179, %c4_180, %c2_181, %c0_182] : memref<1x10x10x8xbf16, #tpu.memory_space<vmem>>, vector<1x1x8x8xbf16>
    %129 = vector.shape_cast %128 : vector<1x1x8x8xbf16> to vector<8x8xbf16>
    %130 = arith.extf %129 : vector<8x8xbf16> to vector<8x8xf32>
    %c24_183 = arith.constant 24 : index
    %c40_184 = arith.constant 40 : index
    %131 = vector.load %arg5[%c24_183, %c40_184] : memref<64x72xf32, #tpu.memory_space<vmem>>, vector<8x8xf32>
    tpu.vector_store %arg5[%c24_183, %c40_184], %130 {strides = array<i32>} : memref<64x72xf32, #tpu.memory_space<vmem>>, vector<8x8xf32>,
    %c0_185 = arith.constant 0 : index
    %c5 = arith.constant 5 : index
    %c0_186 = arith.constant 0 : index
    %c0_187 = arith.constant 0 : index
    %132 = vector.load %arg1[%c0_185, %c5, %c0_186, %c0_187] : memref<1x10x10x8xbf16, #tpu.memory_space<vmem>>, vector<1x1x8x8xbf16>
    %133 = vector.shape_cast %132 : vector<1x1x8x8xbf16> to vector<8x8xbf16>
    %134 = arith.extf %133 : vector<8x8xbf16> to vector<8x8xf32>
    %c24_188 = arith.constant 24 : index
    %c48_189 = arith.constant 48 : index
    %135 = vector.load %arg5[%c24_188, %c48_189] : memref<64x72xf32, #tpu.memory_space<vmem>>, vector<8x8xf32>
    tpu.vector_store %arg5[%c24_188, %c48_189], %134 {strides = array<i32>} : memref<64x72xf32, #tpu.memory_space<vmem>>, vector<8x8xf32>,
    %c0_190 = arith.constant 0 : index
    %c5_191 = arith.constant 5 : index
    %c1_192 = arith.constant 1 : index
    %c0_193 = arith.constant 0 : index
    %136 = vector.load %arg1[%c0_190, %c5_191, %c1_192, %c0_193] : memref<1x10x10x8xbf16, #tpu.memory_space<vmem>>, vector<1x1x8x8xbf16>
    %137 = vector.shape_cast %136 : vector<1x1x8x8xbf16> to vector<8x8xbf16>
    %138 = arith.extf %137 : vector<8x8xbf16> to vector<8x8xf32>
    %c24_194 = arith.constant 24 : index
    %c56_195 = arith.constant 56 : index
    %139 = vector.load %arg5[%c24_194, %c56_195] : memref<64x72xf32, #tpu.memory_space<vmem>>, vector<8x8xf32>
    tpu.vector_store %arg5[%c24_194, %c56_195], %138 {strides = array<i32>} : memref<64x72xf32, #tpu.memory_space<vmem>>, vector<8x8xf32>,
    %c0_196 = arith.constant 0 : index
    %c5_197 = arith.constant 5 : index
    %c2_198 = arith.constant 2 : index
    %c0_199 = arith.constant 0 : index
    %140 = vector.load %arg1[%c0_196, %c5_197, %c2_198, %c0_199] : memref<1x10x10x8xbf16, #tpu.memory_space<vmem>>, vector<1x1x8x8xbf16>
    %141 = vector.shape_cast %140 : vector<1x1x8x8xbf16> to vector<8x8xbf16>
    %142 = arith.extf %141 : vector<8x8xbf16> to vector<8x8xf32>
    %c24_200 = arith.constant 24 : index
    %c64_201 = arith.constant 64 : index
    %143 = vector.load %arg5[%c24_200, %c64_201] : memref<64x72xf32, #tpu.memory_space<vmem>>, vector<8x8xf32>
    tpu.vector_store %arg5[%c24_200, %c64_201], %142 {strides = array<i32>} : memref<64x72xf32, #tpu.memory_space<vmem>>, vector<8x8xf32>,
    %c0_202 = arith.constant 0 : index
    %c4_203 = arith.constant 4 : index
    %c0_204 = arith.constant 0 : index
    %c0_205 = arith.constant 0 : index
    %144 = vector.load %arg1[%c0_202, %c4_203, %c0_204, %c0_205] : memref<1x10x10x8xbf16, #tpu.memory_space<vmem>>, vector<1x1x8x8xbf16>
    %145 = vector.shape_cast %144 : vector<1x1x8x8xbf16> to vector<8x8xbf16>
    %146 = arith.extf %145 : vector<8x8xbf16> to vector<8x8xf32>
    %c32_206 = arith.constant 32 : index
    %c0_207 = arith.constant 0 : index
    %147 = vector.load %arg5[%c32_206, %c0_207] : memref<64x72xf32, #tpu.memory_space<vmem>>, vector<8x8xf32>
    tpu.vector_store %arg5[%c32_206, %c0_207], %146 {strides = array<i32>} : memref<64x72xf32, #tpu.memory_space<vmem>>, vector<8x8xf32>,
    %c0_208 = arith.constant 0 : index
    %c4_209 = arith.constant 4 : index
    %c1_210 = arith.constant 1 : index
    %c0_211 = arith.constant 0 : index
    %148 = vector.load %arg1[%c0_208, %c4_209, %c1_210, %c0_211] : memref<1x10x10x8xbf16, #tpu.memory_space<vmem>>, vector<1x1x8x8xbf16>
    %149 = vector.shape_cast %148 : vector<1x1x8x8xbf16> to vector<8x8xbf16>
    %150 = arith.extf %149 : vector<8x8xbf16> to vector<8x8xf32>
    %c32_212 = arith.constant 32 : index
    %c8_213 = arith.constant 8 : index
    %151 = vector.load %arg5[%c32_212, %c8_213] : memref<64x72xf32, #tpu.memory_space<vmem>>, vector<8x8xf32>
    tpu.vector_store %arg5[%c32_212, %c8_213], %150 {strides = array<i32>} : memref<64x72xf32, #tpu.memory_space<vmem>>, vector<8x8xf32>,
    %c0_214 = arith.constant 0 : index
    %c4_215 = arith.constant 4 : index
    %c2_216 = arith.constant 2 : index
    %c0_217 = arith.constant 0 : index
    %152 = vector.load %arg1[%c0_214, %c4_215, %c2_216, %c0_217] : memref<1x10x10x8xbf16, #tpu.memory_space<vmem>>, vector<1x1x8x8xbf16>
    %153 = vector.shape_cast %152 : vector<1x1x8x8xbf16> to vector<8x8xbf16>
    %154 = arith.extf %153 : vector<8x8xbf16> to vector<8x8xf32>
    %c32_218 = arith.constant 32 : index
    %c16_219 = arith.constant 16 : index
    %155 = vector.load %arg5[%c32_218, %c16_219] : memref<64x72xf32, #tpu.memory_space<vmem>>, vector<8x8xf32>
    tpu.vector_store %arg5[%c32_218, %c16_219], %154 {strides = array<i32>} : memref<64x72xf32, #tpu.memory_space<vmem>>, vector<8x8xf32>,
    %c0_220 = arith.constant 0 : index
    %c5_221 = arith.constant 5 : index
    %c0_222 = arith.constant 0 : index
    %c0_223 = arith.constant 0 : index
    %156 = vector.load %arg1[%c0_220, %c5_221, %c0_222, %c0_223] : memref<1x10x10x8xbf16, #tpu.memory_space<vmem>>, vector<1x1x8x8xbf16>
    %157 = vector.shape_cast %156 : vector<1x1x8x8xbf16> to vector<8x8xbf16>
    %158 = arith.extf %157 : vector<8x8xbf16> to vector<8x8xf32>
    %c32_224 = arith.constant 32 : index
    %c24_225 = arith.constant 24 : index
    %159 = vector.load %arg5[%c32_224, %c24_225] : memref<64x72xf32, #tpu.memory_space<vmem>>, vector<8x8xf32>
    tpu.vector_store %arg5[%c32_224, %c24_225], %158 {strides = array<i32>} : memref<64x72xf32, #tpu.memory_space<vmem>>, vector<8x8xf32>,
    %c0_226 = arith.constant 0 : index
    %c5_227 = arith.constant 5 : index
    %c1_228 = arith.constant 1 : index
    %c0_229 = arith.constant 0 : index
    %160 = vector.load %arg1[%c0_226, %c5_227, %c1_228, %c0_229] : memref<1x10x10x8xbf16, #tpu.memory_space<vmem>>, vector<1x1x8x8xbf16>
    %161 = vector.shape_cast %160 : vector<1x1x8x8xbf16> to vector<8x8xbf16>
    %162 = arith.extf %161 : vector<8x8xbf16> to vector<8x8xf32>
    %c32_230 = arith.constant 32 : index
    %c32_231 = arith.constant 32 : index
    %163 = vector.load %arg5[%c32_230, %c32_231] : memref<64x72xf32, #tpu.memory_space<vmem>>, vector<8x8xf32>
    tpu.vector_store %arg5[%c32_230, %c32_231], %162 {strides = array<i32>} : memref<64x72xf32, #tpu.memory_space<vmem>>, vector<8x8xf32>,
    %c0_232 = arith.constant 0 : index
    %c5_233 = arith.constant 5 : index
    %c2_234 = arith.constant 2 : index
    %c0_235 = arith.constant 0 : index
    %164 = vector.load %arg1[%c0_232, %c5_233, %c2_234, %c0_235] : memref<1x10x10x8xbf16, #tpu.memory_space<vmem>>, vector<1x1x8x8xbf16>
    %165 = vector.shape_cast %164 : vector<1x1x8x8xbf16> to vector<8x8xbf16>
    %166 = arith.extf %165 : vector<8x8xbf16> to vector<8x8xf32>
    %c32_236 = arith.constant 32 : index
    %c40_237 = arith.constant 40 : index
    %167 = vector.load %arg5[%c32_236, %c40_237] : memref<64x72xf32, #tpu.memory_space<vmem>>, vector<8x8xf32>
    tpu.vector_store %arg5[%c32_236, %c40_237], %166 {strides = array<i32>} : memref<64x72xf32, #tpu.memory_space<vmem>>, vector<8x8xf32>,
    %c0_238 = arith.constant 0 : index
    %c6 = arith.constant 6 : index
    %c0_239 = arith.constant 0 : index
    %c0_240 = arith.constant 0 : index
    %168 = vector.load %arg1[%c0_238, %c6, %c0_239, %c0_240] : memref<1x10x10x8xbf16, #tpu.memory_space<vmem>>, vector<1x1x8x8xbf16>
    %169 = vector.shape_cast %168 : vector<1x1x8x8xbf16> to vector<8x8xbf16>
    %170 = arith.extf %169 : vector<8x8xbf16> to vector<8x8xf32>
    %c32_241 = arith.constant 32 : index
    %c48_242 = arith.constant 48 : index
    %171 = vector.load %arg5[%c32_241, %c48_242] : memref<64x72xf32, #tpu.memory_space<vmem>>, vector<8x8xf32>
    tpu.vector_store %arg5[%c32_241, %c48_242], %170 {strides = array<i32>} : memref<64x72xf32, #tpu.memory_space<vmem>>, vector<8x8xf32>,
    %c0_243 = arith.constant 0 : index
    %c6_244 = arith.constant 6 : index
    %c1_245 = arith.constant 1 : index
    %c0_246 = arith.constant 0 : index
    %172 = vector.load %arg1[%c0_243, %c6_244, %c1_245, %c0_246] : memref<1x10x10x8xbf16, #tpu.memory_space<vmem>>, vector<1x1x8x8xbf16>
    %173 = vector.shape_cast %172 : vector<1x1x8x8xbf16> to vector<8x8xbf16>
    %174 = arith.extf %173 : vector<8x8xbf16> to vector<8x8xf32>
    %c32_247 = arith.constant 32 : index
    %c56_248 = arith.constant 56 : index
    %175 = vector.load %arg5[%c32_247, %c56_248] : memref<64x72xf32, #tpu.memory_space<vmem>>, vector<8x8xf32>
    tpu.vector_store %arg5[%c32_247, %c56_248], %174 {strides = array<i32>} : memref<64x72xf32, #tpu.memory_space<vmem>>, vector<8x8xf32>,
    %c0_249 = arith.constant 0 : index
    %c6_250 = arith.constant 6 : index
    %c2_251 = arith.constant 2 : index
    %c0_252 = arith.constant 0 : index
    %176 = vector.load %arg1[%c0_249, %c6_250, %c2_251, %c0_252] : memref<1x10x10x8xbf16, #tpu.memory_space<vmem>>, vector<1x1x8x8xbf16>
    %177 = vector.shape_cast %176 : vector<1x1x8x8xbf16> to vector<8x8xbf16>
    %178 = arith.extf %177 : vector<8x8xbf16> to vector<8x8xf32>
    %c32_253 = arith.constant 32 : index
    %c64_254 = arith.constant 64 : index
    %179 = vector.load %arg5[%c32_253, %c64_254] : memref<64x72xf32, #tpu.memory_space<vmem>>, vector<8x8xf32>
    tpu.vector_store %arg5[%c32_253, %c64_254], %178 {strides = array<i32>} : memref<64x72xf32, #tpu.memory_space<vmem>>, vector<8x8xf32>,
    %c0_255 = arith.constant 0 : index
    %c5_256 = arith.constant 5 : index
    %c0_257 = arith.constant 0 : index
    %c0_258 = arith.constant 0 : index
    %180 = vector.load %arg1[%c0_255, %c5_256, %c0_257, %c0_258] : memref<1x10x10x8xbf16, #tpu.memory_space<vmem>>, vector<1x1x8x8xbf16>
    %181 = vector.shape_cast %180 : vector<1x1x8x8xbf16> to vector<8x8xbf16>
    %182 = arith.extf %181 : vector<8x8xbf16> to vector<8x8xf32>
    %c40_259 = arith.constant 40 : index
    %c0_260 = arith.constant 0 : index
    %183 = vector.load %arg5[%c40_259, %c0_260] : memref<64x72xf32, #tpu.memory_space<vmem>>, vector<8x8xf32>
    tpu.vector_store %arg5[%c40_259, %c0_260], %182 {strides = array<i32>} : memref<64x72xf32, #tpu.memory_space<vmem>>, vector<8x8xf32>,
    %c0_261 = arith.constant 0 : index
    %c5_262 = arith.constant 5 : index
    %c1_263 = arith.constant 1 : index
    %c0_264 = arith.constant 0 : index
    %184 = vector.load %arg1[%c0_261, %c5_262, %c1_263, %c0_264] : memref<1x10x10x8xbf16, #tpu.memory_space<vmem>>, vector<1x1x8x8xbf16>
    %185 = vector.shape_cast %184 : vector<1x1x8x8xbf16> to vector<8x8xbf16>
    %186 = arith.extf %185 : vector<8x8xbf16> to vector<8x8xf32>
    %c40_265 = arith.constant 40 : index
    %c8_266 = arith.constant 8 : index
    %187 = vector.load %arg5[%c40_265, %c8_266] : memref<64x72xf32, #tpu.memory_space<vmem>>, vector<8x8xf32>
    tpu.vector_store %arg5[%c40_265, %c8_266], %186 {strides = array<i32>} : memref<64x72xf32, #tpu.memory_space<vmem>>, vector<8x8xf32>,
    %c0_267 = arith.constant 0 : index
    %c5_268 = arith.constant 5 : index
    %c2_269 = arith.constant 2 : index
    %c0_270 = arith.constant 0 : index
    %188 = vector.load %arg1[%c0_267, %c5_268, %c2_269, %c0_270] : memref<1x10x10x8xbf16, #tpu.memory_space<vmem>>, vector<1x1x8x8xbf16>
    %189 = vector.shape_cast %188 : vector<1x1x8x8xbf16> to vector<8x8xbf16>
    %190 = arith.extf %189 : vector<8x8xbf16> to vector<8x8xf32>
    %c40_271 = arith.constant 40 : index
    %c16_272 = arith.constant 16 : index
    %191 = vector.load %arg5[%c40_271, %c16_272] : memref<64x72xf32, #tpu.memory_space<vmem>>, vector<8x8xf32>
    tpu.vector_store %arg5[%c40_271, %c16_272], %190 {strides = array<i32>} : memref<64x72xf32, #tpu.memory_space<vmem>>, vector<8x8xf32>,
    %c0_273 = arith.constant 0 : index
    %c6_274 = arith.constant 6 : index
    %c0_275 = arith.constant 0 : index
    %c0_276 = arith.constant 0 : index
    %192 = vector.load %arg1[%c0_273, %c6_274, %c0_275, %c0_276] : memref<1x10x10x8xbf16, #tpu.memory_space<vmem>>, vector<1x1x8x8xbf16>
    %193 = vector.shape_cast %192 : vector<1x1x8x8xbf16> to vector<8x8xbf16>
    %194 = arith.extf %193 : vector<8x8xbf16> to vector<8x8xf32>
    %c40_277 = arith.constant 40 : index
    %c24_278 = arith.constant 24 : index
    %195 = vector.load %arg5[%c40_277, %c24_278] : memref<64x72xf32, #tpu.memory_space<vmem>>, vector<8x8xf32>
    tpu.vector_store %arg5[%c40_277, %c24_278], %194 {strides = array<i32>} : memref<64x72xf32, #tpu.memory_space<vmem>>, vector<8x8xf32>,
    %c0_279 = arith.constant 0 : index
    %c6_280 = arith.constant 6 : index
    %c1_281 = arith.constant 1 : index
    %c0_282 = arith.constant 0 : index
    %196 = vector.load %arg1[%c0_279, %c6_280, %c1_281, %c0_282] : memref<1x10x10x8xbf16, #tpu.memory_space<vmem>>, vector<1x1x8x8xbf16>
    %197 = vector.shape_cast %196 : vector<1x1x8x8xbf16> to vector<8x8xbf16>
    %198 = arith.extf %197 : vector<8x8xbf16> to vector<8x8xf32>
    %c40_283 = arith.constant 40 : index
    %c32_284 = arith.constant 32 : index
    %199 = vector.load %arg5[%c40_283, %c32_284] : memref<64x72xf32, #tpu.memory_space<vmem>>, vector<8x8xf32>
    tpu.vector_store %arg5[%c40_283, %c32_284], %198 {strides = array<i32>} : memref<64x72xf32, #tpu.memory_space<vmem>>, vector<8x8xf32>,
    %c0_285 = arith.constant 0 : index
    %c6_286 = arith.constant 6 : index
    %c2_287 = arith.constant 2 : index
    %c0_288 = arith.constant 0 : index
    %200 = vector.load %arg1[%c0_285, %c6_286, %c2_287, %c0_288] : memref<1x10x10x8xbf16, #tpu.memory_space<vmem>>, vector<1x1x8x8xbf16>
    %201 = vector.shape_cast %200 : vector<1x1x8x8xbf16> to vector<8x8xbf16>
    %202 = arith.extf %201 : vector<8x8xbf16> to vector<8x8xf32>
    %c40_289 = arith.constant 40 : index
    %c40_290 = arith.constant 40 : index
    %203 = vector.load %arg5[%c40_289, %c40_290] : memref<64x72xf32, #tpu.memory_space<vmem>>, vector<8x8xf32>
    tpu.vector_store %arg5[%c40_289, %c40_290], %202 {strides = array<i32>} : memref<64x72xf32, #tpu.memory_space<vmem>>, vector<8x8xf32>,
    %c0_291 = arith.constant 0 : index
    %c7 = arith.constant 7 : index
    %c0_292 = arith.constant 0 : index
    %c0_293 = arith.constant 0 : index
    %204 = vector.load %arg1[%c0_291, %c7, %c0_292, %c0_293] : memref<1x10x10x8xbf16, #tpu.memory_space<vmem>>, vector<1x1x8x8xbf16>
    %205 = vector.shape_cast %204 : vector<1x1x8x8xbf16> to vector<8x8xbf16>
    %206 = arith.extf %205 : vector<8x8xbf16> to vector<8x8xf32>
    %c40_294 = arith.constant 40 : index
    %c48_295 = arith.constant 48 : index
    %207 = vector.load %arg5[%c40_294, %c48_295] : memref<64x72xf32, #tpu.memory_space<vmem>>, vector<8x8xf32>
    tpu.vector_store %arg5[%c40_294, %c48_295], %206 {strides = array<i32>} : memref<64x72xf32, #tpu.memory_space<vmem>>, vector<8x8xf32>,
    %c0_296 = arith.constant 0 : index
    %c7_297 = arith.constant 7 : index
    %c1_298 = arith.constant 1 : index
    %c0_299 = arith.constant 0 : index
    %208 = vector.load %arg1[%c0_296, %c7_297, %c1_298, %c0_299] : memref<1x10x10x8xbf16, #tpu.memory_space<vmem>>, vector<1x1x8x8xbf16>
    %209 = vector.shape_cast %208 : vector<1x1x8x8xbf16> to vector<8x8xbf16>
    %210 = arith.extf %209 : vector<8x8xbf16> to vector<8x8xf32>
    %c40_300 = arith.constant 40 : index
    %c56_301 = arith.constant 56 : index
    %211 = vector.load %arg5[%c40_300, %c56_301] : memref<64x72xf32, #tpu.memory_space<vmem>>, vector<8x8xf32>
    tpu.vector_store %arg5[%c40_300, %c56_301], %210 {strides = array<i32>} : memref<64x72xf32, #tpu.memory_space<vmem>>, vector<8x8xf32>,
    %c0_302 = arith.constant 0 : index
    %c7_303 = arith.constant 7 : index
    %c2_304 = arith.constant 2 : index
    %c0_305 = arith.constant 0 : index
    %212 = vector.load %arg1[%c0_302, %c7_303, %c2_304, %c0_305] : memref<1x10x10x8xbf16, #tpu.memory_space<vmem>>, vector<1x1x8x8xbf16>
    %213 = vector.shape_cast %212 : vector<1x1x8x8xbf16> to vector<8x8xbf16>
    %214 = arith.extf %213 : vector<8x8xbf16> to vector<8x8xf32>
    %c40_306 = arith.constant 40 : index
    %c64_307 = arith.constant 64 : index
    %215 = vector.load %arg5[%c40_306, %c64_307] : memref<64x72xf32, #tpu.memory_space<vmem>>, vector<8x8xf32>
    tpu.vector_store %arg5[%c40_306, %c64_307], %214 {strides = array<i32>} : memref<64x72xf32, #tpu.memory_space<vmem>>, vector<8x8xf32>,
    %c0_308 = arith.constant 0 : index
    %c6_309 = arith.constant 6 : index
    %c0_310 = arith.constant 0 : index
    %c0_311 = arith.constant 0 : index
    %216 = vector.load %arg1[%c0_308, %c6_309, %c0_310, %c0_311] : memref<1x10x10x8xbf16, #tpu.memory_space<vmem>>, vector<1x1x8x8xbf16>
    %217 = vector.shape_cast %216 : vector<1x1x8x8xbf16> to vector<8x8xbf16>
    %218 = arith.extf %217 : vector<8x8xbf16> to vector<8x8xf32>
    %c48_312 = arith.constant 48 : index
    %c0_313 = arith.constant 0 : index
    %219 = vector.load %arg5[%c48_312, %c0_313] : memref<64x72xf32, #tpu.memory_space<vmem>>, vector<8x8xf32>
    tpu.vector_store %arg5[%c48_312, %c0_313], %218 {strides = array<i32>} : memref<64x72xf32, #tpu.memory_space<vmem>>, vector<8x8xf32>,
    %c0_314 = arith.constant 0 : index
    %c6_315 = arith.constant 6 : index
    %c1_316 = arith.constant 1 : index
    %c0_317 = arith.constant 0 : index
    %220 = vector.load %arg1[%c0_314, %c6_315, %c1_316, %c0_317] : memref<1x10x10x8xbf16, #tpu.memory_space<vmem>>, vector<1x1x8x8xbf16>
    %221 = vector.shape_cast %220 : vector<1x1x8x8xbf16> to vector<8x8xbf16>
    %222 = arith.extf %221 : vector<8x8xbf16> to vector<8x8xf32>
    %c48_318 = arith.constant 48 : index
    %c8_319 = arith.constant 8 : index
    %223 = vector.load %arg5[%c48_318, %c8_319] : memref<64x72xf32, #tpu.memory_space<vmem>>, vector<8x8xf32>
    tpu.vector_store %arg5[%c48_318, %c8_319], %222 {strides = array<i32>} : memref<64x72xf32, #tpu.memory_space<vmem>>, vector<8x8xf32>,
    %c0_320 = arith.constant 0 : index
    %c6_321 = arith.constant 6 : index
    %c2_322 = arith.constant 2 : index
    %c0_323 = arith.constant 0 : index
    %224 = vector.load %arg1[%c0_320, %c6_321, %c2_322, %c0_323] : memref<1x10x10x8xbf16, #tpu.memory_space<vmem>>, vector<1x1x8x8xbf16>
    %225 = vector.shape_cast %224 : vector<1x1x8x8xbf16> to vector<8x8xbf16>
    %226 = arith.extf %225 : vector<8x8xbf16> to vector<8x8xf32>
    %c48_324 = arith.constant 48 : index
    %c16_325 = arith.constant 16 : index
    %227 = vector.load %arg5[%c48_324, %c16_325] : memref<64x72xf32, #tpu.memory_space<vmem>>, vector<8x8xf32>
    tpu.vector_store %arg5[%c48_324, %c16_325], %226 {strides = array<i32>} : memref<64x72xf32, #tpu.memory_space<vmem>>, vector<8x8xf32>,
    %c0_326 = arith.constant 0 : index
    %c7_327 = arith.constant 7 : index
    %c0_328 = arith.constant 0 : index
    %c0_329 = arith.constant 0 : index
    %228 = vector.load %arg1[%c0_326, %c7_327, %c0_328, %c0_329] : memref<1x10x10x8xbf16, #tpu.memory_space<vmem>>, vector<1x1x8x8xbf16>
    %229 = vector.shape_cast %228 : vector<1x1x8x8xbf16> to vector<8x8xbf16>
    %230 = arith.extf %229 : vector<8x8xbf16> to vector<8x8xf32>
    %c48_330 = arith.constant 48 : index
    %c24_331 = arith.constant 24 : index
    %231 = vector.load %arg5[%c48_330, %c24_331] : memref<64x72xf32, #tpu.memory_space<vmem>>, vector<8x8xf32>
    tpu.vector_store %arg5[%c48_330, %c24_331], %230 {strides = array<i32>} : memref<64x72xf32, #tpu.memory_space<vmem>>, vector<8x8xf32>,
    %c0_332 = arith.constant 0 : index
    %c7_333 = arith.constant 7 : index
    %c1_334 = arith.constant 1 : index
    %c0_335 = arith.constant 0 : index
    %232 = vector.load %arg1[%c0_332, %c7_333, %c1_334, %c0_335] : memref<1x10x10x8xbf16, #tpu.memory_space<vmem>>, vector<1x1x8x8xbf16>
    %233 = vector.shape_cast %232 : vector<1x1x8x8xbf16> to vector<8x8xbf16>
    %234 = arith.extf %233 : vector<8x8xbf16> to vector<8x8xf32>
    %c48_336 = arith.constant 48 : index
    %c32_337 = arith.constant 32 : index
    %235 = vector.load %arg5[%c48_336, %c32_337] : memref<64x72xf32, #tpu.memory_space<vmem>>, vector<8x8xf32>
    tpu.vector_store %arg5[%c48_336, %c32_337], %234 {strides = array<i32>} : memref<64x72xf32, #tpu.memory_space<vmem>>, vector<8x8xf32>,
    %c0_338 = arith.constant 0 : index
    %c7_339 = arith.constant 7 : index
    %c2_340 = arith.constant 2 : index
    %c0_341 = arith.constant 0 : index
    %236 = vector.load %arg1[%c0_338, %c7_339, %c2_340, %c0_341] : memref<1x10x10x8xbf16, #tpu.memory_space<vmem>>, vector<1x1x8x8xbf16>
    %237 = vector.shape_cast %236 : vector<1x1x8x8xbf16> to vector<8x8xbf16>
    %238 = arith.extf %237 : vector<8x8xbf16> to vector<8x8xf32>
    %c48_342 = arith.constant 48 : index
    %c40_343 = arith.constant 40 : index
    %239 = vector.load %arg5[%c48_342, %c40_343] : memref<64x72xf32, #tpu.memory_space<vmem>>, vector<8x8xf32>
    tpu.vector_store %arg5[%c48_342, %c40_343], %238 {strides = array<i32>} : memref<64x72xf32, #tpu.memory_space<vmem>>, vector<8x8xf32>,
    %c0_344 = arith.constant 0 : index
    %c8_345 = arith.constant 8 : index
    %c0_346 = arith.constant 0 : index
    %c0_347 = arith.constant 0 : index
    %240 = vector.load %arg1[%c0_344, %c8_345, %c0_346, %c0_347] : memref<1x10x10x8xbf16, #tpu.memory_space<vmem>>, vector<1x1x8x8xbf16>
    %241 = vector.shape_cast %240 : vector<1x1x8x8xbf16> to vector<8x8xbf16>
    %242 = arith.extf %241 : vector<8x8xbf16> to vector<8x8xf32>
    %c48_348 = arith.constant 48 : index
    %c48_349 = arith.constant 48 : index
    %243 = vector.load %arg5[%c48_348, %c48_349] : memref<64x72xf32, #tpu.memory_space<vmem>>, vector<8x8xf32>
    tpu.vector_store %arg5[%c48_348, %c48_349], %242 {strides = array<i32>} : memref<64x72xf32, #tpu.memory_space<vmem>>, vector<8x8xf32>,
    %c0_350 = arith.constant 0 : index
    %c8_351 = arith.constant 8 : index
    %c1_352 = arith.constant 1 : index
    %c0_353 = arith.constant 0 : index
    %244 = vector.load %arg1[%c0_350, %c8_351, %c1_352, %c0_353] : memref<1x10x10x8xbf16, #tpu.memory_space<vmem>>, vector<1x1x8x8xbf16>
    %245 = vector.shape_cast %244 : vector<1x1x8x8xbf16> to vector<8x8xbf16>
    %246 = arith.extf %245 : vector<8x8xbf16> to vector<8x8xf32>
    %c48_354 = arith.constant 48 : index
    %c56_355 = arith.constant 56 : index
    %247 = vector.load %arg5[%c48_354, %c56_355] : memref<64x72xf32, #tpu.memory_space<vmem>>, vector<8x8xf32>
    tpu.vector_store %arg5[%c48_354, %c56_355], %246 {strides = array<i32>} : memref<64x72xf32, #tpu.memory_space<vmem>>, vector<8x8xf32>,
    %c0_356 = arith.constant 0 : index
    %c8_357 = arith.constant 8 : index
    %c2_358 = arith.constant 2 : index
    %c0_359 = arith.constant 0 : index
    %248 = vector.load %arg1[%c0_356, %c8_357, %c2_358, %c0_359] : memref<1x10x10x8xbf16, #tpu.memory_space<vmem>>, vector<1x1x8x8xbf16>
    %249 = vector.shape_cast %248 : vector<1x1x8x8xbf16> to vector<8x8xbf16>
    %250 = arith.extf %249 : vector<8x8xbf16> to vector<8x8xf32>
    %c48_360 = arith.constant 48 : index
    %c64_361 = arith.constant 64 : index
    %251 = vector.load %arg5[%c48_360, %c64_361] : memref<64x72xf32, #tpu.memory_space<vmem>>, vector<8x8xf32>
    tpu.vector_store %arg5[%c48_360, %c64_361], %250 {strides = array<i32>} : memref<64x72xf32, #tpu.memory_space<vmem>>, vector<8x8xf32>,
    %c0_362 = arith.constant 0 : index
    %c7_363 = arith.constant 7 : index
    %c0_364 = arith.constant 0 : index
    %c0_365 = arith.constant 0 : index
    %252 = vector.load %arg1[%c0_362, %c7_363, %c0_364, %c0_365] : memref<1x10x10x8xbf16, #tpu.memory_space<vmem>>, vector<1x1x8x8xbf16>
    %253 = vector.shape_cast %252 : vector<1x1x8x8xbf16> to vector<8x8xbf16>
    %254 = arith.extf %253 : vector<8x8xbf16> to vector<8x8xf32>
    %c56_366 = arith.constant 56 : index
    %c0_367 = arith.constant 0 : index
    %255 = vector.load %arg5[%c56_366, %c0_367] : memref<64x72xf32, #tpu.memory_space<vmem>>, vector<8x8xf32>
    tpu.vector_store %arg5[%c56_366, %c0_367], %254 {strides = array<i32>} : memref<64x72xf32, #tpu.memory_space<vmem>>, vector<8x8xf32>,
    %c0_368 = arith.constant 0 : index
    %c7_369 = arith.constant 7 : index
    %c1_370 = arith.constant 1 : index
    %c0_371 = arith.constant 0 : index
    %256 = vector.load %arg1[%c0_368, %c7_369, %c1_370, %c0_371] : memref<1x10x10x8xbf16, #tpu.memory_space<vmem>>, vector<1x1x8x8xbf16>
    %257 = vector.shape_cast %256 : vector<1x1x8x8xbf16> to vector<8x8xbf16>
    %258 = arith.extf %257 : vector<8x8xbf16> to vector<8x8xf32>
    %c56_372 = arith.constant 56 : index
    %c8_373 = arith.constant 8 : index
    %259 = vector.load %arg5[%c56_372, %c8_373] : memref<64x72xf32, #tpu.memory_space<vmem>>, vector<8x8xf32>
    tpu.vector_store %arg5[%c56_372, %c8_373], %258 {strides = array<i32>} : memref<64x72xf32, #tpu.memory_space<vmem>>, vector<8x8xf32>,
    %c0_374 = arith.constant 0 : index
    %c7_375 = arith.constant 7 : index
    %c2_376 = arith.constant 2 : index
    %c0_377 = arith.constant 0 : index
    %260 = vector.load %arg1[%c0_374, %c7_375, %c2_376, %c0_377] : memref<1x10x10x8xbf16, #tpu.memory_space<vmem>>, vector<1x1x8x8xbf16>
    %261 = vector.shape_cast %260 : vector<1x1x8x8xbf16> to vector<8x8xbf16>
    %262 = arith.extf %261 : vector<8x8xbf16> to vector<8x8xf32>
    %c56_378 = arith.constant 56 : index
    %c16_379 = arith.constant 16 : index
    %263 = vector.load %arg5[%c56_378, %c16_379] : memref<64x72xf32, #tpu.memory_space<vmem>>, vector<8x8xf32>
    tpu.vector_store %arg5[%c56_378, %c16_379], %262 {strides = array<i32>} : memref<64x72xf32, #tpu.memory_space<vmem>>, vector<8x8xf32>,
    %c0_380 = arith.constant 0 : index
    %c8_381 = arith.constant 8 : index
    %c0_382 = arith.constant 0 : index
    %c0_383 = arith.constant 0 : index
    %264 = vector.load %arg1[%c0_380, %c8_381, %c0_382, %c0_383] : memref<1x10x10x8xbf16, #tpu.memory_space<vmem>>, vector<1x1x8x8xbf16>
    %265 = vector.shape_cast %264 : vector<1x1x8x8xbf16> to vector<8x8xbf16>
    %266 = arith.extf %265 : vector<8x8xbf16> to vector<8x8xf32>
    %c56_384 = arith.constant 56 : index
    %c24_385 = arith.constant 24 : index
    %267 = vector.load %arg5[%c56_384, %c24_385] : memref<64x72xf32, #tpu.memory_space<vmem>>, vector<8x8xf32>
    tpu.vector_store %arg5[%c56_384, %c24_385], %266 {strides = array<i32>} : memref<64x72xf32, #tpu.memory_space<vmem>>, vector<8x8xf32>,
    %c0_386 = arith.constant 0 : index
    %c8_387 = arith.constant 8 : index
    %c1_388 = arith.constant 1 : index
    %c0_389 = arith.constant 0 : index
    %268 = vector.load %arg1[%c0_386, %c8_387, %c1_388, %c0_389] : memref<1x10x10x8xbf16, #tpu.memory_space<vmem>>, vector<1x1x8x8xbf16>
    %269 = vector.shape_cast %268 : vector<1x1x8x8xbf16> to vector<8x8xbf16>
    %270 = arith.extf %269 : vector<8x8xbf16> to vector<8x8xf32>
    %c56_390 = arith.constant 56 : index
    %c32_391 = arith.constant 32 : index
    %271 = vector.load %arg5[%c56_390, %c32_391] : memref<64x72xf32, #tpu.memory_space<vmem>>, vector<8x8xf32>
    tpu.vector_store %arg5[%c56_390, %c32_391], %270 {strides = array<i32>} : memref<64x72xf32, #tpu.memory_space<vmem>>, vector<8x8xf32>,
    %c0_392 = arith.constant 0 : index
    %c8_393 = arith.constant 8 : index
    %c2_394 = arith.constant 2 : index
    %c0_395 = arith.constant 0 : index
    %272 = vector.load %arg1[%c0_392, %c8_393, %c2_394, %c0_395] : memref<1x10x10x8xbf16, #tpu.memory_space<vmem>>, vector<1x1x8x8xbf16>
    %273 = vector.shape_cast %272 : vector<1x1x8x8xbf16> to vector<8x8xbf16>
    %274 = arith.extf %273 : vector<8x8xbf16> to vector<8x8xf32>
    %c56_396 = arith.constant 56 : index
    %c40_397 = arith.constant 40 : index
    %275 = vector.load %arg5[%c56_396, %c40_397] : memref<64x72xf32, #tpu.memory_space<vmem>>, vector<8x8xf32>
    tpu.vector_store %arg5[%c56_396, %c40_397], %274 {strides = array<i32>} : memref<64x72xf32, #tpu.memory_space<vmem>>, vector<8x8xf32>,
    %c0_398 = arith.constant 0 : index
    %c9 = arith.constant 9 : index
    %c0_399 = arith.constant 0 : index
    %c0_400 = arith.constant 0 : index
    %276 = vector.load %arg1[%c0_398, %c9, %c0_399, %c0_400] : memref<1x10x10x8xbf16, #tpu.memory_space<vmem>>, vector<1x1x8x8xbf16>
    %277 = vector.shape_cast %276 : vector<1x1x8x8xbf16> to vector<8x8xbf16>
    %278 = arith.extf %277 : vector<8x8xbf16> to vector<8x8xf32>
    %c56_401 = arith.constant 56 : index
    %c48_402 = arith.constant 48 : index
    %279 = vector.load %arg5[%c56_401, %c48_402] : memref<64x72xf32, #tpu.memory_space<vmem>>, vector<8x8xf32>
    tpu.vector_store %arg5[%c56_401, %c48_402], %278 {strides = array<i32>} : memref<64x72xf32, #tpu.memory_space<vmem>>, vector<8x8xf32>,
    %c0_403 = arith.constant 0 : index
    %c9_404 = arith.constant 9 : index
    %c1_405 = arith.constant 1 : index
    %c0_406 = arith.constant 0 : index
    %280 = vector.load %arg1[%c0_403, %c9_404, %c1_405, %c0_406] : memref<1x10x10x8xbf16, #tpu.memory_space<vmem>>, vector<1x1x8x8xbf16>
    %281 = vector.shape_cast %280 : vector<1x1x8x8xbf16> to vector<8x8xbf16>
    %282 = arith.extf %281 : vector<8x8xbf16> to vector<8x8xf32>
    %c56_407 = arith.constant 56 : index
    %c56_408 = arith.constant 56 : index
    %283 = vector.load %arg5[%c56_407, %c56_408] : memref<64x72xf32, #tpu.memory_space<vmem>>, vector<8x8xf32>
    tpu.vector_store %arg5[%c56_407, %c56_408], %282 {strides = array<i32>} : memref<64x72xf32, #tpu.memory_space<vmem>>, vector<8x8xf32>,
    %c0_409 = arith.constant 0 : index
    %c9_410 = arith.constant 9 : index
    %c2_411 = arith.constant 2 : index
    %c0_412 = arith.constant 0 : index
    %284 = vector.load %arg1[%c0_409, %c9_410, %c2_411, %c0_412] : memref<1x10x10x8xbf16, #tpu.memory_space<vmem>>, vector<1x1x8x8xbf16>
    %285 = vector.shape_cast %284 : vector<1x1x8x8xbf16> to vector<8x8xbf16>
    %286 = arith.extf %285 : vector<8x8xbf16> to vector<8x8xf32>
    %c56_413 = arith.constant 56 : index
    %c64_414 = arith.constant 64 : index
    %287 = vector.load %arg5[%c56_413, %c64_414] : memref<64x72xf32, #tpu.memory_space<vmem>>, vector<8x8xf32>
    tpu.vector_store %arg5[%c56_413, %c64_414], %286 {strides = array<i32>} : memref<64x72xf32, #tpu.memory_space<vmem>>, vector<8x8xf32>,
    %c0_415 = arith.constant 0 : index
    %c0_416 = arith.constant 0 : index
    %288 = vector.load %arg5[%c0_415, %c0_416] : memref<64x72xf32, #tpu.memory_space<vmem>>, vector<64x72xf32>
    %289 = arith.truncf %288 : vector<64x72xf32> to vector<64x72xbf16>
    %c0_417 = arith.constant 0 : index
    %c0_418 = arith.constant 0 : index
    %290 = vector.load %arg2[%c0_417, %c0_418] : memref<72x4xbf16, #tpu.memory_space<vmem>>, vector<72x4xbf16>
    %cst = arith.constant dense<0.000000e+00> : vector<64x4xf32>
    %291 = tpu.matmul %289, %290, %cst {dimension_numbers = #tpu.dot_dimension_numbers<[1], [0], [0], [1], [0, 0, 1, 1], [], []>} : vector<64x72xbf16>, vector<72x4xbf16>, vector<64x4xf32> -> vector<64x4xf32>
    %c0_419 = arith.constant 0 : index
    %c0_420 = arith.constant 0 : index
    %292 = vector.load %arg3[%c0_419, %c0_420] : memref<1x4xf32, #tpu.memory_space<vmem>>, vector<1x4xf32>
    %293 = vector.broadcast %292 : vector<1x4xf32> to vector<64x4xf32>
    %294 = arith.addf %291, %293 : vector<64x4xf32>
    %c0_421 = arith.constant 0 : index
    %c0_422 = arith.constant 0 : index
    %c0_423 = arith.constant 0 : index
    %295 = vector.load %arg4[%c0_421, %c0_422, %c0_423] : memref<1x64x4xf32, #tpu.memory_space<vmem>>, vector<1x64x4xf32>
    %296 = vector.shape_cast %295 : vector<1x64x4xf32> to vector<64x4xf32>
    %297 = vector.shape_cast %294 : vector<64x4xf32> to vector<1x64x4xf32>
    tpu.vector_store %arg4[%c0_421, %c0_422, %c0_423], %297 {strides = array<i32>} : memref<1x64x4xf32, #tpu.memory_space<vmem>>, vector<1x64x4xf32>,
    return
  }
  func.func @transform_0(%arg0: i32) -> (i32, i32, i32, i32) {
    %c0_i32 = arith.constant 0 : i32
    %c0_i32_0 = arith.constant 0 : i32
    %c0_i32_1 = arith.constant 0 : i32
    %c0_i32_2 = arith.constant 0 : i32
    return %arg0, %c0_i32, %c0_i32_0, %c0_i32_1 : i32, i32, i32, i32
  }
  func.func @transform_1(%arg0: i32) -> (i32, i32) {
    %c0_i32 = arith.constant 0 : i32
    %c0_i32_0 = arith.constant 0 : i32
    %c0_i32_1 = arith.constant 0 : i32
    return %c0_i32, %c0_i32_0 : i32, i32
  }
  func.func @transform_2(%arg0: i32) -> (i32, i32) {
    %c0_i32 = arith.constant 0 : i32
    %c0_i32_0 = arith.constant 0 : i32
    %c0_i32_1 = arith.constant 0 : i32
    return %c0_i32, %c0_i32_0 : i32, i32
  }
  func.func @transform_3(%arg0: i32) -> (i32, i32, i32) {
    %c0_i32 = arith.constant 0 : i32
    %c0_i32_0 = arith.constant 0 : i32
    %c0_i32_1 = arith.constant 0 : i32
    return %arg0, %c0_i32, %c0_i32_0 : i32, i32, i32
  }
}

</mosaic_0001>

<llo_original>
// kernel: generator_forward.9
$region0: #{generator_forward.9}
  #allocation0 [shape = 'u32[]', space=smem, size = 0x4, offset = 0x4, fixed_abs, tag = 'smem constant byte address 0x4 - core index']
  #allocation1 [shape = 'u32[144,128]{1,0:T(1,128)}', space=vmem, size = 0x12000, scoped, tag = 'internal scratch']
  #allocation2 [shape = 'f32[4,128]{1,0:T(4,128)}', space=vmem, size = 0x800, scoped, tag = 'scratch operand']
  %s0 = inlined_call_operand.vmem [shape: bf16[8,3,3,32], index: 0, kind: input, shape index: {}]
  %s1 = inlined_call_operand.vmem [shape: bf16[128,16], index: 1, kind: input, shape index: {}]
  %s2 = inlined_call_operand.vmem [shape: f32[1,16], index: 2, kind: input, shape index: {}]
  %s3 = inlined_call_operand.vmem [shape: bf16[8,4,16], index: 3, kind: output, shape index: {}]
  %s4 = sld [smem:[#allocation0]]
  $region45: #{generator_forward.9} parent=0
    _
  %s6 = ssub.s32 1, %s4
  %s7 = scalar_select 0, %s6, %s4
  loop: start=0, step=1, limit=10
  $region2: #{generator_forward.9} parent=0 // loop_pre_header
    _
  $region3: #{generator_forward.9} parent=0 // loop_header
    %s9 = sphi 0, %s13
    %p10 = scmp.ge.s32.totalorder %s9, 10
    %s19 = sphi 0, %s21
    %s22 = sphi 0, %s19
    %s23 = sphi 0, %s22
    %s39 = sphi 0, %s23
    %s43 = sphi 0, %s43
    %s45 = sphi 0, %s43
    %s46 = sphi 0, %s45
    %s60 = sphi 0, %s46
    %s64 = sphi 0, %s64
    %s66 = sphi 0, %s64
    %s67 = sphi 0, %s66
    %s81 = sphi 0, %s67
    %s87 = sphi 0, %s89
    %s90 = sphi 0, %s87
    %s91 = sphi 0, %s90
    %s107 = sphi 0, %s91
  $region4: #{generator_forward.9} parent=0 // loop_header_branch
    %12 = sbr.rel (%p10) target = $region8
  $region5: #{generator_forward.9} parent=0 // loop_body
    %s14 = ssub.s32 %s9, 1
    %s15 = ssub.s32 %s9, 2
    %s16 = sadd.s32 %s9, 1
    %s17 = ssub.s32 %s9, %s16
    %p18 = scmp.eq.s32.totalorder %s17, 0
    %s20 = sadd.s32 %s19, 1
    %s21 = scalar_select %p18, %s19, %s20
    %p24 = pneg %p18
    %p25 = scmp.eq.s32.totalorder %s9, 7
    %p26 = por %p24, %p25
    %p27 = scmp.ne.s32.totalorder %s19, %s22
    %p28 = scmp.eq.s32.totalorder %s9, 0
    %p29 = por %p27, %p28
    %p30 = scmp.ne.s32.totalorder %s19, %s22
    %p31 = scmp.eq.s32.totalorder %s14, 7
    %p32 = por %p30, %p31
    %p33 = scmp.ne.s32.totalorder %s22, %s23
    %p34 = scmp.eq.s32.totalorder %s14, 0
    %p35 = por %p33, %p34
    %p36 = scmp.ne.s32.totalorder %s22, %s23
    %p37 = scmp.eq.s32.totalorder %s15, 7
    %p38 = por %p36, %p37
    %p40 = scmp.ne.s32.totalorder %s23, %s39
    %p41 = scmp.eq.s32.totalorder %s15, 0
    %p42 = por %p40, %p41
    %s44 = sadd.s32 %s43, 1
    %p47 = scmp.eq.s32.totalorder %s9, 7
    %p48 = scmp.ne.s32.totalorder %s43, %s45
    %p49 = scmp.eq.s32.totalorder %s9, 0
    %p50 = por %p48, %p49
    %p51 = scmp.ne.s32.totalorder %s43, %s45
    %p52 = scmp.eq.s32.totalorder %s14, 7
    %p53 = por %p51, %p52
    %p54 = scmp.ne.s32.totalorder %s45, %s46
    %p55 = scmp.eq.s32.totalorder %s14, 0
    %p56 = por %p54, %p55
    %p57 = scmp.ne.s32.totalorder %s45, %s46
    %p58 = scmp.eq.s32.totalorder %s15, 7
    %p59 = por %p57, %p58
    %p61 = scmp.ne.s32.totalorder %s46, %s60
    %p62 = scmp.eq.s32.totalorder %s15, 0
    %p63 = por %p61, %p62
    %s65 = sadd.s32 %s64, 1
    %p68 = scmp.eq.s32.totalorder %s9, 7
    %p69 = scmp.ne.s32.totalorder %s64, %s66
    %p70 = scmp.eq.s32.totalorder %s9, 0
    %p71 = por %p69, %p70
    %p72 = scmp.ne.s32.totalorder %s64, %s66
    %p73 = scmp.eq.s32.totalorder %s14, 7
    %p74 = por %p72, %p73
    %p75 = scmp.ne.s32.totalorder %s66, %s67
    %p76 = scmp.eq.s32.totalorder %s14, 0
    %p77 = por %p75, %p76
    %p78 = scmp.ne.s32.totalorder %s66, %s67
    %p79 = scmp.eq.s32.totalorder %s15, 7
    %p80 = por %p78, %p79
    %p82 = scmp.ne.s32.totalorder %s67, %s81
    %p83 = scmp.eq.s32.totalorder %s15, 0
    %p84 = por %p82, %p83
    %s85 = ssub.s32 %s9, %s16
    %p86 = scmp.eq.s32.totalorder %s85, 0
    %s88 = sadd.s32 %s87, 1
    %s89 = scalar_select %p86, %s87, %s88
    %p92 = pneg %p86
    %p93 = scmp.eq.s32.totalorder %s9, 7
    %p94 = por %p92, %p93
    %p95 = scmp.ne.s32.totalorder %s87, %s90
    %p96 = scmp.eq.s32.totalorder %s9, 0
    %p97 = por %p95, %p96
    %p98 = scmp.ne.s32.totalorder %s87, %s90
    %p99 = scmp.eq.s32.totalorder %s14, 7
    %p100 = por %p98, %p99
    %p101 = scmp.ne.s32.totalorder %s90, %s91
    %p102 = scmp.eq.s32.totalorder %s14, 0
    %p103 = por %p101, %p102
    %p104 = scmp.ne.s32.totalorder %s90, %s91
    %p105 = scmp.eq.s32.totalorder %s15, 7
    %p106 = por %p104, %p105
    %p108 = scmp.ne.s32.totalorder %s91, %s107
    %p109 = scmp.eq.s32.totalorder %s15, 0
    %p110 = por %p108, %p109
    %p111 = scmp.le.s32.totalorder 1, %s9
    %p112 = scmp.lt.s32.totalorder %s9, 9
    %p113 = pnand %p111, %p112
    %p114 = pneg %p113
    // Predicated region
    $region9: #{generator_forward.9} parent=5 // pred_check
      _
    $region10: #{generator_forward.9} parent=5 // pred_check_branch
      %116 = sbr.rel (%p113) target = $region12
    $region11: #{generator_forward.9} parent=5 // pred_region
      %s117 = ssub.s32 %s9, 1
      // Predicated region
      $region13: #{generator_forward.9} parent=11 // pred_check
        %p118 = pneg %p56
      $region14: #{generator_forward.9} parent=11 // pred_check_branch
        %120 = sbr.rel (%p118) target = $region16
      $region15: #{generator_forward.9} parent=11 // pred_region
        _
      $region16: #{generator_forward.9} parent=11 // pred_fallthru
        _
      // Predicated region
      $region17: #{generator_forward.9} parent=11 // pred_check
        %p121 = pneg %p77
      $region18: #{generator_forward.9} parent=11 // pred_check_branch
        %123 = sbr.rel (%p121) target = $region20
      $region19: #{generator_forward.9} parent=11 // pred_region
        _
      $region20: #{generator_forward.9} parent=11 // pred_fallthru
        _
    $region12: #{generator_forward.9} parent=5 // pred_fallthru
      _
    %p124 = scmp.lt.s32.totalorder %s9, 8
    // Predicated region
    $region21: #{generator_forward.9} parent=5 // pred_check
      %p125 = pneg %p124
    $region22: #{generator_forward.9} parent=5 // pred_check_branch
      %127 = sbr.rel (%p125) target = $region24
    $region23: #{generator_forward.9} parent=5 // pred_region
      // Predicated region
      $region25: #{generator_forward.9} parent=23 // pred_check
        %p128 = pneg %p29
      $region26: #{generator_forward.9} parent=23 // pred_check_branch
        %130 = sbr.rel (%p128) target = $region28
      $region27: #{generator_forward.9} parent=23 // pred_region
        %p131 = scmp.lt.s32.totalorder %s9, 7
        %s132 = scalar_select %p131, %s9, 7
        %s133 = smul.addr %s132, 3
        %s134 = smul.addr %s133, 2
        %s135 = scalar_lea.vmem %s0, %s134
      $region28: #{generator_forward.9} parent=23 // pred_fallthru
        _
    $region24: #{generator_forward.9} parent=5 // pred_fallthru
      _
    %p136 = scmp.le.s32.totalorder 1, %s9
    %p137 = scmp.lt.s32.totalorder %s9, 9
    %p138 = pnand %p136, %p137
    %p139 = pneg %p138
    // Predicated region
    $region29: #{generator_forward.9} parent=5 // pred_check
      _
    $region30: #{generator_forward.9} parent=5 // pred_check_branch
      %141 = sbr.rel (%p138) target = $region32
    $region31: #{generator_forward.9} parent=5 // pred_region
      %s142 = ssub.s32 %s9, 1
      %p143 = scmp.lt.s32.totalorder %s14, 7
      %s144 = scalar_select %p143, %s14, 7
      %s145 = smul.addr %s144, 3
      %s146 = smul.addr %s145, 2
      %s147 = scalar_lea.vmem %s0, %s146
      %p148 = pneg %p35
      %p149 = pneg %p32
      %p150 = pneg %p56
      %p151 = pneg %p53
      %p152 = pneg %p77
      %p153 = pneg %p74
      %p154 = pneg %p103
      %p155 = pneg %p100
      %p156 = scmp.lt.s32.totalorder %s14, 7
      %s157 = scalar_select %p156, %s14, 7
      %s158 = smul.addr %s157, 2
      %s159 = scalar_lea.vmem %s3, %s158
      %p160 = scmp.lt.s32.totalorder %s14, 7
      %s161 = scalar_select %p160, %s14, 7
      %s162 = smul.addr %s161, 3
      %s163 = smul.addr %s162, 2
      %s164 = scalar_lea.vmem %s0, %s163
      %p165 = scmp.lt.s32.totalorder %s14, 7
      %s166 = scalar_select %p165, %s14, 7
      %s167 = smul.addr %s166, 2
      %s168 = scalar_lea.vmem %s3, %s167
      %v170 = vld [vmem:[%s164] sm:$0x1]
      %v171 = vunpack.c.l.bf16 %v170
      %vm172 = vcmask 254976
      %173 = vst.msk [vmem:[#allocation2] sm:$0x3] %vm172, %v171
      %v174 = vld [vmem:[%s164] sm:$0x3]
      %v175 = vunpack.c.l.bf16 %v174
      %177 = vrot.lane.b32.xlu0 %v175, 32
      %v178 = vpop.permute.xlu0 %177
      %vm180 = vcmask 518401
      %181 = vst.msk [vmem:[#allocation2 - $0x1] sm:$0x6] %vm180, %v178
      %s182 = scalar_lea.vmem %s164, 2
      %v183 = vld [vmem:[%s182] sm:$0x1]
      %v184 = vunpack.c.l.bf16 %v183
      %186 = vrot.lane.b32.xlu0 %v184, 64
      %v187 = vpop.permute.xlu0 %186
      %vm189 = vcmask 779776
      %190 = vst.msk [vmem:[#allocation2] sm:$0x3] %vm189, %v187
      %v191 = vld [vmem:[%s182] sm:$0x3]
      %v192 = vunpack.c.l.bf16 %v191
      %194 = vrot.lane.b32.xlu0 %v192, 96
      %v195 = vpop.permute.xlu0 %194
      %vm197 = vcmask 1043201
      %198 = vst.msk [vmem:[#allocation2 - $0x1] sm:$0x6] %vm197, %v195
      %v199 = vld [vmem:[%s182] sm:$0x1]
      %v200 = vunpack.c.l.bf16 %v199
      %201 = vst.msk [vmem:[#allocation2 + $0x2] sm:$0x3] %vm172, %v200
      %v202 = vld [vmem:[%s182] sm:$0x3]
      %v203 = vunpack.c.l.bf16 %v202
      %205 = vrot.lane.b32.xlu0 %v203, 32
      %v206 = vpop.permute.xlu0 %205
      %208 = vst.msk [vmem:[#allocation2 + $0x1] sm:$0x6] %vm180, %v206
      %s209 = scalar_lea.vmem %s164, 4
      %v210 = vld [vmem:[%s209] sm:$0x1]
      %v211 = vunpack.c.l.bf16 %v210
      %213 = vrot.lane.b32.xlu0 %v211, 64
      %v214 = vpop.permute.xlu0 %213
      %216 = vst.msk [vmem:[#allocation2 + $0x2] sm:$0x3] %vm189, %v214
      %v217 = vld [vmem:[%s209] sm:$0x3]
      %v218 = vunpack.c.l.bf16 %v217
      %220 = vrot.lane.b32.xlu0 %v218, 96
      %v221 = vpop.permute.xlu0 %220
      %223 = vst.msk [vmem:[#allocation2 + $0x1] sm:$0x6] %vm197, %v221
      %v224 = vld [vmem:[#allocation2] sm:$0xf]
      %v225 = vpack.c.bf16 %v224, %v224
      %v226 = vld [vmem:[%s1] sm:$0xf]
      %v227 = vld [vmem:[%s1 + $0x4] sm:$0xf]
      %v228 = vld [vmem:[%s1 + $0x8] sm:$0xf]
      %v229 = vld [vmem:[%s1 + $0xc] sm:$0xf]
      %v230 = vld [vmem:[%s1 + $0x10] sm:$0xf]
      %v231 = vld [vmem:[%s1 + $0x14] sm:$0xf]
      %v232 = vld [vmem:[%s1 + $0x18] sm:$0xf]
      %v233 = vld [vmem:[%s1 + $0x1c] sm:$0xf]
      %v234 = vld [vmem:[%s1 + $0x20] sm:$0xf]
      %v235 = vld [vmem:[%s1 + $0x24] sm:$0xf]
      %v236 = vld [vmem:[%s1 + $0x28] sm:$0xf]
      %v237 = vld [vmem:[%s1 + $0x2c] sm:$0xf]
      %v238 = vld [vmem:[%s1 + $0x30] sm:$0xf]
      %v239 = vld [vmem:[%s1 + $0x34] sm:$0xf]
      %v240 = vld [vmem:[%s1 + $0x38] sm:$0xf]
      %v241 = vld [vmem:[%s1 + $0x3c] sm:$0xf]
      %v242 = vld [vmem:[%s2] sm:$0x1]
      %v244 = vlaneseq
      %v245 = vshrl.u32 %v244, 7
      %v246 = vsub.s32 0, %v245
      %v247 = vrot.slane %v242, %v246
      %v265 = vunpack.c.l.b16 %v226
      %v266 = vunpack.c.l.b16 %v227
      %v267 = vunpack.c.l.b16 %v228
      %v268 = vunpack.c.l.b16 %v229
      %v269 = vunpack.c.l.b16 %v230
      %v270 = vunpack.c.l.b16 %v231
      %v271 = vunpack.c.l.b16 %v232
      %v272 = vunpack.c.l.b16 %v233
      %v273 = vunpack.c.l.b16 %v234
      %v274 = vunpack.c.l.b16 %v235
      %v275 = vunpack.c.l.b16 %v236
      %v276 = vunpack.c.l.b16 %v237
      %v277 = vunpack.c.l.b16 %v238
      %v278 = vunpack.c.l.b16 %v239
      %v279 = vunpack.c.l.b16 %v240
      %v280 = vunpack.c.l.b16 %v241
      %v281 = vpack.c.b16 %v266, %v265
      %v282 = vpack.c.b16 %v268, %v267
      %v283 = vpack.c.b16 %v270, %v269
      %v284 = vpack.c.b16 %v272, %v271
      %v285 = vpack.c.b16 %v274, %v273
      %v286 = vpack.c.b16 %v276, %v275
      %v287 = vpack.c.b16 %v278, %v277
      %v288 = vpack.c.b16 %v280, %v279
      %297 = vmatprep.subr.bf16.mxu0 0
      %298 = vmatpush1.bf16.msra.mxu0 %v288
      %299 = vmatprep.subr.bf16.mxu0 0
      %300 = vmatpush1.bf16.msra.mxu0 %v287
      %301 = vmatprep.subr.bf16.mxu0 0
      %302 = vmatpush1.bf16.msra.mxu0 %v286
      %303 = vmatprep.subr.bf16.mxu0 0
      %304 = vmatpush1.bf16.msra.mxu0 %v285
      %305 = vmatprep.subr.bf16.mxu0 0
      %306 = vmatpush1.bf16.msra.mxu0 %v284
      %307 = vmatprep.subr.bf16.mxu0 0
      %308 = vmatpush1.bf16.msra.mxu0 %v283
      %309 = vmatprep.subr.bf16.mxu0 0
      %310 = vmatpush1.bf16.msra.mxu0 %v282
      %311 = vmatprep.subr.bf16.mxu0 0
      %312 = vmatpush1.bf16.msra.mxu0 %v281
      %313 = vmatprep.subr.bf16.mxu0 0
      %314 = vmatpush2.bf16.msra.mxu0 0
      %315 = vmatprep.subr.bf16.mxu0 0
      %316 = vmatpush2.bf16.msra.mxu0 0
      %317 = vmatprep.subr.bf16.mxu0 0
      %318 = vmatpush2.bf16.msra.mxu0 0
      %319 = vmatprep.subr.bf16.mxu0 0
      %320 = vmatpush2.bf16.msra.mxu0 0
      %321 = vmatprep.subr.bf16.mxu0 0
      %322 = vmatpush2.bf16.msra.mxu0 0
      %323 = vmatprep.subr.bf16.mxu0 0
      %324 = vmatpush2.bf16.msra.mxu0 0
      %325 = vmatprep.subr.bf16.mxu0 0
      %326 = vmatpush2.bf16.msra.mxu0 0
      %327 = vmatprep.subr.bf16.mxu0 0
      %328 = vmatpush2.bf16.msra.mxu0 0
      %329 = vmatprep.mubr.bf16.mxu0 0
      %330 = vmatmul.mubr.bf16.gmra.mxu0 %v225
      %v331 = vpop.f32.mrf.mxu0
      %v332 = vadd.f32 %v247, %v331
      %v333 = vpop.f32.mrf.mxu0
      %v334 = vpop.f32.mrf.mxu0
      %v335 = vpop.f32.mrf.mxu0
      %336 = vdwg.mxu0
      %v337 = vmax.f32 %v332, 0.0
      %v338 = vpack.c.bf16 %v337, %v337
      %vm339 = vcmask 123904
      %340 = vst.msk [vmem:[%s168] sm:$0x3] %vm339, %v338
      %p341 = scmp.lt.s32.totalorder %s14, 7
      %s342 = scalar_select %p341, %s14, 7
      %s343 = smul.addr %s342, 2
      %s344 = scalar_lea.vmem %s3, %s343
      // Predicated region
      $region33: #{generator_forward.9} parent=31 // pred_check
        %p345 = pneg %p100
      $region34: #{generator_forward.9} parent=31 // pred_check_branch
        %347 = sbr.rel (%p345) target = $region36
      $region35: #{generator_forward.9} parent=31 // pred_region
        _
      $region36: #{generator_forward.9} parent=31 // pred_fallthru
        _
    $region32: #{generator_forward.9} parent=5 // pred_fallthru
      _
    %p348 = scmp.le.s32.totalorder 2, %s9
    // Predicated region
    $region37: #{generator_forward.9} parent=5 // pred_check
      %p349 = pneg %p348
    $region38: #{generator_forward.9} parent=5 // pred_check_branch
      %351 = sbr.rel (%p349) target = $region40
    $region39: #{generator_forward.9} parent=5 // pred_region
      %s352 = ssub.s32 %s9, 2
      // Predicated region
      $region41: #{generator_forward.9} parent=39 // pred_check
        %p353 = pneg %p106
      $region42: #{generator_forward.9} parent=39 // pred_check_branch
        %355 = sbr.rel (%p353) target = $region44
      $region43: #{generator_forward.9} parent=39 // pred_region
        %p356 = scmp.lt.s32.totalorder %s15, 7
        %s357 = scalar_select %p356, %s15, 7
        %s358 = smul.addr %s357, 2
        %s359 = scalar_lea.vmem %s3, %s358
      $region44: #{generator_forward.9} parent=39 // pred_fallthru
        _
    $region40: #{generator_forward.9} parent=5 // pred_fallthru
      _
  $region6: #{generator_forward.9} parent=0 // loop_footer
    %s13 = sadd.s32 1, %s9
  $region7: #{generator_forward.9} parent=0 // loop_footer_branch
    %8 = sbr.rel target = $region3
  $region8: #{generator_forward.9} parent=0 // loop_exit
    _

// kernel: generator_forward.8
$region0: #{generator_forward.8}
  #allocation0 [shape = 'u32[]', space=smem, size = 0x4, offset = 0x4, fixed_abs, tag = 'smem constant byte address 0x4 - core index']
  #allocation1 [shape = 'u32[144,128]{1,0:T(1,128)}', space=vmem, size = 0x12000, scoped, tag = 'internal scratch']
  #allocation2 [shape = 'f32[16,64]{1,0:T(8,128)}', space=vmem, size = 0x2000, scoped, tag = 'scratch operand']
  %s0 = inlined_call_operand.vmem [shape: bf16[8,5,5,16], index: 0, kind: input, shape index: {}]
  %s1 = inlined_call_operand.vmem [shape: bf16[64,8], index: 1, kind: input, shape index: {}]
  %s2 = inlined_call_operand.vmem [shape: f32[1,8], index: 2, kind: input, shape index: {}]
  %s3 = inlined_call_operand.vmem [shape: bf16[8,16,8], index: 3, kind: output, shape index: {}]
  %s4 = sld [smem:[#allocation0]]
  $region45: #{generator_forward.8} parent=0
    _
  %s6 = ssub.s32 1, %s4
  %s7 = scalar_select 0, %s6, %s4
  loop: start=0, step=1, limit=10
  $region2: #{generator_forward.8} parent=0 // loop_pre_header
    _
  $region3: #{generator_forward.8} parent=0 // loop_header
    %s9 = sphi 0, %s13
    %p10 = scmp.ge.s32.totalorder %s9, 10
    %s19 = sphi 0, %s21
    %s22 = sphi 0, %s19
    %s23 = sphi 0, %s22
    %s39 = sphi 0, %s23
    %s43 = sphi 0, %s43
    %s45 = sphi 0, %s43
    %s46 = sphi 0, %s45
    %s60 = sphi 0, %s46
    %s64 = sphi 0, %s64
    %s66 = sphi 0, %s64
    %s67 = sphi 0, %s66
    %s81 = sphi 0, %s67
    %s87 = sphi 0, %s89
    %s90 = sphi 0, %s87
    %s91 = sphi 0, %s90
    %s107 = sphi 0, %s91
  $region4: #{generator_forward.8} parent=0 // loop_header_branch
    %12 = sbr.rel (%p10) target = $region8
  $region5: #{generator_forward.8} parent=0 // loop_body
    %s14 = ssub.s32 %s9, 1
    %s15 = ssub.s32 %s9, 2
    %s16 = sadd.s32 %s9, 1
    %s17 = ssub.s32 %s9, %s16
    %p18 = scmp.eq.s32.totalorder %s17, 0
    %s20 = sadd.s32 %s19, 1
    %s21 = scalar_select %p18, %s19, %s20
    %p24 = pneg %p18
    %p25 = scmp.eq.s32.totalorder %s9, 7
    %p26 = por %p24, %p25
    %p27 = scmp.ne.s32.totalorder %s19, %s22
    %p28 = scmp.eq.s32.totalorder %s9, 0
    %p29 = por %p27, %p28
    %p30 = scmp.ne.s32.totalorder %s19, %s22
    %p31 = scmp.eq.s32.totalorder %s14, 7
    %p32 = por %p30, %p31
    %p33 = scmp.ne.s32.totalorder %s22, %s23
    %p34 = scmp.eq.s32.totalorder %s14, 0
    %p35 = por %p33, %p34
    %p36 = scmp.ne.s32.totalorder %s22, %s23
    %p37 = scmp.eq.s32.totalorder %s15, 7
    %p38 = por %p36, %p37
    %p40 = scmp.ne.s32.totalorder %s23, %s39
    %p41 = scmp.eq.s32.totalorder %s15, 0
    %p42 = por %p40, %p41
    %s44 = sadd.s32 %s43, 1
    %p47 = scmp.eq.s32.totalorder %s9, 7
    %p48 = scmp.ne.s32.totalorder %s43, %s45
    %p49 = scmp.eq.s32.totalorder %s9, 0
    %p50 = por %p48, %p49
    %p51 = scmp.ne.s32.totalorder %s43, %s45
    %p52 = scmp.eq.s32.totalorder %s14, 7
    %p53 = por %p51, %p52
    %p54 = scmp.ne.s32.totalorder %s45, %s46
    %p55 = scmp.eq.s32.totalorder %s14, 0
    %p56 = por %p54, %p55
    %p57 = scmp.ne.s32.totalorder %s45, %s46
    %p58 = scmp.eq.s32.totalorder %s15, 7
    %p59 = por %p57, %p58
    %p61 = scmp.ne.s32.totalorder %s46, %s60
    %p62 = scmp.eq.s32.totalorder %s15, 0
    %p63 = por %p61, %p62
    %s65 = sadd.s32 %s64, 1
    %p68 = scmp.eq.s32.totalorder %s9, 7
    %p69 = scmp.ne.s32.totalorder %s64, %s66
    %p70 = scmp.eq.s32.totalorder %s9, 0
    %p71 = por %p69, %p70
    %p72 = scmp.ne.s32.totalorder %s64, %s66
    %p73 = scmp.eq.s32.totalorder %s14, 7
    %p74 = por %p72, %p73
    %p75 = scmp.ne.s32.totalorder %s66, %s67
    %p76 = scmp.eq.s32.totalorder %s14, 0
    %p77 = por %p75, %p76
    %p78 = scmp.ne.s32.totalorder %s66, %s67
    %p79 = scmp.eq.s32.totalorder %s15, 7
    %p80 = por %p78, %p79
    %p82 = scmp.ne.s32.totalorder %s67, %s81
    %p83 = scmp.eq.s32.totalorder %s15, 0
    %p84 = por %p82, %p83
    %s85 = ssub.s32 %s9, %s16
    %p86 = scmp.eq.s32.totalorder %s85, 0
    %s88 = sadd.s32 %s87, 1
    %s89 = scalar_select %p86, %s87, %s88
    %p92 = pneg %p86
    %p93 = scmp.eq.s32.totalorder %s9, 7
    %p94 = por %p92, %p93
    %p95 = scmp.ne.s32.totalorder %s87, %s90
    %p96 = scmp.eq.s32.totalorder %s9, 0
    %p97 = por %p95, %p96
    %p98 = scmp.ne.s32.totalorder %s87, %s90
    %p99 = scmp.eq.s32.totalorder %s14, 7
    %p100 = por %p98, %p99
    %p101 = scmp.ne.s32.totalorder %s90, %s91
    %p102 = scmp.eq.s32.totalorder %s14, 0
    %p103 = por %p101, %p102
    %p104 = scmp.ne.s32.totalorder %s90, %s91
    %p105 = scmp.eq.s32.totalorder %s15, 7
    %p106 = por %p104, %p105
    %p108 = scmp.ne.s32.totalorder %s91, %s107
    %p109 = scmp.eq.s32.totalorder %s15, 0
    %p110 = por %p108, %p109
    %p111 = scmp.le.s32.totalorder 1, %s9
    %p112 = scmp.lt.s32.totalorder %s9, 9
    %p113 = pnand %p111, %p112
    %p114 = pneg %p113
    // Predicated region
    $region9: #{generator_forward.8} parent=5 // pred_check
      _
    $region10: #{generator_forward.8} parent=5 // pred_check_branch
      %116 = sbr.rel (%p113) target = $region12
    $region11: #{generator_forward.8} parent=5 // pred_region
      %s117 = ssub.s32 %s9, 1
      // Predicated region
      $region13: #{generator_forward.8} parent=11 // pred_check
        %p118 = pneg %p56
      $region14: #{generator_forward.8} parent=11 // pred_check_branch
        %120 = sbr.rel (%p118) target = $region16
      $region15: #{generator_forward.8} parent=11 // pred_region
        _
      $region16: #{generator_forward.8} parent=11 // pred_fallthru
        _
      // Predicated region
      $region17: #{generator_forward.8} parent=11 // pred_check
        %p121 = pneg %p77
      $region18: #{generator_forward.8} parent=11 // pred_check_branch
        %123 = sbr.rel (%p121) target = $region20
      $region19: #{generator_forward.8} parent=11 // pred_region
        _
      $region20: #{generator_forward.8} parent=11 // pred_fallthru
        _
    $region12: #{generator_forward.8} parent=5 // pred_fallthru
      _
    %p124 = scmp.lt.s32.totalorder %s9, 8
    // Predicated region
    $region21: #{generator_forward.8} parent=5 // pred_check
      %p125 = pneg %p124
    $region22: #{generator_forward.8} parent=5 // pred_check_branch
      %127 = sbr.rel (%p125) target = $region24
    $region23: #{generator_forward.8} parent=5 // pred_region
      // Predicated region
      $region25: #{generator_forward.8} parent=23 // pred_check
        %p128 = pneg %p29
      $region26: #{generator_forward.8} parent=23 // pred_check_branch
        %130 = sbr.rel (%p128) target = $region28
      $region27: #{generator_forward.8} parent=23 // pred_region
        %p131 = scmp.lt.s32.totalorder %s9, 7
        %s132 = scalar_select %p131, %s9, 7
        %s133 = smul.addr %s132, 5
        %s134 = smul.addr %s133, 4
        %s135 = scalar_lea.vmem %s0, %s134
      $region28: #{generator_forward.8} parent=23 // pred_fallthru
        _
    $region24: #{generator_forward.8} parent=5 // pred_fallthru
      _
    %p136 = scmp.le.s32.totalorder 1, %s9
    %p137 = scmp.lt.s32.totalorder %s9, 9
    %p138 = pnand %p136, %p137
    %p139 = pneg %p138
    // Predicated region
    $region29: #{generator_forward.8} parent=5 // pred_check
      _
    $region30: #{generator_forward.8} parent=5 // pred_check_branch
      %141 = sbr.rel (%p138) target = $region32
    $region31: #{generator_forward.8} parent=5 // pred_region
      %s142 = ssub.s32 %s9, 1
      %p143 = scmp.lt.s32.totalorder %s14, 7
      %s144 = scalar_select %p143, %s14, 7
      %s145 = smul.addr %s144, 5
      %s146 = smul.addr %s145, 4
      %s147 = scalar_lea.vmem %s0, %s146
      %p148 = pneg %p35
      %p149 = pneg %p32
      %p150 = pneg %p56
      %p151 = pneg %p53
      %p152 = pneg %p77
      %p153 = pneg %p74
      %p154 = pneg %p103
      %p155 = pneg %p100
      %p156 = scmp.lt.s32.totalorder %s14, 7
      %s157 = scalar_select %p156, %s14, 7
      %s158 = smul.addr %s157, 2
      %s159 = smul.addr %s158, 4
      %s160 = scalar_lea.vmem %s3, %s159
      %p161 = scmp.lt.s32.totalorder %s14, 7
      %s162 = scalar_select %p161, %s14, 7
      %s163 = smul.addr %s162, 5
      %s164 = smul.addr %s163, 4
      %s165 = scalar_lea.vmem %s0, %s164
      %p166 = scmp.lt.s32.totalorder %s14, 7
      %s167 = scalar_select %p166, %s14, 7
      %s168 = smul.addr %s167, 2
      %s169 = smul.addr %s168, 4
      %s170 = scalar_lea.vmem %s3, %s169
      %v172 = vld [vmem:[%s165] sm:$0x3]
      %v173 = vunpack.c.l.bf16 %v172
      %vm174 = vcmask 125952
      %175 = vst.msk [vmem:[#allocation2] sm:$0xf] %vm174, %v173
      %v176 = vld [vmem:[%s165] sm:$0x7]
      %v177 = vunpack.c.l.bf16 %v176
      %179 = vrot.lane.b32.xlu0 %v177, 16
      %v180 = vpop.permute.xlu0 %179
      %vm182 = vcmask 258177
      %183 = vst.msk [vmem:[#allocation2 - $0x1] sm:$0x1e] %vm182, %v180
      %s184 = scalar_lea.vmem %s165, 4
      %v185 = vld [vmem:[%s184] sm:$0x3]
      %v186 = vunpack.c.l.bf16 %v185
      %188 = vrot.lane.b32.xlu0 %v186, 32
      %v189 = vpop.permute.xlu0 %188
      %vm191 = vcmask 388352
      %192 = vst.msk [vmem:[#allocation2] sm:$0xf] %vm191, %v189
      %v193 = vld [vmem:[%s184] sm:$0x7]
      %v194 = vunpack.c.l.bf16 %v193
      %196 = vrot.lane.b32.xlu0 %v194, 48
      %v197 = vpop.permute.xlu0 %196
      %vm199 = vcmask 520577
      %200 = vst.msk [vmem:[#allocation2 - $0x1] sm:$0x1e] %vm199, %v197
      %v201 = vld [vmem:[%s184] sm:$0x3]
      %v202 = vunpack.c.l.bf16 %v201
      %203 = vst.msk [vmem:[#allocation2 + $0x4] sm:$0xf] %vm174, %v202
      %v204 = vld [vmem:[%s184] sm:$0x7]
      %v205 = vunpack.c.l.bf16 %v204
      %207 = vrot.lane.b32.xlu0 %v205, 16
      %v208 = vpop.permute.xlu0 %207
      %210 = vst.msk [vmem:[#allocation2 + $0x3] sm:$0x1e] %vm182, %v208
      %s211 = scalar_lea.vmem %s165, 8
      %v212 = vld [vmem:[%s211] sm:$0x3]
      %v213 = vunpack.c.l.bf16 %v212
      %215 = vrot.lane.b32.xlu0 %v213, 32
      %v216 = vpop.permute.xlu0 %215
      %218 = vst.msk [vmem:[#allocation2 + $0x4] sm:$0xf] %vm191, %v216
      %v219 = vld [vmem:[%s211] sm:$0x7]
      %v220 = vunpack.c.l.bf16 %v219
      %222 = vrot.lane.b32.xlu0 %v220, 48
      %v223 = vpop.permute.xlu0 %222
      %225 = vst.msk [vmem:[#allocation2 + $0x3] sm:$0x1e] %vm199, %v223
      %v226 = vld [vmem:[%s211] sm:$0x3]
      %v227 = vunpack.c.l.bf16 %v226
      %228 = vst.msk [vmem:[#allocation2 + $0x8] sm:$0xf] %vm174, %v227
      %v229 = vld [vmem:[%s211] sm:$0x7]
      %v230 = vunpack.c.l.bf16 %v229
      %232 = vrot.lane.b32.xlu0 %v230, 16
      %v233 = vpop.permute.xlu0 %232
      %235 = vst.msk [vmem:[#allocation2 + $0x7] sm:$0x1e] %vm182, %v233
      %s236 = scalar_lea.vmem %s165, 12
      %v237 = vld [vmem:[%s236] sm:$0x3]
      %v238 = vunpack.c.l.bf16 %v237
      %240 = vrot.lane.b32.xlu0 %v238, 32
      %v241 = vpop.permute.xlu0 %240
      %243 = vst.msk [vmem:[#allocation2 + $0x8] sm:$0xf] %vm191, %v241
      %v244 = vld [vmem:[%s236] sm:$0x7]
      %v245 = vunpack.c.l.bf16 %v244
      %247 = vrot.lane.b32.xlu0 %v245, 48
      %v248 = vpop.permute.xlu0 %247
      %250 = vst.msk [vmem:[#allocation2 + $0x7] sm:$0x1e] %vm199, %v248
      %v251 = vld [vmem:[%s236] sm:$0x3]
      %v252 = vunpack.c.l.bf16 %v251
      %253 = vst.msk [vmem:[#allocation2 + $0xc] sm:$0xf] %vm174, %v252
      %v254 = vld [vmem:[%s236] sm:$0x7]
      %v255 = vunpack.c.l.bf16 %v254
      %257 = vrot.lane.b32.xlu0 %v255, 16
      %v258 = vpop.permute.xlu0 %257
      %260 = vst.msk [vmem:[#allocation2 + $0xb] sm:$0x1e] %vm182, %v258
      %s261 = scalar_lea.vmem %s165, 16
      %v262 = vld [vmem:[%s261] sm:$0x3]
      %v263 = vunpack.c.l.bf16 %v262
      %265 = vrot.lane.b32.xlu0 %v263, 32
      %v266 = vpop.permute.xlu0 %265
      %268 = vst.msk [vmem:[#allocation2 + $0xc] sm:$0xf] %vm191, %v266
      %v269 = vld [vmem:[%s261] sm:$0x7]
      %v270 = vunpack.c.l.bf16 %v269
      %272 = vrot.lane.b32.xlu0 %v270, 48
      %v273 = vpop.permute.xlu0 %272
      %275 = vst.msk [vmem:[#allocation2 + $0xb] sm:$0x1e] %vm199, %v273
      %v276 = vld [vmem:[#allocation2] sm:$0xff]
      %v277 = vld [vmem:[#allocation2 + $0x8] sm:$0xff]
      %v278 = vpack.c.bf16 %v277, %v276
      %v279 = vld [vmem:[%s1] sm:$0xf]
      %v280 = vld [vmem:[%s1 + $0x4] sm:$0xf]
      %v281 = vld [vmem:[%s1 + $0x8] sm:$0xf]
      %v282 = vld [vmem:[%s1 + $0xc] sm:$0xf]
      %v283 = vld [vmem:[%s1 + $0x10] sm:$0xf]
      %v284 = vld [vmem:[%s1 + $0x14] sm:$0xf]
      %v285 = vld [vmem:[%s1 + $0x18] sm:$0xf]
      %v286 = vld [vmem:[%s1 + $0x1c] sm:$0xf]
      %v287 = vld [vmem:[%s2] sm:$0x1]
      %v289 = vlaneseq
      %v290 = vshrl.u32 %v289, 7
      %v291 = vsub.s32 0, %v290
      %v292 = vrot.slane %v287, %v291
      %v302 = vunpack.c.l.b16 %v279
      %v303 = vunpack.c.l.b16 %v280
      %v304 = vunpack.c.l.b16 %v281
      %v305 = vunpack.c.l.b16 %v282
      %v306 = vunpack.c.l.b16 %v283
      %v307 = vunpack.c.l.b16 %v284
      %v308 = vunpack.c.l.b16 %v285
      %v309 = vunpack.c.l.b16 %v286
      %v310 = vpack.c.b16 %v303, %v302
      %v311 = vpack.c.b16 %v305, %v304
      %v312 = vpack.c.b16 %v307, %v306
      %v313 = vpack.c.b16 %v309, %v308
      %vm318 = vcmask 523264
      %v320 = vsel %vm318, %v278, 0
      %322 = vmatprep.subr.bf16.mxu0 0
      %323 = vmatpush1.bf16.msra.mxu0 0
      %324 = vmatprep.subr.bf16.mxu0 0
      %325 = vmatpush1.bf16.msra.mxu0 0
      %326 = vmatprep.subr.bf16.mxu0 0
      %327 = vmatpush1.bf16.msra.mxu0 0
      %328 = vmatprep.subr.bf16.mxu0 0
      %329 = vmatpush1.bf16.msra.mxu0 0
      %330 = vmatprep.subr.bf16.mxu0 0
      %331 = vmatpush1.bf16.msra.mxu0 %v313
      %332 = vmatprep.subr.bf16.mxu0 0
      %333 = vmatpush1.bf16.msra.mxu0 %v312
      %334 = vmatprep.subr.bf16.mxu0 0
      %335 = vmatpush1.bf16.msra.mxu0 %v311
      %336 = vmatprep.subr.bf16.mxu0 0
      %337 = vmatpush1.bf16.msra.mxu0 %v310
      %338 = vmatprep.subr.bf16.mxu0 0
      %339 = vmatpush2.bf16.msra.mxu0 0
      %340 = vmatprep.subr.bf16.mxu0 0
      %341 = vmatpush2.bf16.msra.mxu0 0
      %342 = vmatprep.subr.bf16.mxu0 0
      %343 = vmatpush2.bf16.msra.mxu0 0
      %344 = vmatprep.subr.bf16.mxu0 0
      %345 = vmatpush2.bf16.msra.mxu0 0
      %346 = vmatprep.subr.bf16.mxu0 0
      %347 = vmatpush2.bf16.msra.mxu0 0
      %348 = vmatprep.subr.bf16.mxu0 0
      %349 = vmatpush2.bf16.msra.mxu0 0
      %350 = vmatprep.subr.bf16.mxu0 0
      %351 = vmatpush2.bf16.msra.mxu0 0
      %352 = vmatprep.subr.bf16.mxu0 0
      %353 = vmatpush2.bf16.msra.mxu0 0
      %354 = vmatprep.mubr.bf16.mxu0 0
      %355 = vmatmul.mubr.bf16.gmra.mxu0 %v320
      %v356 = vpop.f32.mrf.mxu0
      %v357 = vadd.f32 %v292, %v356
      %v358 = vpop.f32.mrf.mxu0
      %v359 = vpop.f32.mrf.mxu0
      %v360 = vadd.f32 %v292, %v359
      %v361 = vpop.f32.mrf.mxu0
      %362 = vdwg.mxu0
      %v363 = vmax.f32 %v357, 0.0
      %v364 = vmax.f32 %v360, 0.0
      %v365 = vpack.c.bf16 %v364, %v363
      %v367 = vunpack.c.l.b16 %v365
      %v368 = vunpack.c.h.b16 %v365
      %v369 = vpack.c.b16 %v367, %v367
      %v370 = vpack.c.b16 %v368, %v368
      %vm373 = vcmask 60416
      %374 = vst.msk [vmem:[%s170] sm:$0xf] %vm373, %v369
      %375 = vst.msk [vmem:[%s170 + $0x4] sm:$0xf] %vm373, %v370
      %p376 = scmp.lt.s32.totalorder %s14, 7
      %s377 = scalar_select %p376, %s14, 7
      %s378 = smul.addr %s377, 2
      %s379 = smul.addr %s378, 4
      %s380 = scalar_lea.vmem %s3, %s379
      // Predicated region
      $region33: #{generator_forward.8} parent=31 // pred_check
        %p381 = pneg %p100
      $region34: #{generator_forward.8} parent=31 // pred_check_branch
        %383 = sbr.rel (%p381) target = $region36
      $region35: #{generator_forward.8} parent=31 // pred_region
        _
      $region36: #{generator_forward.8} parent=31 // pred_fallthru
        _
    $region32: #{generator_forward.8} parent=5 // pred_fallthru
      _
    %p384 = scmp.le.s32.totalorder 2, %s9
    // Predicated region
    $region37: #{generator_forward.8} parent=5 // pred_check
      %p385 = pneg %p384
    $region38: #{generator_forward.8} parent=5 // pred_check_branch
      %387 = sbr.rel (%p385) target = $region40
    $region39: #{generator_forward.8} parent=5 // pred_region
      %s388 = ssub.s32 %s9, 2
      // Predicated region
      $region41: #{generator_forward.8} parent=39 // pred_check
        %p389 = pneg %p106
      $region42: #{generator_forward.8} parent=39 // pred_check_branch
        %391 = sbr.rel (%p389) target = $region44
      $region43: #{generator_forward.8} parent=39 // pred_region
        %p392 = scmp.lt.s32.totalorder %s15, 7
        %s393 = scalar_select %p392, %s15, 7
        %s394 = smul.addr %s393, 2
        %s395 = smul.addr %s394, 4
        %s396 = scalar_lea.vmem %s3, %s395
      $region44: #{generator_forward.8} parent=39 // pred_fallthru
        _
    $region40: #{generator_forward.8} parent=5 // pred_fallthru
      _
  $region6: #{generator_forward.8} parent=0 // loop_footer
    %s13 = sadd.s32 1, %s9
  $region7: #{generator_forward.8} parent=0 // loop_footer_branch
    %8 = sbr.rel target = $region3
  $region8: #{generator_forward.8} parent=0 // loop_exit
    _

// kernel: generator_forward.11
$region0: #{generator_forward.11}
  #allocation0 [shape = 'u32[]', space=smem, size = 0x4, offset = 0x4, fixed_abs, tag = 'smem constant byte address 0x4 - core index']
  #allocation1 [shape = 'u32[144,128]{1,0:T(1,128)}', space=vmem, size = 0x12000, scoped, tag = 'internal scratch']
  #allocation2 [shape = 'f32[4,576]{1,0:T(4,128)}', space=vmem, size = 0x2800, scoped, tag = 'scratch operand']
  %s0 = inlined_call_operand.vmem [shape: bf16[2,4,4,64], index: 0, kind: input, shape index: {}]
  %s1 = inlined_call_operand.vmem [shape: bf16[576,32], index: 1, kind: input, shape index: {}]
  %s2 = inlined_call_operand.vmem [shape: f32[1,32], index: 2, kind: input, shape index: {}]
  %s3 = inlined_call_operand.vmem [shape: f32[2,4,32], index: 3, kind: output, shape index: {}]
  %s4 = sld [smem:[#allocation0]]
  $region45: #{generator_forward.11} parent=0
    _
  %s6 = ssub.s32 1, %s4
  %s7 = scalar_select 0, %s6, %s4
  loop: start=0, step=1, limit=4
  $region2: #{generator_forward.11} parent=0 // loop_pre_header
    _
  $region3: #{generator_forward.11} parent=0 // loop_header
    %s9 = sphi 0, %s13
    %p10 = scmp.ge.s32.totalorder %s9, 4
    %s19 = sphi 0, %s21
    %s22 = sphi 0, %s19
    %s23 = sphi 0, %s22
    %s39 = sphi 0, %s23
    %s43 = sphi 0, %s43
    %s45 = sphi 0, %s43
    %s46 = sphi 0, %s45
    %s60 = sphi 0, %s46
    %s64 = sphi 0, %s64
    %s66 = sphi 0, %s64
    %s67 = sphi 0, %s66
    %s81 = sphi 0, %s67
    %s87 = sphi 0, %s89
    %s90 = sphi 0, %s87
    %s91 = sphi 0, %s90
    %s107 = sphi 0, %s91
  $region4: #{generator_forward.11} parent=0 // loop_header_branch
    %12 = sbr.rel (%p10) target = $region8
  $region5: #{generator_forward.11} parent=0 // loop_body
    %s14 = ssub.s32 %s9, 1
    %s15 = ssub.s32 %s9, 2
    %s16 = sadd.s32 %s9, 1
    %s17 = ssub.s32 %s9, %s16
    %p18 = scmp.eq.s32.totalorder %s17, 0
    %s20 = sadd.s32 %s19, 1
    %s21 = scalar_select %p18, %s19, %s20
    %p24 = pneg %p18
    %p25 = scmp.eq.s32.totalorder %s9, 1
    %p26 = por %p24, %p25
    %p27 = scmp.ne.s32.totalorder %s19, %s22
    %p28 = scmp.eq.s32.totalorder %s9, 0
    %p29 = por %p27, %p28
    %p30 = scmp.ne.s32.totalorder %s19, %s22
    %p31 = scmp.eq.s32.totalorder %s14, 1
    %p32 = por %p30, %p31
    %p33 = scmp.ne.s32.totalorder %s22, %s23
    %p34 = scmp.eq.s32.totalorder %s14, 0
    %p35 = por %p33, %p34
    %p36 = scmp.ne.s32.totalorder %s22, %s23
    %p37 = scmp.eq.s32.totalorder %s15, 1
    %p38 = por %p36, %p37
    %p40 = scmp.ne.s32.totalorder %s23, %s39
    %p41 = scmp.eq.s32.totalorder %s15, 0
    %p42 = por %p40, %p41
    %s44 = sadd.s32 %s43, 1
    %p47 = scmp.eq.s32.totalorder %s9, 1
    %p48 = scmp.ne.s32.totalorder %s43, %s45
    %p49 = scmp.eq.s32.totalorder %s9, 0
    %p50 = por %p48, %p49
    %p51 = scmp.ne.s32.totalorder %s43, %s45
    %p52 = scmp.eq.s32.totalorder %s14, 1
    %p53 = por %p51, %p52
    %p54 = scmp.ne.s32.totalorder %s45, %s46
    %p55 = scmp.eq.s32.totalorder %s14, 0
    %p56 = por %p54, %p55
    %p57 = scmp.ne.s32.totalorder %s45, %s46
    %p58 = scmp.eq.s32.totalorder %s15, 1
    %p59 = por %p57, %p58
    %p61 = scmp.ne.s32.totalorder %s46, %s60
    %p62 = scmp.eq.s32.totalorder %s15, 0
    %p63 = por %p61, %p62
    %s65 = sadd.s32 %s64, 1
    %p68 = scmp.eq.s32.totalorder %s9, 1
    %p69 = scmp.ne.s32.totalorder %s64, %s66
    %p70 = scmp.eq.s32.totalorder %s9, 0
    %p71 = por %p69, %p70
    %p72 = scmp.ne.s32.totalorder %s64, %s66
    %p73 = scmp.eq.s32.totalorder %s14, 1
    %p74 = por %p72, %p73
    %p75 = scmp.ne.s32.totalorder %s66, %s67
    %p76 = scmp.eq.s32.totalorder %s14, 0
    %p77 = por %p75, %p76
    %p78 = scmp.ne.s32.totalorder %s66, %s67
    %p79 = scmp.eq.s32.totalorder %s15, 1
    %p80 = por %p78, %p79
    %p82 = scmp.ne.s32.totalorder %s67, %s81
    %p83 = scmp.eq.s32.totalorder %s15, 0
    %p84 = por %p82, %p83
    %s85 = ssub.s32 %s9, %s16
    %p86 = scmp.eq.s32.totalorder %s85, 0
    %s88 = sadd.s32 %s87, 1
    %s89 = scalar_select %p86, %s87, %s88
    %p92 = pneg %p86
    %p93 = scmp.eq.s32.totalorder %s9, 1
    %p94 = por %p92, %p93
    %p95 = scmp.ne.s32.totalorder %s87, %s90
    %p96 = scmp.eq.s32.totalorder %s9, 0
    %p97 = por %p95, %p96
    %p98 = scmp.ne.s32.totalorder %s87, %s90
    %p99 = scmp.eq.s32.totalorder %s14, 1
    %p100 = por %p98, %p99
    %p101 = scmp.ne.s32.totalorder %s90, %s91
    %p102 = scmp.eq.s32.totalorder %s14, 0
    %p103 = por %p101, %p102
    %p104 = scmp.ne.s32.totalorder %s90, %s91
    %p105 = scmp.eq.s32.totalorder %s15, 1
    %p106 = por %p104, %p105
    %p108 = scmp.ne.s32.totalorder %s91, %s107
    %p109 = scmp.eq.s32.totalorder %s15, 0
    %p110 = por %p108, %p109
    %p111 = scmp.le.s32.totalorder 1, %s9
    %p112 = scmp.lt.s32.totalorder %s9, 3
    %p113 = pnand %p111, %p112
    %p114 = pneg %p113
    // Predicated region
    $region9: #{generator_forward.11} parent=5 // pred_check
      _
    $region10: #{generator_forward.11} parent=5 // pred_check_branch
      %116 = sbr.rel (%p113) target = $region12
    $region11: #{generator_forward.11} parent=5 // pred_region
      %s117 = ssub.s32 %s9, 1
      // Predicated region
      $region13: #{generator_forward.11} parent=11 // pred_check
        %p118 = pneg %p56
      $region14: #{generator_forward.11} parent=11 // pred_check_branch
        %120 = sbr.rel (%p118) target = $region16
      $region15: #{generator_forward.11} parent=11 // pred_region
        _
      $region16: #{generator_forward.11} parent=11 // pred_fallthru
        _
      // Predicated region
      $region17: #{generator_forward.11} parent=11 // pred_check
        %p121 = pneg %p77
      $region18: #{generator_forward.11} parent=11 // pred_check_branch
        %123 = sbr.rel (%p121) target = $region20
      $region19: #{generator_forward.11} parent=11 // pred_region
        _
      $region20: #{generator_forward.11} parent=11 // pred_fallthru
        _
    $region12: #{generator_forward.11} parent=5 // pred_fallthru
      _
    %p124 = scmp.lt.s32.totalorder %s9, 2
    // Predicated region
    $region21: #{generator_forward.11} parent=5 // pred_check
      %p125 = pneg %p124
    $region22: #{generator_forward.11} parent=5 // pred_check_branch
      %127 = sbr.rel (%p125) target = $region24
    $region23: #{generator_forward.11} parent=5 // pred_region
      // Predicated region
      $region25: #{generator_forward.11} parent=23 // pred_check
        %p128 = pneg %p29
      $region26: #{generator_forward.11} parent=23 // pred_check_branch
        %130 = sbr.rel (%p128) target = $region28
      $region27: #{generator_forward.11} parent=23 // pred_region
        %p131 = scmp.lt.s32.totalorder %s9, 1
        %s132 = scalar_select %p131, %s9, 1
        %s133 = smul.addr %s132, 4
        %s134 = smul.addr %s133, 2
        %s135 = scalar_lea.vmem %s0, %s134
      $region28: #{generator_forward.11} parent=23 // pred_fallthru
        _
    $region24: #{generator_forward.11} parent=5 // pred_fallthru
      _
    %p136 = scmp.le.s32.totalorder 1, %s9
    %p137 = scmp.lt.s32.totalorder %s9, 3
    %p138 = pnand %p136, %p137
    %p139 = pneg %p138
    // Predicated region
    $region29: #{generator_forward.11} parent=5 // pred_check
      _
    $region30: #{generator_forward.11} parent=5 // pred_check_branch
      %141 = sbr.rel (%p138) target = $region32
    $region31: #{generator_forward.11} parent=5 // pred_region
      %s142 = ssub.s32 %s9, 1
      %p143 = scmp.lt.s32.totalorder %s14, 1
      %s144 = scalar_select %p143, %s14, 1
      %s145 = smul.addr %s144, 4
      %s146 = smul.addr %s145, 2
      %s147 = scalar_lea.vmem %s0, %s146
      %p148 = pneg %p35
      %p149 = pneg %p32
      %p150 = pneg %p56
      %p151 = pneg %p53
      %p152 = pneg %p77
      %p153 = pneg %p74
      %p154 = pneg %p103
      %p155 = pneg %p100
      %p156 = scmp.lt.s32.totalorder %s14, 1
      %s157 = scalar_select %p156, %s14, 1
      %s158 = smul.addr %s157, 4
      %s159 = scalar_lea.vmem %s3, %s158
      %p160 = scmp.lt.s32.totalorder %s14, 1
      %s161 = scalar_select %p160, %s14, 1
      %s162 = smul.addr %s161, 4
      %s163 = smul.addr %s162, 2
      %s164 = scalar_lea.vmem %s0, %s163
      %p165 = scmp.lt.s32.totalorder %s14, 1
      %s166 = scalar_select %p165, %s14, 1
      %s167 = smul.addr %s166, 4
      %s168 = scalar_lea.vmem %s3, %s167
      %v170 = vld [vmem:[%s164] sm:$0x1]
      %v171 = vunpack.c.l.bf16 %v170
      %vm172 = vcmask 517120
      %173 = vst.msk [vmem:[#allocation2] sm:$0x3] %vm172, %v171
      %v174 = vld [vmem:[%s164] sm:$0x3]
      %v175 = vunpack.c.l.bf16 %v174
      %v177 = vrot.slane %v175, 5
      %v178 = vrot.slane %v177, 4
      %179 = vrot.lane.b32.xlu0 %v178, 64
      %v180 = vpop.permute.xlu0 %179
      %vm182 = vcmask 1041920
      %183 = vst.msk [vmem:[#allocation2] sm:$0x3] %vm182, %v180
      %v184 = vld [vmem:[%s164] sm:$0x2]
      %v185 = vunpack.c.l.bf16 %v184
      %v187 = vrot.slane %v185, 6
      %v188 = vrot.slane %v187, 4
      %190 = vst.msk [vmem:[#allocation2 + $0x4] sm:$0x3] %vm172, %v188
      %s191 = scalar_lea.vmem %s164, 2
      %v192 = vld [vmem:[%s191] sm:$0x1]
      %v193 = vunpack.c.l.bf16 %v192
      %195 = vrot.lane.b32.xlu0 %v193, 64
      %v196 = vpop.permute.xlu0 %195
      %198 = vst.msk [vmem:[#allocation2 + $0x4] sm:$0x3] %vm182, %v196
      %v199 = vld [vmem:[%s191] sm:$0x3]
      %v200 = vunpack.c.l.bf16 %v199
      %v202 = vrot.slane %v200, 5
      %v203 = vrot.slane %v202, 4
      %205 = vst.msk [vmem:[#allocation2 + $0x8] sm:$0x3] %vm172, %v203
      %v206 = vld [vmem:[%s191] sm:$0x2]
      %v207 = vunpack.c.l.bf16 %v206
      %v209 = vrot.slane %v207, 6
      %v210 = vrot.slane %v209, 4
      %211 = vrot.lane.b32.xlu0 %v210, 64
      %v212 = vpop.permute.xlu0 %211
      %214 = vst.msk [vmem:[#allocation2 + $0x8] sm:$0x3] %vm182, %v212
      %s215 = scalar_lea.vmem %s164, 4
      %v216 = vld [vmem:[%s215] sm:$0x1]
      %v217 = vunpack.c.l.bf16 %v216
      %218 = vst.msk [vmem:[#allocation2 + $0xc] sm:$0x3] %vm172, %v217
      %v219 = vld [vmem:[%s215] sm:$0x3]
      %v220 = vunpack.c.l.bf16 %v219
      %v222 = vrot.slane %v220, 5
      %v223 = vrot.slane %v222, 4
      %224 = vrot.lane.b32.xlu0 %v223, 64
      %v225 = vpop.permute.xlu0 %224
      %227 = vst.msk [vmem:[#allocation2 + $0xc] sm:$0x3] %vm182, %v225
      %v228 = vld [vmem:[%s215] sm:$0x2]
      %v229 = vunpack.c.l.bf16 %v228
      %v231 = vrot.slane %v229, 6
      %v232 = vrot.slane %v231, 4
      %234 = vst.msk [vmem:[#allocation2 + $0x10] sm:$0x3] %vm172, %v232
      %v235 = vld [vmem:[%s191] sm:$0x1]
      %v236 = vunpack.c.l.bf16 %v235
      %v238 = vrot.slane %v236, 6
      %vm240 = vcmask 519170
      %241 = vst.msk [vmem:[#allocation2] sm:$0xc] %vm240, %v238
      %v242 = vld [vmem:[%s191] sm:$0x3]
      %v243 = vunpack.c.l.bf16 %v242
      %v245 = vrot.slane %v243, 7
      %246 = vrot.lane.b32.xlu0 %v245, 64
      %v247 = vpop.permute.xlu0 %246
      %vm249 = vcmask 1043970
      %250 = vst.msk [vmem:[#allocation2] sm:$0xc] %vm249, %v247
      %v251 = vld [vmem:[%s191] sm:$0x2]
      %v252 = vunpack.c.l.bf16 %v251
      %253 = vst.msk [vmem:[#allocation2 + $0x4] sm:$0xc] %vm240, %v252
      %v254 = vld [vmem:[%s215] sm:$0x1]
      %v255 = vunpack.c.l.bf16 %v254
      %v257 = vrot.slane %v255, 6
      %258 = vrot.lane.b32.xlu0 %v257, 64
      %v259 = vpop.permute.xlu0 %258
      %261 = vst.msk [vmem:[#allocation2 + $0x4] sm:$0xc] %vm249, %v259
      %v262 = vld [vmem:[%s215] sm:$0x3]
      %v263 = vunpack.c.l.bf16 %v262
      %v265 = vrot.slane %v263, 7
      %267 = vst.msk [vmem:[#allocation2 + $0x8] sm:$0xc] %vm240, %v265
      %v268 = vld [vmem:[%s215] sm:$0x2]
      %v269 = vunpack.c.l.bf16 %v268
      %271 = vrot.lane.b32.xlu0 %v269, 64
      %v272 = vpop.permute.xlu0 %271
      %274 = vst.msk [vmem:[#allocation2 + $0x8] sm:$0xc] %vm249, %v272
      %s275 = scalar_lea.vmem %s164, 6
      %v276 = vld [vmem:[%s275] sm:$0x1]
      %v277 = vunpack.c.l.bf16 %v276
      %v279 = vrot.slane %v277, 6
      %281 = vst.msk [vmem:[#allocation2 + $0xc] sm:$0xc] %vm240, %v279
      %v282 = vld [vmem:[%s275] sm:$0x3]
      %v283 = vunpack.c.l.bf16 %v282
      %v285 = vrot.slane %v283, 7
      %286 = vrot.lane.b32.xlu0 %v285, 64
      %v287 = vpop.permute.xlu0 %286
      %289 = vst.msk [vmem:[#allocation2 + $0xc] sm:$0xc] %vm249, %v287
      %v290 = vld [vmem:[%s275] sm:$0x2]
      %v291 = vunpack.c.l.bf16 %v290
      %292 = vst.msk [vmem:[#allocation2 + $0x10] sm:$0xc] %vm240, %v291
      %v293 = vld [vmem:[#allocation2] sm:$0xff]
      %v294 = vld [vmem:[#allocation2 + $0x8] sm:$0xff]
      %v295 = vld [vmem:[#allocation2 + $0x10] sm:$0xf]
      %v298 = vcombine.high %v293, %v293
      %v299 = vcombine.high %v294, %v294
      %v302 = vpack.c.bf16 %v293, %v293
      %v303 = vpack.c.bf16 %v298, %v298
      %v304 = vpack.c.bf16 %v294, %v294
      %v305 = vpack.c.bf16 %v299, %v299
      %v306 = vpack.c.bf16 %v295, %v295
      %v307 = vld [vmem:[%s1] sm:$0xf]
      %v308 = vld [vmem:[%s1 + $0x4] sm:$0xf]
      %v309 = vld [vmem:[%s1 + $0x8] sm:$0xf]
      %v310 = vld [vmem:[%s1 + $0xc] sm:$0xf]
      %v311 = vld [vmem:[%s1 + $0x10] sm:$0xf]
      %v312 = vld [vmem:[%s1 + $0x14] sm:$0xf]
      %v313 = vld [vmem:[%s1 + $0x18] sm:$0xf]
      %v314 = vld [vmem:[%s1 + $0x1c] sm:$0xf]
      %v315 = vld [vmem:[%s1 + $0x20] sm:$0xf]
      %v316 = vld [vmem:[%s1 + $0x24] sm:$0xf]
      %v317 = vld [vmem:[%s1 + $0x28] sm:$0xf]
      %v318 = vld [vmem:[%s1 + $0x2c] sm:$0xf]
      %v319 = vld [vmem:[%s1 + $0x30] sm:$0xf]
      %v320 = vld [vmem:[%s1 + $0x34] sm:$0xf]
      %v321 = vld [vmem:[%s1 + $0x38] sm:$0xf]
      %v322 = vld [vmem:[%s1 + $0x3c] sm:$0xf]
      %v323 = vld [vmem:[%s1 + $0x40] sm:$0xf]
      %v324 = vld [vmem:[%s1 + $0x44] sm:$0xf]
      %v325 = vld [vmem:[%s1 + $0x48] sm:$0xf]
      %v326 = vld [vmem:[%s1 + $0x4c] sm:$0xf]
      %v327 = vld [vmem:[%s1 + $0x50] sm:$0xf]
      %v328 = vld [vmem:[%s1 + $0x54] sm:$0xf]
      %v329 = vld [vmem:[%s1 + $0x58] sm:$0xf]
      %v330 = vld [vmem:[%s1 + $0x5c] sm:$0xf]
      %v331 = vld [vmem:[%s1 + $0x60] sm:$0xf]
      %v332 = vld [vmem:[%s1 + $0x64] sm:$0xf]
      %v333 = vld [vmem:[%s1 + $0x68] sm:$0xf]
      %v334 = vld [vmem:[%s1 + $0x6c] sm:$0xf]
      %v335 = vld [vmem:[%s1 + $0x70] sm:$0xf]
      %v336 = vld [vmem:[%s1 + $0x74] sm:$0xf]
      %v337 = vld [vmem:[%s1 + $0x78] sm:$0xf]
      %v338 = vld [vmem:[%s1 + $0x7c] sm:$0xf]
      %v339 = vld [vmem:[%s1 + $0x80] sm:$0xf]
      %v340 = vld [vmem:[%s1 + $0x84] sm:$0xf]
      %v341 = vld [vmem:[%s1 + $0x88] sm:$0xf]
      %v342 = vld [vmem:[%s1 + $0x8c] sm:$0xf]
      %v343 = vld [vmem:[%s1 + $0x90] sm:$0xf]
      %v344 = vld [vmem:[%s1 + $0x94] sm:$0xf]
      %v345 = vld [vmem:[%s1 + $0x98] sm:$0xf]
      %v346 = vld [vmem:[%s1 + $0x9c] sm:$0xf]
      %v347 = vld [vmem:[%s1 + $0xa0] sm:$0xf]
      %v348 = vld [vmem:[%s1 + $0xa4] sm:$0xf]
      %v349 = vld [vmem:[%s1 + $0xa8] sm:$0xf]
      %v350 = vld [vmem:[%s1 + $0xac] sm:$0xf]
      %v351 = vld [vmem:[%s1 + $0xb0] sm:$0xf]
      %v352 = vld [vmem:[%s1 + $0xb4] sm:$0xf]
      %v353 = vld [vmem:[%s1 + $0xb8] sm:$0xf]
      %v354 = vld [vmem:[%s1 + $0xbc] sm:$0xf]
      %v355 = vld [vmem:[%s1 + $0xc0] sm:$0xf]
      %v356 = vld [vmem:[%s1 + $0xc4] sm:$0xf]
      %v357 = vld [vmem:[%s1 + $0xc8] sm:$0xf]
      %v358 = vld [vmem:[%s1 + $0xcc] sm:$0xf]
      %v359 = vld [vmem:[%s1 + $0xd0] sm:$0xf]
      %v360 = vld [vmem:[%s1 + $0xd4] sm:$0xf]
      %v361 = vld [vmem:[%s1 + $0xd8] sm:$0xf]
      %v362 = vld [vmem:[%s1 + $0xdc] sm:$0xf]
      %v363 = vld [vmem:[%s1 + $0xe0] sm:$0xf]
      %v364 = vld [vmem:[%s1 + $0xe4] sm:$0xf]
      %v365 = vld [vmem:[%s1 + $0xe8] sm:$0xf]
      %v366 = vld [vmem:[%s1 + $0xec] sm:$0xf]
      %v367 = vld [vmem:[%s1 + $0xf0] sm:$0xf]
      %v368 = vld [vmem:[%s1 + $0xf4] sm:$0xf]
      %v369 = vld [vmem:[%s1 + $0xf8] sm:$0xf]
      %v370 = vld [vmem:[%s1 + $0xfc] sm:$0xf]
      %v371 = vld [vmem:[%s1 + $0x100] sm:$0xf]
      %v372 = vld [vmem:[%s1 + $0x104] sm:$0xf]
      %v373 = vld [vmem:[%s1 + $0x108] sm:$0xf]
      %v374 = vld [vmem:[%s1 + $0x10c] sm:$0xf]
      %v375 = vld [vmem:[%s1 + $0x110] sm:$0xf]
      %v376 = vld [vmem:[%s1 + $0x114] sm:$0xf]
      %v377 = vld [vmem:[%s1 + $0x118] sm:$0xf]
      %v378 = vld [vmem:[%s1 + $0x11c] sm:$0xf]
      %v379 = vld [vmem:[%s2] sm:$0x1]
      %v381 = vlaneseq
      %v382 = vshrl.u32 %v381, 7
      %v383 = vsub.s32 0, %v382
      %v384 = vrot.slane %v379, %v383
      %v458 = vunpack.c.l.b16 %v307
      %v459 = vunpack.c.l.b16 %v308
      %v460 = vunpack.c.l.b16 %v309
      %v461 = vunpack.c.l.b16 %v310
      %v462 = vunpack.c.l.b16 %v311
      %v463 = vunpack.c.l.b16 %v312
      %v464 = vunpack.c.l.b16 %v313
      %v465 = vunpack.c.l.b16 %v314
      %v466 = vunpack.c.l.b16 %v315
      %v467 = vunpack.c.l.b16 %v316
      %v468 = vunpack.c.l.b16 %v317
      %v469 = vunpack.c.l.b16 %v318
      %v470 = vunpack.c.l.b16 %v319
      %v471 = vunpack.c.l.b16 %v320
      %v472 = vunpack.c.l.b16 %v321
      %v473 = vunpack.c.l.b16 %v322
      %v474 = vunpack.c.l.b16 %v323
      %v475 = vunpack.c.l.b16 %v324
      %v476 = vunpack.c.l.b16 %v325
      %v477 = vunpack.c.l.b16 %v326
      %v478 = vunpack.c.l.b16 %v327
      %v479 = vunpack.c.l.b16 %v328
      %v480 = vunpack.c.l.b16 %v329
      %v481 = vunpack.c.l.b16 %v330
      %v482 = vunpack.c.l.b16 %v331
      %v483 = vunpack.c.l.b16 %v332
      %v484 = vunpack.c.l.b16 %v333
      %v485 = vunpack.c.l.b16 %v334
      %v486 = vunpack.c.l.b16 %v335
      %v487 = vunpack.c.l.b16 %v336
      %v488 = vunpack.c.l.b16 %v337
      %v489 = vunpack.c.l.b16 %v338
      %v490 = vunpack.c.l.b16 %v339
      %v491 = vunpack.c.l.b16 %v340
      %v492 = vunpack.c.l.b16 %v341
      %v493 = vunpack.c.l.b16 %v342
      %v494 = vunpack.c.l.b16 %v343
      %v495 = vunpack.c.l.b16 %v344
      %v496 = vunpack.c.l.b16 %v345
      %v497 = vunpack.c.l.b16 %v346
      %v498 = vunpack.c.l.b16 %v347
      %v499 = vunpack.c.l.b16 %v348
      %v500 = vunpack.c.l.b16 %v349
      %v501 = vunpack.c.l.b16 %v350
      %v502 = vunpack.c.l.b16 %v351
      %v503 = vunpack.c.l.b16 %v352
      %v504 = vunpack.c.l.b16 %v353
      %v505 = vunpack.c.l.b16 %v354
      %v506 = vunpack.c.l.b16 %v355
      %v507 = vunpack.c.l.b16 %v356
      %v508 = vunpack.c.l.b16 %v357
      %v509 = vunpack.c.l.b16 %v358
      %v510 = vunpack.c.l.b16 %v359
      %v511 = vunpack.c.l.b16 %v360
      %v512 = vunpack.c.l.b16 %v361
      %v513 = vunpack.c.l.b16 %v362
      %v514 = vunpack.c.l.b16 %v363
      %v515 = vunpack.c.l.b16 %v364
      %v516 = vunpack.c.l.b16 %v365
      %v517 = vunpack.c.l.b16 %v366
      %v518 = vunpack.c.l.b16 %v367
      %v519 = vunpack.c.l.b16 %v368
      %v520 = vunpack.c.l.b16 %v369
      %v521 = vunpack.c.l.b16 %v370
      %v522 = vunpack.c.l.b16 %v371
      %v523 = vunpack.c.l.b16 %v372
      %v524 = vunpack.c.l.b16 %v373
      %v525 = vunpack.c.l.b16 %v374
      %v526 = vunpack.c.l.b16 %v375
      %v527 = vunpack.c.l.b16 %v376
      %v528 = vunpack.c.l.b16 %v377
      %v529 = vunpack.c.l.b16 %v378
      %v530 = vpack.c.b16 %v459, %v458
      %v531 = vpack.c.b16 %v461, %v460
      %v532 = vpack.c.b16 %v463, %v462
      %v533 = vpack.c.b16 %v465, %v464
      %v534 = vpack.c.b16 %v467, %v466
      %v535 = vpack.c.b16 %v469, %v468
      %v536 = vpack.c.b16 %v471, %v470
      %v537 = vpack.c.b16 %v473, %v472
      %v538 = vpack.c.b16 %v475, %v474
      %v539 = vpack.c.b16 %v477, %v476
      %v540 = vpack.c.b16 %v479, %v478
      %v541 = vpack.c.b16 %v481, %v480
      %v542 = vpack.c.b16 %v483, %v482
      %v543 = vpack.c.b16 %v485, %v484
      %v544 = vpack.c.b16 %v487, %v486
      %v545 = vpack.c.b16 %v489, %v488
      %v546 = vpack.c.b16 %v491, %v490
      %v547 = vpack.c.b16 %v493, %v492
      %v548 = vpack.c.b16 %v495, %v494
      %v549 = vpack.c.b16 %v497, %v496
      %v550 = vpack.c.b16 %v499, %v498
      %v551 = vpack.c.b16 %v501, %v500
      %v552 = vpack.c.b16 %v503, %v502
      %v553 = vpack.c.b16 %v505, %v504
      %v554 = vpack.c.b16 %v507, %v506
      %v555 = vpack.c.b16 %v509, %v508
      %v556 = vpack.c.b16 %v511, %v510
      %v557 = vpack.c.b16 %v513, %v512
      %v558 = vpack.c.b16 %v515, %v514
      %v559 = vpack.c.b16 %v517, %v516
      %v560 = vpack.c.b16 %v519, %v518
      %v561 = vpack.c.b16 %v521, %v520
      %v562 = vpack.c.b16 %v523, %v522
      %v563 = vpack.c.b16 %v525, %v524
      %v564 = vpack.c.b16 %v527, %v526
      %v565 = vpack.c.b16 %v529, %v528
      %vm602 = vcmask 523264
      %v604 = vsel %vm602, %v306, 0
      %606 = vmatprep.subr.bf16.mxu0 0
      %607 = vmatpush1.bf16.msra.mxu0 %v537
      %608 = vmatprep.subr.bf16.mxu0 0
      %609 = vmatpush1.bf16.msra.mxu0 %v536
      %610 = vmatprep.subr.bf16.mxu0 0
      %611 = vmatpush1.bf16.msra.mxu0 %v535
      %612 = vmatprep.subr.bf16.mxu0 0
      %613 = vmatpush1.bf16.msra.mxu0 %v534
      %614 = vmatprep.subr.bf16.mxu0 0
      %615 = vmatpush1.bf16.msra.mxu0 %v533
      %616 = vmatprep.subr.bf16.mxu0 0
      %617 = vmatpush1.bf16.msra.mxu0 %v532
      %618 = vmatprep.subr.bf16.mxu0 0
      %619 = vmatpush1.bf16.msra.mxu0 %v531
      %620 = vmatprep.subr.bf16.mxu0 0
      %621 = vmatpush1.bf16.msra.mxu0 %v530
      %622 = vmatprep.subr.bf16.mxu0 0
      %623 = vmatpush2.bf16.msra.mxu0 %v545
      %624 = vmatprep.subr.bf16.mxu0 0
      %625 = vmatpush2.bf16.msra.mxu0 %v544
      %626 = vmatprep.subr.bf16.mxu0 0
      %627 = vmatpush2.bf16.msra.mxu0 %v543
      %628 = vmatprep.subr.bf16.mxu0 0
      %629 = vmatpush2.bf16.msra.mxu0 %v542
      %630 = vmatprep.subr.bf16.mxu0 0
      %631 = vmatpush2.bf16.msra.mxu0 %v541
      %632 = vmatprep.subr.bf16.mxu0 0
      %633 = vmatpush2.bf16.msra.mxu0 %v540
      %634 = vmatprep.subr.bf16.mxu0 0
      %635 = vmatpush2.bf16.msra.mxu0 %v539
      %636 = vmatprep.subr.bf16.mxu0 0
      %637 = vmatpush2.bf16.msra.mxu0 %v538
      %638 = vmatprep.mubr.bf16.mxu0 %v303
      %639 = vmatmul.mubr.bf16.gmra.mxu0 %v302
      %v640 = vpop.f32.mrf.mxu0
      %v641 = vadd.f32 %v384, %v640
      %v642 = vpop.f32.mrf.mxu0
      %v643 = vpop.f32.mrf.mxu0
      %v644 = vpop.f32.mrf.mxu0
      %645 = vdwg.mxu0
      %646 = vmatprep.subr.bf16.mxu0 0
      %647 = vmatpush1.bf16.msra.mxu0 %v553
      %648 = vmatprep.subr.bf16.mxu0 0
      %649 = vmatpush1.bf16.msra.mxu0 %v552
      %650 = vmatprep.subr.bf16.mxu0 0
      %651 = vmatpush1.bf16.msra.mxu0 %v551
      %652 = vmatprep.subr.bf16.mxu0 0
      %653 = vmatpush1.bf16.msra.mxu0 %v550
      %654 = vmatprep.subr.bf16.mxu0 0
      %655 = vmatpush1.bf16.msra.mxu0 %v549
      %656 = vmatprep.subr.bf16.mxu0 0
      %657 = vmatpush1.bf16.msra.mxu0 %v548
      %658 = vmatprep.subr.bf16.mxu0 0
      %659 = vmatpush1.bf16.msra.mxu0 %v547
      %660 = vmatprep.subr.bf16.mxu0 0
      %661 = vmatpush1.bf16.msra.mxu0 %v546
      %662 = vmatprep.subr.bf16.mxu0 0
      %663 = vmatpush2.bf16.msra.mxu0 %v561
      %664 = vmatprep.subr.bf16.mxu0 0
      %665 = vmatpush2.bf16.msra.mxu0 %v560
      %666 = vmatprep.subr.bf16.mxu0 0
      %667 = vmatpush2.bf16.msra.mxu0 %v559
      %668 = vmatprep.subr.bf16.mxu0 0
      %669 = vmatpush2.bf16.msra.mxu0 %v558
      %670 = vmatprep.subr.bf16.mxu0 0
      %671 = vmatpush2.bf16.msra.mxu0 %v557
      %672 = vmatprep.subr.bf16.mxu0 0
      %673 = vmatpush2.bf16.msra.mxu0 %v556
      %674 = vmatprep.subr.bf16.mxu0 0
      %675 = vmatpush2.bf16.msra.mxu0 %v555
      %676 = vmatprep.subr.bf16.mxu0 0
      %677 = vmatpush2.bf16.msra.mxu0 %v554
      %678 = vmatprep.mubr.bf16.mxu0 %v305
      %679 = vmatmul.mubr.bf16.gmra.mxu0 %v304
      %v680 = vpop.f32.mrf.mxu0
      %v681 = vadd.f32 %v641, %v680
      %v682 = vpop.f32.mrf.mxu0
      %v683 = vpop.f32.mrf.mxu0
      %v684 = vpop.f32.mrf.mxu0
      %685 = vdwg.mxu0
      %686 = vmatprep.subr.bf16.mxu0 0
      %687 = vmatpush1.bf16.msra.mxu0 0
      %688 = vmatprep.subr.bf16.mxu0 0
      %689 = vmatpush1.bf16.msra.mxu0 0
      %690 = vmatprep.subr.bf16.mxu0 0
      %691 = vmatpush1.bf16.msra.mxu0 0
      %692 = vmatprep.subr.bf16.mxu0 0
      %693 = vmatpush1.bf16.msra.mxu0 0
      %694 = vmatprep.subr.bf16.mxu0 0
      %695 = vmatpush1.bf16.msra.mxu0 %v565
      %696 = vmatprep.subr.bf16.mxu0 0
      %697 = vmatpush1.bf16.msra.mxu0 %v564
      %698 = vmatprep.subr.bf16.mxu0 0
      %699 = vmatpush1.bf16.msra.mxu0 %v563
      %700 = vmatprep.subr.bf16.mxu0 0
      %701 = vmatpush1.bf16.msra.mxu0 %v562
      %702 = vmatprep.subr.bf16.mxu0 0
      %703 = vmatpush2.bf16.msra.mxu0 0
      %704 = vmatprep.subr.bf16.mxu0 0
      %705 = vmatpush2.bf16.msra.mxu0 0
      %706 = vmatprep.subr.bf16.mxu0 0
      %707 = vmatpush2.bf16.msra.mxu0 0
      %708 = vmatprep.subr.bf16.mxu0 0
      %709 = vmatpush2.bf16.msra.mxu0 0
      %710 = vmatprep.subr.bf16.mxu0 0
      %711 = vmatpush2.bf16.msra.mxu0 0
      %712 = vmatprep.subr.bf16.mxu0 0
      %713 = vmatpush2.bf16.msra.mxu0 0
      %714 = vmatprep.subr.bf16.mxu0 0
      %715 = vmatpush2.bf16.msra.mxu0 0
      %716 = vmatprep.subr.bf16.mxu0 0
      %717 = vmatpush2.bf16.msra.mxu0 0
      %718 = vmatprep.mubr.bf16.mxu0 0
      %719 = vmatmul.mubr.bf16.gmra.mxu0 %v604
      %v720 = vpop.f32.mrf.mxu0
      %v721 = vadd.f32 %v681, %v720
      %v722 = vpop.f32.mrf.mxu0
      %v723 = vpop.f32.mrf.mxu0
      %v724 = vpop.f32.mrf.mxu0
      %725 = vdwg.mxu0
      %v726 = vmax.f32 %v721, 0.0
      %vm727 = vcmask 257024
      %728 = vst.msk [vmem:[%s168] sm:$0xf] %vm727, %v726
      %p729 = scmp.lt.s32.totalorder %s14, 1
      %s730 = scalar_select %p729, %s14, 1
      %s731 = smul.addr %s730, 4
      %s732 = scalar_lea.vmem %s3, %s731
      // Predicated region
      $region33: #{generator_forward.11} parent=31 // pred_check
        %p733 = pneg %p100
      $region34: #{generator_forward.11} parent=31 // pred_check_branch
        %735 = sbr.rel (%p733) target = $region36
      $region35: #{generator_forward.11} parent=31 // pred_region
        _
      $region36: #{generator_forward.11} parent=31 // pred_fallthru
        _
    $region32: #{generator_forward.11} parent=5 // pred_fallthru
      _
    %p736 = scmp.le.s32.totalorder 2, %s9
    // Predicated region
    $region37: #{generator_forward.11} parent=5 // pred_check
      %p737 = pneg %p736
    $region38: #{generator_forward.11} parent=5 // pred_check_branch
      %739 = sbr.rel (%p737) target = $region40
    $region39: #{generator_forward.11} parent=5 // pred_region
      %s740 = ssub.s32 %s9, 2
      // Predicated region
      $region41: #{generator_forward.11} parent=39 // pred_check
        %p741 = pneg %p106
      $region42: #{generator_forward.11} parent=39 // pred_check_branch
        %743 = sbr.rel (%p741) target = $region44
      $region43: #{generator_forward.11} parent=39 // pred_region
        %p744 = scmp.lt.s32.totalorder %s15, 1
        %s745 = scalar_select %p744, %s15, 1
        %s746 = smul.addr %s745, 4
        %s747 = scalar_lea.vmem %s3, %s746
      $region44: #{generator_forward.11} parent=39 // pred_fallthru
        _
    $region40: #{generator_forward.11} parent=5 // pred_fallthru
      _
  $region6: #{generator_forward.11} parent=0 // loop_footer
    %s13 = sadd.s32 1, %s9
  $region7: #{generator_forward.11} parent=0 // loop_footer_branch
    %8 = sbr.rel target = $region3
  $region8: #{generator_forward.11} parent=0 // loop_exit
    _

// kernel: generator_forward.13
$region0: #{generator_forward.13}
  #allocation0 [shape = 'u32[]', space=smem, size = 0x4, offset = 0x4, fixed_abs, tag = 'smem constant byte address 0x4 - core index']
  #allocation1 [shape = 'u32[144,128]{1,0:T(1,128)}', space=vmem, size = 0x12000, scoped, tag = 'internal scratch']
  #allocation2 [shape = 'f32[4,288]{1,0:T(4,128)}', space=vmem, size = 0x1800, scoped, tag = 'scratch operand']
  %s0 = inlined_call_operand.vmem [shape: bf16[6,4,4,32], index: 0, kind: input, shape index: {}]
  %s1 = inlined_call_operand.vmem [shape: bf16[288,64], index: 1, kind: input, shape index: {}]
  %s2 = inlined_call_operand.vmem [shape: f32[1,64], index: 2, kind: input, shape index: {}]
  %s3 = inlined_call_operand.vmem [shape: bf16[6,4,64], index: 3, kind: output, shape index: {}]
  %s4 = sld [smem:[#allocation0]]
  $region45: #{generator_forward.13} parent=0
    _
  %s6 = ssub.s32 1, %s4
  %s7 = scalar_select 0, %s6, %s4
  loop: start=0, step=1, limit=8
  $region2: #{generator_forward.13} parent=0 // loop_pre_header
    _
  $region3: #{generator_forward.13} parent=0 // loop_header
    %s9 = sphi 0, %s13
    %p10 = scmp.ge.s32.totalorder %s9, 8
    %s19 = sphi 0, %s21
    %s22 = sphi 0, %s19
    %s23 = sphi 0, %s22
    %s39 = sphi 0, %s23
    %s43 = sphi 0, %s43
    %s45 = sphi 0, %s43
    %s46 = sphi 0, %s45
    %s60 = sphi 0, %s46
    %s64 = sphi 0, %s64
    %s66 = sphi 0, %s64
    %s67 = sphi 0, %s66
    %s81 = sphi 0, %s67
    %s87 = sphi 0, %s89
    %s90 = sphi 0, %s87
    %s91 = sphi 0, %s90
    %s107 = sphi 0, %s91
  $region4: #{generator_forward.13} parent=0 // loop_header_branch
    %12 = sbr.rel (%p10) target = $region8
  $region5: #{generator_forward.13} parent=0 // loop_body
    %s14 = ssub.s32 %s9, 1
    %s15 = ssub.s32 %s9, 2
    %s16 = sadd.s32 %s9, 1
    %s17 = ssub.s32 %s9, %s16
    %p18 = scmp.eq.s32.totalorder %s17, 0
    %s20 = sadd.s32 %s19, 1
    %s21 = scalar_select %p18, %s19, %s20
    %p24 = pneg %p18
    %p25 = scmp.eq.s32.totalorder %s9, 5
    %p26 = por %p24, %p25
    %p27 = scmp.ne.s32.totalorder %s19, %s22
    %p28 = scmp.eq.s32.totalorder %s9, 0
    %p29 = por %p27, %p28
    %p30 = scmp.ne.s32.totalorder %s19, %s22
    %p31 = scmp.eq.s32.totalorder %s14, 5
    %p32 = por %p30, %p31
    %p33 = scmp.ne.s32.totalorder %s22, %s23
    %p34 = scmp.eq.s32.totalorder %s14, 0
    %p35 = por %p33, %p34
    %p36 = scmp.ne.s32.totalorder %s22, %s23
    %p37 = scmp.eq.s32.totalorder %s15, 5
    %p38 = por %p36, %p37
    %p40 = scmp.ne.s32.totalorder %s23, %s39
    %p41 = scmp.eq.s32.totalorder %s15, 0
    %p42 = por %p40, %p41
    %s44 = sadd.s32 %s43, 1
    %p47 = scmp.eq.s32.totalorder %s9, 5
    %p48 = scmp.ne.s32.totalorder %s43, %s45
    %p49 = scmp.eq.s32.totalorder %s9, 0
    %p50 = por %p48, %p49
    %p51 = scmp.ne.s32.totalorder %s43, %s45
    %p52 = scmp.eq.s32.totalorder %s14, 5
    %p53 = por %p51, %p52
    %p54 = scmp.ne.s32.totalorder %s45, %s46
    %p55 = scmp.eq.s32.totalorder %s14, 0
    %p56 = por %p54, %p55
    %p57 = scmp.ne.s32.totalorder %s45, %s46
    %p58 = scmp.eq.s32.totalorder %s15, 5
    %p59 = por %p57, %p58
    %p61 = scmp.ne.s32.totalorder %s46, %s60
    %p62 = scmp.eq.s32.totalorder %s15, 0
    %p63 = por %p61, %p62
    %s65 = sadd.s32 %s64, 1
    %p68 = scmp.eq.s32.totalorder %s9, 5
    %p69 = scmp.ne.s32.totalorder %s64, %s66
    %p70 = scmp.eq.s32.totalorder %s9, 0
    %p71 = por %p69, %p70
    %p72 = scmp.ne.s32.totalorder %s64, %s66
    %p73 = scmp.eq.s32.totalorder %s14, 5
    %p74 = por %p72, %p73
    %p75 = scmp.ne.s32.totalorder %s66, %s67
    %p76 = scmp.eq.s32.totalorder %s14, 0
    %p77 = por %p75, %p76
    %p78 = scmp.ne.s32.totalorder %s66, %s67
    %p79 = scmp.eq.s32.totalorder %s15, 5
    %p80 = por %p78, %p79
    %p82 = scmp.ne.s32.totalorder %s67, %s81
    %p83 = scmp.eq.s32.totalorder %s15, 0
    %p84 = por %p82, %p83
    %s85 = ssub.s32 %s9, %s16
    %p86 = scmp.eq.s32.totalorder %s85, 0
    %s88 = sadd.s32 %s87, 1
    %s89 = scalar_select %p86, %s87, %s88
    %p92 = pneg %p86
    %p93 = scmp.eq.s32.totalorder %s9, 5
    %p94 = por %p92, %p93
    %p95 = scmp.ne.s32.totalorder %s87, %s90
    %p96 = scmp.eq.s32.totalorder %s9, 0
    %p97 = por %p95, %p96
    %p98 = scmp.ne.s32.totalorder %s87, %s90
    %p99 = scmp.eq.s32.totalorder %s14, 5
    %p100 = por %p98, %p99
    %p101 = scmp.ne.s32.totalorder %s90, %s91
    %p102 = scmp.eq.s32.totalorder %s14, 0
    %p103 = por %p101, %p102
    %p104 = scmp.ne.s32.totalorder %s90, %s91
    %p105 = scmp.eq.s32.totalorder %s15, 5
    %p106 = por %p104, %p105
    %p108 = scmp.ne.s32.totalorder %s91, %s107
    %p109 = scmp.eq.s32.totalorder %s15, 0
    %p110 = por %p108, %p109
    %p111 = scmp.le.s32.totalorder 1, %s9
    %p112 = scmp.lt.s32.totalorder %s9, 7
    %p113 = pnand %p111, %p112
    %p114 = pneg %p113
    // Predicated region
    $region9: #{generator_forward.13} parent=5 // pred_check
      _
    $region10: #{generator_forward.13} parent=5 // pred_check_branch
      %116 = sbr.rel (%p113) target = $region12
    $region11: #{generator_forward.13} parent=5 // pred_region
      %s117 = ssub.s32 %s9, 1
      // Predicated region
      $region13: #{generator_forward.13} parent=11 // pred_check
        %p118 = pneg %p56
      $region14: #{generator_forward.13} parent=11 // pred_check_branch
        %120 = sbr.rel (%p118) target = $region16
      $region15: #{generator_forward.13} parent=11 // pred_region
        _
      $region16: #{generator_forward.13} parent=11 // pred_fallthru
        _
      // Predicated region
      $region17: #{generator_forward.13} parent=11 // pred_check
        %p121 = pneg %p77
      $region18: #{generator_forward.13} parent=11 // pred_check_branch
        %123 = sbr.rel (%p121) target = $region20
      $region19: #{generator_forward.13} parent=11 // pred_region
        _
      $region20: #{generator_forward.13} parent=11 // pred_fallthru
        _
    $region12: #{generator_forward.13} parent=5 // pred_fallthru
      _
    %p124 = scmp.lt.s32.totalorder %s9, 6
    // Predicated region
    $region21: #{generator_forward.13} parent=5 // pred_check
      %p125 = pneg %p124
    $region22: #{generator_forward.13} parent=5 // pred_check_branch
      %127 = sbr.rel (%p125) target = $region24
    $region23: #{generator_forward.13} parent=5 // pred_region
      // Predicated region
      $region25: #{generator_forward.13} parent=23 // pred_check
        %p128 = pneg %p29
      $region26: #{generator_forward.13} parent=23 // pred_check_branch
        %130 = sbr.rel (%p128) target = $region28
      $region27: #{generator_forward.13} parent=23 // pred_region
        %p131 = scmp.lt.s32.totalorder %s9, 5
        %s132 = scalar_select %p131, %s9, 5
        %s133 = smul.addr %s132, 4
        %s134 = smul.addr %s133, 2
        %s135 = scalar_lea.vmem %s0, %s134
      $region28: #{generator_forward.13} parent=23 // pred_fallthru
        _
    $region24: #{generator_forward.13} parent=5 // pred_fallthru
      _
    %p136 = scmp.le.s32.totalorder 1, %s9
    %p137 = scmp.lt.s32.totalorder %s9, 7
    %p138 = pnand %p136, %p137
    %p139 = pneg %p138
    // Predicated region
    $region29: #{generator_forward.13} parent=5 // pred_check
      _
    $region30: #{generator_forward.13} parent=5 // pred_check_branch
      %141 = sbr.rel (%p138) target = $region32
    $region31: #{generator_forward.13} parent=5 // pred_region
      %s142 = ssub.s32 %s9, 1
      %p143 = scmp.lt.s32.totalorder %s14, 5
      %s144 = scalar_select %p143, %s14, 5
      %s145 = smul.addr %s144, 4
      %s146 = smul.addr %s145, 2
      %s147 = scalar_lea.vmem %s0, %s146
      %p148 = pneg %p35
      %p149 = pneg %p32
      %p150 = pneg %p56
      %p151 = pneg %p53
      %p152 = pneg %p77
      %p153 = pneg %p74
      %p154 = pneg %p103
      %p155 = pneg %p100
      %p156 = scmp.lt.s32.totalorder %s14, 5
      %s157 = scalar_select %p156, %s14, 5
      %s158 = smul.addr %s157, 2
      %s159 = scalar_lea.vmem %s3, %s158
      %p160 = scmp.lt.s32.totalorder %s14, 5
      %s161 = scalar_select %p160, %s14, 5
      %s162 = smul.addr %s161, 4
      %s163 = smul.addr %s162, 2
      %s164 = scalar_lea.vmem %s0, %s163
      %p165 = scmp.lt.s32.totalorder %s14, 5
      %s166 = scalar_select %p165, %s14, 5
      %s167 = smul.addr %s166, 2
      %s168 = scalar_lea.vmem %s3, %s167
      %v170 = vld [vmem:[%s164] sm:$0x1]
      %v171 = vunpack.c.l.bf16 %v170
      %vm172 = vcmask 254976
      %173 = vst.msk [vmem:[#allocation2] sm:$0x3] %vm172, %v171
      %v174 = vld [vmem:[%s164] sm:$0x3]
      %v175 = vunpack.c.l.bf16 %v174
      %v177 = vrot.slane %v175, 5
      %v178 = vrot.slane %v177, 4
      %179 = vrot.lane.b32.xlu0 %v178, 32
      %v180 = vpop.permute.xlu0 %179
      %vm182 = vcmask 517376
      %183 = vst.msk [vmem:[#allocation2] sm:$0x3] %vm182, %v180
      %v184 = vld [vmem:[%s164] sm:$0x2]
      %v185 = vunpack.c.l.bf16 %v184
      %v187 = vrot.slane %v185, 6
      %v188 = vrot.slane %v187, 4
      %189 = vrot.lane.b32.xlu0 %v188, 64
      %v190 = vpop.permute.xlu0 %189
      %vm192 = vcmask 779776
      %193 = vst.msk [vmem:[#allocation2] sm:$0x3] %vm192, %v190
      %s194 = scalar_lea.vmem %s164, 2
      %v195 = vld [vmem:[%s194] sm:$0x1]
      %v196 = vunpack.c.l.bf16 %v195
      %198 = vrot.lane.b32.xlu0 %v196, 96
      %v199 = vpop.permute.xlu0 %198
      %vm201 = vcmask 1042176
      %202 = vst.msk [vmem:[#allocation2] sm:$0x3] %vm201, %v199
      %v203 = vld [vmem:[%s194] sm:$0x3]
      %v204 = vunpack.c.l.bf16 %v203
      %v206 = vrot.slane %v204, 5
      %v207 = vrot.slane %v206, 4
      %209 = vst.msk [vmem:[#allocation2 + $0x4] sm:$0x3] %vm172, %v207
      %v210 = vld [vmem:[%s194] sm:$0x2]
      %v211 = vunpack.c.l.bf16 %v210
      %v213 = vrot.slane %v211, 6
      %v214 = vrot.slane %v213, 4
      %215 = vrot.lane.b32.xlu0 %v214, 32
      %v216 = vpop.permute.xlu0 %215
      %218 = vst.msk [vmem:[#allocation2 + $0x4] sm:$0x3] %vm182, %v216
      %s219 = scalar_lea.vmem %s164, 4
      %v220 = vld [vmem:[%s219] sm:$0x1]
      %v221 = vunpack.c.l.bf16 %v220
      %223 = vrot.lane.b32.xlu0 %v221, 64
      %v224 = vpop.permute.xlu0 %223
      %226 = vst.msk [vmem:[#allocation2 + $0x4] sm:$0x3] %vm192, %v224
      %v227 = vld [vmem:[%s219] sm:$0x3]
      %v228 = vunpack.c.l.bf16 %v227
      %v230 = vrot.slane %v228, 5
      %v231 = vrot.slane %v230, 4
      %232 = vrot.lane.b32.xlu0 %v231, 96
      %v233 = vpop.permute.xlu0 %232
      %235 = vst.msk [vmem:[#allocation2 + $0x4] sm:$0x3] %vm201, %v233
      %v236 = vld [vmem:[%s219] sm:$0x2]
      %v237 = vunpack.c.l.bf16 %v236
      %v239 = vrot.slane %v237, 6
      %v240 = vrot.slane %v239, 4
      %242 = vst.msk [vmem:[#allocation2 + $0x8] sm:$0x3] %vm172, %v240
      %v243 = vld [vmem:[%s194] sm:$0x1]
      %v244 = vunpack.c.l.bf16 %v243
      %v246 = vrot.slane %v244, 6
      %vm248 = vcmask 257026
      %249 = vst.msk [vmem:[#allocation2] sm:$0xc] %vm248, %v246
      %v250 = vld [vmem:[%s194] sm:$0x3]
      %v251 = vunpack.c.l.bf16 %v250
      %v253 = vrot.slane %v251, 7
      %254 = vrot.lane.b32.xlu0 %v253, 32
      %v255 = vpop.permute.xlu0 %254
      %vm257 = vcmask 519426
      %258 = vst.msk [vmem:[#allocation2] sm:$0xc] %vm257, %v255
      %v259 = vld [vmem:[%s194] sm:$0x2]
      %v260 = vunpack.c.l.bf16 %v259
      %262 = vrot.lane.b32.xlu0 %v260, 64
      %v263 = vpop.permute.xlu0 %262
      %vm265 = vcmask 781826
      %266 = vst.msk [vmem:[#allocation2] sm:$0xc] %vm265, %v263
      %v267 = vld [vmem:[%s219] sm:$0x1]
      %v268 = vunpack.c.l.bf16 %v267
      %v270 = vrot.slane %v268, 6
      %271 = vrot.lane.b32.xlu0 %v270, 96
      %v272 = vpop.permute.xlu0 %271
      %vm274 = vcmask 1044226
      %275 = vst.msk [vmem:[#allocation2] sm:$0xc] %vm274, %v272
      %v276 = vld [vmem:[%s219] sm:$0x3]
      %v277 = vunpack.c.l.bf16 %v276
      %v279 = vrot.slane %v277, 7
      %281 = vst.msk [vmem:[#allocation2 + $0x4] sm:$0xc] %vm248, %v279
      %v282 = vld [vmem:[%s219] sm:$0x2]
      %v283 = vunpack.c.l.bf16 %v282
      %285 = vrot.lane.b32.xlu0 %v283, 32
      %v286 = vpop.permute.xlu0 %285
      %288 = vst.msk [vmem:[#allocation2 + $0x4] sm:$0xc] %vm257, %v286
      %s289 = scalar_lea.vmem %s164, 6
      %v290 = vld [vmem:[%s289] sm:$0x1]
      %v291 = vunpack.c.l.bf16 %v290
      %v293 = vrot.slane %v291, 6
      %294 = vrot.lane.b32.xlu0 %v293, 64
      %v295 = vpop.permute.xlu0 %294
      %297 = vst.msk [vmem:[#allocation2 + $0x4] sm:$0xc] %vm265, %v295
      %v298 = vld [vmem:[%s289] sm:$0x3]
      %v299 = vunpack.c.l.bf16 %v298
      %v301 = vrot.slane %v299, 7
      %302 = vrot.lane.b32.xlu0 %v301, 96
      %v303 = vpop.permute.xlu0 %302
      %305 = vst.msk [vmem:[#allocation2 + $0x4] sm:$0xc] %vm274, %v303
      %v306 = vld [vmem:[%s289] sm:$0x2]
      %v307 = vunpack.c.l.bf16 %v306
      %308 = vst.msk [vmem:[#allocation2 + $0x8] sm:$0xc] %vm248, %v307
      %v309 = vld [vmem:[#allocation2] sm:$0xff]
      %v310 = vld [vmem:[#allocation2 + $0x8] sm:$0xf]
      %v312 = vcombine.high %v309, %v309
      %v314 = vpack.c.bf16 %v309, %v309
      %v315 = vpack.c.bf16 %v312, %v312
      %v316 = vpack.c.bf16 %v310, %v310
      %v317 = vld [vmem:[%s1] sm:$0xf]
      %v318 = vld [vmem:[%s1 + $0x4] sm:$0xf]
      %v319 = vld [vmem:[%s1 + $0x8] sm:$0xf]
      %v320 = vld [vmem:[%s1 + $0xc] sm:$0xf]
      %v321 = vld [vmem:[%s1 + $0x10] sm:$0xf]
      %v322 = vld [vmem:[%s1 + $0x14] sm:$0xf]
      %v323 = vld [vmem:[%s1 + $0x18] sm:$0xf]
      %v324 = vld [vmem:[%s1 + $0x1c] sm:$0xf]
      %v325 = vld [vmem:[%s1 + $0x20] sm:$0xf]
      %v326 = vld [vmem:[%s1 + $0x24] sm:$0xf]
      %v327 = vld [vmem:[%s1 + $0x28] sm:$0xf]
      %v328 = vld [vmem:[%s1 + $0x2c] sm:$0xf]
      %v329 = vld [vmem:[%s1 + $0x30] sm:$0xf]
      %v330 = vld [vmem:[%s1 + $0x34] sm:$0xf]
      %v331 = vld [vmem:[%s1 + $0x38] sm:$0xf]
      %v332 = vld [vmem:[%s1 + $0x3c] sm:$0xf]
      %v333 = vld [vmem:[%s1 + $0x40] sm:$0xf]
      %v334 = vld [vmem:[%s1 + $0x44] sm:$0xf]
      %v335 = vld [vmem:[%s1 + $0x48] sm:$0xf]
      %v336 = vld [vmem:[%s1 + $0x4c] sm:$0xf]
      %v337 = vld [vmem:[%s1 + $0x50] sm:$0xf]
      %v338 = vld [vmem:[%s1 + $0x54] sm:$0xf]
      %v339 = vld [vmem:[%s1 + $0x58] sm:$0xf]
      %v340 = vld [vmem:[%s1 + $0x5c] sm:$0xf]
      %v341 = vld [vmem:[%s1 + $0x60] sm:$0xf]
      %v342 = vld [vmem:[%s1 + $0x64] sm:$0xf]
      %v343 = vld [vmem:[%s1 + $0x68] sm:$0xf]
      %v344 = vld [vmem:[%s1 + $0x6c] sm:$0xf]
      %v345 = vld [vmem:[%s1 + $0x70] sm:$0xf]
      %v346 = vld [vmem:[%s1 + $0x74] sm:$0xf]
      %v347 = vld [vmem:[%s1 + $0x78] sm:$0xf]
      %v348 = vld [vmem:[%s1 + $0x7c] sm:$0xf]
      %v349 = vld [vmem:[%s1 + $0x80] sm:$0xf]
      %v350 = vld [vmem:[%s1 + $0x84] sm:$0xf]
      %v351 = vld [vmem:[%s1 + $0x88] sm:$0xf]
      %v352 = vld [vmem:[%s1 + $0x8c] sm:$0xf]
      %v353 = vld [vmem:[%s2] sm:$0x1]
      %v355 = vlaneseq
      %v356 = vshrl.u32 %v355, 7
      %v357 = vsub.s32 0, %v356
      %v358 = vrot.slane %v353, %v357
      %v396 = vunpack.c.l.b16 %v317
      %v397 = vunpack.c.l.b16 %v318
      %v398 = vunpack.c.l.b16 %v319
      %v399 = vunpack.c.l.b16 %v320
      %v400 = vunpack.c.l.b16 %v321
      %v401 = vunpack.c.l.b16 %v322
      %v402 = vunpack.c.l.b16 %v323
      %v403 = vunpack.c.l.b16 %v324
      %v404 = vunpack.c.l.b16 %v325
      %v405 = vunpack.c.l.b16 %v326
      %v406 = vunpack.c.l.b16 %v327
      %v407 = vunpack.c.l.b16 %v328
      %v408 = vunpack.c.l.b16 %v329
      %v409 = vunpack.c.l.b16 %v330
      %v410 = vunpack.c.l.b16 %v331
      %v411 = vunpack.c.l.b16 %v332
      %v412 = vunpack.c.l.b16 %v333
      %v413 = vunpack.c.l.b16 %v334
      %v414 = vunpack.c.l.b16 %v335
      %v415 = vunpack.c.l.b16 %v336
      %v416 = vunpack.c.l.b16 %v337
      %v417 = vunpack.c.l.b16 %v338
      %v418 = vunpack.c.l.b16 %v339
      %v419 = vunpack.c.l.b16 %v340
      %v420 = vunpack.c.l.b16 %v341
      %v421 = vunpack.c.l.b16 %v342
      %v422 = vunpack.c.l.b16 %v343
      %v423 = vunpack.c.l.b16 %v344
      %v424 = vunpack.c.l.b16 %v345
      %v425 = vunpack.c.l.b16 %v346
      %v426 = vunpack.c.l.b16 %v347
      %v427 = vunpack.c.l.b16 %v348
      %v428 = vunpack.c.l.b16 %v349
      %v429 = vunpack.c.l.b16 %v350
      %v430 = vunpack.c.l.b16 %v351
      %v431 = vunpack.c.l.b16 %v352
      %v432 = vpack.c.b16 %v397, %v396
      %v433 = vpack.c.b16 %v399, %v398
      %v434 = vpack.c.b16 %v401, %v400
      %v435 = vpack.c.b16 %v403, %v402
      %v436 = vpack.c.b16 %v405, %v404
      %v437 = vpack.c.b16 %v407, %v406
      %v438 = vpack.c.b16 %v409, %v408
      %v439 = vpack.c.b16 %v411, %v410
      %v440 = vpack.c.b16 %v413, %v412
      %v441 = vpack.c.b16 %v415, %v414
      %v442 = vpack.c.b16 %v417, %v416
      %v443 = vpack.c.b16 %v419, %v418
      %v444 = vpack.c.b16 %v421, %v420
      %v445 = vpack.c.b16 %v423, %v422
      %v446 = vpack.c.b16 %v425, %v424
      %v447 = vpack.c.b16 %v427, %v426
      %v448 = vpack.c.b16 %v429, %v428
      %v449 = vpack.c.b16 %v431, %v430
      %vm468 = vcmask 261120
      %v470 = vsel %vm468, %v316, 0
      %472 = vmatprep.subr.bf16.mxu0 0
      %473 = vmatpush1.bf16.msra.mxu0 %v439
      %474 = vmatprep.subr.bf16.mxu0 0
      %475 = vmatpush1.bf16.msra.mxu0 %v438
      %476 = vmatprep.subr.bf16.mxu0 0
      %477 = vmatpush1.bf16.msra.mxu0 %v437
      %478 = vmatprep.subr.bf16.mxu0 0
      %479 = vmatpush1.bf16.msra.mxu0 %v436
      %480 = vmatprep.subr.bf16.mxu0 0
      %481 = vmatpush1.bf16.msra.mxu0 %v435
      %482 = vmatprep.subr.bf16.mxu0 0
      %483 = vmatpush1.bf16.msra.mxu0 %v434
      %484 = vmatprep.subr.bf16.mxu0 0
      %485 = vmatpush1.bf16.msra.mxu0 %v433
      %486 = vmatprep.subr.bf16.mxu0 0
      %487 = vmatpush1.bf16.msra.mxu0 %v432
      %488 = vmatprep.subr.bf16.mxu0 0
      %489 = vmatpush2.bf16.msra.mxu0 %v447
      %490 = vmatprep.subr.bf16.mxu0 0
      %491 = vmatpush2.bf16.msra.mxu0 %v446
      %492 = vmatprep.subr.bf16.mxu0 0
      %493 = vmatpush2.bf16.msra.mxu0 %v445
      %494 = vmatprep.subr.bf16.mxu0 0
      %495 = vmatpush2.bf16.msra.mxu0 %v444
      %496 = vmatprep.subr.bf16.mxu0 0
      %497 = vmatpush2.bf16.msra.mxu0 %v443
      %498 = vmatprep.subr.bf16.mxu0 0
      %499 = vmatpush2.bf16.msra.mxu0 %v442
      %500 = vmatprep.subr.bf16.mxu0 0
      %501 = vmatpush2.bf16.msra.mxu0 %v441
      %502 = vmatprep.subr.bf16.mxu0 0
      %503 = vmatpush2.bf16.msra.mxu0 %v440
      %504 = vmatprep.mubr.bf16.mxu0 %v315
      %505 = vmatmul.mubr.bf16.gmra.mxu0 %v314
      %v506 = vpop.f32.mrf.mxu0
      %v507 = vadd.f32 %v358, %v506
      %v508 = vpop.f32.mrf.mxu0
      %v509 = vpop.f32.mrf.mxu0
      %v510 = vpop.f32.mrf.mxu0
      %511 = vdwg.mxu0
      %512 = vmatprep.subr.bf16.mxu0 0
      %513 = vmatpush1.bf16.msra.mxu0 0
      %514 = vmatprep.subr.bf16.mxu0 0
      %515 = vmatpush1.bf16.msra.mxu0 0
      %516 = vmatprep.subr.bf16.mxu0 0
      %517 = vmatpush1.bf16.msra.mxu0 0
      %518 = vmatprep.subr.bf16.mxu0 0
      %519 = vmatpush1.bf16.msra.mxu0 0
      %520 = vmatprep.subr.bf16.mxu0 0
      %521 = vmatpush1.bf16.msra.mxu0 0
      %522 = vmatprep.subr.bf16.mxu0 0
      %523 = vmatpush1.bf16.msra.mxu0 0
      %524 = vmatprep.subr.bf16.mxu0 0
      %525 = vmatpush1.bf16.msra.mxu0 %v449
      %526 = vmatprep.subr.bf16.mxu0 0
      %527 = vmatpush1.bf16.msra.mxu0 %v448
      %528 = vmatprep.subr.bf16.mxu0 0
      %529 = vmatpush2.bf16.msra.mxu0 0
      %530 = vmatprep.subr.bf16.mxu0 0
      %531 = vmatpush2.bf16.msra.mxu0 0
      %532 = vmatprep.subr.bf16.mxu0 0
      %533 = vmatpush2.bf16.msra.mxu0 0
      %534 = vmatprep.subr.bf16.mxu0 0
      %535 = vmatpush2.bf16.msra.mxu0 0
      %536 = vmatprep.subr.bf16.mxu0 0
      %537 = vmatpush2.bf16.msra.mxu0 0
      %538 = vmatprep.subr.bf16.mxu0 0
      %539 = vmatpush2.bf16.msra.mxu0 0
      %540 = vmatprep.subr.bf16.mxu0 0
      %541 = vmatpush2.bf16.msra.mxu0 0
      %542 = vmatprep.subr.bf16.mxu0 0
      %543 = vmatpush2.bf16.msra.mxu0 0
      %544 = vmatprep.mubr.bf16.mxu0 0
      %545 = vmatmul.mubr.bf16.gmra.mxu0 %v470
      %v546 = vpop.f32.mrf.mxu0
      %v547 = vadd.f32 %v507, %v546
      %v548 = vpop.f32.mrf.mxu0
      %v549 = vpop.f32.mrf.mxu0
      %v550 = vpop.f32.mrf.mxu0
      %551 = vdwg.mxu0
      %v552 = vpack.c.bf16 %v547, %v547
      %vm553 = vcmask 517120
      %554 = vst.msk [vmem:[%s168] sm:$0x3] %vm553, %v552
      %p555 = scmp.lt.s32.totalorder %s14, 5
      %s556 = scalar_select %p555, %s14, 5
      %s557 = smul.addr %s556, 2
      %s558 = scalar_lea.vmem %s3, %s557
      // Predicated region
      $region33: #{generator_forward.13} parent=31 // pred_check
        %p559 = pneg %p100
      $region34: #{generator_forward.13} parent=31 // pred_check_branch
        %561 = sbr.rel (%p559) target = $region36
      $region35: #{generator_forward.13} parent=31 // pred_region
        _
      $region36: #{generator_forward.13} parent=31 // pred_fallthru
        _
    $region32: #{generator_forward.13} parent=5 // pred_fallthru
      _
    %p562 = scmp.le.s32.totalorder 2, %s9
    // Predicated region
    $region37: #{generator_forward.13} parent=5 // pred_check
      %p563 = pneg %p562
    $region38: #{generator_forward.13} parent=5 // pred_check_branch
      %565 = sbr.rel (%p563) target = $region40
    $region39: #{generator_forward.13} parent=5 // pred_region
      %s566 = ssub.s32 %s9, 2
      // Predicated region
      $region41: #{generator_forward.13} parent=39 // pred_check
        %p567 = pneg %p106
      $region42: #{generator_forward.13} parent=39 // pred_check_branch
        %569 = sbr.rel (%p567) target = $region44
      $region43: #{generator_forward.13} parent=39 // pred_region
        %p570 = scmp.lt.s32.totalorder %s15, 5
        %s571 = scalar_select %p570, %s15, 5
        %s572 = smul.addr %s571, 2
        %s573 = scalar_lea.vmem %s3, %s572
      $region44: #{generator_forward.13} parent=39 // pred_fallthru
        _
    $region40: #{generator_forward.13} parent=5 // pred_fallthru
      _
  $region6: #{generator_forward.13} parent=0 // loop_footer
    %s13 = sadd.s32 1, %s9
  $region7: #{generator_forward.13} parent=0 // loop_footer_branch
    %8 = sbr.rel target = $region3
  $region8: #{generator_forward.13} parent=0 // loop_exit
    _

// kernel: generator_forward.12
$region0: #{generator_forward.12}
  #allocation0 [shape = 'u32[]', space=smem, size = 0x4, offset = 0x4, fixed_abs, tag = 'smem constant byte address 0x4 - core index']
  #allocation1 [shape = 'u32[144,128]{1,0:T(1,128)}', space=vmem, size = 0x12000, scoped, tag = 'internal scratch']
  #allocation2 [shape = 'f32[4,32]{1,0:T(4,128)}', space=vmem, size = 0x800, scoped, tag = 'scratch operand']
  #allocation3 [shape = 'f32[4,4,32]{2,1,0:T(4,128)}', space=vmem, size = 0x2000, scoped, tag = 'scratch operand']
  #allocation4 [shape = 'f32[4,72]{1,0:T(4,128)}', space=vmem, size = 0x800, scoped, tag = 'scratch operand']
  #allocation5 [shape = 'f32[4,288]{1,0:T(4,128)}', space=vmem, size = 0x1800, scoped, tag = 'scratch operand']
  %s0 = inlined_call_operand.vmem [shape: bf16[2,4,4,8], index: 0, kind: input, shape index: {}]
  %s1 = inlined_call_operand.vmem [shape: f32[2,4,32], index: 1, kind: input, shape index: {}]
  %s2 = inlined_call_operand.vmem [shape: bf16[72,32], index: 2, kind: input, shape index: {}]
  %s3 = inlined_call_operand.vmem [shape: bf16[288,32], index: 3, kind: input, shape index: {}]
  %s4 = inlined_call_operand.vmem [shape: bf16[72,32], index: 4, kind: input, shape index: {}]
  %s5 = inlined_call_operand.vmem [shape: bf16[288,32], index: 5, kind: input, shape index: {}]
  %s6 = inlined_call_operand.vmem [shape: bf16[72,32], index: 6, kind: input, shape index: {}]
  %s7 = inlined_call_operand.vmem [shape: bf16[288,32], index: 7, kind: input, shape index: {}]
  %s8 = inlined_call_operand.vmem [shape: f32[1,32], index: 8, kind: input, shape index: {}]
  %s9 = inlined_call_operand.vmem [shape: f32[1,32], index: 9, kind: input, shape index: {}]
  %s10 = inlined_call_operand.vmem [shape: f32[1,32], index: 10, kind: input, shape index: {}]
  %s11 = inlined_call_operand.vmem [shape: bf16[2,3,4,32], index: 11, kind: output, shape index: {}]
  %s12 = sld [smem:[#allocation0]]
  $region81: #{generator_forward.12} parent=0
    _
  %s14 = ssub.s32 1, %s12
  %s15 = scalar_select 0, %s14, %s12
  loop: start=0, step=1, limit=8
  $region2: #{generator_forward.12} parent=0 // loop_pre_header
    _
  $region3: #{generator_forward.12} parent=0 // loop_header
    %s17 = sphi 0, %s21
    %p18 = scmp.ge.s32.totalorder %s17, 8
    %s24 = sphi 0, %s36
    %s25 = sphi 0, %s32
    %s26 = sphi 0, %s24
    %s27 = sphi 0, %s25
    %s28 = sphi 0, %s26
    %s29 = sphi 0, %s27
    %s39 = sphi 0, %s41
    %s42 = sphi 0, %s39
    %s43 = sphi 0, %s42
    %s59 = sphi 0, %s43
    %s65 = sphi 0, %s67
    %s68 = sphi 0, %s65
    %s69 = sphi 0, %s68
    %s85 = sphi 0, %s69
    %s89 = sphi 0, %s89
    %s91 = sphi 0, %s89
    %s92 = sphi 0, %s91
    %s106 = sphi 0, %s92
    %s110 = sphi 0, %s110
    %s112 = sphi 0, %s110
    %s113 = sphi 0, %s112
    %s127 = sphi 0, %s113
    %s131 = sphi 0, %s131
    %s133 = sphi 0, %s131
    %s134 = sphi 0, %s133
    %s148 = sphi 0, %s134
    %s152 = sphi 0, %s152
    %s154 = sphi 0, %s152
    %s155 = sphi 0, %s154
    %s169 = sphi 0, %s155
    %s173 = sphi 0, %s173
    %s175 = sphi 0, %s173
    %s176 = sphi 0, %s175
    %s190 = sphi 0, %s176
    %s194 = sphi 0, %s194
    %s196 = sphi 0, %s194
    %s197 = sphi 0, %s196
    %s211 = sphi 0, %s197
    %s215 = sphi 0, %s215
    %s217 = sphi 0, %s215
    %s218 = sphi 0, %s217
    %s232 = sphi 0, %s218
    %s236 = sphi 0, %s236
    %s238 = sphi 0, %s236
    %s239 = sphi 0, %s238
    %s253 = sphi 0, %s239
    %s257 = sphi 0, %s257
    %s259 = sphi 0, %s257
    %s260 = sphi 0, %s259
    %s274 = sphi 0, %s260
    %s282 = sphi 0, %s284
    %s285 = sphi 0, %s282
    %s286 = sphi 0, %s285
    %s302 = sphi 0, %s286
  $region4: #{generator_forward.12} parent=0 // loop_header_branch
    %20 = sbr.rel (%p18) target = $region8
  $region5: #{generator_forward.12} parent=0 // loop_body
    %s22 = ssub.s32 %s17, 1
    %s23 = ssub.s32 %s17, 2
    %s30 = sadd.s32 1, %s25
    %p31 = scmp.ge.s32.totalorder %s30, 3
    %s32 = scalar_select %p31, 0, %s30
    %s33 = sadd.s32 1, %s24
    %s34 = scalar_select %p31, %s33, %s24
    %p35 = scmp.ge.s32.totalorder %s34, 2
    %s36 = scalar_select %p35, 0, %s34
    %s37 = ssub.s32 %s24, %s36
    %p38 = scmp.eq.s32.totalorder %s37, 0
    %s40 = sadd.s32 %s39, 1
    %s41 = scalar_select %p38, %s39, %s40
    %p44 = pneg %p38
    %p45 = scmp.eq.s32.totalorder %s17, 5
    %p46 = por %p44, %p45
    %p47 = scmp.ne.s32.totalorder %s39, %s42
    %p48 = scmp.eq.s32.totalorder %s17, 0
    %p49 = por %p47, %p48
    %p50 = scmp.ne.s32.totalorder %s39, %s42
    %p51 = scmp.eq.s32.totalorder %s22, 5
    %p52 = por %p50, %p51
    %p53 = scmp.ne.s32.totalorder %s42, %s43
    %p54 = scmp.eq.s32.totalorder %s22, 0
    %p55 = por %p53, %p54
    %p56 = scmp.ne.s32.totalorder %s42, %s43
    %p57 = scmp.eq.s32.totalorder %s23, 5
    %p58 = por %p56, %p57
    %p60 = scmp.ne.s32.totalorder %s43, %s59
    %p61 = scmp.eq.s32.totalorder %s23, 0
    %p62 = por %p60, %p61
    %s63 = ssub.s32 %s24, %s36
    %p64 = scmp.eq.s32.totalorder %s63, 0
    %s66 = sadd.s32 %s65, 1
    %s67 = scalar_select %p64, %s65, %s66
    %p70 = pneg %p64
    %p71 = scmp.eq.s32.totalorder %s17, 5
    %p72 = por %p70, %p71
    %p73 = scmp.ne.s32.totalorder %s65, %s68
    %p74 = scmp.eq.s32.totalorder %s17, 0
    %p75 = por %p73, %p74
    %p76 = scmp.ne.s32.totalorder %s65, %s68
    %p77 = scmp.eq.s32.totalorder %s22, 5
    %p78 = por %p76, %p77
    %p79 = scmp.ne.s32.totalorder %s68, %s69
    %p80 = scmp.eq.s32.totalorder %s22, 0
    %p81 = por %p79, %p80
    %p82 = scmp.ne.s32.totalorder %s68, %s69
    %p83 = scmp.eq.s32.totalorder %s23, 5
    %p84 = por %p82, %p83
    %p86 = scmp.ne.s32.totalorder %s69, %s85
    %p87 = scmp.eq.s32.totalorder %s23, 0
    %p88 = por %p86, %p87
    %s90 = sadd.s32 %s89, 1
    %p93 = scmp.eq.s32.totalorder %s17, 5
    %p94 = scmp.ne.s32.totalorder %s89, %s91
    %p95 = scmp.eq.s32.totalorder %s17, 0
    %p96 = por %p94, %p95
    %p97 = scmp.ne.s32.totalorder %s89, %s91
    %p98 = scmp.eq.s32.totalorder %s22, 5
    %p99 = por %p97, %p98
    %p100 = scmp.ne.s32.totalorder %s91, %s92
    %p101 = scmp.eq.s32.totalorder %s22, 0
    %p102 = por %p100, %p101
    %p103 = scmp.ne.s32.totalorder %s91, %s92
    %p104 = scmp.eq.s32.totalorder %s23, 5
    %p105 = por %p103, %p104
    %p107 = scmp.ne.s32.totalorder %s92, %s106
    %p108 = scmp.eq.s32.totalorder %s23, 0
    %p109 = por %p107, %p108
    %s111 = sadd.s32 %s110, 1
    %p114 = scmp.eq.s32.totalorder %s17, 5
    %p115 = scmp.ne.s32.totalorder %s110, %s112
    %p116 = scmp.eq.s32.totalorder %s17, 0
    %p117 = por %p115, %p116
    %p118 = scmp.ne.s32.totalorder %s110, %s112
    %p119 = scmp.eq.s32.totalorder %s22, 5
    %p120 = por %p118, %p119
    %p121 = scmp.ne.s32.totalorder %s112, %s113
    %p122 = scmp.eq.s32.totalorder %s22, 0
    %p123 = por %p121, %p122
    %p124 = scmp.ne.s32.totalorder %s112, %s113
    %p125 = scmp.eq.s32.totalorder %s23, 5
    %p126 = por %p124, %p125
    %p128 = scmp.ne.s32.totalorder %s113, %s127
    %p129 = scmp.eq.s32.totalorder %s23, 0
    %p130 = por %p128, %p129
    %s132 = sadd.s32 %s131, 1
    %p135 = scmp.eq.s32.totalorder %s17, 5
    %p136 = scmp.ne.s32.totalorder %s131, %s133
    %p137 = scmp.eq.s32.totalorder %s17, 0
    %p138 = por %p136, %p137
    %p139 = scmp.ne.s32.totalorder %s131, %s133
    %p140 = scmp.eq.s32.totalorder %s22, 5
    %p141 = por %p139, %p140
    %p142 = scmp.ne.s32.totalorder %s133, %s134
    %p143 = scmp.eq.s32.totalorder %s22, 0
    %p144 = por %p142, %p143
    %p145 = scmp.ne.s32.totalorder %s133, %s134
    %p146 = scmp.eq.s32.totalorder %s23, 5
    %p147 = por %p145, %p146
    %p149 = scmp.ne.s32.totalorder %s134, %s148
    %p150 = scmp.eq.s32.totalorder %s23, 0
    %p151 = por %p149, %p150
    %s153 = sadd.s32 %s152, 1
    %p156 = scmp.eq.s32.totalorder %s17, 5
    %p157 = scmp.ne.s32.totalorder %s152, %s154
    %p158 = scmp.eq.s32.totalorder %s17, 0
    %p159 = por %p157, %p158
    %p160 = scmp.ne.s32.totalorder %s152, %s154
    %p161 = scmp.eq.s32.totalorder %s22, 5
    %p162 = por %p160, %p161
    %p163 = scmp.ne.s32.totalorder %s154, %s155
    %p164 = scmp.eq.s32.totalorder %s22, 0
    %p165 = por %p163, %p164
    %p166 = scmp.ne.s32.totalorder %s154, %s155
    %p167 = scmp.eq.s32.totalorder %s23, 5
    %p168 = por %p166, %p167
    %p170 = scmp.ne.s32.totalorder %s155, %s169
    %p171 = scmp.eq.s32.totalorder %s23, 0
    %p172 = por %p170, %p171
    %s174 = sadd.s32 %s173, 1
    %p177 = scmp.eq.s32.totalorder %s17, 5
    %p178 = scmp.ne.s32.totalorder %s173, %s175
    %p179 = scmp.eq.s32.totalorder %s17, 0
    %p180 = por %p178, %p179
    %p181 = scmp.ne.s32.totalorder %s173, %s175
    %p182 = scmp.eq.s32.totalorder %s22, 5
    %p183 = por %p181, %p182
    %p184 = scmp.ne.s32.totalorder %s175, %s176
    %p185 = scmp.eq.s32.totalorder %s22, 0
    %p186 = por %p184, %p185
    %p187 = scmp.ne.s32.totalorder %s175, %s176
    %p188 = scmp.eq.s32.totalorder %s23, 5
    %p189 = por %p187, %p188
    %p191 = scmp.ne.s32.totalorder %s176, %s190
    %p192 = scmp.eq.s32.totalorder %s23, 0
    %p193 = por %p191, %p192
    %s195 = sadd.s32 %s194, 1
    %p198 = scmp.eq.s32.totalorder %s17, 5
    %p199 = scmp.ne.s32.totalorder %s194, %s196
    %p200 = scmp.eq.s32.totalorder %s17, 0
    %p201 = por %p199, %p200
    %p202 = scmp.ne.s32.totalorder %s194, %s196
    %p203 = scmp.eq.s32.totalorder %s22, 5
    %p204 = por %p202, %p203
    %p205 = scmp.ne.s32.totalorder %s196, %s197
    %p206 = scmp.eq.s32.totalorder %s22, 0
    %p207 = por %p205, %p206
    %p208 = scmp.ne.s32.totalorder %s196, %s197
    %p209 = scmp.eq.s32.totalorder %s23, 5
    %p210 = por %p208, %p209
    %p212 = scmp.ne.s32.totalorder %s197, %s211
    %p213 = scmp.eq.s32.totalorder %s23, 0
    %p214 = por %p212, %p213
    %s216 = sadd.s32 %s215, 1
    %p219 = scmp.eq.s32.totalorder %s17, 5
    %p220 = scmp.ne.s32.totalorder %s215, %s217
    %p221 = scmp.eq.s32.totalorder %s17, 0
    %p222 = por %p220, %p221
    %p223 = scmp.ne.s32.totalorder %s215, %s217
    %p224 = scmp.eq.s32.totalorder %s22, 5
    %p225 = por %p223, %p224
    %p226 = scmp.ne.s32.totalorder %s217, %s218
    %p227 = scmp.eq.s32.totalorder %s22, 0
    %p228 = por %p226, %p227
    %p229 = scmp.ne.s32.totalorder %s217, %s218
    %p230 = scmp.eq.s32.totalorder %s23, 5
    %p231 = por %p229, %p230
    %p233 = scmp.ne.s32.totalorder %s218, %s232
    %p234 = scmp.eq.s32.totalorder %s23, 0
    %p235 = por %p233, %p234
    %s237 = sadd.s32 %s236, 1
    %p240 = scmp.eq.s32.totalorder %s17, 5
    %p241 = scmp.ne.s32.totalorder %s236, %s238
    %p242 = scmp.eq.s32.totalorder %s17, 0
    %p243 = por %p241, %p242
    %p244 = scmp.ne.s32.totalorder %s236, %s238
    %p245 = scmp.eq.s32.totalorder %s22, 5
    %p246 = por %p244, %p245
    %p247 = scmp.ne.s32.totalorder %s238, %s239
    %p248 = scmp.eq.s32.totalorder %s22, 0
    %p249 = por %p247, %p248
    %p250 = scmp.ne.s32.totalorder %s238, %s239
    %p251 = scmp.eq.s32.totalorder %s23, 5
    %p252 = por %p250, %p251
    %p254 = scmp.ne.s32.totalorder %s239, %s253
    %p255 = scmp.eq.s32.totalorder %s23, 0
    %p256 = por %p254, %p255
    %s258 = sadd.s32 %s257, 1
    %p261 = scmp.eq.s32.totalorder %s17, 5
    %p262 = scmp.ne.s32.totalorder %s257, %s259
    %p263 = scmp.eq.s32.totalorder %s17, 0
    %p264 = por %p262, %p263
    %p265 = scmp.ne.s32.totalorder %s257, %s259
    %p266 = scmp.eq.s32.totalorder %s22, 5
    %p267 = por %p265, %p266
    %p268 = scmp.ne.s32.totalorder %s259, %s260
    %p269 = scmp.eq.s32.totalorder %s22, 0
    %p270 = por %p268, %p269
    %p271 = scmp.ne.s32.totalorder %s259, %s260
    %p272 = scmp.eq.s32.totalorder %s23, 5
    %p273 = por %p271, %p272
    %p275 = scmp.ne.s32.totalorder %s260, %s274
    %p276 = scmp.eq.s32.totalorder %s23, 0
    %p277 = por %p275, %p276
    %s278 = ssub.s32 %s24, %s36
    %s279 = ssub.s32 %s25, %s32
    %s280 = sor.u32 %s278, %s279
    %p281 = scmp.eq.s32.totalorder %s280, 0
    %s283 = sadd.s32 %s282, 1
    %s284 = scalar_select %p281, %s282, %s283
    %p287 = pneg %p281
    %p288 = scmp.eq.s32.totalorder %s17, 5
    %p289 = por %p287, %p288
    %p290 = scmp.ne.s32.totalorder %s282, %s285
    %p291 = scmp.eq.s32.totalorder %s17, 0
    %p292 = por %p290, %p291
    %p293 = scmp.ne.s32.totalorder %s282, %s285
    %p294 = scmp.eq.s32.totalorder %s22, 5
    %p295 = por %p293, %p294
    %p296 = scmp.ne.s32.totalorder %s285, %s286
    %p297 = scmp.eq.s32.totalorder %s22, 0
    %p298 = por %p296, %p297
    %p299 = scmp.ne.s32.totalorder %s285, %s286
    %p300 = scmp.eq.s32.totalorder %s23, 5
    %p301 = por %p299, %p300
    %p303 = scmp.ne.s32.totalorder %s286, %s302
    %p304 = scmp.eq.s32.totalorder %s23, 0
    %p305 = por %p303, %p304
    %p306 = scmp.le.s32.totalorder 1, %s17
    %p307 = scmp.lt.s32.totalorder %s17, 7
    %p308 = pnand %p306, %p307
    %p309 = pneg %p308
    // Predicated region
    $region9: #{generator_forward.12} parent=5 // pred_check
      _
    $region10: #{generator_forward.12} parent=5 // pred_check_branch
      %311 = sbr.rel (%p308) target = $region12
    $region11: #{generator_forward.12} parent=5 // pred_region
      %s312 = ssub.s32 %s17, 1
      // Predicated region
      $region13: #{generator_forward.12} parent=11 // pred_check
        %p313 = pneg %p102
      $region14: #{generator_forward.12} parent=11 // pred_check_branch
        %315 = sbr.rel (%p313) target = $region16
      $region15: #{generator_forward.12} parent=11 // pred_region
        _
      $region16: #{generator_forward.12} parent=11 // pred_fallthru
        _
      // Predicated region
      $region17: #{generator_forward.12} parent=11 // pred_check
        %p316 = pneg %p123
      $region18: #{generator_forward.12} parent=11 // pred_check_branch
        %318 = sbr.rel (%p316) target = $region20
      $region19: #{generator_forward.12} parent=11 // pred_region
        _
      $region20: #{generator_forward.12} parent=11 // pred_fallthru
        _
      // Predicated region
      $region21: #{generator_forward.12} parent=11 // pred_check
        %p319 = pneg %p144
      $region22: #{generator_forward.12} parent=11 // pred_check_branch
        %321 = sbr.rel (%p319) target = $region24
      $region23: #{generator_forward.12} parent=11 // pred_region
        _
      $region24: #{generator_forward.12} parent=11 // pred_fallthru
        _
      // Predicated region
      $region25: #{generator_forward.12} parent=11 // pred_check
        %p322 = pneg %p165
      $region26: #{generator_forward.12} parent=11 // pred_check_branch
        %324 = sbr.rel (%p322) target = $region28
      $region27: #{generator_forward.12} parent=11 // pred_region
        _
      $region28: #{generator_forward.12} parent=11 // pred_fallthru
        _
      // Predicated region
      $region29: #{generator_forward.12} parent=11 // pred_check
        %p325 = pneg %p186
      $region30: #{generator_forward.12} parent=11 // pred_check_branch
        %327 = sbr.rel (%p325) target = $region32
      $region31: #{generator_forward.12} parent=11 // pred_region
        _
      $region32: #{generator_forward.12} parent=11 // pred_fallthru
        _
      // Predicated region
      $region33: #{generator_forward.12} parent=11 // pred_check
        %p328 = pneg %p207
      $region34: #{generator_forward.12} parent=11 // pred_check_branch
        %330 = sbr.rel (%p328) target = $region36
      $region35: #{generator_forward.12} parent=11 // pred_region
        _
      $region36: #{generator_forward.12} parent=11 // pred_fallthru
        _
      // Predicated region
      $region37: #{generator_forward.12} parent=11 // pred_check
        %p331 = pneg %p228
      $region38: #{generator_forward.12} parent=11 // pred_check_branch
        %333 = sbr.rel (%p331) target = $region40
      $region39: #{generator_forward.12} parent=11 // pred_region
        _
      $region40: #{generator_forward.12} parent=11 // pred_fallthru
        _
      // Predicated region
      $region41: #{generator_forward.12} parent=11 // pred_check
        %p334 = pneg %p249
      $region42: #{generator_forward.12} parent=11 // pred_check_branch
        %336 = sbr.rel (%p334) target = $region44
      $region43: #{generator_forward.12} parent=11 // pred_region
        _
      $region44: #{generator_forward.12} parent=11 // pred_fallthru
        _
      // Predicated region
      $region45: #{generator_forward.12} parent=11 // pred_check
        %p337 = pneg %p270
      $region46: #{generator_forward.12} parent=11 // pred_check_branch
        %339 = sbr.rel (%p337) target = $region48
      $region47: #{generator_forward.12} parent=11 // pred_region
        _
      $region48: #{generator_forward.12} parent=11 // pred_fallthru
        _
    $region12: #{generator_forward.12} parent=5 // pred_fallthru
      _
    %p340 = scmp.lt.s32.totalorder %s17, 6
    // Predicated region
    $region49: #{generator_forward.12} parent=5 // pred_check
      %p341 = pneg %p340
    $region50: #{generator_forward.12} parent=5 // pred_check_branch
      %343 = sbr.rel (%p341) target = $region52
    $region51: #{generator_forward.12} parent=5 // pred_region
      // Predicated region
      $region53: #{generator_forward.12} parent=51 // pred_check
        %p344 = pneg %p49
      $region54: #{generator_forward.12} parent=51 // pred_check_branch
        %346 = sbr.rel (%p344) target = $region56
      $region55: #{generator_forward.12} parent=51 // pred_region
        %p347 = scmp.lt.s32.totalorder %s24, 1
        %s348 = scalar_select %p347, %s24, 1
        %s349 = smul.addr %s348, 4
        %s350 = smul.addr %s349, 2
        %s351 = scalar_lea.vmem %s0, %s350
      $region56: #{generator_forward.12} parent=51 // pred_fallthru
        _
      // Predicated region
      $region57: #{generator_forward.12} parent=51 // pred_check
        %p352 = pneg %p75
      $region58: #{generator_forward.12} parent=51 // pred_check_branch
        %354 = sbr.rel (%p352) target = $region60
      $region59: #{generator_forward.12} parent=51 // pred_region
        %p355 = scmp.lt.s32.totalorder %s24, 1
        %s356 = scalar_select %p355, %s24, 1
        %s357 = smul.addr %s356, 4
        %s358 = scalar_lea.vmem %s1, %s357
      $region60: #{generator_forward.12} parent=51 // pred_fallthru
        _
    $region52: #{generator_forward.12} parent=5 // pred_fallthru
      _
    %p359 = scmp.le.s32.totalorder 1, %s17
    %p360 = scmp.lt.s32.totalorder %s17, 7
    %p361 = pnand %p359, %p360
    %p362 = pneg %p361
    // Predicated region
    $region61: #{generator_forward.12} parent=5 // pred_check
      _
    $region62: #{generator_forward.12} parent=5 // pred_check_branch
      %364 = sbr.rel (%p361) target = $region64
    $region63: #{generator_forward.12} parent=5 // pred_region
      %s365 = ssub.s32 %s17, 1
      %p366 = scmp.lt.s32.totalorder %s26, 1
      %s367 = scalar_select %p366, %s26, 1
      %s368 = smul.addr %s367, 4
      %s369 = smul.addr %s368, 2
      %s370 = scalar_lea.vmem %s0, %s369
      %p371 = pneg %p55
      %p372 = pneg %p52
      %p373 = scmp.lt.s32.totalorder %s26, 1
      %s374 = scalar_select %p373, %s26, 1
      %s375 = smul.addr %s374, 4
      %s376 = scalar_lea.vmem %s1, %s375
      %p377 = pneg %p81
      %p378 = pneg %p78
      %p379 = pneg %p102
      %p380 = pneg %p99
      %p381 = pneg %p123
      %p382 = pneg %p120
      %p383 = pneg %p144
      %p384 = pneg %p141
      %p385 = pneg %p165
      %p386 = pneg %p162
      %p387 = pneg %p186
      %p388 = pneg %p183
      %p389 = pneg %p207
      %p390 = pneg %p204
      %p391 = pneg %p228
      %p392 = pneg %p225
      %p393 = pneg %p249
      %p394 = pneg %p246
      %p395 = pneg %p270
      %p396 = pneg %p267
      %p397 = pneg %p298
      %p398 = pneg %p295
      %p399 = scmp.lt.s32.totalorder %s26, 1
      %s400 = scalar_select %p399, %s26, 1
      %p401 = scmp.lt.s32.totalorder %s27, 2
      %s402 = scalar_select %p401, %s27, 2
      %s403 = smul.addr %s400, 3
      %s404 = sadd.s32 %s402, %s403
      %s405 = smul.addr %s404, 2
      %s406 = scalar_lea.vmem %s11, %s405
      %p407 = scmp.lt.s32.totalorder %s26, 1
      %s408 = scalar_select %p407, %s26, 1
      %s409 = smul.addr %s408, 4
      %s410 = smul.addr %s409, 2
      %s411 = scalar_lea.vmem %s0, %s410
      %p412 = scmp.lt.s32.totalorder %s26, 1
      %s413 = scalar_select %p412, %s26, 1
      %s414 = smul.addr %s413, 4
      %s415 = scalar_lea.vmem %s1, %s414
      %p416 = scmp.lt.s32.totalorder %s26, 1
      %s417 = scalar_select %p416, %s26, 1
      %p418 = scmp.lt.s32.totalorder %s27, 2
      %s419 = scalar_select %p418, %s27, 2
      %s420 = smul.addr %s417, 3
      %s421 = sadd.s32 %s419, %s420
      %s422 = smul.addr %s421, 2
      %s423 = scalar_lea.vmem %s11, %s422
      %p425 = scmp.eq.s32.totalorder %s27, 0
      // Predicated region
      $region65: #{generator_forward.12} parent=63 // pred_check
        %p426 = pneg %p425
      $region66: #{generator_forward.12} parent=63 // pred_check_branch
        %428 = sbr.rel (%p426) target = $region68
      $region67: #{generator_forward.12} parent=63 // pred_region
        %v429 = vld [vmem:[%s415] sm:$0xf]
        %vm430 = vcmask 257024
        %431 = vst.msk [vmem:[#allocation2] sm:$0xf] %vm430, %v429
        %432 = vst.msk [vmem:[#allocation3] sm:$0xf] %vm430, 0.0
        %433 = vst.msk [vmem:[#allocation3 + $0x4] sm:$0xf] %vm430, 0.0
        %434 = vst.msk [vmem:[#allocation3 + $0x8] sm:$0xf] %vm430, 0.0
        %435 = vst.msk [vmem:[#allocation3 + $0xc] sm:$0xf] %vm430, 0.0
        %v436 = vld [vmem:[%s411] sm:$0x1]
        %v437 = vunpack.c.l.bf16 %v436
        %vm438 = vcmask 58368
        %439 = vst.msk [vmem:[#allocation4] sm:$0x3] %vm438, %v437
        %v440 = vld [vmem:[%s411] sm:$0x3]
        %v441 = vunpack.c.l.bf16 %v440
        %443 = vrot.lane.b32.xlu0 %v441, 8
        %v444 = vpop.permute.xlu0 %443
        %vm446 = vcmask 124993
        %447 = vst.msk [vmem:[#allocation4 - $0x1] sm:$0x6] %vm446, %v444
        %v448 = vld [vmem:[%s411] sm:$0x2]
        %v449 = vunpack.c.l.bf16 %v448
        %451 = vrot.lane.b32.xlu0 %v449, 16
        %v452 = vpop.permute.xlu0 %451
        %vm454 = vcmask 191618
        %455 = vst.msk [vmem:[#allocation4 - $0x2] sm:$0xc] %vm454, %v452
        %s456 = scalar_lea.vmem %s411, 2
        %v457 = vld [vmem:[%s456] sm:$0x1]
        %v458 = vunpack.c.l.bf16 %v457
        %460 = vrot.lane.b32.xlu0 %v458, 24
        %v461 = vpop.permute.xlu0 %460
        %vm463 = vcmask 255168
        %464 = vst.msk [vmem:[#allocation4] sm:$0x3] %vm463, %v461
        %v465 = vld [vmem:[%s456] sm:$0x3]
        %v466 = vunpack.c.l.bf16 %v465
        %468 = vrot.lane.b32.xlu0 %v466, 32
        %v469 = vpop.permute.xlu0 %468
        %vm471 = vcmask 321793
        %472 = vst.msk [vmem:[#allocation4 - $0x1] sm:$0x6] %vm471, %v469
        %v473 = vld [vmem:[%s456] sm:$0x2]
        %v474 = vunpack.c.l.bf16 %v473
        %476 = vrot.lane.b32.xlu0 %v474, 40
        %v477 = vpop.permute.xlu0 %476
        %vm479 = vcmask 388418
        %480 = vst.msk [vmem:[#allocation4 - $0x2] sm:$0xc] %vm479, %v477
        %s481 = scalar_lea.vmem %s411, 4
        %v482 = vld [vmem:[%s481] sm:$0x1]
        %v483 = vunpack.c.l.bf16 %v482
        %485 = vrot.lane.b32.xlu0 %v483, 48
        %v486 = vpop.permute.xlu0 %485
        %vm488 = vcmask 451968
        %489 = vst.msk [vmem:[#allocation4] sm:$0x3] %vm488, %v486
        %v490 = vld [vmem:[%s481] sm:$0x3]
        %v491 = vunpack.c.l.bf16 %v490
        %493 = vrot.lane.b32.xlu0 %v491, 56
        %v494 = vpop.permute.xlu0 %493
        %vm496 = vcmask 518593
        %497 = vst.msk [vmem:[#allocation4 - $0x1] sm:$0x6] %vm496, %v494
        %v498 = vld [vmem:[%s481] sm:$0x2]
        %v499 = vunpack.c.l.bf16 %v498
        %501 = vrot.lane.b32.xlu0 %v499, 64
        %v502 = vpop.permute.xlu0 %501
        %vm504 = vcmask 585218
        %505 = vst.msk [vmem:[#allocation4 - $0x2] sm:$0xc] %vm504, %v502
        %v506 = vld [vmem:[%s456] sm:$0x1]
        %v507 = vunpack.c.l.bf16 %v506
        %508 = vst.msk [vmem:[#allocation4 + $0x2] sm:$0x3] %vm438, %v507
        %v509 = vld [vmem:[%s456] sm:$0x3]
        %v510 = vunpack.c.l.bf16 %v509
        %512 = vrot.lane.b32.xlu0 %v510, 8
        %v513 = vpop.permute.xlu0 %512
        %515 = vst.msk [vmem:[#allocation4 + $0x1] sm:$0x6] %vm446, %v513
        %v516 = vld [vmem:[%s456] sm:$0x2]
        %v517 = vunpack.c.l.bf16 %v516
        %519 = vrot.lane.b32.xlu0 %v517, 16
        %v520 = vpop.permute.xlu0 %519
        %522 = vst.msk [vmem:[#allocation4] sm:$0xc] %vm454, %v520
        %v523 = vld [vmem:[%s481] sm:$0x1]
        %v524 = vunpack.c.l.bf16 %v523
        %526 = vrot.lane.b32.xlu0 %v524, 24
        %v527 = vpop.permute.xlu0 %526
        %529 = vst.msk [vmem:[#allocation4 + $0x2] sm:$0x3] %vm463, %v527
        %v530 = vld [vmem:[%s481] sm:$0x3]
        %v531 = vunpack.c.l.bf16 %v530
        %533 = vrot.lane.b32.xlu0 %v531, 32
        %v534 = vpop.permute.xlu0 %533
        %536 = vst.msk [vmem:[#allocation4 + $0x1] sm:$0x6] %vm471, %v534
        %v537 = vld [vmem:[%s481] sm:$0x2]
        %v538 = vunpack.c.l.bf16 %v537
        %540 = vrot.lane.b32.xlu0 %v538, 40
        %v541 = vpop.permute.xlu0 %540
        %543 = vst.msk [vmem:[#allocation4] sm:$0xc] %vm479, %v541
        %s544 = scalar_lea.vmem %s411, 6
        %v545 = vld [vmem:[%s544] sm:$0x1]
        %v546 = vunpack.c.l.bf16 %v545
        %548 = vrot.lane.b32.xlu0 %v546, 48
        %v549 = vpop.permute.xlu0 %548
        %551 = vst.msk [vmem:[#allocation4 + $0x2] sm:$0x3] %vm488, %v549
        %v552 = vld [vmem:[%s544] sm:$0x3]
        %v553 = vunpack.c.l.bf16 %v552
        %555 = vrot.lane.b32.xlu0 %v553, 56
        %v556 = vpop.permute.xlu0 %555
        %558 = vst.msk [vmem:[#allocation4 + $0x1] sm:$0x6] %vm496, %v556
        %v559 = vld [vmem:[%s544] sm:$0x2]
        %v560 = vunpack.c.l.bf16 %v559
        %562 = vrot.lane.b32.xlu0 %v560, 64
        %v563 = vpop.permute.xlu0 %562
        %565 = vst.msk [vmem:[#allocation4] sm:$0xc] %vm504, %v563
      $region68: #{generator_forward.12} parent=63 // pred_fallthru
        _
      %v566 = vld [vmem:[#allocation2] sm:$0xf]
      %s567 = scalar_lea.vmem [#allocation3], 4
      %vm568 = vcmask 254976
      %569 = vst.msk [vmem:[%s567 + $0x1] sm:$0x3] %vm568, %v566
      %s570 = scalar_lea.vmem [#allocation3], 8
      %vm571 = vcmask 257026
      %572 = vst.msk [vmem:[%s570 - $0x1] sm:$0xc] %vm571, %v566
      %v573 = vld [vmem:[#allocation3] sm:$0x3]
      %574 = vst.msk [vmem:[#allocation5] sm:$0x3] %vm568, %v573
      %v575 = vld [vmem:[#allocation3 + $0x1] sm:$0x3]
      %577 = vrot.lane.b32.xlu0 %v575, 32
      %v578 = vpop.permute.xlu0 %577
      %vm580 = vcmask 517376
      %581 = vst.msk [vmem:[#allocation5] sm:$0x3] %vm580, %v578
      %v582 = vld [vmem:[#allocation3 + $0x2] sm:$0x3]
      %584 = vrot.lane.b32.xlu0 %v582, 64
      %v585 = vpop.permute.xlu0 %584
      %vm587 = vcmask 779776
      %588 = vst.msk [vmem:[#allocation5] sm:$0x3] %vm587, %v585
      %v589 = vld [vmem:[%s567] sm:$0x3]
      %591 = vrot.lane.b32.xlu0 %v589, 96
      %v592 = vpop.permute.xlu0 %591
      %vm594 = vcmask 1042176
      %595 = vst.msk [vmem:[#allocation5] sm:$0x3] %vm594, %v592
      %v596 = vld [vmem:[%s567 + $0x1] sm:$0x3]
      %597 = vst.msk [vmem:[#allocation5 + $0x4] sm:$0x3] %vm568, %v596
      %v598 = vld [vmem:[%s567 + $0x2] sm:$0x3]
      %600 = vrot.lane.b32.xlu0 %v598, 32
      %v601 = vpop.permute.xlu0 %600
      %603 = vst.msk [vmem:[#allocation5 + $0x4] sm:$0x3] %vm580, %v601
      %v604 = vld [vmem:[%s570] sm:$0x3]
      %606 = vrot.lane.b32.xlu0 %v604, 64
      %v607 = vpop.permute.xlu0 %606
      %609 = vst.msk [vmem:[#allocation5 + $0x4] sm:$0x3] %vm587, %v607
      %v610 = vld [vmem:[%s570 + $0x1] sm:$0x3]
      %612 = vrot.lane.b32.xlu0 %v610, 96
      %v613 = vpop.permute.xlu0 %612
      %615 = vst.msk [vmem:[#allocation5 + $0x4] sm:$0x3] %vm594, %v613
      %v616 = vld [vmem:[%s570 + $0x2] sm:$0x3]
      %617 = vst.msk [vmem:[#allocation5 + $0x8] sm:$0x3] %vm568, %v616
      %v618 = vld [vmem:[%s567] sm:$0x3]
      %v620 = vrot.slane %v618, 6
      %622 = vst.msk [vmem:[#allocation5] sm:$0xc] %vm571, %v620
      %v623 = vld [vmem:[%s567 + $0x1] sm:$0x3]
      %v625 = vrot.slane %v623, 6
      %626 = vrot.lane.b32.xlu0 %v625, 32
      %v627 = vpop.permute.xlu0 %626
      %vm629 = vcmask 519426
      %630 = vst.msk [vmem:[#allocation5] sm:$0xc] %vm629, %v627
      %v631 = vld [vmem:[%s567 + $0x2] sm:$0x3]
      %v633 = vrot.slane %v631, 6
      %634 = vrot.lane.b32.xlu0 %v633, 64
      %v635 = vpop.permute.xlu0 %634
      %vm637 = vcmask 781826
      %638 = vst.msk [vmem:[#allocation5] sm:$0xc] %vm637, %v635
      %v639 = vld [vmem:[%s570] sm:$0x3]
      %v641 = vrot.slane %v639, 6
      %642 = vrot.lane.b32.xlu0 %v641, 96
      %v643 = vpop.permute.xlu0 %642
      %vm645 = vcmask 1044226
      %646 = vst.msk [vmem:[#allocation5] sm:$0xc] %vm645, %v643
      %v647 = vld [vmem:[%s570 + $0x1] sm:$0x3]
      %v649 = vrot.slane %v647, 6
      %651 = vst.msk [vmem:[#allocation5 + $0x4] sm:$0xc] %vm571, %v649
      %v652 = vld [vmem:[%s570 + $0x2] sm:$0x3]
      %v654 = vrot.slane %v652, 6
      %655 = vrot.lane.b32.xlu0 %v654, 32
      %v656 = vpop.permute.xlu0 %655
      %658 = vst.msk [vmem:[#allocation5 + $0x4] sm:$0xc] %vm629, %v656
      %s659 = scalar_lea.vmem [#allocation3], 12
      %v660 = vld [vmem:[%s659] sm:$0x3]
      %v662 = vrot.slane %v660, 6
      %663 = vrot.lane.b32.xlu0 %v662, 64
      %v664 = vpop.permute.xlu0 %663
      %666 = vst.msk [vmem:[#allocation5 + $0x4] sm:$0xc] %vm637, %v664
      %v667 = vld [vmem:[%s659 + $0x1] sm:$0x3]
      %v669 = vrot.slane %v667, 6
      %670 = vrot.lane.b32.xlu0 %v669, 96
      %v671 = vpop.permute.xlu0 %670
      %673 = vst.msk [vmem:[#allocation5 + $0x4] sm:$0xc] %vm645, %v671
      %v674 = vld [vmem:[%s659 + $0x2] sm:$0x3]
      %v676 = vrot.slane %v674, 6
      %678 = vst.msk [vmem:[#allocation5 + $0x8] sm:$0xc] %vm571, %v676
      %v679 = vld [vmem:[#allocation4] sm:$0xf]
      %v680 = vld [vmem:[#allocation5] sm:$0xff]
      %v681 = vld [vmem:[#allocation5 + $0x8] sm:$0xf]
      %v682 = vpack.c.bf16 %v679, %v679
      %v683 = vld [vmem:[%s2] sm:$0xf]
      %v684 = vld [vmem:[%s2 + $0x4] sm:$0xf]
      %v685 = vld [vmem:[%s2 + $0x8] sm:$0xf]
      %v686 = vld [vmem:[%s2 + $0xc] sm:$0xf]
      %v687 = vld [vmem:[%s2 + $0x10] sm:$0xf]
      %v688 = vld [vmem:[%s2 + $0x14] sm:$0xf]
      %v689 = vld [vmem:[%s2 + $0x18] sm:$0xf]
      %v690 = vld [vmem:[%s2 + $0x1c] sm:$0xf]
      %v691 = vld [vmem:[%s2 + $0x20] sm:$0xf]
      %v693 = vcombine.high %v680, %v680
      %v695 = vpack.c.bf16 %v680, %v680
      %v696 = vpack.c.bf16 %v693, %v693
      %v697 = vpack.c.bf16 %v681, %v681
      %v698 = vld [vmem:[%s3] sm:$0xf]
      %v699 = vld [vmem:[%s3 + $0x4] sm:$0xf]
      %v700 = vld [vmem:[%s3 + $0x8] sm:$0xf]
      %v701 = vld [vmem:[%s3 + $0xc] sm:$0xf]
      %v702 = vld [vmem:[%s3 + $0x10] sm:$0xf]
      %v703 = vld [vmem:[%s3 + $0x14] sm:$0xf]
      %v704 = vld [vmem:[%s3 + $0x18] sm:$0xf]
      %v705 = vld [vmem:[%s3 + $0x1c] sm:$0xf]
      %v706 = vld [vmem:[%s3 + $0x20] sm:$0xf]
      %v707 = vld [vmem:[%s3 + $0x24] sm:$0xf]
      %v708 = vld [vmem:[%s3 + $0x28] sm:$0xf]
      %v709 = vld [vmem:[%s3 + $0x2c] sm:$0xf]
      %v710 = vld [vmem:[%s3 + $0x30] sm:$0xf]
      %v711 = vld [vmem:[%s3 + $0x34] sm:$0xf]
      %v712 = vld [vmem:[%s3 + $0x38] sm:$0xf]
      %v713 = vld [vmem:[%s3 + $0x3c] sm:$0xf]
      %v714 = vld [vmem:[%s3 + $0x40] sm:$0xf]
      %v715 = vld [vmem:[%s3 + $0x44] sm:$0xf]
      %v716 = vld [vmem:[%s3 + $0x48] sm:$0xf]
      %v717 = vld [vmem:[%s3 + $0x4c] sm:$0xf]
      %v718 = vld [vmem:[%s3 + $0x50] sm:$0xf]
      %v719 = vld [vmem:[%s3 + $0x54] sm:$0xf]
      %v720 = vld [vmem:[%s3 + $0x58] sm:$0xf]
      %v721 = vld [vmem:[%s3 + $0x5c] sm:$0xf]
      %v722 = vld [vmem:[%s3 + $0x60] sm:$0xf]
      %v723 = vld [vmem:[%s3 + $0x64] sm:$0xf]
      %v724 = vld [vmem:[%s3 + $0x68] sm:$0xf]
      %v725 = vld [vmem:[%s3 + $0x6c] sm:$0xf]
      %v726 = vld [vmem:[%s3 + $0x70] sm:$0xf]
      %v727 = vld [vmem:[%s3 + $0x74] sm:$0xf]
      %v728 = vld [vmem:[%s3 + $0x78] sm:$0xf]
      %v729 = vld [vmem:[%s3 + $0x7c] sm:$0xf]
      %v730 = vld [vmem:[%s3 + $0x80] sm:$0xf]
      %v731 = vld [vmem:[%s3 + $0x84] sm:$0xf]
      %v732 = vld [vmem:[%s3 + $0x88] sm:$0xf]
      %v733 = vld [vmem:[%s3 + $0x8c] sm:$0xf]
      %v770 = vunpack.c.l.b16 %v698
      %v771 = vunpack.c.l.b16 %v699
      %v772 = vunpack.c.l.b16 %v700
      %v773 = vunpack.c.l.b16 %v701
      %v774 = vunpack.c.l.b16 %v702
      %v775 = vunpack.c.l.b16 %v703
      %v776 = vunpack.c.l.b16 %v704
      %v777 = vunpack.c.l.b16 %v705
      %v778 = vunpack.c.l.b16 %v706
      %v779 = vunpack.c.l.b16 %v707
      %v780 = vunpack.c.l.b16 %v708
      %v781 = vunpack.c.l.b16 %v709
      %v782 = vunpack.c.l.b16 %v710
      %v783 = vunpack.c.l.b16 %v711
      %v784 = vunpack.c.l.b16 %v712
      %v785 = vunpack.c.l.b16 %v713
      %v786 = vunpack.c.l.b16 %v714
      %v787 = vunpack.c.l.b16 %v715
      %v788 = vunpack.c.l.b16 %v716
      %v789 = vunpack.c.l.b16 %v717
      %v790 = vunpack.c.l.b16 %v718
      %v791 = vunpack.c.l.b16 %v719
      %v792 = vunpack.c.l.b16 %v720
      %v793 = vunpack.c.l.b16 %v721
      %v794 = vunpack.c.l.b16 %v722
      %v795 = vunpack.c.l.b16 %v723
      %v796 = vunpack.c.l.b16 %v724
      %v797 = vunpack.c.l.b16 %v725
      %v798 = vunpack.c.l.b16 %v726
      %v799 = vunpack.c.l.b16 %v727
      %v800 = vunpack.c.l.b16 %v728
      %v801 = vunpack.c.l.b16 %v729
      %v802 = vunpack.c.l.b16 %v730
      %v803 = vunpack.c.l.b16 %v731
      %v804 = vunpack.c.l.b16 %v732
      %v805 = vunpack.c.l.b16 %v733
      %v806 = vpack.c.b16 %v771, %v770
      %v807 = vpack.c.b16 %v773, %v772
      %v808 = vpack.c.b16 %v775, %v774
      %v809 = vpack.c.b16 %v777, %v776
      %v810 = vpack.c.b16 %v779, %v778
      %v811 = vpack.c.b16 %v781, %v780
      %v812 = vpack.c.b16 %v783, %v782
      %v813 = vpack.c.b16 %v785, %v784
      %v814 = vpack.c.b16 %v787, %v786
      %v815 = vpack.c.b16 %v789, %v788
      %v816 = vpack.c.b16 %v791, %v790
      %v817 = vpack.c.b16 %v793, %v792
      %v818 = vpack.c.b16 %v795, %v794
      %v819 = vpack.c.b16 %v797, %v796
      %v820 = vpack.c.b16 %v799, %v798
      %v821 = vpack.c.b16 %v801, %v800
      %v822 = vpack.c.b16 %v803, %v802
      %v823 = vpack.c.b16 %v805, %v804
      %vm842 = vcmask 261120
      %v844 = vsel %vm842, %v697, 0
      %846 = vmatprep.subr.bf16.mxu0 0
      %847 = vmatpush1.bf16.msra.mxu0 %v813
      %848 = vmatprep.subr.bf16.mxu0 0
      %849 = vmatpush1.bf16.msra.mxu0 %v812
      %850 = vmatprep.subr.bf16.mxu0 0
      %851 = vmatpush1.bf16.msra.mxu0 %v811
      %852 = vmatprep.subr.bf16.mxu0 0
      %853 = vmatpush1.bf16.msra.mxu0 %v810
      %854 = vmatprep.subr.bf16.mxu0 0
      %855 = vmatpush1.bf16.msra.mxu0 %v809
      %856 = vmatprep.subr.bf16.mxu0 0
      %857 = vmatpush1.bf16.msra.mxu0 %v808
      %858 = vmatprep.subr.bf16.mxu0 0
      %859 = vmatpush1.bf16.msra.mxu0 %v807
      %860 = vmatprep.subr.bf16.mxu0 0
      %861 = vmatpush1.bf16.msra.mxu0 %v806
      %862 = vmatprep.subr.bf16.mxu0 0
      %863 = vmatpush2.bf16.msra.mxu0 %v821
      %864 = vmatprep.subr.bf16.mxu0 0
      %865 = vmatpush2.bf16.msra.mxu0 %v820
      %866 = vmatprep.subr.bf16.mxu0 0
      %867 = vmatpush2.bf16.msra.mxu0 %v819
      %868 = vmatprep.subr.bf16.mxu0 0
      %869 = vmatpush2.bf16.msra.mxu0 %v818
      %870 = vmatprep.subr.bf16.mxu0 0
      %871 = vmatpush2.bf16.msra.mxu0 %v817
      %872 = vmatprep.subr.bf16.mxu0 0
      %873 = vmatpush2.bf16.msra.mxu0 %v816
      %874 = vmatprep.subr.bf16.mxu0 0
      %875 = vmatpush2.bf16.msra.mxu0 %v815
      %876 = vmatprep.subr.bf16.mxu0 0
      %877 = vmatpush2.bf16.msra.mxu0 %v814
      %878 = vmatprep.mubr.bf16.mxu0 %v696
      %879 = vmatmul.mubr.bf16.gmra.mxu0 %v695
      %v880 = vpop.f32.mrf.mxu0
      %v881 = vadd.f32 0.0, %v880
      %v882 = vpop.f32.mrf.mxu0
      %v883 = vpop.f32.mrf.mxu0
      %v884 = vpop.f32.mrf.mxu0
      %885 = vdwg.mxu0
      %886 = vmatprep.subr.bf16.mxu0 0
      %887 = vmatpush1.bf16.msra.mxu0 0
      %888 = vmatprep.subr.bf16.mxu0 0
      %889 = vmatpush1.bf16.msra.mxu0 0
      %890 = vmatprep.subr.bf16.mxu0 0
      %891 = vmatpush1.bf16.msra.mxu0 0
      %892 = vmatprep.subr.bf16.mxu0 0
      %893 = vmatpush1.bf16.msra.mxu0 0
      %894 = vmatprep.subr.bf16.mxu0 0
      %895 = vmatpush1.bf16.msra.mxu0 0
      %896 = vmatprep.subr.bf16.mxu0 0
      %897 = vmatpush1.bf16.msra.mxu0 0
      %898 = vmatprep.subr.bf16.mxu0 0
      %899 = vmatpush1.bf16.msra.mxu0 %v823
      %900 = vmatprep.subr.bf16.mxu0 0
      %901 = vmatpush1.bf16.msra.mxu0 %v822
      %902 = vmatprep.subr.bf16.mxu0 0
      %903 = vmatpush2.bf16.msra.mxu0 0
      %904 = vmatprep.subr.bf16.mxu0 0
      %905 = vmatpush2.bf16.msra.mxu0 0
      %906 = vmatprep.subr.bf16.mxu0 0
      %907 = vmatpush2.bf16.msra.mxu0 0
      %908 = vmatprep.subr.bf16.mxu0 0
      %909 = vmatpush2.bf16.msra.mxu0 0
      %910 = vmatprep.subr.bf16.mxu0 0
      %911 = vmatpush2.bf16.msra.mxu0 0
      %912 = vmatprep.subr.bf16.mxu0 0
      %913 = vmatpush2.bf16.msra.mxu0 0
      %914 = vmatprep.subr.bf16.mxu0 0
      %915 = vmatpush2.bf16.msra.mxu0 0
      %916 = vmatprep.subr.bf16.mxu0 0
      %917 = vmatpush2.bf16.msra.mxu0 0
      %918 = vmatprep.mubr.bf16.mxu0 0
      %919 = vmatmul.mubr.bf16.gmra.mxu0 %v844
      %v920 = vpop.f32.mrf.mxu0
      %v921 = vadd.f32 %v881, %v920
      %v922 = vpop.f32.mrf.mxu0
      %v923 = vpop.f32.mrf.mxu0
      %v924 = vpop.f32.mrf.mxu0
      %925 = vdwg.mxu0
      %v935 = vunpack.c.l.b16 %v683
      %v936 = vunpack.c.l.b16 %v684
      %v937 = vunpack.c.l.b16 %v685
      %v938 = vunpack.c.l.b16 %v686
      %v939 = vunpack.c.l.b16 %v687
      %v940 = vunpack.c.l.b16 %v688
      %v941 = vunpack.c.l.b16 %v689
      %v942 = vunpack.c.l.b16 %v690
      %v943 = vunpack.c.l.b16 %v691
      %v944 = vpack.c.b16 %v936, %v935
      %v945 = vpack.c.b16 %v938, %v937
      %v946 = vpack.c.b16 %v940, %v939
      %v947 = vpack.c.b16 %v942, %v941
      %v948 = vpack.c.b16 %v943, %v943
      %vm953 = vcmask 588800
      %v955 = vsel %vm953, %v682, 0
      %vm957 = vcmask 1043456
      %v959 = vsel %vm957, %v948, 0
      %961 = vmatprep.subr.bf16.mxu0 0
      %962 = vmatpush1.bf16.msra.mxu0 0
      %963 = vmatprep.subr.bf16.mxu0 0
      %964 = vmatpush1.bf16.msra.mxu0 0
      %965 = vmatprep.subr.bf16.mxu0 0
      %966 = vmatpush1.bf16.msra.mxu0 0
      %967 = vmatprep.subr.bf16.mxu0 0
      %968 = vmatpush1.bf16.msra.mxu0 %v959
      %969 = vmatprep.subr.bf16.mxu0 0
      %970 = vmatpush1.bf16.msra.mxu0 %v947
      %971 = vmatprep.subr.bf16.mxu0 0
      %972 = vmatpush1.bf16.msra.mxu0 %v946
      %973 = vmatprep.subr.bf16.mxu0 0
      %974 = vmatpush1.bf16.msra.mxu0 %v945
      %975 = vmatprep.subr.bf16.mxu0 0
      %976 = vmatpush1.bf16.msra.mxu0 %v944
      %977 = vmatprep.subr.bf16.mxu0 0
      %978 = vmatpush2.bf16.msra.mxu0 0
      %979 = vmatprep.subr.bf16.mxu0 0
      %980 = vmatpush2.bf16.msra.mxu0 0
      %981 = vmatprep.subr.bf16.mxu0 0
      %982 = vmatpush2.bf16.msra.mxu0 0
      %983 = vmatprep.subr.bf16.mxu0 0
      %984 = vmatpush2.bf16.msra.mxu0 0
      %985 = vmatprep.subr.bf16.mxu0 0
      %986 = vmatpush2.bf16.msra.mxu0 0
      %987 = vmatprep.subr.bf16.mxu0 0
      %988 = vmatpush2.bf16.msra.mxu0 0
      %989 = vmatprep.subr.bf16.mxu0 0
      %990 = vmatpush2.bf16.msra.mxu0 0
      %991 = vmatprep.subr.bf16.mxu0 0
      %992 = vmatpush2.bf16.msra.mxu0 0
      %993 = vmatprep.mubr.bf16.mxu0 0
      %994 = vmatmul.mubr.bf16.gmra.mxu0 %v955
      %v995 = vpop.f32.mrf.mxu0
      %v996 = vadd.f32 %v921, %v995
      %v997 = vpop.f32.mrf.mxu0
      %v998 = vpop.f32.mrf.mxu0
      %v999 = vpop.f32.mrf.mxu0
      %1000 = vdwg.mxu0
      %v1001 = vld [vmem:[%s8] sm:$0x1]
      %v1003 = vlaneseq
      %v1004 = vshrl.u32 %v1003, 7
      %v1005 = vsub.s32 0, %v1004
      %v1006 = vrot.slane %v1001, %v1005
      %v1008 = vadd.f32 %v996, %v1006
      %v1009 = vxor.u32 %v1008, 2147483648
      %v1010 = vmul.f32 %v1009, 1.442695
      %v1011 = vpow.pop %v1010
      %v1012 = vadd.f32 %v1011, 1.0
      %v1013 = vrcp.pop %v1012
      %v1014 = vmul.f32 1.0, %v1013
      %v1015 = vld [vmem:[%s4] sm:$0xf]
      %v1016 = vld [vmem:[%s4 + $0x4] sm:$0xf]
      %v1017 = vld [vmem:[%s4 + $0x8] sm:$0xf]
      %v1018 = vld [vmem:[%s4 + $0xc] sm:$0xf]
      %v1019 = vld [vmem:[%s4 + $0x10] sm:$0xf]
      %v1020 = vld [vmem:[%s4 + $0x14] sm:$0xf]
      %v1021 = vld [vmem:[%s4 + $0x18] sm:$0xf]
      %v1022 = vld [vmem:[%s4 + $0x1c] sm:$0xf]
      %v1023 = vld [vmem:[%s4 + $0x20] sm:$0xf]
      %v1024 = vld [vmem:[%s5] sm:$0xf]
      %v1025 = vld [vmem:[%s5 + $0x4] sm:$0xf]
      %v1026 = vld [vmem:[%s5 + $0x8] sm:$0xf]
      %v1027 = vld [vmem:[%s5 + $0xc] sm:$0xf]
      %v1028 = vld [vmem:[%s5 + $0x10] sm:$0xf]
      %v1029 = vld [vmem:[%s5 + $0x14] sm:$0xf]
      %v1030 = vld [vmem:[%s5 + $0x18] sm:$0xf]
      %v1031 = vld [vmem:[%s5 + $0x1c] sm:$0xf]
      %v1032 = vld [vmem:[%s5 + $0x20] sm:$0xf]
      %v1033 = vld [vmem:[%s5 + $0x24] sm:$0xf]
      %v1034 = vld [vmem:[%s5 + $0x28] sm:$0xf]
      %v1035 = vld [vmem:[%s5 + $0x2c] sm:$0xf]
      %v1036 = vld [vmem:[%s5 + $0x30] sm:$0xf]
      %v1037 = vld [vmem:[%s5 + $0x34] sm:$0xf]
      %v1038 = vld [vmem:[%s5 + $0x38] sm:$0xf]
      %v1039 = vld [vmem:[%s5 + $0x3c] sm:$0xf]
      %v1040 = vld [vmem:[%s5 + $0x40] sm:$0xf]
      %v1041 = vld [vmem:[%s5 + $0x44] sm:$0xf]
      %v1042 = vld [vmem:[%s5 + $0x48] sm:$0xf]
      %v1043 = vld [vmem:[%s5 + $0x4c] sm:$0xf]
      %v1044 = vld [vmem:[%s5 + $0x50] sm:$0xf]
      %v1045 = vld [vmem:[%s5 + $0x54] sm:$0xf]
      %v1046 = vld [vmem:[%s5 + $0x58] sm:$0xf]
      %v1047 = vld [vmem:[%s5 + $0x5c] sm:$0xf]
      %v1048 = vld [vmem:[%s5 + $0x60] sm:$0xf]
      %v1049 = vld [vmem:[%s5 + $0x64] sm:$0xf]
      %v1050 = vld [vmem:[%s5 + $0x68] sm:$0xf]
      %v1051 = vld [vmem:[%s5 + $0x6c] sm:$0xf]
      %v1052 = vld [vmem:[%s5 + $0x70] sm:$0xf]
      %v1053 = vld [vmem:[%s5 + $0x74] sm:$0xf]
      %v1054 = vld [vmem:[%s5 + $0x78] sm:$0xf]
      %v1055 = vld [vmem:[%s5 + $0x7c] sm:$0xf]
      %v1056 = vld [vmem:[%s5 + $0x80] sm:$0xf]
      %v1057 = vld [vmem:[%s5 + $0x84] sm:$0xf]
      %v1058 = vld [vmem:[%s5 + $0x88] sm:$0xf]
      %v1059 = vld [vmem:[%s5 + $0x8c] sm:$0xf]
      %v1096 = vunpack.c.l.b16 %v1024
      %v1097 = vunpack.c.l.b16 %v1025
      %v1098 = vunpack.c.l.b16 %v1026
      %v1099 = vunpack.c.l.b16 %v1027
      %v1100 = vunpack.c.l.b16 %v1028
      %v1101 = vunpack.c.l.b16 %v1029
      %v1102 = vunpack.c.l.b16 %v1030
      %v1103 = vunpack.c.l.b16 %v1031
      %v1104 = vunpack.c.l.b16 %v1032
      %v1105 = vunpack.c.l.b16 %v1033
      %v1106 = vunpack.c.l.b16 %v1034
      %v1107 = vunpack.c.l.b16 %v1035
      %v1108 = vunpack.c.l.b16 %v1036
      %v1109 = vunpack.c.l.b16 %v1037
      %v1110 = vunpack.c.l.b16 %v1038
      %v1111 = vunpack.c.l.b16 %v1039
      %v1112 = vunpack.c.l.b16 %v1040
      %v1113 = vunpack.c.l.b16 %v1041
      %v1114 = vunpack.c.l.b16 %v1042
      %v1115 = vunpack.c.l.b16 %v1043
      %v1116 = vunpack.c.l.b16 %v1044
      %v1117 = vunpack.c.l.b16 %v1045
      %v1118 = vunpack.c.l.b16 %v1046
      %v1119 = vunpack.c.l.b16 %v1047
      %v1120 = vunpack.c.l.b16 %v1048
      %v1121 = vunpack.c.l.b16 %v1049
      %v1122 = vunpack.c.l.b16 %v1050
      %v1123 = vunpack.c.l.b16 %v1051
      %v1124 = vunpack.c.l.b16 %v1052
      %v1125 = vunpack.c.l.b16 %v1053
      %v1126 = vunpack.c.l.b16 %v1054
      %v1127 = vunpack.c.l.b16 %v1055
      %v1128 = vunpack.c.l.b16 %v1056
      %v1129 = vunpack.c.l.b16 %v1057
      %v1130 = vunpack.c.l.b16 %v1058
      %v1131 = vunpack.c.l.b16 %v1059
      %v1132 = vpack.c.b16 %v1097, %v1096
      %v1133 = vpack.c.b16 %v1099, %v1098
      %v1134 = vpack.c.b16 %v1101, %v1100
      %v1135 = vpack.c.b16 %v1103, %v1102
      %v1136 = vpack.c.b16 %v1105, %v1104
      %v1137 = vpack.c.b16 %v1107, %v1106
      %v1138 = vpack.c.b16 %v1109, %v1108
      %v1139 = vpack.c.b16 %v1111, %v1110
      %v1140 = vpack.c.b16 %v1113, %v1112
      %v1141 = vpack.c.b16 %v1115, %v1114
      %v1142 = vpack.c.b16 %v1117, %v1116
      %v1143 = vpack.c.b16 %v1119, %v1118
      %v1144 = vpack.c.b16 %v1121, %v1120
      %v1145 = vpack.c.b16 %v1123, %v1122
      %v1146 = vpack.c.b16 %v1125, %v1124
      %v1147 = vpack.c.b16 %v1127, %v1126
      %v1148 = vpack.c.b16 %v1129, %v1128
      %v1149 = vpack.c.b16 %v1131, %v1130
      %1168 = vmatprep.subr.bf16.mxu0 0
      %1169 = vmatpush1.bf16.msra.mxu0 %v1139
      %1170 = vmatprep.subr.bf16.mxu0 0
      %1171 = vmatpush1.bf16.msra.mxu0 %v1138
      %1172 = vmatprep.subr.bf16.mxu0 0
      %1173 = vmatpush1.bf16.msra.mxu0 %v1137
      %1174 = vmatprep.subr.bf16.mxu0 0
      %1175 = vmatpush1.bf16.msra.mxu0 %v1136
      %1176 = vmatprep.subr.bf16.mxu0 0
      %1177 = vmatpush1.bf16.msra.mxu0 %v1135
      %1178 = vmatprep.subr.bf16.mxu0 0
      %1179 = vmatpush1.bf16.msra.mxu0 %v1134
      %1180 = vmatprep.subr.bf16.mxu0 0
      %1181 = vmatpush1.bf16.msra.mxu0 %v1133
      %1182 = vmatprep.subr.bf16.mxu0 0
      %1183 = vmatpush1.bf16.msra.mxu0 %v1132
      %1184 = vmatprep.subr.bf16.mxu0 0
      %1185 = vmatpush2.bf16.msra.mxu0 %v1147
      %1186 = vmatprep.subr.bf16.mxu0 0
      %1187 = vmatpush2.bf16.msra.mxu0 %v1146
      %1188 = vmatprep.subr.bf16.mxu0 0
      %1189 = vmatpush2.bf16.msra.mxu0 %v1145
      %1190 = vmatprep.subr.bf16.mxu0 0
      %1191 = vmatpush2.bf16.msra.mxu0 %v1144
      %1192 = vmatprep.subr.bf16.mxu0 0
      %1193 = vmatpush2.bf16.msra.mxu0 %v1143
      %1194 = vmatprep.subr.bf16.mxu0 0
      %1195 = vmatpush2.bf16.msra.mxu0 %v1142
      %1196 = vmatprep.subr.bf16.mxu0 0
      %1197 = vmatpush2.bf16.msra.mxu0 %v1141
      %1198 = vmatprep.subr.bf16.mxu0 0
      %1199 = vmatpush2.bf16.msra.mxu0 %v1140
      %1200 = vmatprep.mubr.bf16.mxu0 %v696
      %1201 = vmatmul.mubr.bf16.gmra.mxu0 %v695
      %v1202 = vpop.f32.mrf.mxu0
      %v1203 = vadd.f32 0.0, %v1202
      %v1204 = vpop.f32.mrf.mxu0
      %v1205 = vpop.f32.mrf.mxu0
      %v1206 = vpop.f32.mrf.mxu0
      %1207 = vdwg.mxu0
      %1208 = vmatprep.subr.bf16.mxu0 0
      %1209 = vmatpush1.bf16.msra.mxu0 0
      %1210 = vmatprep.subr.bf16.mxu0 0
      %1211 = vmatpush1.bf16.msra.mxu0 0
      %1212 = vmatprep.subr.bf16.mxu0 0
      %1213 = vmatpush1.bf16.msra.mxu0 0
      %1214 = vmatprep.subr.bf16.mxu0 0
      %1215 = vmatpush1.bf16.msra.mxu0 0
      %1216 = vmatprep.subr.bf16.mxu0 0
      %1217 = vmatpush1.bf16.msra.mxu0 0
      %1218 = vmatprep.subr.bf16.mxu0 0
      %1219 = vmatpush1.bf16.msra.mxu0 0
      %1220 = vmatprep.subr.bf16.mxu0 0
      %1221 = vmatpush1.bf16.msra.mxu0 %v1149
      %1222 = vmatprep.subr.bf16.mxu0 0
      %1223 = vmatpush1.bf16.msra.mxu0 %v1148
      %1224 = vmatprep.subr.bf16.mxu0 0
      %1225 = vmatpush2.bf16.msra.mxu0 0
      %1226 = vmatprep.subr.bf16.mxu0 0
      %1227 = vmatpush2.bf16.msra.mxu0 0
      %1228 = vmatprep.subr.bf16.mxu0 0
      %1229 = vmatpush2.bf16.msra.mxu0 0
      %1230 = vmatprep.subr.bf16.mxu0 0
      %1231 = vmatpush2.bf16.msra.mxu0 0
      %1232 = vmatprep.subr.bf16.mxu0 0
      %1233 = vmatpush2.bf16.msra.mxu0 0
      %1234 = vmatprep.subr.bf16.mxu0 0
      %1235 = vmatpush2.bf16.msra.mxu0 0
      %1236 = vmatprep.subr.bf16.mxu0 0
      %1237 = vmatpush2.bf16.msra.mxu0 0
      %1238 = vmatprep.subr.bf16.mxu0 0
      %1239 = vmatpush2.bf16.msra.mxu0 0
      %1240 = vmatprep.mubr.bf16.mxu0 0
      %1241 = vmatmul.mubr.bf16.gmra.mxu0 %v844
      %v1242 = vpop.f32.mrf.mxu0
      %v1243 = vadd.f32 %v1203, %v1242
      %v1244 = vpop.f32.mrf.mxu0
      %v1245 = vpop.f32.mrf.mxu0
      %v1246 = vpop.f32.mrf.mxu0
      %1247 = vdwg.mxu0
      %v1257 = vunpack.c.l.b16 %v1015
      %v1258 = vunpack.c.l.b16 %v1016
      %v1259 = vunpack.c.l.b16 %v1017
      %v1260 = vunpack.c.l.b16 %v1018
      %v1261 = vunpack.c.l.b16 %v1019
      %v1262 = vunpack.c.l.b16 %v1020
      %v1263 = vunpack.c.l.b16 %v1021
      %v1264 = vunpack.c.l.b16 %v1022
      %v1265 = vunpack.c.l.b16 %v1023
      %v1266 = vpack.c.b16 %v1258, %v1257
      %v1267 = vpack.c.b16 %v1260, %v1259
      %v1268 = vpack.c.b16 %v1262, %v1261
      %v1269 = vpack.c.b16 %v1264, %v1263
      %v1270 = vpack.c.b16 %v1265, %v1265
      %v1276 = vsel %vm957, %v1270, 0
      %1278 = vmatprep.subr.bf16.mxu0 0
      %1279 = vmatpush1.bf16.msra.mxu0 0
      %1280 = vmatprep.subr.bf16.mxu0 0
      %1281 = vmatpush1.bf16.msra.mxu0 0
      %1282 = vmatprep.subr.bf16.mxu0 0
      %1283 = vmatpush1.bf16.msra.mxu0 0
      %1284 = vmatprep.subr.bf16.mxu0 0
      %1285 = vmatpush1.bf16.msra.mxu0 %v1276
      %1286 = vmatprep.subr.bf16.mxu0 0
      %1287 = vmatpush1.bf16.msra.mxu0 %v1269
      %1288 = vmatprep.subr.bf16.mxu0 0
      %1289 = vmatpush1.bf16.msra.mxu0 %v1268
      %1290 = vmatprep.subr.bf16.mxu0 0
      %1291 = vmatpush1.bf16.msra.mxu0 %v1267
      %1292 = vmatprep.subr.bf16.mxu0 0
      %1293 = vmatpush1.bf16.msra.mxu0 %v1266
      %1294 = vmatprep.subr.bf16.mxu0 0
      %1295 = vmatpush2.bf16.msra.mxu0 0
      %1296 = vmatprep.subr.bf16.mxu0 0
      %1297 = vmatpush2.bf16.msra.mxu0 0
      %1298 = vmatprep.subr.bf16.mxu0 0
      %1299 = vmatpush2.bf16.msra.mxu0 0
      %1300 = vmatprep.subr.bf16.mxu0 0
      %1301 = vmatpush2.bf16.msra.mxu0 0
      %1302 = vmatprep.subr.bf16.mxu0 0
      %1303 = vmatpush2.bf16.msra.mxu0 0
      %1304 = vmatprep.subr.bf16.mxu0 0
      %1305 = vmatpush2.bf16.msra.mxu0 0
      %1306 = vmatprep.subr.bf16.mxu0 0
      %1307 = vmatpush2.bf16.msra.mxu0 0
      %1308 = vmatprep.subr.bf16.mxu0 0
      %1309 = vmatpush2.bf16.msra.mxu0 0
      %1310 = vmatprep.mubr.bf16.mxu0 0
      %1311 = vmatmul.mubr.bf16.gmra.mxu0 %v955
      %v1312 = vpop.f32.mrf.mxu0
      %v1313 = vadd.f32 %v1243, %v1312
      %v1314 = vpop.f32.mrf.mxu0
      %v1315 = vpop.f32.mrf.mxu0
      %v1316 = vpop.f32.mrf.mxu0
      %1317 = vdwg.mxu0
      %v1318 = vld [vmem:[%s9] sm:$0x1]
      %v1320 = vlaneseq
      %v1321 = vshrl.u32 %v1320, 7
      %v1322 = vsub.s32 0, %v1321
      %v1323 = vrot.slane %v1318, %v1322
      %v1325 = vadd.f32 %v1313, %v1323
      %v1326 = vxor.u32 %v1325, 2147483648
      %v1327 = vmul.f32 %v1326, 1.442695
      %v1328 = vpow.pop %v1327
      %v1329 = vadd.f32 %v1328, 1.0
      %v1330 = vrcp.pop %v1329
      %v1331 = vmul.f32 1.0, %v1330
      %v1332 = vmul.f32 %v1331, %v566
      %1333 = vst.msk [vmem:[%s567 + $0x1] sm:$0x3] %vm568, %v1332
      %1334 = vst.msk [vmem:[%s570 - $0x1] sm:$0xc] %vm571, %v1332
      %v1335 = vld [vmem:[#allocation3] sm:$0x3]
      %1336 = vst.msk [vmem:[#allocation5] sm:$0x3] %vm568, %v1335
      %v1337 = vld [vmem:[#allocation3 + $0x1] sm:$0x3]
      %1339 = vrot.lane.b32.xlu0 %v1337, 32
      %v1340 = vpop.permute.xlu0 %1339
      %1342 = vst.msk [vmem:[#allocation5] sm:$0x3] %vm580, %v1340
      %v1343 = vld [vmem:[#allocation3 + $0x2] sm:$0x3]
      %1345 = vrot.lane.b32.xlu0 %v1343, 64
      %v1346 = vpop.permute.xlu0 %1345
      %1348 = vst.msk [vmem:[#allocation5] sm:$0x3] %vm587, %v1346
      %v1349 = vld [vmem:[%s567] sm:$0x3]
      %1351 = vrot.lane.b32.xlu0 %v1349, 96
      %v1352 = vpop.permute.xlu0 %1351
      %1354 = vst.msk [vmem:[#allocation5] sm:$0x3] %vm594, %v1352
      %v1355 = vld [vmem:[%s567 + $0x1] sm:$0x3]
      %1356 = vst.msk [vmem:[#allocation5 + $0x4] sm:$0x3] %vm568, %v1355
      %v1357 = vld [vmem:[%s567 + $0x2] sm:$0x3]
      %1359 = vrot.lane.b32.xlu0 %v1357, 32
      %v1360 = vpop.permute.xlu0 %1359
      %1362 = vst.msk [vmem:[#allocation5 + $0x4] sm:$0x3] %vm580, %v1360
      %v1363 = vld [vmem:[%s570] sm:$0x3]
      %1365 = vrot.lane.b32.xlu0 %v1363, 64
      %v1366 = vpop.permute.xlu0 %1365
      %1368 = vst.msk [vmem:[#allocation5 + $0x4] sm:$0x3] %vm587, %v1366
      %v1369 = vld [vmem:[%s570 + $0x1] sm:$0x3]
      %1371 = vrot.lane.b32.xlu0 %v1369, 96
      %v1372 = vpop.permute.xlu0 %1371
      %1374 = vst.msk [vmem:[#allocation5 + $0x4] sm:$0x3] %vm594, %v1372
      %v1375 = vld [vmem:[%s570 + $0x2] sm:$0x3]
      %1376 = vst.msk [vmem:[#allocation5 + $0x8] sm:$0x3] %vm568, %v1375
      %v1377 = vld [vmem:[%s567] sm:$0x3]
      %v1379 = vrot.slane %v1377, 6
      %1381 = vst.msk [vmem:[#allocation5] sm:$0xc] %vm571, %v1379
      %v1382 = vld [vmem:[%s567 + $0x1] sm:$0x3]
      %v1384 = vrot.slane %v1382, 6
      %1385 = vrot.lane.b32.xlu0 %v1384, 32
      %v1386 = vpop.permute.xlu0 %1385
      %1388 = vst.msk [vmem:[#allocation5] sm:$0xc] %vm629, %v1386
      %v1389 = vld [vmem:[%s567 + $0x2] sm:$0x3]
      %v1391 = vrot.slane %v1389, 6
      %1392 = vrot.lane.b32.xlu0 %v1391, 64
      %v1393 = vpop.permute.xlu0 %1392
      %1395 = vst.msk [vmem:[#allocation5] sm:$0xc] %vm637, %v1393
      %v1396 = vld [vmem:[%s570] sm:$0x3]
      %v1398 = vrot.slane %v1396, 6
      %1399 = vrot.lane.b32.xlu0 %v1398, 96
      %v1400 = vpop.permute.xlu0 %1399
      %1402 = vst.msk [vmem:[#allocation5] sm:$0xc] %vm645, %v1400
      %v1403 = vld [vmem:[%s570 + $0x1] sm:$0x3]
      %v1405 = vrot.slane %v1403, 6
      %1407 = vst.msk [vmem:[#allocation5 + $0x4] sm:$0xc] %vm571, %v1405
      %v1408 = vld [vmem:[%s570 + $0x2] sm:$0x3]
      %v1410 = vrot.slane %v1408, 6
      %1411 = vrot.lane.b32.xlu0 %v1410, 32
      %v1412 = vpop.permute.xlu0 %1411
      %1414 = vst.msk [vmem:[#allocation5 + $0x4] sm:$0xc] %vm629, %v1412
      %v1415 = vld [vmem:[%s659] sm:$0x3]
      %v1417 = vrot.slane %v1415, 6
      %1418 = vrot.lane.b32.xlu0 %v1417, 64
      %v1419 = vpop.permute.xlu0 %1418
      %1421 = vst.msk [vmem:[#allocation5 + $0x4] sm:$0xc] %vm637, %v1419
      %v1422 = vld [vmem:[%s659 + $0x1] sm:$0x3]
      %v1424 = vrot.slane %v1422, 6
      %1425 = vrot.lane.b32.xlu0 %v1424, 96
      %v1426 = vpop.permute.xlu0 %1425
      %1428 = vst.msk [vmem:[#allocation5 + $0x4] sm:$0xc] %vm645, %v1426
      %v1429 = vld [vmem:[%s659 + $0x2] sm:$0x3]
      %v1431 = vrot.slane %v1429, 6
      %1433 = vst.msk [vmem:[#allocation5 + $0x8] sm:$0xc] %vm571, %v1431
      %v1434 = vld [vmem:[%s6] sm:$0xf]
      %v1435 = vld [vmem:[%s6 + $0x4] sm:$0xf]
      %v1436 = vld [vmem:[%s6 + $0x8] sm:$0xf]
      %v1437 = vld [vmem:[%s6 + $0xc] sm:$0xf]
      %v1438 = vld [vmem:[%s6 + $0x10] sm:$0xf]
      %v1439 = vld [vmem:[%s6 + $0x14] sm:$0xf]
      %v1440 = vld [vmem:[%s6 + $0x18] sm:$0xf]
      %v1441 = vld [vmem:[%s6 + $0x1c] sm:$0xf]
      %v1442 = vld [vmem:[%s6 + $0x20] sm:$0xf]
      %v1443 = vld [vmem:[#allocation5] sm:$0xff]
      %v1444 = vld [vmem:[#allocation5 + $0x8] sm:$0xf]
      %v1446 = vcombine.high %v1443, %v1443
      %v1448 = vpack.c.bf16 %v1443, %v1443
      %v1449 = vpack.c.bf16 %v1446, %v1446
      %v1450 = vpack.c.bf16 %v1444, %v1444
      %v1451 = vld [vmem:[%s7] sm:$0xf]
      %v1452 = vld [vmem:[%s7 + $0x4] sm:$0xf]
      %v1453 = vld [vmem:[%s7 + $0x8] sm:$0xf]
      %v1454 = vld [vmem:[%s7 + $0xc] sm:$0xf]
      %v1455 = vld [vmem:[%s7 + $0x10] sm:$0xf]
      %v1456 = vld [vmem:[%s7 + $0x14] sm:$0xf]
      %v1457 = vld [vmem:[%s7 + $0x18] sm:$0xf]
      %v1458 = vld [vmem:[%s7 + $0x1c] sm:$0xf]
      %v1459 = vld [vmem:[%s7 + $0x20] sm:$0xf]
      %v1460 = vld [vmem:[%s7 + $0x24] sm:$0xf]
      %v1461 = vld [vmem:[%s7 + $0x28] sm:$0xf]
      %v1462 = vld [vmem:[%s7 + $0x2c] sm:$0xf]
      %v1463 = vld [vmem:[%s7 + $0x30] sm:$0xf]
      %v1464 = vld [vmem:[%s7 + $0x34] sm:$0xf]
      %v1465 = vld [vmem:[%s7 + $0x38] sm:$0xf]
      %v1466 = vld [vmem:[%s7 + $0x3c] sm:$0xf]
      %v1467 = vld [vmem:[%s7 + $0x40] sm:$0xf]
      %v1468 = vld [vmem:[%s7 + $0x44] sm:$0xf]
      %v1469 = vld [vmem:[%s7 + $0x48] sm:$0xf]
      %v1470 = vld [vmem:[%s7 + $0x4c] sm:$0xf]
      %v1471 = vld [vmem:[%s7 + $0x50] sm:$0xf]
      %v1472 = vld [vmem:[%s7 + $0x54] sm:$0xf]
      %v1473 = vld [vmem:[%s7 + $0x58] sm:$0xf]
      %v1474 = vld [vmem:[%s7 + $0x5c] sm:$0xf]
      %v1475 = vld [vmem:[%s7 + $0x60] sm:$0xf]
      %v1476 = vld [vmem:[%s7 + $0x64] sm:$0xf]
      %v1477 = vld [vmem:[%s7 + $0x68] sm:$0xf]
      %v1478 = vld [vmem:[%s7 + $0x6c] sm:$0xf]
      %v1479 = vld [vmem:[%s7 + $0x70] sm:$0xf]
      %v1480 = vld [vmem:[%s7 + $0x74] sm:$0xf]
      %v1481 = vld [vmem:[%s7 + $0x78] sm:$0xf]
      %v1482 = vld [vmem:[%s7 + $0x7c] sm:$0xf]
      %v1483 = vld [vmem:[%s7 + $0x80] sm:$0xf]
      %v1484 = vld [vmem:[%s7 + $0x84] sm:$0xf]
      %v1485 = vld [vmem:[%s7 + $0x88] sm:$0xf]
      %v1486 = vld [vmem:[%s7 + $0x8c] sm:$0xf]
      %v1523 = vunpack.c.l.b16 %v1451
      %v1524 = vunpack.c.l.b16 %v1452
      %v1525 = vunpack.c.l.b16 %v1453
      %v1526 = vunpack.c.l.b16 %v1454
      %v1527 = vunpack.c.l.b16 %v1455
      %v1528 = vunpack.c.l.b16 %v1456
      %v1529 = vunpack.c.l.b16 %v1457
      %v1530 = vunpack.c.l.b16 %v1458
      %v1531 = vunpack.c.l.b16 %v1459
      %v1532 = vunpack.c.l.b16 %v1460
      %v1533 = vunpack.c.l.b16 %v1461
      %v1534 = vunpack.c.l.b16 %v1462
      %v1535 = vunpack.c.l.b16 %v1463
      %v1536 = vunpack.c.l.b16 %v1464
      %v1537 = vunpack.c.l.b16 %v1465
      %v1538 = vunpack.c.l.b16 %v1466
      %v1539 = vunpack.c.l.b16 %v1467
      %v1540 = vunpack.c.l.b16 %v1468
      %v1541 = vunpack.c.l.b16 %v1469
      %v1542 = vunpack.c.l.b16 %v1470
      %v1543 = vunpack.c.l.b16 %v1471
      %v1544 = vunpack.c.l.b16 %v1472
      %v1545 = vunpack.c.l.b16 %v1473
      %v1546 = vunpack.c.l.b16 %v1474
      %v1547 = vunpack.c.l.b16 %v1475
      %v1548 = vunpack.c.l.b16 %v1476
      %v1549 = vunpack.c.l.b16 %v1477
      %v1550 = vunpack.c.l.b16 %v1478
      %v1551 = vunpack.c.l.b16 %v1479
      %v1552 = vunpack.c.l.b16 %v1480
      %v1553 = vunpack.c.l.b16 %v1481
      %v1554 = vunpack.c.l.b16 %v1482
      %v1555 = vunpack.c.l.b16 %v1483
      %v1556 = vunpack.c.l.b16 %v1484
      %v1557 = vunpack.c.l.b16 %v1485
      %v1558 = vunpack.c.l.b16 %v1486
      %v1559 = vpack.c.b16 %v1524, %v1523
      %v1560 = vpack.c.b16 %v1526, %v1525
      %v1561 = vpack.c.b16 %v1528, %v1527
      %v1562 = vpack.c.b16 %v1530, %v1529
      %v1563 = vpack.c.b16 %v1532, %v1531
      %v1564 = vpack.c.b16 %v1534, %v1533
      %v1565 = vpack.c.b16 %v1536, %v1535
      %v1566 = vpack.c.b16 %v1538, %v1537
      %v1567 = vpack.c.b16 %v1540, %v1539
      %v1568 = vpack.c.b16 %v1542, %v1541
      %v1569 = vpack.c.b16 %v1544, %v1543
      %v1570 = vpack.c.b16 %v1546, %v1545
      %v1571 = vpack.c.b16 %v1548, %v1547
      %v1572 = vpack.c.b16 %v1550, %v1549
      %v1573 = vpack.c.b16 %v1552, %v1551
      %v1574 = vpack.c.b16 %v1554, %v1553
      %v1575 = vpack.c.b16 %v1556, %v1555
      %v1576 = vpack.c.b16 %v1558, %v1557
      %v1596 = vsel %vm842, %v1450, 0
      %1598 = vmatprep.subr.bf16.mxu0 0
      %1599 = vmatpush1.bf16.msra.mxu0 %v1566
      %1600 = vmatprep.subr.bf16.mxu0 0
      %1601 = vmatpush1.bf16.msra.mxu0 %v1565
      %1602 = vmatprep.subr.bf16.mxu0 0
      %1603 = vmatpush1.bf16.msra.mxu0 %v1564
      %1604 = vmatprep.subr.bf16.mxu0 0
      %1605 = vmatpush1.bf16.msra.mxu0 %v1563
      %1606 = vmatprep.subr.bf16.mxu0 0
      %1607 = vmatpush1.bf16.msra.mxu0 %v1562
      %1608 = vmatprep.subr.bf16.mxu0 0
      %1609 = vmatpush1.bf16.msra.mxu0 %v1561
      %1610 = vmatprep.subr.bf16.mxu0 0
      %1611 = vmatpush1.bf16.msra.mxu0 %v1560
      %1612 = vmatprep.subr.bf16.mxu0 0
      %1613 = vmatpush1.bf16.msra.mxu0 %v1559
      %1614 = vmatprep.subr.bf16.mxu0 0
      %1615 = vmatpush2.bf16.msra.mxu0 %v1574
      %1616 = vmatprep.subr.bf16.mxu0 0
      %1617 = vmatpush2.bf16.msra.mxu0 %v1573
      %1618 = vmatprep.subr.bf16.mxu0 0
      %1619 = vmatpush2.bf16.msra.mxu0 %v1572
      %1620 = vmatprep.subr.bf16.mxu0 0
      %1621 = vmatpush2.bf16.msra.mxu0 %v1571
      %1622 = vmatprep.subr.bf16.mxu0 0
      %1623 = vmatpush2.bf16.msra.mxu0 %v1570
      %1624 = vmatprep.subr.bf16.mxu0 0
      %1625 = vmatpush2.bf16.msra.mxu0 %v1569
      %1626 = vmatprep.subr.bf16.mxu0 0
      %1627 = vmatpush2.bf16.msra.mxu0 %v1568
      %1628 = vmatprep.subr.bf16.mxu0 0
      %1629 = vmatpush2.bf16.msra.mxu0 %v1567
      %1630 = vmatprep.mubr.bf16.mxu0 %v1449
      %1631 = vmatmul.mubr.bf16.gmra.mxu0 %v1448
      %v1632 = vpop.f32.mrf.mxu0
      %v1633 = vadd.f32 0.0, %v1632
      %v1634 = vpop.f32.mrf.mxu0
      %v1635 = vpop.f32.mrf.mxu0
      %v1636 = vpop.f32.mrf.mxu0
      %1637 = vdwg.mxu0
      %1638 = vmatprep.subr.bf16.mxu0 0
      %1639 = vmatpush1.bf16.msra.mxu0 0
      %1640 = vmatprep.subr.bf16.mxu0 0
      %1641 = vmatpush1.bf16.msra.mxu0 0
      %1642 = vmatprep.subr.bf16.mxu0 0
      %1643 = vmatpush1.bf16.msra.mxu0 0
      %1644 = vmatprep.subr.bf16.mxu0 0
      %1645 = vmatpush1.bf16.msra.mxu0 0
      %1646 = vmatprep.subr.bf16.mxu0 0
      %1647 = vmatpush1.bf16.msra.mxu0 0
      %1648 = vmatprep.subr.bf16.mxu0 0
      %1649 = vmatpush1.bf16.msra.mxu0 0
      %1650 = vmatprep.subr.bf16.mxu0 0
      %1651 = vmatpush1.bf16.msra.mxu0 %v1576
      %1652 = vmatprep.subr.bf16.mxu0 0
      %1653 = vmatpush1.bf16.msra.mxu0 %v1575
      %1654 = vmatprep.subr.bf16.mxu0 0
      %1655 = vmatpush2.bf16.msra.mxu0 0
      %1656 = vmatprep.subr.bf16.mxu0 0
      %1657 = vmatpush2.bf16.msra.mxu0 0
      %1658 = vmatprep.subr.bf16.mxu0 0
      %1659 = vmatpush2.bf16.msra.mxu0 0
      %1660 = vmatprep.subr.bf16.mxu0 0
      %1661 = vmatpush2.bf16.msra.mxu0 0
      %1662 = vmatprep.subr.bf16.mxu0 0
      %1663 = vmatpush2.bf16.msra.mxu0 0
      %1664 = vmatprep.subr.bf16.mxu0 0
      %1665 = vmatpush2.bf16.msra.mxu0 0
      %1666 = vmatprep.subr.bf16.mxu0 0
      %1667 = vmatpush2.bf16.msra.mxu0 0
      %1668 = vmatprep.subr.bf16.mxu0 0
      %1669 = vmatpush2.bf16.msra.mxu0 0
      %1670 = vmatprep.mubr.bf16.mxu0 0
      %1671 = vmatmul.mubr.bf16.gmra.mxu0 %v1596
      %v1672 = vpop.f32.mrf.mxu0
      %v1673 = vadd.f32 %v1633, %v1672
      %v1674 = vpop.f32.mrf.mxu0
      %v1675 = vpop.f32.mrf.mxu0
      %v1676 = vpop.f32.mrf.mxu0
      %1677 = vdwg.mxu0
      %v1687 = vunpack.c.l.b16 %v1434
      %v1688 = vunpack.c.l.b16 %v1435
      %v1689 = vunpack.c.l.b16 %v1436
      %v1690 = vunpack.c.l.b16 %v1437
      %v1691 = vunpack.c.l.b16 %v1438
      %v1692 = vunpack.c.l.b16 %v1439
      %v1693 = vunpack.c.l.b16 %v1440
      %v1694 = vunpack.c.l.b16 %v1441
      %v1695 = vunpack.c.l.b16 %v1442
      %v1696 = vpack.c.b16 %v1688, %v1687
      %v1697 = vpack.c.b16 %v1690, %v1689
      %v1698 = vpack.c.b16 %v1692, %v1691
      %v1699 = vpack.c.b16 %v1694, %v1693
      %v1700 = vpack.c.b16 %v1695, %v1695
      %v1706 = vsel %vm957, %v1700, 0
      %1708 = vmatprep.subr.bf16.mxu0 0
      %1709 = vmatpush1.bf16.msra.mxu0 0
      %1710 = vmatprep.subr.bf16.mxu0 0
      %1711 = vmatpush1.bf16.msra.mxu0 0
      %1712 = vmatprep.subr.bf16.mxu0 0
      %1713 = vmatpush1.bf16.msra.mxu0 0
      %1714 = vmatprep.subr.bf16.mxu0 0
      %1715 = vmatpush1.bf16.msra.mxu0 %v1706
      %1716 = vmatprep.subr.bf16.mxu0 0
      %1717 = vmatpush1.bf16.msra.mxu0 %v1699
      %1718 = vmatprep.subr.bf16.mxu0 0
      %1719 = vmatpush1.bf16.msra.mxu0 %v1698
      %1720 = vmatprep.subr.bf16.mxu0 0
      %1721 = vmatpush1.bf16.msra.mxu0 %v1697
      %1722 = vmatprep.subr.bf16.mxu0 0
      %1723 = vmatpush1.bf16.msra.mxu0 %v1696
      %1724 = vmatprep.subr.bf16.mxu0 0
      %1725 = vmatpush2.bf16.msra.mxu0 0
      %1726 = vmatprep.subr.bf16.mxu0 0
      %1727 = vmatpush2.bf16.msra.mxu0 0
      %1728 = vmatprep.subr.bf16.mxu0 0
      %1729 = vmatpush2.bf16.msra.mxu0 0
      %1730 = vmatprep.subr.bf16.mxu0 0
      %1731 = vmatpush2.bf16.msra.mxu0 0
      %1732 = vmatprep.subr.bf16.mxu0 0
      %1733 = vmatpush2.bf16.msra.mxu0 0
      %1734 = vmatprep.subr.bf16.mxu0 0
      %1735 = vmatpush2.bf16.msra.mxu0 0
      %1736 = vmatprep.subr.bf16.mxu0 0
      %1737 = vmatpush2.bf16.msra.mxu0 0
      %1738 = vmatprep.subr.bf16.mxu0 0
      %1739 = vmatpush2.bf16.msra.mxu0 0
      %1740 = vmatprep.mubr.bf16.mxu0 0
      %1741 = vmatmul.mubr.bf16.gmra.mxu0 %v955
      %v1742 = vpop.f32.mrf.mxu0
      %v1743 = vadd.f32 %v1673, %v1742
      %v1744 = vpop.f32.mrf.mxu0
      %v1745 = vpop.f32.mrf.mxu0
      %v1746 = vpop.f32.mrf.mxu0
      %1747 = vdwg.mxu0
      %v1748 = vld [vmem:[%s10] sm:$0x1]
      %v1750 = vlaneseq
      %v1751 = vshrl.u32 %v1750, 7
      %v1752 = vsub.s32 0, %v1751
      %v1753 = vrot.slane %v1748, %v1752
      %v1755 = vadd.f32 %v1743, %v1753
      %v1756 = vtanh.pop %v1755
      %v1757 = vsub.f32 1.0, %v1014
      %v1758 = vmul.f32 %v1757, %v566
      %v1759 = vmul.f32 %v1014, %v1756
      %v1760 = vadd.f32 %v1758, %v1759
      %vm1761 = vcmask 257024
      %1762 = vst.msk [vmem:[#allocation2] sm:$0xf] %vm1761, %v1760
      %v1763 = vpack.c.bf16 %v1760, %v1760
      %1764 = vst.msk [vmem:[%s423] sm:$0x3] %vm568, %v1763
      %p1765 = scmp.lt.s32.totalorder %s26, 1
      %s1766 = scalar_select %p1765, %s26, 1
      %p1767 = scmp.lt.s32.totalorder %s27, 2
      %s1768 = scalar_select %p1767, %s27, 2
      %s1769 = smul.addr %s1766, 3
      %s1770 = sadd.s32 %s1768, %s1769
      %s1771 = smul.addr %s1770, 2
      %s1772 = scalar_lea.vmem %s11, %s1771
      // Predicated region
      $region69: #{generator_forward.12} parent=63 // pred_check
        %p1773 = pneg %p295
      $region70: #{generator_forward.12} parent=63 // pred_check_branch
        %1775 = sbr.rel (%p1773) target = $region72
      $region71: #{generator_forward.12} parent=63 // pred_region
        _
      $region72: #{generator_forward.12} parent=63 // pred_fallthru
        _
    $region64: #{generator_forward.12} parent=5 // pred_fallthru
      _
    %p1776 = scmp.le.s32.totalorder 2, %s17
    // Predicated region
    $region73: #{generator_forward.12} parent=5 // pred_check
      %p1777 = pneg %p1776
    $region74: #{generator_forward.12} parent=5 // pred_check_branch
      %1779 = sbr.rel (%p1777) target = $region76
    $region75: #{generator_forward.12} parent=5 // pred_region
      %s1780 = ssub.s32 %s17, 2
      // Predicated region
      $region77: #{generator_forward.12} parent=75 // pred_check
        %p1781 = pneg %p301
      $region78: #{generator_forward.12} parent=75 // pred_check_branch
        %1783 = sbr.rel (%p1781) target = $region80
      $region79: #{generator_forward.12} parent=75 // pred_region
        %p1784 = scmp.lt.s32.totalorder %s28, 1
        %s1785 = scalar_select %p1784, %s28, 1
        %p1786 = scmp.lt.s32.totalorder %s29, 2
        %s1787 = scalar_select %p1786, %s29, 2
        %s1788 = smul.addr %s1785, 3
        %s1789 = sadd.s32 %s1787, %s1788
        %s1790 = smul.addr %s1789, 2
        %s1791 = scalar_lea.vmem %s11, %s1790
      $region80: #{generator_forward.12} parent=75 // pred_fallthru
        _
    $region76: #{generator_forward.12} parent=5 // pred_fallthru
      _
  $region6: #{generator_forward.12} parent=0 // loop_footer
    %s21 = sadd.s32 1, %s17
  $region7: #{generator_forward.12} parent=0 // loop_footer_branch
    %16 = sbr.rel target = $region3
  $region8: #{generator_forward.12} parent=0 // loop_exit
    _

// kernel: generator_forward.10
$region0: #{generator_forward.10}
  #allocation0 [shape = 'u32[]', space=smem, size = 0x4, offset = 0x4, fixed_abs, tag = 'smem constant byte address 0x4 - core index']
  #allocation1 [shape = 'u32[144,128]{1,0:T(1,128)}', space=vmem, size = 0x12000, scoped, tag = 'internal scratch']
  #allocation2 [shape = 'f32[16,288]{1,0:T(8,128)}', space=vmem, size = 0x6000, scoped, tag = 'scratch operand']
  %s0 = inlined_call_operand.vmem [shape: bf16[2,6,6,32], index: 0, kind: input, shape index: {}]
  %s1 = inlined_call_operand.vmem [shape: bf16[288,16], index: 1, kind: input, shape index: {}]
  %s2 = inlined_call_operand.vmem [shape: f32[1,16], index: 2, kind: input, shape index: {}]
  %s3 = inlined_call_operand.vmem [shape: f32[2,16,16], index: 3, kind: output, shape index: {}]
  %s4 = sld [smem:[#allocation0]]
  $region45: #{generator_forward.10} parent=0
    _
  %s6 = ssub.s32 1, %s4
  %s7 = scalar_select 0, %s6, %s4
  loop: start=0, step=1, limit=4
  $region2: #{generator_forward.10} parent=0 // loop_pre_header
    _
  $region3: #{generator_forward.10} parent=0 // loop_header
    %s9 = sphi 0, %s13
    %p10 = scmp.ge.s32.totalorder %s9, 4
    %s19 = sphi 0, %s21
    %s22 = sphi 0, %s19
    %s23 = sphi 0, %s22
    %s39 = sphi 0, %s23
    %s43 = sphi 0, %s43
    %s45 = sphi 0, %s43
    %s46 = sphi 0, %s45
    %s60 = sphi 0, %s46
    %s64 = sphi 0, %s64
    %s66 = sphi 0, %s64
    %s67 = sphi 0, %s66
    %s81 = sphi 0, %s67
    %s87 = sphi 0, %s89
    %s90 = sphi 0, %s87
    %s91 = sphi 0, %s90
    %s107 = sphi 0, %s91
  $region4: #{generator_forward.10} parent=0 // loop_header_branch
    %12 = sbr.rel (%p10) target = $region8
  $region5: #{generator_forward.10} parent=0 // loop_body
    %s14 = ssub.s32 %s9, 1
    %s15 = ssub.s32 %s9, 2
    %s16 = sadd.s32 %s9, 1
    %s17 = ssub.s32 %s9, %s16
    %p18 = scmp.eq.s32.totalorder %s17, 0
    %s20 = sadd.s32 %s19, 1
    %s21 = scalar_select %p18, %s19, %s20
    %p24 = pneg %p18
    %p25 = scmp.eq.s32.totalorder %s9, 1
    %p26 = por %p24, %p25
    %p27 = scmp.ne.s32.totalorder %s19, %s22
    %p28 = scmp.eq.s32.totalorder %s9, 0
    %p29 = por %p27, %p28
    %p30 = scmp.ne.s32.totalorder %s19, %s22
    %p31 = scmp.eq.s32.totalorder %s14, 1
    %p32 = por %p30, %p31
    %p33 = scmp.ne.s32.totalorder %s22, %s23
    %p34 = scmp.eq.s32.totalorder %s14, 0
    %p35 = por %p33, %p34
    %p36 = scmp.ne.s32.totalorder %s22, %s23
    %p37 = scmp.eq.s32.totalorder %s15, 1
    %p38 = por %p36, %p37
    %p40 = scmp.ne.s32.totalorder %s23, %s39
    %p41 = scmp.eq.s32.totalorder %s15, 0
    %p42 = por %p40, %p41
    %s44 = sadd.s32 %s43, 1
    %p47 = scmp.eq.s32.totalorder %s9, 1
    %p48 = scmp.ne.s32.totalorder %s43, %s45
    %p49 = scmp.eq.s32.totalorder %s9, 0
    %p50 = por %p48, %p49
    %p51 = scmp.ne.s32.totalorder %s43, %s45
    %p52 = scmp.eq.s32.totalorder %s14, 1
    %p53 = por %p51, %p52
    %p54 = scmp.ne.s32.totalorder %s45, %s46
    %p55 = scmp.eq.s32.totalorder %s14, 0
    %p56 = por %p54, %p55
    %p57 = scmp.ne.s32.totalorder %s45, %s46
    %p58 = scmp.eq.s32.totalorder %s15, 1
    %p59 = por %p57, %p58
    %p61 = scmp.ne.s32.totalorder %s46, %s60
    %p62 = scmp.eq.s32.totalorder %s15, 0
    %p63 = por %p61, %p62
    %s65 = sadd.s32 %s64, 1
    %p68 = scmp.eq.s32.totalorder %s9, 1
    %p69 = scmp.ne.s32.totalorder %s64, %s66
    %p70 = scmp.eq.s32.totalorder %s9, 0
    %p71 = por %p69, %p70
    %p72 = scmp.ne.s32.totalorder %s64, %s66
    %p73 = scmp.eq.s32.totalorder %s14, 1
    %p74 = por %p72, %p73
    %p75 = scmp.ne.s32.totalorder %s66, %s67
    %p76 = scmp.eq.s32.totalorder %s14, 0
    %p77 = por %p75, %p76
    %p78 = scmp.ne.s32.totalorder %s66, %s67
    %p79 = scmp.eq.s32.totalorder %s15, 1
    %p80 = por %p78, %p79
    %p82 = scmp.ne.s32.totalorder %s67, %s81
    %p83 = scmp.eq.s32.totalorder %s15, 0
    %p84 = por %p82, %p83
    %s85 = ssub.s32 %s9, %s16
    %p86 = scmp.eq.s32.totalorder %s85, 0
    %s88 = sadd.s32 %s87, 1
    %s89 = scalar_select %p86, %s87, %s88
    %p92 = pneg %p86
    %p93 = scmp.eq.s32.totalorder %s9, 1
    %p94 = por %p92, %p93
    %p95 = scmp.ne.s32.totalorder %s87, %s90
    %p96 = scmp.eq.s32.totalorder %s9, 0
    %p97 = por %p95, %p96
    %p98 = scmp.ne.s32.totalorder %s87, %s90
    %p99 = scmp.eq.s32.totalorder %s14, 1
    %p100 = por %p98, %p99
    %p101 = scmp.ne.s32.totalorder %s90, %s91
    %p102 = scmp.eq.s32.totalorder %s14, 0
    %p103 = por %p101, %p102
    %p104 = scmp.ne.s32.totalorder %s90, %s91
    %p105 = scmp.eq.s32.totalorder %s15, 1
    %p106 = por %p104, %p105
    %p108 = scmp.ne.s32.totalorder %s91, %s107
    %p109 = scmp.eq.s32.totalorder %s15, 0
    %p110 = por %p108, %p109
    %p111 = scmp.le.s32.totalorder 1, %s9
    %p112 = scmp.lt.s32.totalorder %s9, 3
    %p113 = pnand %p111, %p112
    %p114 = pneg %p113
    // Predicated region
    $region9: #{generator_forward.10} parent=5 // pred_check
      _
    $region10: #{generator_forward.10} parent=5 // pred_check_branch
      %116 = sbr.rel (%p113) target = $region12
    $region11: #{generator_forward.10} parent=5 // pred_region
      %s117 = ssub.s32 %s9, 1
      // Predicated region
      $region13: #{generator_forward.10} parent=11 // pred_check
        %p118 = pneg %p56
      $region14: #{generator_forward.10} parent=11 // pred_check_branch
        %120 = sbr.rel (%p118) target = $region16
      $region15: #{generator_forward.10} parent=11 // pred_region
        _
      $region16: #{generator_forward.10} parent=11 // pred_fallthru
        _
      // Predicated region
      $region17: #{generator_forward.10} parent=11 // pred_check
        %p121 = pneg %p77
      $region18: #{generator_forward.10} parent=11 // pred_check_branch
        %123 = sbr.rel (%p121) target = $region20
      $region19: #{generator_forward.10} parent=11 // pred_region
        _
      $region20: #{generator_forward.10} parent=11 // pred_fallthru
        _
    $region12: #{generator_forward.10} parent=5 // pred_fallthru
      _
    %p124 = scmp.lt.s32.totalorder %s9, 2
    // Predicated region
    $region21: #{generator_forward.10} parent=5 // pred_check
      %p125 = pneg %p124
    $region22: #{generator_forward.10} parent=5 // pred_check_branch
      %127 = sbr.rel (%p125) target = $region24
    $region23: #{generator_forward.10} parent=5 // pred_region
      // Predicated region
      $region25: #{generator_forward.10} parent=23 // pred_check
        %p128 = pneg %p29
      $region26: #{generator_forward.10} parent=23 // pred_check_branch
        %130 = sbr.rel (%p128) target = $region28
      $region27: #{generator_forward.10} parent=23 // pred_region
        %p131 = scmp.lt.s32.totalorder %s9, 1
        %s132 = scalar_select %p131, %s9, 1
        %s133 = smul.addr %s132, 6
        %s134 = smul.addr %s133, 4
        %s135 = scalar_lea.vmem %s0, %s134
      $region28: #{generator_forward.10} parent=23 // pred_fallthru
        _
    $region24: #{generator_forward.10} parent=5 // pred_fallthru
      _
    %p136 = scmp.le.s32.totalorder 1, %s9
    %p137 = scmp.lt.s32.totalorder %s9, 3
    %p138 = pnand %p136, %p137
    %p139 = pneg %p138
    // Predicated region
    $region29: #{generator_forward.10} parent=5 // pred_check
      _
    $region30: #{generator_forward.10} parent=5 // pred_check_branch
      %141 = sbr.rel (%p138) target = $region32
    $region31: #{generator_forward.10} parent=5 // pred_region
      %s142 = ssub.s32 %s9, 1
      %p143 = scmp.lt.s32.totalorder %s14, 1
      %s144 = scalar_select %p143, %s14, 1
      %s145 = smul.addr %s144, 6
      %s146 = smul.addr %s145, 4
      %s147 = scalar_lea.vmem %s0, %s146
      %p148 = pneg %p35
      %p149 = pneg %p32
      %p150 = pneg %p56
      %p151 = pneg %p53
      %p152 = pneg %p77
      %p153 = pneg %p74
      %p154 = pneg %p103
      %p155 = pneg %p100
      %p156 = scmp.lt.s32.totalorder %s14, 1
      %s157 = scalar_select %p156, %s14, 1
      %s158 = smul.addr %s157, 2
      %s159 = smul.addr %s158, 8
      %s160 = scalar_lea.vmem %s3, %s159
      %p161 = scmp.lt.s32.totalorder %s14, 1
      %s162 = scalar_select %p161, %s14, 1
      %s163 = smul.addr %s162, 6
      %s164 = smul.addr %s163, 4
      %s165 = scalar_lea.vmem %s0, %s164
      %p166 = scmp.lt.s32.totalorder %s14, 1
      %s167 = scalar_select %p166, %s14, 1
      %s168 = smul.addr %s167, 2
      %s169 = smul.addr %s168, 8
      %s170 = scalar_lea.vmem %s3, %s169
      %v172 = vld [vmem:[%s165] sm:$0x3]
      %v173 = vunpack.c.l.bf16 %v172
      %vm174 = vcmask 257024
      %175 = vst.msk [vmem:[#allocation2] sm:$0xf] %vm174, %v173
      %v176 = vld [vmem:[%s165] sm:$0x7]
      %v177 = vunpack.c.l.bf16 %v176
      %v179 = vrot.slane %v177, 1
      %180 = vrot.lane.b32.xlu0 %v179, 32
      %v181 = vpop.permute.xlu0 %180
      %vm183 = vcmask 519424
      %184 = vst.msk [vmem:[#allocation2] sm:$0xf] %vm183, %v181
      %v185 = vld [vmem:[%s165] sm:$0x6]
      %v186 = vunpack.c.l.bf16 %v185
      %v188 = vrot.slane %v186, 2
      %189 = vrot.lane.b32.xlu0 %v188, 64
      %v190 = vpop.permute.xlu0 %189
      %vm192 = vcmask 781824
      %193 = vst.msk [vmem:[#allocation2] sm:$0xf] %vm192, %v190
      %s194 = scalar_lea.vmem %s165, 4
      %v195 = vld [vmem:[%s194] sm:$0x3]
      %v196 = vunpack.c.l.bf16 %v195
      %198 = vrot.lane.b32.xlu0 %v196, 96
      %v199 = vpop.permute.xlu0 %198
      %vm201 = vcmask 1044224
      %202 = vst.msk [vmem:[#allocation2] sm:$0xf] %vm201, %v199
      %v203 = vld [vmem:[%s194] sm:$0x7]
      %v204 = vunpack.c.l.bf16 %v203
      %v206 = vrot.slane %v204, 1
      %208 = vst.msk [vmem:[#allocation2 + $0x8] sm:$0xf] %vm174, %v206
      %v209 = vld [vmem:[%s194] sm:$0x6]
      %v210 = vunpack.c.l.bf16 %v209
      %v212 = vrot.slane %v210, 2
      %213 = vrot.lane.b32.xlu0 %v212, 32
      %v214 = vpop.permute.xlu0 %213
      %216 = vst.msk [vmem:[#allocation2 + $0x8] sm:$0xf] %vm183, %v214
      %s217 = scalar_lea.vmem %s165, 8
      %v218 = vld [vmem:[%s217] sm:$0x3]
      %v219 = vunpack.c.l.bf16 %v218
      %221 = vrot.lane.b32.xlu0 %v219, 64
      %v222 = vpop.permute.xlu0 %221
      %224 = vst.msk [vmem:[#allocation2 + $0x8] sm:$0xf] %vm192, %v222
      %v225 = vld [vmem:[%s217] sm:$0x7]
      %v226 = vunpack.c.l.bf16 %v225
      %v228 = vrot.slane %v226, 1
      %229 = vrot.lane.b32.xlu0 %v228, 96
      %v230 = vpop.permute.xlu0 %229
      %232 = vst.msk [vmem:[#allocation2 + $0x8] sm:$0xf] %vm201, %v230
      %v233 = vld [vmem:[%s217] sm:$0x6]
      %v234 = vunpack.c.l.bf16 %v233
      %v236 = vrot.slane %v234, 2
      %238 = vst.msk [vmem:[#allocation2 + $0x10] sm:$0xf] %vm174, %v236
      %v239 = vld [vmem:[%s194] sm:$0x3]
      %v240 = vunpack.c.l.bf16 %v239
      %v242 = vrot.slane %v240, 4
      %vm244 = vcmask 261124
      %245 = vst.msk [vmem:[#allocation2] sm:$0xf0] %vm244, %v242
      %v246 = vld [vmem:[%s194] sm:$0x7]
      %v247 = vunpack.c.l.bf16 %v246
      %v249 = vrot.slane %v247, 5
      %250 = vrot.lane.b32.xlu0 %v249, 32
      %v251 = vpop.permute.xlu0 %250
      %vm253 = vcmask 523524
      %254 = vst.msk [vmem:[#allocation2] sm:$0xf0] %vm253, %v251
      %v255 = vld [vmem:[%s194] sm:$0x6]
      %v256 = vunpack.c.l.bf16 %v255
      %v258 = vrot.slane %v256, 6
      %259 = vrot.lane.b32.xlu0 %v258, 64
      %v260 = vpop.permute.xlu0 %259
      %vm262 = vcmask 785924
      %263 = vst.msk [vmem:[#allocation2] sm:$0xf0] %vm262, %v260
      %v264 = vld [vmem:[%s217] sm:$0x3]
      %v265 = vunpack.c.l.bf16 %v264
      %v267 = vrot.slane %v265, 4
      %268 = vrot.lane.b32.xlu0 %v267, 96
      %v269 = vpop.permute.xlu0 %268
      %vm271 = vcmask 1048324
      %272 = vst.msk [vmem:[#allocation2] sm:$0xf0] %vm271, %v269
      %v273 = vld [vmem:[%s217] sm:$0x7]
      %v274 = vunpack.c.l.bf16 %v273
      %v276 = vrot.slane %v274, 5
      %278 = vst.msk [vmem:[#allocation2 + $0x8] sm:$0xf0] %vm244, %v276
      %v279 = vld [vmem:[%s217] sm:$0x6]
      %v280 = vunpack.c.l.bf16 %v279
      %v282 = vrot.slane %v280, 6
      %283 = vrot.lane.b32.xlu0 %v282, 32
      %v284 = vpop.permute.xlu0 %283
      %286 = vst.msk [vmem:[#allocation2 + $0x8] sm:$0xf0] %vm253, %v284
      %s287 = scalar_lea.vmem %s165, 12
      %v288 = vld [vmem:[%s287] sm:$0x3]
      %v289 = vunpack.c.l.bf16 %v288
      %v291 = vrot.slane %v289, 4
      %292 = vrot.lane.b32.xlu0 %v291, 64
      %v293 = vpop.permute.xlu0 %292
      %295 = vst.msk [vmem:[#allocation2 + $0x8] sm:$0xf0] %vm262, %v293
      %v296 = vld [vmem:[%s287] sm:$0x7]
      %v297 = vunpack.c.l.bf16 %v296
      %v299 = vrot.slane %v297, 5
      %300 = vrot.lane.b32.xlu0 %v299, 96
      %v301 = vpop.permute.xlu0 %300
      %303 = vst.msk [vmem:[#allocation2 + $0x8] sm:$0xf0] %vm271, %v301
      %v304 = vld [vmem:[%s287] sm:$0x6]
      %v305 = vunpack.c.l.bf16 %v304
      %v307 = vrot.slane %v305, 6
      %309 = vst.msk [vmem:[#allocation2 + $0x10] sm:$0xf0] %vm244, %v307
      %v310 = vld [vmem:[%s217] sm:$0x3]
      %v311 = vunpack.c.l.bf16 %v310
      %312 = vst.msk [vmem:[#allocation2 + $0x18] sm:$0xf] %vm174, %v311
      %v313 = vld [vmem:[%s217] sm:$0x7]
      %v314 = vunpack.c.l.bf16 %v313
      %v316 = vrot.slane %v314, 1
      %317 = vrot.lane.b32.xlu0 %v316, 32
      %v318 = vpop.permute.xlu0 %317
      %320 = vst.msk [vmem:[#allocation2 + $0x18] sm:$0xf] %vm183, %v318
      %v321 = vld [vmem:[%s217] sm:$0x6]
      %v322 = vunpack.c.l.bf16 %v321
      %v324 = vrot.slane %v322, 2
      %325 = vrot.lane.b32.xlu0 %v324, 64
      %v326 = vpop.permute.xlu0 %325
      %328 = vst.msk [vmem:[#allocation2 + $0x18] sm:$0xf] %vm192, %v326
      %v329 = vld [vmem:[%s287] sm:$0x3]
      %v330 = vunpack.c.l.bf16 %v329
      %332 = vrot.lane.b32.xlu0 %v330, 96
      %v333 = vpop.permute.xlu0 %332
      %335 = vst.msk [vmem:[#allocation2 + $0x18] sm:$0xf] %vm201, %v333
      %v336 = vld [vmem:[%s287] sm:$0x7]
      %v337 = vunpack.c.l.bf16 %v336
      %v339 = vrot.slane %v337, 1
      %341 = vst.msk [vmem:[#allocation2 + $0x20] sm:$0xf] %vm174, %v339
      %v342 = vld [vmem:[%s287] sm:$0x6]
      %v343 = vunpack.c.l.bf16 %v342
      %v345 = vrot.slane %v343, 2
      %346 = vrot.lane.b32.xlu0 %v345, 32
      %v347 = vpop.permute.xlu0 %346
      %349 = vst.msk [vmem:[#allocation2 + $0x20] sm:$0xf] %vm183, %v347
      %s350 = scalar_lea.vmem %s165, 16
      %v351 = vld [vmem:[%s350] sm:$0x3]
      %v352 = vunpack.c.l.bf16 %v351
      %354 = vrot.lane.b32.xlu0 %v352, 64
      %v355 = vpop.permute.xlu0 %354
      %357 = vst.msk [vmem:[#allocation2 + $0x20] sm:$0xf] %vm192, %v355
      %v358 = vld [vmem:[%s350] sm:$0x7]
      %v359 = vunpack.c.l.bf16 %v358
      %v361 = vrot.slane %v359, 1
      %362 = vrot.lane.b32.xlu0 %v361, 96
      %v363 = vpop.permute.xlu0 %362
      %365 = vst.msk [vmem:[#allocation2 + $0x20] sm:$0xf] %vm201, %v363
      %v366 = vld [vmem:[%s350] sm:$0x6]
      %v367 = vunpack.c.l.bf16 %v366
      %v369 = vrot.slane %v367, 2
      %371 = vst.msk [vmem:[#allocation2 + $0x28] sm:$0xf] %vm174, %v369
      %v372 = vld [vmem:[%s287] sm:$0x3]
      %v373 = vunpack.c.l.bf16 %v372
      %v375 = vrot.slane %v373, 4
      %377 = vst.msk [vmem:[#allocation2 + $0x18] sm:$0xf0] %vm244, %v375
      %v378 = vld [vmem:[%s287] sm:$0x7]
      %v379 = vunpack.c.l.bf16 %v378
      %v381 = vrot.slane %v379, 5
      %382 = vrot.lane.b32.xlu0 %v381, 32
      %v383 = vpop.permute.xlu0 %382
      %385 = vst.msk [vmem:[#allocation2 + $0x18] sm:$0xf0] %vm253, %v383
      %v386 = vld [vmem:[%s287] sm:$0x6]
      %v387 = vunpack.c.l.bf16 %v386
      %v389 = vrot.slane %v387, 6
      %390 = vrot.lane.b32.xlu0 %v389, 64
      %v391 = vpop.permute.xlu0 %390
      %393 = vst.msk [vmem:[#allocation2 + $0x18] sm:$0xf0] %vm262, %v391
      %v394 = vld [vmem:[%s350] sm:$0x3]
      %v395 = vunpack.c.l.bf16 %v394
      %v397 = vrot.slane %v395, 4
      %398 = vrot.lane.b32.xlu0 %v397, 96
      %v399 = vpop.permute.xlu0 %398
      %401 = vst.msk [vmem:[#allocation2 + $0x18] sm:$0xf0] %vm271, %v399
      %v402 = vld [vmem:[%s350] sm:$0x7]
      %v403 = vunpack.c.l.bf16 %v402
      %v405 = vrot.slane %v403, 5
      %407 = vst.msk [vmem:[#allocation2 + $0x20] sm:$0xf0] %vm244, %v405
      %v408 = vld [vmem:[%s350] sm:$0x6]
      %v409 = vunpack.c.l.bf16 %v408
      %v411 = vrot.slane %v409, 6
      %412 = vrot.lane.b32.xlu0 %v411, 32
      %v413 = vpop.permute.xlu0 %412
      %415 = vst.msk [vmem:[#allocation2 + $0x20] sm:$0xf0] %vm253, %v413
      %s416 = scalar_lea.vmem %s165, 20
      %v417 = vld [vmem:[%s416] sm:$0x3]
      %v418 = vunpack.c.l.bf16 %v417
      %v420 = vrot.slane %v418, 4
      %421 = vrot.lane.b32.xlu0 %v420, 64
      %v422 = vpop.permute.xlu0 %421
      %424 = vst.msk [vmem:[#allocation2 + $0x20] sm:$0xf0] %vm262, %v422
      %v425 = vld [vmem:[%s416] sm:$0x7]
      %v426 = vunpack.c.l.bf16 %v425
      %v428 = vrot.slane %v426, 5
      %429 = vrot.lane.b32.xlu0 %v428, 96
      %v430 = vpop.permute.xlu0 %429
      %432 = vst.msk [vmem:[#allocation2 + $0x20] sm:$0xf0] %vm271, %v430
      %v433 = vld [vmem:[%s416] sm:$0x6]
      %v434 = vunpack.c.l.bf16 %v433
      %v436 = vrot.slane %v434, 6
      %438 = vst.msk [vmem:[#allocation2 + $0x28] sm:$0xf0] %vm244, %v436
      %v439 = vld [vmem:[#allocation2] sm:$0xff]
      %v440 = vld [vmem:[#allocation2 + $0x8] sm:$0xff]
      %v441 = vld [vmem:[#allocation2 + $0x10] sm:$0xff]
      %v442 = vld [vmem:[#allocation2 + $0x18] sm:$0xff]
      %v443 = vld [vmem:[#allocation2 + $0x20] sm:$0xff]
      %v444 = vld [vmem:[#allocation2 + $0x28] sm:$0xff]
      %v445 = vpack.c.bf16 %v442, %v439
      %v446 = vpack.c.bf16 %v443, %v440
      %v447 = vpack.c.bf16 %v444, %v441
      %v448 = vld [vmem:[%s1] sm:$0xf]
      %v449 = vld [vmem:[%s1 + $0x4] sm:$0xf]
      %v450 = vld [vmem:[%s1 + $0x8] sm:$0xf]
      %v451 = vld [vmem:[%s1 + $0xc] sm:$0xf]
      %v452 = vld [vmem:[%s1 + $0x10] sm:$0xf]
      %v453 = vld [vmem:[%s1 + $0x14] sm:$0xf]
      %v454 = vld [vmem:[%s1 + $0x18] sm:$0xf]
      %v455 = vld [vmem:[%s1 + $0x1c] sm:$0xf]
      %v456 = vld [vmem:[%s1 + $0x20] sm:$0xf]
      %v457 = vld [vmem:[%s1 + $0x24] sm:$0xf]
      %v458 = vld [vmem:[%s1 + $0x28] sm:$0xf]
      %v459 = vld [vmem:[%s1 + $0x2c] sm:$0xf]
      %v460 = vld [vmem:[%s1 + $0x30] sm:$0xf]
      %v461 = vld [vmem:[%s1 + $0x34] sm:$0xf]
      %v462 = vld [vmem:[%s1 + $0x38] sm:$0xf]
      %v463 = vld [vmem:[%s1 + $0x3c] sm:$0xf]
      %v464 = vld [vmem:[%s1 + $0x40] sm:$0xf]
      %v465 = vld [vmem:[%s1 + $0x44] sm:$0xf]
      %v466 = vld [vmem:[%s1 + $0x48] sm:$0xf]
      %v467 = vld [vmem:[%s1 + $0x4c] sm:$0xf]
      %v468 = vld [vmem:[%s1 + $0x50] sm:$0xf]
      %v469 = vld [vmem:[%s1 + $0x54] sm:$0xf]
      %v470 = vld [vmem:[%s1 + $0x58] sm:$0xf]
      %v471 = vld [vmem:[%s1 + $0x5c] sm:$0xf]
      %v472 = vld [vmem:[%s1 + $0x60] sm:$0xf]
      %v473 = vld [vmem:[%s1 + $0x64] sm:$0xf]
      %v474 = vld [vmem:[%s1 + $0x68] sm:$0xf]
      %v475 = vld [vmem:[%s1 + $0x6c] sm:$0xf]
      %v476 = vld [vmem:[%s1 + $0x70] sm:$0xf]
      %v477 = vld [vmem:[%s1 + $0x74] sm:$0xf]
      %v478 = vld [vmem:[%s1 + $0x78] sm:$0xf]
      %v479 = vld [vmem:[%s1 + $0x7c] sm:$0xf]
      %v480 = vld [vmem:[%s1 + $0x80] sm:$0xf]
      %v481 = vld [vmem:[%s1 + $0x84] sm:$0xf]
      %v482 = vld [vmem:[%s1 + $0x88] sm:$0xf]
      %v483 = vld [vmem:[%s1 + $0x8c] sm:$0xf]
      %v484 = vld [vmem:[%s2] sm:$0x1]
      %v486 = vlaneseq
      %v487 = vshrl.u32 %v486, 7
      %v488 = vsub.s32 0, %v487
      %v489 = vrot.slane %v484, %v488
      %v527 = vunpack.c.l.b16 %v448
      %v528 = vunpack.c.l.b16 %v449
      %v529 = vunpack.c.l.b16 %v450
      %v530 = vunpack.c.l.b16 %v451
      %v531 = vunpack.c.l.b16 %v452
      %v532 = vunpack.c.l.b16 %v453
      %v533 = vunpack.c.l.b16 %v454
      %v534 = vunpack.c.l.b16 %v455
      %v535 = vunpack.c.l.b16 %v456
      %v536 = vunpack.c.l.b16 %v457
      %v537 = vunpack.c.l.b16 %v458
      %v538 = vunpack.c.l.b16 %v459
      %v539 = vunpack.c.l.b16 %v460
      %v540 = vunpack.c.l.b16 %v461
      %v541 = vunpack.c.l.b16 %v462
      %v542 = vunpack.c.l.b16 %v463
      %v543 = vunpack.c.l.b16 %v464
      %v544 = vunpack.c.l.b16 %v465
      %v545 = vunpack.c.l.b16 %v466
      %v546 = vunpack.c.l.b16 %v467
      %v547 = vunpack.c.l.b16 %v468
      %v548 = vunpack.c.l.b16 %v469
      %v549 = vunpack.c.l.b16 %v470
      %v550 = vunpack.c.l.b16 %v471
      %v551 = vunpack.c.l.b16 %v472
      %v552 = vunpack.c.l.b16 %v473
      %v553 = vunpack.c.l.b16 %v474
      %v554 = vunpack.c.l.b16 %v475
      %v555 = vunpack.c.l.b16 %v476
      %v556 = vunpack.c.l.b16 %v477
      %v557 = vunpack.c.l.b16 %v478
      %v558 = vunpack.c.l.b16 %v479
      %v559 = vunpack.c.l.b16 %v480
      %v560 = vunpack.c.l.b16 %v481
      %v561 = vunpack.c.l.b16 %v482
      %v562 = vunpack.c.l.b16 %v483
      %v563 = vpack.c.b16 %v528, %v527
      %v564 = vpack.c.b16 %v530, %v529
      %v565 = vpack.c.b16 %v532, %v531
      %v566 = vpack.c.b16 %v534, %v533
      %v567 = vpack.c.b16 %v536, %v535
      %v568 = vpack.c.b16 %v538, %v537
      %v569 = vpack.c.b16 %v540, %v539
      %v570 = vpack.c.b16 %v542, %v541
      %v571 = vpack.c.b16 %v544, %v543
      %v572 = vpack.c.b16 %v546, %v545
      %v573 = vpack.c.b16 %v548, %v547
      %v574 = vpack.c.b16 %v550, %v549
      %v575 = vpack.c.b16 %v552, %v551
      %v576 = vpack.c.b16 %v554, %v553
      %v577 = vpack.c.b16 %v556, %v555
      %v578 = vpack.c.b16 %v558, %v557
      %v579 = vpack.c.b16 %v560, %v559
      %v580 = vpack.c.b16 %v562, %v561
      %vm599 = vcmask 261120
      %v601 = vsel %vm599, %v447, 0
      %603 = vmatprep.subr.bf16.mxu0 0
      %604 = vmatpush1.bf16.msra.mxu0 %v570
      %605 = vmatprep.subr.bf16.mxu0 0
      %606 = vmatpush1.bf16.msra.mxu0 %v569
      %607 = vmatprep.subr.bf16.mxu0 0
      %608 = vmatpush1.bf16.msra.mxu0 %v568
      %609 = vmatprep.subr.bf16.mxu0 0
      %610 = vmatpush1.bf16.msra.mxu0 %v567
      %611 = vmatprep.subr.bf16.mxu0 0
      %612 = vmatpush1.bf16.msra.mxu0 %v566
      %613 = vmatprep.subr.bf16.mxu0 0
      %614 = vmatpush1.bf16.msra.mxu0 %v565
      %615 = vmatprep.subr.bf16.mxu0 0
      %616 = vmatpush1.bf16.msra.mxu0 %v564
      %617 = vmatprep.subr.bf16.mxu0 0
      %618 = vmatpush1.bf16.msra.mxu0 %v563
      %619 = vmatprep.subr.bf16.mxu0 0
      %620 = vmatpush2.bf16.msra.mxu0 %v578
      %621 = vmatprep.subr.bf16.mxu0 0
      %622 = vmatpush2.bf16.msra.mxu0 %v577
      %623 = vmatprep.subr.bf16.mxu0 0
      %624 = vmatpush2.bf16.msra.mxu0 %v576
      %625 = vmatprep.subr.bf16.mxu0 0
      %626 = vmatpush2.bf16.msra.mxu0 %v575
      %627 = vmatprep.subr.bf16.mxu0 0
      %628 = vmatpush2.bf16.msra.mxu0 %v574
      %629 = vmatprep.subr.bf16.mxu0 0
      %630 = vmatpush2.bf16.msra.mxu0 %v573
      %631 = vmatprep.subr.bf16.mxu0 0
      %632 = vmatpush2.bf16.msra.mxu0 %v572
      %633 = vmatprep.subr.bf16.mxu0 0
      %634 = vmatpush2.bf16.msra.mxu0 %v571
      %635 = vmatprep.mubr.bf16.mxu0 %v446
      %636 = vmatmul.mubr.bf16.gmra.mxu0 %v445
      %v637 = vpop.f32.mrf.mxu0
      %v638 = vadd.f32 %v489, %v637
      %v639 = vpop.f32.mrf.mxu0
      %v640 = vpop.f32.mrf.mxu0
      %v641 = vadd.f32 %v489, %v640
      %v642 = vpop.f32.mrf.mxu0
      %643 = vdwg.mxu0
      %644 = vmatprep.subr.bf16.mxu0 0
      %645 = vmatpush1.bf16.msra.mxu0 0
      %646 = vmatprep.subr.bf16.mxu0 0
      %647 = vmatpush1.bf16.msra.mxu0 0
      %648 = vmatprep.subr.bf16.mxu0 0
      %649 = vmatpush1.bf16.msra.mxu0 0
      %650 = vmatprep.subr.bf16.mxu0 0
      %651 = vmatpush1.bf16.msra.mxu0 0
      %652 = vmatprep.subr.bf16.mxu0 0
      %653 = vmatpush1.bf16.msra.mxu0 0
      %654 = vmatprep.subr.bf16.mxu0 0
      %655 = vmatpush1.bf16.msra.mxu0 0
      %656 = vmatprep.subr.bf16.mxu0 0
      %657 = vmatpush1.bf16.msra.mxu0 %v580
      %658 = vmatprep.subr.bf16.mxu0 0
      %659 = vmatpush1.bf16.msra.mxu0 %v579
      %660 = vmatprep.subr.bf16.mxu0 0
      %661 = vmatpush2.bf16.msra.mxu0 0
      %662 = vmatprep.subr.bf16.mxu0 0
      %663 = vmatpush2.bf16.msra.mxu0 0
      %664 = vmatprep.subr.bf16.mxu0 0
      %665 = vmatpush2.bf16.msra.mxu0 0
      %666 = vmatprep.subr.bf16.mxu0 0
      %667 = vmatpush2.bf16.msra.mxu0 0
      %668 = vmatprep.subr.bf16.mxu0 0
      %669 = vmatpush2.bf16.msra.mxu0 0
      %670 = vmatprep.subr.bf16.mxu0 0
      %671 = vmatpush2.bf16.msra.mxu0 0
      %672 = vmatprep.subr.bf16.mxu0 0
      %673 = vmatpush2.bf16.msra.mxu0 0
      %674 = vmatprep.subr.bf16.mxu0 0
      %675 = vmatpush2.bf16.msra.mxu0 0
      %676 = vmatprep.mubr.bf16.mxu0 0
      %677 = vmatmul.mubr.bf16.gmra.mxu0 %v601
      %v678 = vpop.f32.mrf.mxu0
      %v679 = vadd.f32 %v638, %v678
      %v680 = vpop.f32.mrf.mxu0
      %v681 = vpop.f32.mrf.mxu0
      %v682 = vadd.f32 %v641, %v681
      %v683 = vpop.f32.mrf.mxu0
      %684 = vdwg.mxu0
      %v685 = vmax.f32 %v679, 0.0
      %v686 = vmax.f32 %v682, 0.0
      %vm687 = vcmask 130048
      %688 = vst.msk [vmem:[%s170] sm:$0xff] %vm687, %v685
      %689 = vst.msk [vmem:[%s170 + $0x8] sm:$0xff] %vm687, %v686
      %p690 = scmp.lt.s32.totalorder %s14, 1
      %s691 = scalar_select %p690, %s14, 1
      %s692 = smul.addr %s691, 2
      %s693 = smul.addr %s692, 8
      %s694 = scalar_lea.vmem %s3, %s693
      // Predicated region
      $region33: #{generator_forward.10} parent=31 // pred_check
        %p695 = pneg %p100
      $region34: #{generator_forward.10} parent=31 // pred_check_branch
        %697 = sbr.rel (%p695) target = $region36
      $region35: #{generator_forward.10} parent=31 // pred_region
        _
      $region36: #{generator_forward.10} parent=31 // pred_fallthru
        _
    $region32: #{generator_forward.10} parent=5 // pred_fallthru
      _
    %p698 = scmp.le.s32.totalorder 2, %s9
    // Predicated region
    $region37: #{generator_forward.10} parent=5 // pred_check
      %p699 = pneg %p698
    $region38: #{generator_forward.10} parent=5 // pred_check_branch
      %701 = sbr.rel (%p699) target = $region40
    $region39: #{generator_forward.10} parent=5 // pred_region
      %s702 = ssub.s32 %s9, 2
      // Predicated region
      $region41: #{generator_forward.10} parent=39 // pred_check
        %p703 = pneg %p106
      $region42: #{generator_forward.10} parent=39 // pred_check_branch
        %705 = sbr.rel (%p703) target = $region44
      $region43: #{generator_forward.10} parent=39 // pred_region
        %p706 = scmp.lt.s32.totalorder %s15, 1
        %s707 = scalar_select %p706, %s15, 1
        %s708 = smul.addr %s707, 2
        %s709 = smul.addr %s708, 8
        %s710 = scalar_lea.vmem %s3, %s709
      $region44: #{generator_forward.10} parent=39 // pred_fallthru
        _
    $region40: #{generator_forward.10} parent=5 // pred_fallthru
      _
  $region6: #{generator_forward.10} parent=0 // loop_footer
    %s13 = sadd.s32 1, %s9
  $region7: #{generator_forward.10} parent=0 // loop_footer_branch
    %8 = sbr.rel target = $region3
  $region8: #{generator_forward.10} parent=0 // loop_exit
    _

// kernel: generator_forward.14
$region0: #{generator_forward.14}
  #allocation0 [shape = 'u32[]', space=smem, size = 0x4, offset = 0x4, fixed_abs, tag = 'smem constant byte address 0x4 - core index']
  #allocation1 [shape = 'u32[144,128]{1,0:T(1,128)}', space=vmem, size = 0x12000, scoped, tag = 'internal scratch']
  #allocation2 [shape = 'f32[16,144]{1,0:T(8,128)}', space=vmem, size = 0x4000, scoped, tag = 'scratch operand']
  %s0 = inlined_call_operand.vmem [shape: bf16[6,6,6,16], index: 0, kind: input, shape index: {}]
  %s1 = inlined_call_operand.vmem [shape: bf16[144,32], index: 1, kind: input, shape index: {}]
  %s2 = inlined_call_operand.vmem [shape: f32[1,32], index: 2, kind: input, shape index: {}]
  %s3 = inlined_call_operand.vmem [shape: bf16[6,16,32], index: 3, kind: output, shape index: {}]
  %s4 = sld [smem:[#allocation0]]
  $region45: #{generator_forward.14} parent=0
    _
  %s6 = ssub.s32 1, %s4
  %s7 = scalar_select 0, %s6, %s4
  loop: start=0, step=1, limit=8
  $region2: #{generator_forward.14} parent=0 // loop_pre_header
    _
  $region3: #{generator_forward.14} parent=0 // loop_header
    %s9 = sphi 0, %s13
    %p10 = scmp.ge.s32.totalorder %s9, 8
    %s19 = sphi 0, %s21
    %s22 = sphi 0, %s19
    %s23 = sphi 0, %s22
    %s39 = sphi 0, %s23
    %s43 = sphi 0, %s43
    %s45 = sphi 0, %s43
    %s46 = sphi 0, %s45
    %s60 = sphi 0, %s46
    %s64 = sphi 0, %s64
    %s66 = sphi 0, %s64
    %s67 = sphi 0, %s66
    %s81 = sphi 0, %s67
    %s87 = sphi 0, %s89
    %s90 = sphi 0, %s87
    %s91 = sphi 0, %s90
    %s107 = sphi 0, %s91
  $region4: #{generator_forward.14} parent=0 // loop_header_branch
    %12 = sbr.rel (%p10) target = $region8
  $region5: #{generator_forward.14} parent=0 // loop_body
    %s14 = ssub.s32 %s9, 1
    %s15 = ssub.s32 %s9, 2
    %s16 = sadd.s32 %s9, 1
    %s17 = ssub.s32 %s9, %s16
    %p18 = scmp.eq.s32.totalorder %s17, 0
    %s20 = sadd.s32 %s19, 1
    %s21 = scalar_select %p18, %s19, %s20
    %p24 = pneg %p18
    %p25 = scmp.eq.s32.totalorder %s9, 5
    %p26 = por %p24, %p25
    %p27 = scmp.ne.s32.totalorder %s19, %s22
    %p28 = scmp.eq.s32.totalorder %s9, 0
    %p29 = por %p27, %p28
    %p30 = scmp.ne.s32.totalorder %s19, %s22
    %p31 = scmp.eq.s32.totalorder %s14, 5
    %p32 = por %p30, %p31
    %p33 = scmp.ne.s32.totalorder %s22, %s23
    %p34 = scmp.eq.s32.totalorder %s14, 0
    %p35 = por %p33, %p34
    %p36 = scmp.ne.s32.totalorder %s22, %s23
    %p37 = scmp.eq.s32.totalorder %s15, 5
    %p38 = por %p36, %p37
    %p40 = scmp.ne.s32.totalorder %s23, %s39
    %p41 = scmp.eq.s32.totalorder %s15, 0
    %p42 = por %p40, %p41
    %s44 = sadd.s32 %s43, 1
    %p47 = scmp.eq.s32.totalorder %s9, 5
    %p48 = scmp.ne.s32.totalorder %s43, %s45
    %p49 = scmp.eq.s32.totalorder %s9, 0
    %p50 = por %p48, %p49
    %p51 = scmp.ne.s32.totalorder %s43, %s45
    %p52 = scmp.eq.s32.totalorder %s14, 5
    %p53 = por %p51, %p52
    %p54 = scmp.ne.s32.totalorder %s45, %s46
    %p55 = scmp.eq.s32.totalorder %s14, 0
    %p56 = por %p54, %p55
    %p57 = scmp.ne.s32.totalorder %s45, %s46
    %p58 = scmp.eq.s32.totalorder %s15, 5
    %p59 = por %p57, %p58
    %p61 = scmp.ne.s32.totalorder %s46, %s60
    %p62 = scmp.eq.s32.totalorder %s15, 0
    %p63 = por %p61, %p62
    %s65 = sadd.s32 %s64, 1
    %p68 = scmp.eq.s32.totalorder %s9, 5
    %p69 = scmp.ne.s32.totalorder %s64, %s66
    %p70 = scmp.eq.s32.totalorder %s9, 0
    %p71 = por %p69, %p70
    %p72 = scmp.ne.s32.totalorder %s64, %s66
    %p73 = scmp.eq.s32.totalorder %s14, 5
    %p74 = por %p72, %p73
    %p75 = scmp.ne.s32.totalorder %s66, %s67
    %p76 = scmp.eq.s32.totalorder %s14, 0
    %p77 = por %p75, %p76
    %p78 = scmp.ne.s32.totalorder %s66, %s67
    %p79 = scmp.eq.s32.totalorder %s15, 5
    %p80 = por %p78, %p79
    %p82 = scmp.ne.s32.totalorder %s67, %s81
    %p83 = scmp.eq.s32.totalorder %s15, 0
    %p84 = por %p82, %p83
    %s85 = ssub.s32 %s9, %s16
    %p86 = scmp.eq.s32.totalorder %s85, 0
    %s88 = sadd.s32 %s87, 1
    %s89 = scalar_select %p86, %s87, %s88
    %p92 = pneg %p86
    %p93 = scmp.eq.s32.totalorder %s9, 5
    %p94 = por %p92, %p93
    %p95 = scmp.ne.s32.totalorder %s87, %s90
    %p96 = scmp.eq.s32.totalorder %s9, 0
    %p97 = por %p95, %p96
    %p98 = scmp.ne.s32.totalorder %s87, %s90
    %p99 = scmp.eq.s32.totalorder %s14, 5
    %p100 = por %p98, %p99
    %p101 = scmp.ne.s32.totalorder %s90, %s91
    %p102 = scmp.eq.s32.totalorder %s14, 0
    %p103 = por %p101, %p102
    %p104 = scmp.ne.s32.totalorder %s90, %s91
    %p105 = scmp.eq.s32.totalorder %s15, 5
    %p106 = por %p104, %p105
    %p108 = scmp.ne.s32.totalorder %s91, %s107
    %p109 = scmp.eq.s32.totalorder %s15, 0
    %p110 = por %p108, %p109
    %p111 = scmp.le.s32.totalorder 1, %s9
    %p112 = scmp.lt.s32.totalorder %s9, 7
    %p113 = pnand %p111, %p112
    %p114 = pneg %p113
    // Predicated region
    $region9: #{generator_forward.14} parent=5 // pred_check
      _
    $region10: #{generator_forward.14} parent=5 // pred_check_branch
      %116 = sbr.rel (%p113) target = $region12
    $region11: #{generator_forward.14} parent=5 // pred_region
      %s117 = ssub.s32 %s9, 1
      // Predicated region
      $region13: #{generator_forward.14} parent=11 // pred_check
        %p118 = pneg %p56
      $region14: #{generator_forward.14} parent=11 // pred_check_branch
        %120 = sbr.rel (%p118) target = $region16
      $region15: #{generator_forward.14} parent=11 // pred_region
        _
      $region16: #{generator_forward.14} parent=11 // pred_fallthru
        _
      // Predicated region
      $region17: #{generator_forward.14} parent=11 // pred_check
        %p121 = pneg %p77
      $region18: #{generator_forward.14} parent=11 // pred_check_branch
        %123 = sbr.rel (%p121) target = $region20
      $region19: #{generator_forward.14} parent=11 // pred_region
        _
      $region20: #{generator_forward.14} parent=11 // pred_fallthru
        _
    $region12: #{generator_forward.14} parent=5 // pred_fallthru
      _
    %p124 = scmp.lt.s32.totalorder %s9, 6
    // Predicated region
    $region21: #{generator_forward.14} parent=5 // pred_check
      %p125 = pneg %p124
    $region22: #{generator_forward.14} parent=5 // pred_check_branch
      %127 = sbr.rel (%p125) target = $region24
    $region23: #{generator_forward.14} parent=5 // pred_region
      // Predicated region
      $region25: #{generator_forward.14} parent=23 // pred_check
        %p128 = pneg %p29
      $region26: #{generator_forward.14} parent=23 // pred_check_branch
        %130 = sbr.rel (%p128) target = $region28
      $region27: #{generator_forward.14} parent=23 // pred_region
        %p131 = scmp.lt.s32.totalorder %s9, 5
        %s132 = scalar_select %p131, %s9, 5
        %s133 = smul.addr %s132, 6
        %s134 = smul.addr %s133, 4
        %s135 = scalar_lea.vmem %s0, %s134
      $region28: #{generator_forward.14} parent=23 // pred_fallthru
        _
    $region24: #{generator_forward.14} parent=5 // pred_fallthru
      _
    %p136 = scmp.le.s32.totalorder 1, %s9
    %p137 = scmp.lt.s32.totalorder %s9, 7
    %p138 = pnand %p136, %p137
    %p139 = pneg %p138
    // Predicated region
    $region29: #{generator_forward.14} parent=5 // pred_check
      _
    $region30: #{generator_forward.14} parent=5 // pred_check_branch
      %141 = sbr.rel (%p138) target = $region32
    $region31: #{generator_forward.14} parent=5 // pred_region
      %s142 = ssub.s32 %s9, 1
      %p143 = scmp.lt.s32.totalorder %s14, 5
      %s144 = scalar_select %p143, %s14, 5
      %s145 = smul.addr %s144, 6
      %s146 = smul.addr %s145, 4
      %s147 = scalar_lea.vmem %s0, %s146
      %p148 = pneg %p35
      %p149 = pneg %p32
      %p150 = pneg %p56
      %p151 = pneg %p53
      %p152 = pneg %p77
      %p153 = pneg %p74
      %p154 = pneg %p103
      %p155 = pneg %p100
      %p156 = scmp.lt.s32.totalorder %s14, 5
      %s157 = scalar_select %p156, %s14, 5
      %s158 = smul.addr %s157, 2
      %s159 = smul.addr %s158, 4
      %s160 = scalar_lea.vmem %s3, %s159
      %p161 = scmp.lt.s32.totalorder %s14, 5
      %s162 = scalar_select %p161, %s14, 5
      %s163 = smul.addr %s162, 6
      %s164 = smul.addr %s163, 4
      %s165 = scalar_lea.vmem %s0, %s164
      %p166 = scmp.lt.s32.totalorder %s14, 5
      %s167 = scalar_select %p166, %s14, 5
      %s168 = smul.addr %s167, 2
      %s169 = smul.addr %s168, 4
      %s170 = scalar_lea.vmem %s3, %s169
      %v172 = vld [vmem:[%s165] sm:$0x3]
      %v173 = vunpack.c.l.bf16 %v172
      %vm174 = vcmask 125952
      %175 = vst.msk [vmem:[#allocation2] sm:$0xf] %vm174, %v173
      %v176 = vld [vmem:[%s165] sm:$0x7]
      %v177 = vunpack.c.l.bf16 %v176
      %v179 = vrot.slane %v177, 1
      %180 = vrot.lane.b32.xlu0 %v179, 16
      %v181 = vpop.permute.xlu0 %180
      %vm183 = vcmask 257152
      %184 = vst.msk [vmem:[#allocation2] sm:$0xf] %vm183, %v181
      %v185 = vld [vmem:[%s165] sm:$0x6]
      %v186 = vunpack.c.l.bf16 %v185
      %v188 = vrot.slane %v186, 2
      %189 = vrot.lane.b32.xlu0 %v188, 32
      %v190 = vpop.permute.xlu0 %189
      %vm192 = vcmask 388352
      %193 = vst.msk [vmem:[#allocation2] sm:$0xf] %vm192, %v190
      %s194 = scalar_lea.vmem %s165, 4
      %v195 = vld [vmem:[%s194] sm:$0x3]
      %v196 = vunpack.c.l.bf16 %v195
      %198 = vrot.lane.b32.xlu0 %v196, 48
      %v199 = vpop.permute.xlu0 %198
      %vm201 = vcmask 519552
      %202 = vst.msk [vmem:[#allocation2] sm:$0xf] %vm201, %v199
      %v203 = vld [vmem:[%s194] sm:$0x7]
      %v204 = vunpack.c.l.bf16 %v203
      %v206 = vrot.slane %v204, 1
      %207 = vrot.lane.b32.xlu0 %v206, 64
      %v208 = vpop.permute.xlu0 %207
      %vm210 = vcmask 650752
      %211 = vst.msk [vmem:[#allocation2] sm:$0xf] %vm210, %v208
      %v212 = vld [vmem:[%s194] sm:$0x6]
      %v213 = vunpack.c.l.bf16 %v212
      %v215 = vrot.slane %v213, 2
      %216 = vrot.lane.b32.xlu0 %v215, 80
      %v217 = vpop.permute.xlu0 %216
      %vm219 = vcmask 781952
      %220 = vst.msk [vmem:[#allocation2] sm:$0xf] %vm219, %v217
      %s221 = scalar_lea.vmem %s165, 8
      %v222 = vld [vmem:[%s221] sm:$0x3]
      %v223 = vunpack.c.l.bf16 %v222
      %225 = vrot.lane.b32.xlu0 %v223, 96
      %v226 = vpop.permute.xlu0 %225
      %vm228 = vcmask 913152
      %229 = vst.msk [vmem:[#allocation2] sm:$0xf] %vm228, %v226
      %v230 = vld [vmem:[%s221] sm:$0x7]
      %v231 = vunpack.c.l.bf16 %v230
      %v233 = vrot.slane %v231, 1
      %234 = vrot.lane.b32.xlu0 %v233, 112
      %v235 = vpop.permute.xlu0 %234
      %vm237 = vcmask 1044352
      %238 = vst.msk [vmem:[#allocation2] sm:$0xf] %vm237, %v235
      %v239 = vld [vmem:[%s221] sm:$0x6]
      %v240 = vunpack.c.l.bf16 %v239
      %v242 = vrot.slane %v240, 2
      %244 = vst.msk [vmem:[#allocation2 + $0x8] sm:$0xf] %vm174, %v242
      %v245 = vld [vmem:[%s194] sm:$0x3]
      %v246 = vunpack.c.l.bf16 %v245
      %v248 = vrot.slane %v246, 4
      %vm250 = vcmask 130052
      %251 = vst.msk [vmem:[#allocation2] sm:$0xf0] %vm250, %v248
      %v252 = vld [vmem:[%s194] sm:$0x7]
      %v253 = vunpack.c.l.bf16 %v252
      %v255 = vrot.slane %v253, 5
      %256 = vrot.lane.b32.xlu0 %v255, 16
      %v257 = vpop.permute.xlu0 %256
      %vm259 = vcmask 261252
      %260 = vst.msk [vmem:[#allocation2] sm:$0xf0] %vm259, %v257
      %v261 = vld [vmem:[%s194] sm:$0x6]
      %v262 = vunpack.c.l.bf16 %v261
      %v264 = vrot.slane %v262, 6
      %265 = vrot.lane.b32.xlu0 %v264, 32
      %v266 = vpop.permute.xlu0 %265
      %vm268 = vcmask 392452
      %269 = vst.msk [vmem:[#allocation2] sm:$0xf0] %vm268, %v266
      %v270 = vld [vmem:[%s221] sm:$0x3]
      %v271 = vunpack.c.l.bf16 %v270
      %v273 = vrot.slane %v271, 4
      %274 = vrot.lane.b32.xlu0 %v273, 48
      %v275 = vpop.permute.xlu0 %274
      %vm277 = vcmask 523652
      %278 = vst.msk [vmem:[#allocation2] sm:$0xf0] %vm277, %v275
      %v279 = vld [vmem:[%s221] sm:$0x7]
      %v280 = vunpack.c.l.bf16 %v279
      %v282 = vrot.slane %v280, 5
      %283 = vrot.lane.b32.xlu0 %v282, 64
      %v284 = vpop.permute.xlu0 %283
      %vm286 = vcmask 654852
      %287 = vst.msk [vmem:[#allocation2] sm:$0xf0] %vm286, %v284
      %v288 = vld [vmem:[%s221] sm:$0x6]
      %v289 = vunpack.c.l.bf16 %v288
      %v291 = vrot.slane %v289, 6
      %292 = vrot.lane.b32.xlu0 %v291, 80
      %v293 = vpop.permute.xlu0 %292
      %vm295 = vcmask 786052
      %296 = vst.msk [vmem:[#allocation2] sm:$0xf0] %vm295, %v293
      %s297 = scalar_lea.vmem %s165, 12
      %v298 = vld [vmem:[%s297] sm:$0x3]
      %v299 = vunpack.c.l.bf16 %v298
      %v301 = vrot.slane %v299, 4
      %302 = vrot.lane.b32.xlu0 %v301, 96
      %v303 = vpop.permute.xlu0 %302
      %vm305 = vcmask 917252
      %306 = vst.msk [vmem:[#allocation2] sm:$0xf0] %vm305, %v303
      %v307 = vld [vmem:[%s297] sm:$0x7]
      %v308 = vunpack.c.l.bf16 %v307
      %v310 = vrot.slane %v308, 5
      %311 = vrot.lane.b32.xlu0 %v310, 112
      %v312 = vpop.permute.xlu0 %311
      %vm314 = vcmask 1048452
      %315 = vst.msk [vmem:[#allocation2] sm:$0xf0] %vm314, %v312
      %v316 = vld [vmem:[%s297] sm:$0x6]
      %v317 = vunpack.c.l.bf16 %v316
      %v319 = vrot.slane %v317, 6
      %321 = vst.msk [vmem:[#allocation2 + $0x8] sm:$0xf0] %vm250, %v319
      %v322 = vld [vmem:[%s221] sm:$0x3]
      %v323 = vunpack.c.l.bf16 %v322
      %324 = vst.msk [vmem:[#allocation2 + $0x10] sm:$0xf] %vm174, %v323
      %v325 = vld [vmem:[%s221] sm:$0x7]
      %v326 = vunpack.c.l.bf16 %v325
      %v328 = vrot.slane %v326, 1
      %329 = vrot.lane.b32.xlu0 %v328, 16
      %v330 = vpop.permute.xlu0 %329
      %332 = vst.msk [vmem:[#allocation2 + $0x10] sm:$0xf] %vm183, %v330
      %v333 = vld [vmem:[%s221] sm:$0x6]
      %v334 = vunpack.c.l.bf16 %v333
      %v336 = vrot.slane %v334, 2
      %337 = vrot.lane.b32.xlu0 %v336, 32
      %v338 = vpop.permute.xlu0 %337
      %340 = vst.msk [vmem:[#allocation2 + $0x10] sm:$0xf] %vm192, %v338
      %v341 = vld [vmem:[%s297] sm:$0x3]
      %v342 = vunpack.c.l.bf16 %v341
      %344 = vrot.lane.b32.xlu0 %v342, 48
      %v345 = vpop.permute.xlu0 %344
      %347 = vst.msk [vmem:[#allocation2 + $0x10] sm:$0xf] %vm201, %v345
      %v348 = vld [vmem:[%s297] sm:$0x7]
      %v349 = vunpack.c.l.bf16 %v348
      %v351 = vrot.slane %v349, 1
      %352 = vrot.lane.b32.xlu0 %v351, 64
      %v353 = vpop.permute.xlu0 %352
      %355 = vst.msk [vmem:[#allocation2 + $0x10] sm:$0xf] %vm210, %v353
      %v356 = vld [vmem:[%s297] sm:$0x6]
      %v357 = vunpack.c.l.bf16 %v356
      %v359 = vrot.slane %v357, 2
      %360 = vrot.lane.b32.xlu0 %v359, 80
      %v361 = vpop.permute.xlu0 %360
      %363 = vst.msk [vmem:[#allocation2 + $0x10] sm:$0xf] %vm219, %v361
      %s364 = scalar_lea.vmem %s165, 16
      %v365 = vld [vmem:[%s364] sm:$0x3]
      %v366 = vunpack.c.l.bf16 %v365
      %368 = vrot.lane.b32.xlu0 %v366, 96
      %v369 = vpop.permute.xlu0 %368
      %371 = vst.msk [vmem:[#allocation2 + $0x10] sm:$0xf] %vm228, %v369
      %v372 = vld [vmem:[%s364] sm:$0x7]
      %v373 = vunpack.c.l.bf16 %v372
      %v375 = vrot.slane %v373, 1
      %376 = vrot.lane.b32.xlu0 %v375, 112
      %v377 = vpop.permute.xlu0 %376
      %379 = vst.msk [vmem:[#allocation2 + $0x10] sm:$0xf] %vm237, %v377
      %v380 = vld [vmem:[%s364] sm:$0x6]
      %v381 = vunpack.c.l.bf16 %v380
      %v383 = vrot.slane %v381, 2
      %385 = vst.msk [vmem:[#allocation2 + $0x18] sm:$0xf] %vm174, %v383
      %v386 = vld [vmem:[%s297] sm:$0x3]
      %v387 = vunpack.c.l.bf16 %v386
      %v389 = vrot.slane %v387, 4
      %391 = vst.msk [vmem:[#allocation2 + $0x10] sm:$0xf0] %vm250, %v389
      %v392 = vld [vmem:[%s297] sm:$0x7]
      %v393 = vunpack.c.l.bf16 %v392
      %v395 = vrot.slane %v393, 5
      %396 = vrot.lane.b32.xlu0 %v395, 16
      %v397 = vpop.permute.xlu0 %396
      %399 = vst.msk [vmem:[#allocation2 + $0x10] sm:$0xf0] %vm259, %v397
      %v400 = vld [vmem:[%s297] sm:$0x6]
      %v401 = vunpack.c.l.bf16 %v400
      %v403 = vrot.slane %v401, 6
      %404 = vrot.lane.b32.xlu0 %v403, 32
      %v405 = vpop.permute.xlu0 %404
      %407 = vst.msk [vmem:[#allocation2 + $0x10] sm:$0xf0] %vm268, %v405
      %v408 = vld [vmem:[%s364] sm:$0x3]
      %v409 = vunpack.c.l.bf16 %v408
      %v411 = vrot.slane %v409, 4
      %412 = vrot.lane.b32.xlu0 %v411, 48
      %v413 = vpop.permute.xlu0 %412
      %415 = vst.msk [vmem:[#allocation2 + $0x10] sm:$0xf0] %vm277, %v413
      %v416 = vld [vmem:[%s364] sm:$0x7]
      %v417 = vunpack.c.l.bf16 %v416
      %v419 = vrot.slane %v417, 5
      %420 = vrot.lane.b32.xlu0 %v419, 64
      %v421 = vpop.permute.xlu0 %420
      %423 = vst.msk [vmem:[#allocation2 + $0x10] sm:$0xf0] %vm286, %v421
      %v424 = vld [vmem:[%s364] sm:$0x6]
      %v425 = vunpack.c.l.bf16 %v424
      %v427 = vrot.slane %v425, 6
      %428 = vrot.lane.b32.xlu0 %v427, 80
      %v429 = vpop.permute.xlu0 %428
      %431 = vst.msk [vmem:[#allocation2 + $0x10] sm:$0xf0] %vm295, %v429
      %s432 = scalar_lea.vmem %s165, 20
      %v433 = vld [vmem:[%s432] sm:$0x3]
      %v434 = vunpack.c.l.bf16 %v433
      %v436 = vrot.slane %v434, 4
      %437 = vrot.lane.b32.xlu0 %v436, 96
      %v438 = vpop.permute.xlu0 %437
      %440 = vst.msk [vmem:[#allocation2 + $0x10] sm:$0xf0] %vm305, %v438
      %v441 = vld [vmem:[%s432] sm:$0x7]
      %v442 = vunpack.c.l.bf16 %v441
      %v444 = vrot.slane %v442, 5
      %445 = vrot.lane.b32.xlu0 %v444, 112
      %v446 = vpop.permute.xlu0 %445
      %448 = vst.msk [vmem:[#allocation2 + $0x10] sm:$0xf0] %vm314, %v446
      %v449 = vld [vmem:[%s432] sm:$0x6]
      %v450 = vunpack.c.l.bf16 %v449
      %v452 = vrot.slane %v450, 6
      %454 = vst.msk [vmem:[#allocation2 + $0x18] sm:$0xf0] %vm250, %v452
      %v455 = vld [vmem:[#allocation2] sm:$0xff]
      %v456 = vld [vmem:[#allocation2 + $0x8] sm:$0xff]
      %v457 = vld [vmem:[#allocation2 + $0x10] sm:$0xff]
      %v458 = vld [vmem:[#allocation2 + $0x18] sm:$0xff]
      %v459 = vpack.c.bf16 %v457, %v455
      %v460 = vpack.c.bf16 %v458, %v456
      %v461 = vld [vmem:[%s1] sm:$0xf]
      %v462 = vld [vmem:[%s1 + $0x4] sm:$0xf]
      %v463 = vld [vmem:[%s1 + $0x8] sm:$0xf]
      %v464 = vld [vmem:[%s1 + $0xc] sm:$0xf]
      %v465 = vld [vmem:[%s1 + $0x10] sm:$0xf]
      %v466 = vld [vmem:[%s1 + $0x14] sm:$0xf]
      %v467 = vld [vmem:[%s1 + $0x18] sm:$0xf]
      %v468 = vld [vmem:[%s1 + $0x1c] sm:$0xf]
      %v469 = vld [vmem:[%s1 + $0x20] sm:$0xf]
      %v470 = vld [vmem:[%s1 + $0x24] sm:$0xf]
      %v471 = vld [vmem:[%s1 + $0x28] sm:$0xf]
      %v472 = vld [vmem:[%s1 + $0x2c] sm:$0xf]
      %v473 = vld [vmem:[%s1 + $0x30] sm:$0xf]
      %v474 = vld [vmem:[%s1 + $0x34] sm:$0xf]
      %v475 = vld [vmem:[%s1 + $0x38] sm:$0xf]
      %v476 = vld [vmem:[%s1 + $0x3c] sm:$0xf]
      %v477 = vld [vmem:[%s1 + $0x40] sm:$0xf]
      %v478 = vld [vmem:[%s1 + $0x44] sm:$0xf]
      %v479 = vld [vmem:[%s2] sm:$0x1]
      %v481 = vlaneseq
      %v482 = vshrl.u32 %v481, 7
      %v483 = vsub.s32 0, %v482
      %v484 = vrot.slane %v479, %v483
      %v504 = vunpack.c.l.b16 %v461
      %v505 = vunpack.c.l.b16 %v462
      %v506 = vunpack.c.l.b16 %v463
      %v507 = vunpack.c.l.b16 %v464
      %v508 = vunpack.c.l.b16 %v465
      %v509 = vunpack.c.l.b16 %v466
      %v510 = vunpack.c.l.b16 %v467
      %v511 = vunpack.c.l.b16 %v468
      %v512 = vunpack.c.l.b16 %v469
      %v513 = vunpack.c.l.b16 %v470
      %v514 = vunpack.c.l.b16 %v471
      %v515 = vunpack.c.l.b16 %v472
      %v516 = vunpack.c.l.b16 %v473
      %v517 = vunpack.c.l.b16 %v474
      %v518 = vunpack.c.l.b16 %v475
      %v519 = vunpack.c.l.b16 %v476
      %v520 = vunpack.c.l.b16 %v477
      %v521 = vunpack.c.l.b16 %v478
      %v522 = vpack.c.b16 %v505, %v504
      %v523 = vpack.c.b16 %v507, %v506
      %v524 = vpack.c.b16 %v509, %v508
      %v525 = vpack.c.b16 %v511, %v510
      %v526 = vpack.c.b16 %v513, %v512
      %v527 = vpack.c.b16 %v515, %v514
      %v528 = vpack.c.b16 %v517, %v516
      %v529 = vpack.c.b16 %v519, %v518
      %v530 = vpack.c.b16 %v521, %v520
      %vm540 = vcmask 130048
      %v542 = vsel %vm540, %v460, 0
      %544 = vmatprep.subr.bf16.mxu0 0
      %545 = vmatpush1.bf16.msra.mxu0 %v529
      %546 = vmatprep.subr.bf16.mxu0 0
      %547 = vmatpush1.bf16.msra.mxu0 %v528
      %548 = vmatprep.subr.bf16.mxu0 0
      %549 = vmatpush1.bf16.msra.mxu0 %v527
      %550 = vmatprep.subr.bf16.mxu0 0
      %551 = vmatpush1.bf16.msra.mxu0 %v526
      %552 = vmatprep.subr.bf16.mxu0 0
      %553 = vmatpush1.bf16.msra.mxu0 %v525
      %554 = vmatprep.subr.bf16.mxu0 0
      %555 = vmatpush1.bf16.msra.mxu0 %v524
      %556 = vmatprep.subr.bf16.mxu0 0
      %557 = vmatpush1.bf16.msra.mxu0 %v523
      %558 = vmatprep.subr.bf16.mxu0 0
      %559 = vmatpush1.bf16.msra.mxu0 %v522
      %560 = vmatprep.subr.bf16.mxu0 0
      %561 = vmatpush2.bf16.msra.mxu0 0
      %562 = vmatprep.subr.bf16.mxu0 0
      %563 = vmatpush2.bf16.msra.mxu0 0
      %564 = vmatprep.subr.bf16.mxu0 0
      %565 = vmatpush2.bf16.msra.mxu0 0
      %566 = vmatprep.subr.bf16.mxu0 0
      %567 = vmatpush2.bf16.msra.mxu0 0
      %568 = vmatprep.subr.bf16.mxu0 0
      %569 = vmatpush2.bf16.msra.mxu0 0
      %570 = vmatprep.subr.bf16.mxu0 0
      %571 = vmatpush2.bf16.msra.mxu0 0
      %572 = vmatprep.subr.bf16.mxu0 0
      %573 = vmatpush2.bf16.msra.mxu0 0
      %574 = vmatprep.subr.bf16.mxu0 0
      %575 = vmatpush2.bf16.msra.mxu0 %v530
      %576 = vmatprep.mubr.bf16.mxu0 %v542
      %577 = vmatmul.mubr.bf16.gmra.mxu0 %v459
      %v578 = vpop.f32.mrf.mxu0
      %v579 = vadd.f32 %v484, %v578
      %v580 = vpop.f32.mrf.mxu0
      %v581 = vpop.f32.mrf.mxu0
      %v582 = vadd.f32 %v484, %v581
      %v583 = vpop.f32.mrf.mxu0
      %584 = vdwg.mxu0
      %v585 = vmax.f32 %v579, 0.0
      %v586 = vmax.f32 %v582, 0.0
      %v587 = vpack.c.bf16 %v586, %v585
      %v589 = vunpack.c.l.b16 %v587
      %v590 = vunpack.c.h.b16 %v587
      %v591 = vpack.c.b16 %v589, %v589
      %v592 = vpack.c.b16 %v590, %v590
      %vm595 = vcmask 257024
      %596 = vst.msk [vmem:[%s170] sm:$0xf] %vm595, %v591
      %597 = vst.msk [vmem:[%s170 + $0x4] sm:$0xf] %vm595, %v592
      %p598 = scmp.lt.s32.totalorder %s14, 5
      %s599 = scalar_select %p598, %s14, 5
      %s600 = smul.addr %s599, 2
      %s601 = smul.addr %s600, 4
      %s602 = scalar_lea.vmem %s3, %s601
      // Predicated region
      $region33: #{generator_forward.14} parent=31 // pred_check
        %p603 = pneg %p100
      $region34: #{generator_forward.14} parent=31 // pred_check_branch
        %605 = sbr.rel (%p603) target = $region36
      $region35: #{generator_forward.14} parent=31 // pred_region
        _
      $region36: #{generator_forward.14} parent=31 // pred_fallthru
        _
    $region32: #{generator_forward.14} parent=5 // pred_fallthru
      _
    %p606 = scmp.le.s32.totalorder 2, %s9
    // Predicated region
    $region37: #{generator_forward.14} parent=5 // pred_check
      %p607 = pneg %p606
    $region38: #{generator_forward.14} parent=5 // pred_check_branch
      %609 = sbr.rel (%p607) target = $region40
    $region39: #{generator_forward.14} parent=5 // pred_region
      %s610 = ssub.s32 %s9, 2
      // Predicated region
      $region41: #{generator_forward.14} parent=39 // pred_check
        %p611 = pneg %p106
      $region42: #{generator_forward.14} parent=39 // pred_check_branch
        %613 = sbr.rel (%p611) target = $region44
      $region43: #{generator_forward.14} parent=39 // pred_region
        %p614 = scmp.lt.s32.totalorder %s15, 5
        %s615 = scalar_select %p614, %s15, 5
        %s616 = smul.addr %s615, 2
        %s617 = smul.addr %s616, 4
        %s618 = scalar_lea.vmem %s3, %s617
      $region44: #{generator_forward.14} parent=39 // pred_fallthru
        _
    $region40: #{generator_forward.14} parent=5 // pred_fallthru
      _
  $region6: #{generator_forward.14} parent=0 // loop_footer
    %s13 = sadd.s32 1, %s9
  $region7: #{generator_forward.14} parent=0 // loop_footer_branch
    %8 = sbr.rel target = $region3
  $region8: #{generator_forward.14} parent=0 // loop_exit
    _

// kernel: generator_forward.15
$region0: #{generator_forward.15}
  #allocation0 [shape = 'u32[]', space=smem, size = 0x4, offset = 0x4, fixed_abs, tag = 'smem constant byte address 0x4 - core index']
  #allocation1 [shape = 'u32[144,128]{1,0:T(1,128)}', space=vmem, size = 0x12000, scoped, tag = 'internal scratch']
  #allocation2 [shape = 'f32[64,72]{1,0:T(8,128)}', space=vmem, size = 0x8000, scoped, tag = 'scratch operand']
  %s0 = inlined_call_operand.vmem [shape: bf16[6,10,10,8], index: 0, kind: input, shape index: {}]
  %s1 = inlined_call_operand.vmem [shape: bf16[72,4], index: 1, kind: input, shape index: {}]
  %s2 = inlined_call_operand.vmem [shape: f32[1,4], index: 2, kind: input, shape index: {}]
  %s3 = inlined_call_operand.vmem [shape: f32[6,64,4], index: 3, kind: output, shape index: {}]
  %s4 = sld [smem:[#allocation0]]
  $region45: #{generator_forward.15} parent=0
    _
  %s6 = ssub.s32 1, %s4
  %s7 = scalar_select 0, %s6, %s4
  loop: start=0, step=1, limit=8
  $region2: #{generator_forward.15} parent=0 // loop_pre_header
    _
  $region3: #{generator_forward.15} parent=0 // loop_header
    %s9 = sphi 0, %s13
    %p10 = scmp.ge.s32.totalorder %s9, 8
    %s19 = sphi 0, %s21
    %s22 = sphi 0, %s19
    %s23 = sphi 0, %s22
    %s39 = sphi 0, %s23
    %s43 = sphi 0, %s43
    %s45 = sphi 0, %s43
    %s46 = sphi 0, %s45
    %s60 = sphi 0, %s46
    %s64 = sphi 0, %s64
    %s66 = sphi 0, %s64
    %s67 = sphi 0, %s66
    %s81 = sphi 0, %s67
    %s87 = sphi 0, %s89
    %s90 = sphi 0, %s87
    %s91 = sphi 0, %s90
    %s107 = sphi 0, %s91
  $region4: #{generator_forward.15} parent=0 // loop_header_branch
    %12 = sbr.rel (%p10) target = $region8
  $region5: #{generator_forward.15} parent=0 // loop_body
    %s14 = ssub.s32 %s9, 1
    %s15 = ssub.s32 %s9, 2
    %s16 = sadd.s32 %s9, 1
    %s17 = ssub.s32 %s9, %s16
    %p18 = scmp.eq.s32.totalorder %s17, 0
    %s20 = sadd.s32 %s19, 1
    %s21 = scalar_select %p18, %s19, %s20
    %p24 = pneg %p18
    %p25 = scmp.eq.s32.totalorder %s9, 5
    %p26 = por %p24, %p25
    %p27 = scmp.ne.s32.totalorder %s19, %s22
    %p28 = scmp.eq.s32.totalorder %s9, 0
    %p29 = por %p27, %p28
    %p30 = scmp.ne.s32.totalorder %s19, %s22
    %p31 = scmp.eq.s32.totalorder %s14, 5
    %p32 = por %p30, %p31
    %p33 = scmp.ne.s32.totalorder %s22, %s23
    %p34 = scmp.eq.s32.totalorder %s14, 0
    %p35 = por %p33, %p34
    %p36 = scmp.ne.s32.totalorder %s22, %s23
    %p37 = scmp.eq.s32.totalorder %s15, 5
    %p38 = por %p36, %p37
    %p40 = scmp.ne.s32.totalorder %s23, %s39
    %p41 = scmp.eq.s32.totalorder %s15, 0
    %p42 = por %p40, %p41
    %s44 = sadd.s32 %s43, 1
    %p47 = scmp.eq.s32.totalorder %s9, 5
    %p48 = scmp.ne.s32.totalorder %s43, %s45
    %p49 = scmp.eq.s32.totalorder %s9, 0
    %p50 = por %p48, %p49
    %p51 = scmp.ne.s32.totalorder %s43, %s45
    %p52 = scmp.eq.s32.totalorder %s14, 5
    %p53 = por %p51, %p52
    %p54 = scmp.ne.s32.totalorder %s45, %s46
    %p55 = scmp.eq.s32.totalorder %s14, 0
    %p56 = por %p54, %p55
    %p57 = scmp.ne.s32.totalorder %s45, %s46
    %p58 = scmp.eq.s32.totalorder %s15, 5
    %p59 = por %p57, %p58
    %p61 = scmp.ne.s32.totalorder %s46, %s60
    %p62 = scmp.eq.s32.totalorder %s15, 0
    %p63 = por %p61, %p62
    %s65 = sadd.s32 %s64, 1
    %p68 = scmp.eq.s32.totalorder %s9, 5
    %p69 = scmp.ne.s32.totalorder %s64, %s66
    %p70 = scmp.eq.s32.totalorder %s9, 0
    %p71 = por %p69, %p70
    %p72 = scmp.ne.s32.totalorder %s64, %s66
    %p73 = scmp.eq.s32.totalorder %s14, 5
    %p74 = por %p72, %p73
    %p75 = scmp.ne.s32.totalorder %s66, %s67
    %p76 = scmp.eq.s32.totalorder %s14, 0
    %p77 = por %p75, %p76
    %p78 = scmp.ne.s32.totalorder %s66, %s67
    %p79 = scmp.eq.s32.totalorder %s15, 5
    %p80 = por %p78, %p79
    %p82 = scmp.ne.s32.totalorder %s67, %s81
    %p83 = scmp.eq.s32.totalorder %s15, 0
    %p84 = por %p82, %p83
    %s85 = ssub.s32 %s9, %s16
    %p86 = scmp.eq.s32.totalorder %s85, 0
    %s88 = sadd.s32 %s87, 1
    %s89 = scalar_select %p86, %s87, %s88
    %p92 = pneg %p86
    %p93 = scmp.eq.s32.totalorder %s9, 5
    %p94 = por %p92, %p93
    %p95 = scmp.ne.s32.totalorder %s87, %s90
    %p96 = scmp.eq.s32.totalorder %s9, 0
    %p97 = por %p95, %p96
    %p98 = scmp.ne.s32.totalorder %s87, %s90
    %p99 = scmp.eq.s32.totalorder %s14, 5
    %p100 = por %p98, %p99
    %p101 = scmp.ne.s32.totalorder %s90, %s91
    %p102 = scmp.eq.s32.totalorder %s14, 0
    %p103 = por %p101, %p102
    %p104 = scmp.ne.s32.totalorder %s90, %s91
    %p105 = scmp.eq.s32.totalorder %s15, 5
    %p106 = por %p104, %p105
    %p108 = scmp.ne.s32.totalorder %s91, %s107
    %p109 = scmp.eq.s32.totalorder %s15, 0
    %p110 = por %p108, %p109
    %p111 = scmp.le.s32.totalorder 1, %s9
    %p112 = scmp.lt.s32.totalorder %s9, 7
    %p113 = pnand %p111, %p112
    %p114 = pneg %p113
    // Predicated region
    $region9: #{generator_forward.15} parent=5 // pred_check
      _
    $region10: #{generator_forward.15} parent=5 // pred_check_branch
      %116 = sbr.rel (%p113) target = $region12
    $region11: #{generator_forward.15} parent=5 // pred_region
      %s117 = ssub.s32 %s9, 1
      // Predicated region
      $region13: #{generator_forward.15} parent=11 // pred_check
        %p118 = pneg %p56
      $region14: #{generator_forward.15} parent=11 // pred_check_branch
        %120 = sbr.rel (%p118) target = $region16
      $region15: #{generator_forward.15} parent=11 // pred_region
        _
      $region16: #{generator_forward.15} parent=11 // pred_fallthru
        _
      // Predicated region
      $region17: #{generator_forward.15} parent=11 // pred_check
        %p121 = pneg %p77
      $region18: #{generator_forward.15} parent=11 // pred_check_branch
        %123 = sbr.rel (%p121) target = $region20
      $region19: #{generator_forward.15} parent=11 // pred_region
        _
      $region20: #{generator_forward.15} parent=11 // pred_fallthru
        _
    $region12: #{generator_forward.15} parent=5 // pred_fallthru
      _
    %p124 = scmp.lt.s32.totalorder %s9, 6
    // Predicated region
    $region21: #{generator_forward.15} parent=5 // pred_check
      %p125 = pneg %p124
    $region22: #{generator_forward.15} parent=5 // pred_check_branch
      %127 = sbr.rel (%p125) target = $region24
    $region23: #{generator_forward.15} parent=5 // pred_region
      // Predicated region
      $region25: #{generator_forward.15} parent=23 // pred_check
        %p128 = pneg %p29
      $region26: #{generator_forward.15} parent=23 // pred_check_branch
        %130 = sbr.rel (%p128) target = $region28
      $region27: #{generator_forward.15} parent=23 // pred_region
        %p131 = scmp.lt.s32.totalorder %s9, 5
        %s132 = scalar_select %p131, %s9, 5
        %s133 = smul.addr %s132, 20
        %s134 = smul.addr %s133, 4
        %s135 = scalar_lea.vmem %s0, %s134
      $region28: #{generator_forward.15} parent=23 // pred_fallthru
        _
    $region24: #{generator_forward.15} parent=5 // pred_fallthru
      _
    %p136 = scmp.le.s32.totalorder 1, %s9
    %p137 = scmp.lt.s32.totalorder %s9, 7
    %p138 = pnand %p136, %p137
    %p139 = pneg %p138
    // Predicated region
    $region29: #{generator_forward.15} parent=5 // pred_check
      _
    $region30: #{generator_forward.15} parent=5 // pred_check_branch
      %141 = sbr.rel (%p138) target = $region32
    $region31: #{generator_forward.15} parent=5 // pred_region
      %s142 = ssub.s32 %s9, 1
      %p143 = scmp.lt.s32.totalorder %s14, 5
      %s144 = scalar_select %p143, %s14, 5
      %s145 = smul.addr %s144, 20
      %s146 = smul.addr %s145, 4
      %s147 = scalar_lea.vmem %s0, %s146
      %p148 = pneg %p35
      %p149 = pneg %p32
      %p150 = pneg %p56
      %p151 = pneg %p53
      %p152 = pneg %p77
      %p153 = pneg %p74
      %p154 = pneg %p103
      %p155 = pneg %p100
      %p156 = scmp.lt.s32.totalorder %s14, 5
      %s157 = scalar_select %p156, %s14, 5
      %s158 = smul.addr %s157, 8
      %s159 = smul.addr %s158, 8
      %s160 = scalar_lea.vmem %s3, %s159
      %p161 = scmp.lt.s32.totalorder %s14, 5
      %s162 = scalar_select %p161, %s14, 5
      %s163 = smul.addr %s162, 20
      %s164 = smul.addr %s163, 4
      %s165 = scalar_lea.vmem %s0, %s164
      %p166 = scmp.lt.s32.totalorder %s14, 5
      %s167 = scalar_select %p166, %s14, 5
      %s168 = smul.addr %s167, 8
      %s169 = smul.addr %s168, 8
      %s170 = scalar_lea.vmem %s3, %s169
      %v172 = vld [vmem:[%s165] sm:$0xf]
      %v173 = vunpack.c.l.bf16 %v172
      %vm174 = vcmask 64512
      %175 = vst.msk [vmem:[#allocation2] sm:$0xff] %vm174, %v173
      %v176 = vld [vmem:[%s165] sm:$0xf]
      %v177 = vld [vmem:[%s165 + $0x4] sm:$0x1]
      %v178 = vunpack.c.l.bf16 %v176
      %v179 = vunpack.c.l.bf16 %v177
      %182 = vrot.lane.b32.xlu0 %v178, 8
      %v183 = vpop.permute.xlu0 %182
      %184 = vrot.lane.b32.xlu0 %v179, 8
      %v185 = vpop.permute.xlu0 %184
      %vm188 = vcmask 130113
      %189 = vst.msk [vmem:[#allocation2 - $0x1] sm:$0xfe] %vm188, %v183
      %vm190 = vcmask 122944
      %191 = vst.msk [vmem:[#allocation2 + $0x7] sm:$0x1] %vm190, %v185
      %v192 = vld [vmem:[%s165] sm:$0xe]
      %v193 = vld [vmem:[%s165 + $0x4] sm:$0x1]
      %v194 = vunpack.c.l.bf16 %v192
      %v195 = vunpack.c.l.bf16 %v193
      %198 = vrot.lane.b32.xlu0 %v194, 16
      %v199 = vpop.permute.xlu0 %198
      %200 = vrot.lane.b32.xlu0 %v195, 16
      %v201 = vpop.permute.xlu0 %200
      %vm204 = vcmask 195714
      %205 = vst.msk [vmem:[#allocation2 - $0x2] sm:$0xfc] %vm204, %v199
      %vm206 = vcmask 189568
      %207 = vst.msk [vmem:[#allocation2 + $0x6] sm:$0x3] %vm206, %v201
      %s208 = scalar_lea.vmem %s165, 8
      %v209 = vld [vmem:[%s208] sm:$0xf]
      %v210 = vunpack.c.l.bf16 %v209
      %212 = vrot.lane.b32.xlu0 %v210, 24
      %v213 = vpop.permute.xlu0 %212
      %vm215 = vcmask 261312
      %216 = vst.msk [vmem:[#allocation2] sm:$0xff] %vm215, %v213
      %v217 = vld [vmem:[%s208] sm:$0xf]
      %v218 = vld [vmem:[%s208 + $0x4] sm:$0x1]
      %v219 = vunpack.c.l.bf16 %v217
      %v220 = vunpack.c.l.bf16 %v218
      %223 = vrot.lane.b32.xlu0 %v219, 32
      %v224 = vpop.permute.xlu0 %223
      %225 = vrot.lane.b32.xlu0 %v220, 32
      %v226 = vpop.permute.xlu0 %225
      %vm229 = vcmask 326913
      %230 = vst.msk [vmem:[#allocation2 - $0x1] sm:$0xfe] %vm229, %v224
      %vm231 = vcmask 319744
      %232 = vst.msk [vmem:[#allocation2 + $0x7] sm:$0x1] %vm231, %v226
      %v233 = vld [vmem:[%s208] sm:$0xe]
      %v234 = vld [vmem:[%s208 + $0x4] sm:$0x1]
      %v235 = vunpack.c.l.bf16 %v233
      %v236 = vunpack.c.l.bf16 %v234
      %239 = vrot.lane.b32.xlu0 %v235, 40
      %v240 = vpop.permute.xlu0 %239
      %241 = vrot.lane.b32.xlu0 %v236, 40
      %v242 = vpop.permute.xlu0 %241
      %vm245 = vcmask 392514
      %246 = vst.msk [vmem:[#allocation2 - $0x2] sm:$0xfc] %vm245, %v240
      %vm247 = vcmask 386368
      %248 = vst.msk [vmem:[#allocation2 + $0x6] sm:$0x3] %vm247, %v242
      %s249 = scalar_lea.vmem %s165, 16
      %v250 = vld [vmem:[%s249] sm:$0xf]
      %v251 = vunpack.c.l.bf16 %v250
      %253 = vrot.lane.b32.xlu0 %v251, 48
      %v254 = vpop.permute.xlu0 %253
      %vm256 = vcmask 458112
      %257 = vst.msk [vmem:[#allocation2] sm:$0xff] %vm256, %v254
      %v258 = vld [vmem:[%s249] sm:$0xf]
      %v259 = vld [vmem:[%s249 + $0x4] sm:$0x1]
      %v260 = vunpack.c.l.bf16 %v258
      %v261 = vunpack.c.l.bf16 %v259
      %264 = vrot.lane.b32.xlu0 %v260, 56
      %v265 = vpop.permute.xlu0 %264
      %266 = vrot.lane.b32.xlu0 %v261, 56
      %v267 = vpop.permute.xlu0 %266
      %vm270 = vcmask 523713
      %271 = vst.msk [vmem:[#allocation2 - $0x1] sm:$0xfe] %vm270, %v265
      %vm272 = vcmask 516544
      %273 = vst.msk [vmem:[#allocation2 + $0x7] sm:$0x1] %vm272, %v267
      %v274 = vld [vmem:[%s249] sm:$0xe]
      %v275 = vld [vmem:[%s249 + $0x4] sm:$0x1]
      %v276 = vunpack.c.l.bf16 %v274
      %v277 = vunpack.c.l.bf16 %v275
      %280 = vrot.lane.b32.xlu0 %v276, 64
      %v281 = vpop.permute.xlu0 %280
      %282 = vrot.lane.b32.xlu0 %v277, 64
      %v283 = vpop.permute.xlu0 %282
      %vm286 = vcmask 589314
      %287 = vst.msk [vmem:[#allocation2 - $0x2] sm:$0xfc] %vm286, %v281
      %vm288 = vcmask 583168
      %289 = vst.msk [vmem:[#allocation2 + $0x6] sm:$0x3] %vm288, %v283
      %v290 = vld [vmem:[%s208] sm:$0xf]
      %v291 = vunpack.c.l.bf16 %v290
      %292 = vst.msk [vmem:[#allocation2 + $0x8] sm:$0xff] %vm174, %v291
      %v293 = vld [vmem:[%s208] sm:$0xf]
      %v294 = vld [vmem:[%s208 + $0x4] sm:$0x1]
      %v295 = vunpack.c.l.bf16 %v293
      %v296 = vunpack.c.l.bf16 %v294
      %299 = vrot.lane.b32.xlu0 %v295, 8
      %v300 = vpop.permute.xlu0 %299
      %301 = vrot.lane.b32.xlu0 %v296, 8
      %v302 = vpop.permute.xlu0 %301
      %305 = vst.msk [vmem:[#allocation2 + $0x7] sm:$0xfe] %vm188, %v300
      %306 = vst.msk [vmem:[#allocation2 + $0xf] sm:$0x1] %vm190, %v302
      %v307 = vld [vmem:[%s208] sm:$0xe]
      %v308 = vld [vmem:[%s208 + $0x4] sm:$0x1]
      %v309 = vunpack.c.l.bf16 %v307
      %v310 = vunpack.c.l.bf16 %v308
      %313 = vrot.lane.b32.xlu0 %v309, 16
      %v314 = vpop.permute.xlu0 %313
      %315 = vrot.lane.b32.xlu0 %v310, 16
      %v316 = vpop.permute.xlu0 %315
      %319 = vst.msk [vmem:[#allocation2 + $0x6] sm:$0xfc] %vm204, %v314
      %320 = vst.msk [vmem:[#allocation2 + $0xe] sm:$0x3] %vm206, %v316
      %v321 = vld [vmem:[%s249] sm:$0xf]
      %v322 = vunpack.c.l.bf16 %v321
      %324 = vrot.lane.b32.xlu0 %v322, 24
      %v325 = vpop.permute.xlu0 %324
      %327 = vst.msk [vmem:[#allocation2 + $0x8] sm:$0xff] %vm215, %v325
      %v328 = vld [vmem:[%s249] sm:$0xf]
      %v329 = vld [vmem:[%s249 + $0x4] sm:$0x1]
      %v330 = vunpack.c.l.bf16 %v328
      %v331 = vunpack.c.l.bf16 %v329
      %334 = vrot.lane.b32.xlu0 %v330, 32
      %v335 = vpop.permute.xlu0 %334
      %336 = vrot.lane.b32.xlu0 %v331, 32
      %v337 = vpop.permute.xlu0 %336
      %340 = vst.msk [vmem:[#allocation2 + $0x7] sm:$0xfe] %vm229, %v335
      %341 = vst.msk [vmem:[#allocation2 + $0xf] sm:$0x1] %vm231, %v337
      %v342 = vld [vmem:[%s249] sm:$0xe]
      %v343 = vld [vmem:[%s249 + $0x4] sm:$0x1]
      %v344 = vunpack.c.l.bf16 %v342
      %v345 = vunpack.c.l.bf16 %v343
      %348 = vrot.lane.b32.xlu0 %v344, 40
      %v349 = vpop.permute.xlu0 %348
      %350 = vrot.lane.b32.xlu0 %v345, 40
      %v351 = vpop.permute.xlu0 %350
      %354 = vst.msk [vmem:[#allocation2 + $0x6] sm:$0xfc] %vm245, %v349
      %355 = vst.msk [vmem:[#allocation2 + $0xe] sm:$0x3] %vm247, %v351
      %s356 = scalar_lea.vmem %s165, 24
      %v357 = vld [vmem:[%s356] sm:$0xf]
      %v358 = vunpack.c.l.bf16 %v357
      %360 = vrot.lane.b32.xlu0 %v358, 48
      %v361 = vpop.permute.xlu0 %360
      %363 = vst.msk [vmem:[#allocation2 + $0x8] sm:$0xff] %vm256, %v361
      %v364 = vld [vmem:[%s356] sm:$0xf]
      %v365 = vld [vmem:[%s356 + $0x4] sm:$0x1]
      %v366 = vunpack.c.l.bf16 %v364
      %v367 = vunpack.c.l.bf16 %v365
      %370 = vrot.lane.b32.xlu0 %v366, 56
      %v371 = vpop.permute.xlu0 %370
      %372 = vrot.lane.b32.xlu0 %v367, 56
      %v373 = vpop.permute.xlu0 %372
      %376 = vst.msk [vmem:[#allocation2 + $0x7] sm:$0xfe] %vm270, %v371
      %377 = vst.msk [vmem:[#allocation2 + $0xf] sm:$0x1] %vm272, %v373
      %v378 = vld [vmem:[%s356] sm:$0xe]
      %v379 = vld [vmem:[%s356 + $0x4] sm:$0x1]
      %v380 = vunpack.c.l.bf16 %v378
      %v381 = vunpack.c.l.bf16 %v379
      %384 = vrot.lane.b32.xlu0 %v380, 64
      %v385 = vpop.permute.xlu0 %384
      %386 = vrot.lane.b32.xlu0 %v381, 64
      %v387 = vpop.permute.xlu0 %386
      %390 = vst.msk [vmem:[#allocation2 + $0x6] sm:$0xfc] %vm286, %v385
      %391 = vst.msk [vmem:[#allocation2 + $0xe] sm:$0x3] %vm288, %v387
      %v392 = vld [vmem:[%s249] sm:$0xf]
      %v393 = vunpack.c.l.bf16 %v392
      %394 = vst.msk [vmem:[#allocation2 + $0x10] sm:$0xff] %vm174, %v393
      %v395 = vld [vmem:[%s249] sm:$0xf]
      %v396 = vld [vmem:[%s249 + $0x4] sm:$0x1]
      %v397 = vunpack.c.l.bf16 %v395
      %v398 = vunpack.c.l.bf16 %v396
      %401 = vrot.lane.b32.xlu0 %v397, 8
      %v402 = vpop.permute.xlu0 %401
      %403 = vrot.lane.b32.xlu0 %v398, 8
      %v404 = vpop.permute.xlu0 %403
      %407 = vst.msk [vmem:[#allocation2 + $0xf] sm:$0xfe] %vm188, %v402
      %408 = vst.msk [vmem:[#allocation2 + $0x17] sm:$0x1] %vm190, %v404
      %v409 = vld [vmem:[%s249] sm:$0xe]
      %v410 = vld [vmem:[%s249 + $0x4] sm:$0x1]
      %v411 = vunpack.c.l.bf16 %v409
      %v412 = vunpack.c.l.bf16 %v410
      %415 = vrot.lane.b32.xlu0 %v411, 16
      %v416 = vpop.permute.xlu0 %415
      %417 = vrot.lane.b32.xlu0 %v412, 16
      %v418 = vpop.permute.xlu0 %417
      %421 = vst.msk [vmem:[#allocation2 + $0xe] sm:$0xfc] %vm204, %v416
      %422 = vst.msk [vmem:[#allocation2 + $0x16] sm:$0x3] %vm206, %v418
      %v423 = vld [vmem:[%s356] sm:$0xf]
      %v424 = vunpack.c.l.bf16 %v423
      %426 = vrot.lane.b32.xlu0 %v424, 24
      %v427 = vpop.permute.xlu0 %426
      %429 = vst.msk [vmem:[#allocation2 + $0x10] sm:$0xff] %vm215, %v427
      %v430 = vld [vmem:[%s356] sm:$0xf]
      %v431 = vld [vmem:[%s356 + $0x4] sm:$0x1]
      %v432 = vunpack.c.l.bf16 %v430
      %v433 = vunpack.c.l.bf16 %v431
      %436 = vrot.lane.b32.xlu0 %v432, 32
      %v437 = vpop.permute.xlu0 %436
      %438 = vrot.lane.b32.xlu0 %v433, 32
      %v439 = vpop.permute.xlu0 %438
      %442 = vst.msk [vmem:[#allocation2 + $0xf] sm:$0xfe] %vm229, %v437
      %443 = vst.msk [vmem:[#allocation2 + $0x17] sm:$0x1] %vm231, %v439
      %v444 = vld [vmem:[%s356] sm:$0xe]
      %v445 = vld [vmem:[%s356 + $0x4] sm:$0x1]
      %v446 = vunpack.c.l.bf16 %v444
      %v447 = vunpack.c.l.bf16 %v445
      %450 = vrot.lane.b32.xlu0 %v446, 40
      %v451 = vpop.permute.xlu0 %450
      %452 = vrot.lane.b32.xlu0 %v447, 40
      %v453 = vpop.permute.xlu0 %452
      %456 = vst.msk [vmem:[#allocation2 + $0xe] sm:$0xfc] %vm245, %v451
      %457 = vst.msk [vmem:[#allocation2 + $0x16] sm:$0x3] %vm247, %v453
      %s458 = scalar_lea.vmem %s165, 32
      %v459 = vld [vmem:[%s458] sm:$0xf]
      %v460 = vunpack.c.l.bf16 %v459
      %462 = vrot.lane.b32.xlu0 %v460, 48
      %v463 = vpop.permute.xlu0 %462
      %465 = vst.msk [vmem:[#allocation2 + $0x10] sm:$0xff] %vm256, %v463
      %v466 = vld [vmem:[%s458] sm:$0xf]
      %v467 = vld [vmem:[%s458 + $0x4] sm:$0x1]
      %v468 = vunpack.c.l.bf16 %v466
      %v469 = vunpack.c.l.bf16 %v467
      %472 = vrot.lane.b32.xlu0 %v468, 56
      %v473 = vpop.permute.xlu0 %472
      %474 = vrot.lane.b32.xlu0 %v469, 56
      %v475 = vpop.permute.xlu0 %474
      %478 = vst.msk [vmem:[#allocation2 + $0xf] sm:$0xfe] %vm270, %v473
      %479 = vst.msk [vmem:[#allocation2 + $0x17] sm:$0x1] %vm272, %v475
      %v480 = vld [vmem:[%s458] sm:$0xe]
      %v481 = vld [vmem:[%s458 + $0x4] sm:$0x1]
      %v482 = vunpack.c.l.bf16 %v480
      %v483 = vunpack.c.l.bf16 %v481
      %486 = vrot.lane.b32.xlu0 %v482, 64
      %v487 = vpop.permute.xlu0 %486
      %488 = vrot.lane.b32.xlu0 %v483, 64
      %v489 = vpop.permute.xlu0 %488
      %492 = vst.msk [vmem:[#allocation2 + $0xe] sm:$0xfc] %vm286, %v487
      %493 = vst.msk [vmem:[#allocation2 + $0x16] sm:$0x3] %vm288, %v489
      %v494 = vld [vmem:[%s356] sm:$0xf]
      %v495 = vunpack.c.l.bf16 %v494
      %496 = vst.msk [vmem:[#allocation2 + $0x18] sm:$0xff] %vm174, %v495
      %v497 = vld [vmem:[%s356] sm:$0xf]
      %v498 = vld [vmem:[%s356 + $0x4] sm:$0x1]
      %v499 = vunpack.c.l.bf16 %v497
      %v500 = vunpack.c.l.bf16 %v498
      %503 = vrot.lane.b32.xlu0 %v499, 8
      %v504 = vpop.permute.xlu0 %503
      %505 = vrot.lane.b32.xlu0 %v500, 8
      %v506 = vpop.permute.xlu0 %505
      %509 = vst.msk [vmem:[#allocation2 + $0x17] sm:$0xfe] %vm188, %v504
      %510 = vst.msk [vmem:[#allocation2 + $0x1f] sm:$0x1] %vm190, %v506
      %v511 = vld [vmem:[%s356] sm:$0xe]
      %v512 = vld [vmem:[%s356 + $0x4] sm:$0x1]
      %v513 = vunpack.c.l.bf16 %v511
      %v514 = vunpack.c.l.bf16 %v512
      %517 = vrot.lane.b32.xlu0 %v513, 16
      %v518 = vpop.permute.xlu0 %517
      %519 = vrot.lane.b32.xlu0 %v514, 16
      %v520 = vpop.permute.xlu0 %519
      %523 = vst.msk [vmem:[#allocation2 + $0x16] sm:$0xfc] %vm204, %v518
      %524 = vst.msk [vmem:[#allocation2 + $0x1e] sm:$0x3] %vm206, %v520
      %v525 = vld [vmem:[%s458] sm:$0xf]
      %v526 = vunpack.c.l.bf16 %v525
      %528 = vrot.lane.b32.xlu0 %v526, 24
      %v529 = vpop.permute.xlu0 %528
      %531 = vst.msk [vmem:[#allocation2 + $0x18] sm:$0xff] %vm215, %v529
      %v532 = vld [vmem:[%s458] sm:$0xf]
      %v533 = vld [vmem:[%s458 + $0x4] sm:$0x1]
      %v534 = vunpack.c.l.bf16 %v532
      %v535 = vunpack.c.l.bf16 %v533
      %538 = vrot.lane.b32.xlu0 %v534, 32
      %v539 = vpop.permute.xlu0 %538
      %540 = vrot.lane.b32.xlu0 %v535, 32
      %v541 = vpop.permute.xlu0 %540
      %544 = vst.msk [vmem:[#allocation2 + $0x17] sm:$0xfe] %vm229, %v539
      %545 = vst.msk [vmem:[#allocation2 + $0x1f] sm:$0x1] %vm231, %v541
      %v546 = vld [vmem:[%s458] sm:$0xe]
      %v547 = vld [vmem:[%s458 + $0x4] sm:$0x1]
      %v548 = vunpack.c.l.bf16 %v546
      %v549 = vunpack.c.l.bf16 %v547
      %552 = vrot.lane.b32.xlu0 %v548, 40
      %v553 = vpop.permute.xlu0 %552
      %554 = vrot.lane.b32.xlu0 %v549, 40
      %v555 = vpop.permute.xlu0 %554
      %558 = vst.msk [vmem:[#allocation2 + $0x16] sm:$0xfc] %vm245, %v553
      %559 = vst.msk [vmem:[#allocation2 + $0x1e] sm:$0x3] %vm247, %v555
      %s560 = scalar_lea.vmem %s165, 40
      %v561 = vld [vmem:[%s560] sm:$0xf]
      %v562 = vunpack.c.l.bf16 %v561
      %564 = vrot.lane.b32.xlu0 %v562, 48
      %v565 = vpop.permute.xlu0 %564
      %567 = vst.msk [vmem:[#allocation2 + $0x18] sm:$0xff] %vm256, %v565
      %v568 = vld [vmem:[%s560] sm:$0xf]
      %v569 = vld [vmem:[%s560 + $0x4] sm:$0x1]
      %v570 = vunpack.c.l.bf16 %v568
      %v571 = vunpack.c.l.bf16 %v569
      %574 = vrot.lane.b32.xlu0 %v570, 56
      %v575 = vpop.permute.xlu0 %574
      %576 = vrot.lane.b32.xlu0 %v571, 56
      %v577 = vpop.permute.xlu0 %576
      %580 = vst.msk [vmem:[#allocation2 + $0x17] sm:$0xfe] %vm270, %v575
      %581 = vst.msk [vmem:[#allocation2 + $0x1f] sm:$0x1] %vm272, %v577
      %v582 = vld [vmem:[%s560] sm:$0xe]
      %v583 = vld [vmem:[%s560 + $0x4] sm:$0x1]
      %v584 = vunpack.c.l.bf16 %v582
      %v585 = vunpack.c.l.bf16 %v583
      %588 = vrot.lane.b32.xlu0 %v584, 64
      %v589 = vpop.permute.xlu0 %588
      %590 = vrot.lane.b32.xlu0 %v585, 64
      %v591 = vpop.permute.xlu0 %590
      %594 = vst.msk [vmem:[#allocation2 + $0x16] sm:$0xfc] %vm286, %v589
      %595 = vst.msk [vmem:[#allocation2 + $0x1e] sm:$0x3] %vm288, %v591
      %v596 = vld [vmem:[%s458] sm:$0xf]
      %v597 = vunpack.c.l.bf16 %v596
      %598 = vst.msk [vmem:[#allocation2 + $0x20] sm:$0xff] %vm174, %v597
      %v599 = vld [vmem:[%s458] sm:$0xf]
      %v600 = vld [vmem:[%s458 + $0x4] sm:$0x1]
      %v601 = vunpack.c.l.bf16 %v599
      %v602 = vunpack.c.l.bf16 %v600
      %605 = vrot.lane.b32.xlu0 %v601, 8
      %v606 = vpop.permute.xlu0 %605
      %607 = vrot.lane.b32.xlu0 %v602, 8
      %v608 = vpop.permute.xlu0 %607
      %611 = vst.msk [vmem:[#allocation2 + $0x1f] sm:$0xfe] %vm188, %v606
      %612 = vst.msk [vmem:[#allocation2 + $0x27] sm:$0x1] %vm190, %v608
      %v613 = vld [vmem:[%s458] sm:$0xe]
      %v614 = vld [vmem:[%s458 + $0x4] sm:$0x1]
      %v615 = vunpack.c.l.bf16 %v613
      %v616 = vunpack.c.l.bf16 %v614
      %619 = vrot.lane.b32.xlu0 %v615, 16
      %v620 = vpop.permute.xlu0 %619
      %621 = vrot.lane.b32.xlu0 %v616, 16
      %v622 = vpop.permute.xlu0 %621
      %625 = vst.msk [vmem:[#allocation2 + $0x1e] sm:$0xfc] %vm204, %v620
      %626 = vst.msk [vmem:[#allocation2 + $0x26] sm:$0x3] %vm206, %v622
      %v627 = vld [vmem:[%s560] sm:$0xf]
      %v628 = vunpack.c.l.bf16 %v627
      %630 = vrot.lane.b32.xlu0 %v628, 24
      %v631 = vpop.permute.xlu0 %630
      %633 = vst.msk [vmem:[#allocation2 + $0x20] sm:$0xff] %vm215, %v631
      %v634 = vld [vmem:[%s560] sm:$0xf]
      %v635 = vld [vmem:[%s560 + $0x4] sm:$0x1]
      %v636 = vunpack.c.l.bf16 %v634
      %v637 = vunpack.c.l.bf16 %v635
      %640 = vrot.lane.b32.xlu0 %v636, 32
      %v641 = vpop.permute.xlu0 %640
      %642 = vrot.lane.b32.xlu0 %v637, 32
      %v643 = vpop.permute.xlu0 %642
      %646 = vst.msk [vmem:[#allocation2 + $0x1f] sm:$0xfe] %vm229, %v641
      %647 = vst.msk [vmem:[#allocation2 + $0x27] sm:$0x1] %vm231, %v643
      %v648 = vld [vmem:[%s560] sm:$0xe]
      %v649 = vld [vmem:[%s560 + $0x4] sm:$0x1]
      %v650 = vunpack.c.l.bf16 %v648
      %v651 = vunpack.c.l.bf16 %v649
      %654 = vrot.lane.b32.xlu0 %v650, 40
      %v655 = vpop.permute.xlu0 %654
      %656 = vrot.lane.b32.xlu0 %v651, 40
      %v657 = vpop.permute.xlu0 %656
      %660 = vst.msk [vmem:[#allocation2 + $0x1e] sm:$0xfc] %vm245, %v655
      %661 = vst.msk [vmem:[#allocation2 + $0x26] sm:$0x3] %vm247, %v657
      %s662 = scalar_lea.vmem %s165, 48
      %v663 = vld [vmem:[%s662] sm:$0xf]
      %v664 = vunpack.c.l.bf16 %v663
      %666 = vrot.lane.b32.xlu0 %v664, 48
      %v667 = vpop.permute.xlu0 %666
      %669 = vst.msk [vmem:[#allocation2 + $0x20] sm:$0xff] %vm256, %v667
      %v670 = vld [vmem:[%s662] sm:$0xf]
      %v671 = vld [vmem:[%s662 + $0x4] sm:$0x1]
      %v672 = vunpack.c.l.bf16 %v670
      %v673 = vunpack.c.l.bf16 %v671
      %676 = vrot.lane.b32.xlu0 %v672, 56
      %v677 = vpop.permute.xlu0 %676
      %678 = vrot.lane.b32.xlu0 %v673, 56
      %v679 = vpop.permute.xlu0 %678
      %682 = vst.msk [vmem:[#allocation2 + $0x1f] sm:$0xfe] %vm270, %v677
      %683 = vst.msk [vmem:[#allocation2 + $0x27] sm:$0x1] %vm272, %v679
      %v684 = vld [vmem:[%s662] sm:$0xe]
      %v685 = vld [vmem:[%s662 + $0x4] sm:$0x1]
      %v686 = vunpack.c.l.bf16 %v684
      %v687 = vunpack.c.l.bf16 %v685
      %690 = vrot.lane.b32.xlu0 %v686, 64
      %v691 = vpop.permute.xlu0 %690
      %692 = vrot.lane.b32.xlu0 %v687, 64
      %v693 = vpop.permute.xlu0 %692
      %696 = vst.msk [vmem:[#allocation2 + $0x1e] sm:$0xfc] %vm286, %v691
      %697 = vst.msk [vmem:[#allocation2 + $0x26] sm:$0x3] %vm288, %v693
      %v698 = vld [vmem:[%s560] sm:$0xf]
      %v699 = vunpack.c.l.bf16 %v698
      %700 = vst.msk [vmem:[#allocation2 + $0x28] sm:$0xff] %vm174, %v699
      %v701 = vld [vmem:[%s560] sm:$0xf]
      %v702 = vld [vmem:[%s560 + $0x4] sm:$0x1]
      %v703 = vunpack.c.l.bf16 %v701
      %v704 = vunpack.c.l.bf16 %v702
      %707 = vrot.lane.b32.xlu0 %v703, 8
      %v708 = vpop.permute.xlu0 %707
      %709 = vrot.lane.b32.xlu0 %v704, 8
      %v710 = vpop.permute.xlu0 %709
      %713 = vst.msk [vmem:[#allocation2 + $0x27] sm:$0xfe] %vm188, %v708
      %714 = vst.msk [vmem:[#allocation2 + $0x2f] sm:$0x1] %vm190, %v710
      %v715 = vld [vmem:[%s560] sm:$0xe]
      %v716 = vld [vmem:[%s560 + $0x4] sm:$0x1]
      %v717 = vunpack.c.l.bf16 %v715
      %v718 = vunpack.c.l.bf16 %v716
      %721 = vrot.lane.b32.xlu0 %v717, 16
      %v722 = vpop.permute.xlu0 %721
      %723 = vrot.lane.b32.xlu0 %v718, 16
      %v724 = vpop.permute.xlu0 %723
      %727 = vst.msk [vmem:[#allocation2 + $0x26] sm:$0xfc] %vm204, %v722
      %728 = vst.msk [vmem:[#allocation2 + $0x2e] sm:$0x3] %vm206, %v724
      %v729 = vld [vmem:[%s662] sm:$0xf]
      %v730 = vunpack.c.l.bf16 %v729
      %732 = vrot.lane.b32.xlu0 %v730, 24
      %v733 = vpop.permute.xlu0 %732
      %735 = vst.msk [vmem:[#allocation2 + $0x28] sm:$0xff] %vm215, %v733
      %v736 = vld [vmem:[%s662] sm:$0xf]
      %v737 = vld [vmem:[%s662 + $0x4] sm:$0x1]
      %v738 = vunpack.c.l.bf16 %v736
      %v739 = vunpack.c.l.bf16 %v737
      %742 = vrot.lane.b32.xlu0 %v738, 32
      %v743 = vpop.permute.xlu0 %742
      %744 = vrot.lane.b32.xlu0 %v739, 32
      %v745 = vpop.permute.xlu0 %744
      %748 = vst.msk [vmem:[#allocation2 + $0x27] sm:$0xfe] %vm229, %v743
      %749 = vst.msk [vmem:[#allocation2 + $0x2f] sm:$0x1] %vm231, %v745
      %v750 = vld [vmem:[%s662] sm:$0xe]
      %v751 = vld [vmem:[%s662 + $0x4] sm:$0x1]
      %v752 = vunpack.c.l.bf16 %v750
      %v753 = vunpack.c.l.bf16 %v751
      %756 = vrot.lane.b32.xlu0 %v752, 40
      %v757 = vpop.permute.xlu0 %756
      %758 = vrot.lane.b32.xlu0 %v753, 40
      %v759 = vpop.permute.xlu0 %758
      %762 = vst.msk [vmem:[#allocation2 + $0x26] sm:$0xfc] %vm245, %v757
      %763 = vst.msk [vmem:[#allocation2 + $0x2e] sm:$0x3] %vm247, %v759
      %s764 = scalar_lea.vmem %s165, 56
      %v765 = vld [vmem:[%s764] sm:$0xf]
      %v766 = vunpack.c.l.bf16 %v765
      %768 = vrot.lane.b32.xlu0 %v766, 48
      %v769 = vpop.permute.xlu0 %768
      %771 = vst.msk [vmem:[#allocation2 + $0x28] sm:$0xff] %vm256, %v769
      %v772 = vld [vmem:[%s764] sm:$0xf]
      %v773 = vld [vmem:[%s764 + $0x4] sm:$0x1]
      %v774 = vunpack.c.l.bf16 %v772
      %v775 = vunpack.c.l.bf16 %v773
      %778 = vrot.lane.b32.xlu0 %v774, 56
      %v779 = vpop.permute.xlu0 %778
      %780 = vrot.lane.b32.xlu0 %v775, 56
      %v781 = vpop.permute.xlu0 %780
      %784 = vst.msk [vmem:[#allocation2 + $0x27] sm:$0xfe] %vm270, %v779
      %785 = vst.msk [vmem:[#allocation2 + $0x2f] sm:$0x1] %vm272, %v781
      %v786 = vld [vmem:[%s764] sm:$0xe]
      %v787 = vld [vmem:[%s764 + $0x4] sm:$0x1]
      %v788 = vunpack.c.l.bf16 %v786
      %v789 = vunpack.c.l.bf16 %v787
      %792 = vrot.lane.b32.xlu0 %v788, 64
      %v793 = vpop.permute.xlu0 %792
      %794 = vrot.lane.b32.xlu0 %v789, 64
      %v795 = vpop.permute.xlu0 %794
      %798 = vst.msk [vmem:[#allocation2 + $0x26] sm:$0xfc] %vm286, %v793
      %799 = vst.msk [vmem:[#allocation2 + $0x2e] sm:$0x3] %vm288, %v795
      %v800 = vld [vmem:[%s662] sm:$0xf]
      %v801 = vunpack.c.l.bf16 %v800
      %802 = vst.msk [vmem:[#allocation2 + $0x30] sm:$0xff] %vm174, %v801
      %v803 = vld [vmem:[%s662] sm:$0xf]
      %v804 = vld [vmem:[%s662 + $0x4] sm:$0x1]
      %v805 = vunpack.c.l.bf16 %v803
      %v806 = vunpack.c.l.bf16 %v804
      %809 = vrot.lane.b32.xlu0 %v805, 8
      %v810 = vpop.permute.xlu0 %809
      %811 = vrot.lane.b32.xlu0 %v806, 8
      %v812 = vpop.permute.xlu0 %811
      %815 = vst.msk [vmem:[#allocation2 + $0x2f] sm:$0xfe] %vm188, %v810
      %816 = vst.msk [vmem:[#allocation2 + $0x37] sm:$0x1] %vm190, %v812
      %v817 = vld [vmem:[%s662] sm:$0xe]
      %v818 = vld [vmem:[%s662 + $0x4] sm:$0x1]
      %v819 = vunpack.c.l.bf16 %v817
      %v820 = vunpack.c.l.bf16 %v818
      %823 = vrot.lane.b32.xlu0 %v819, 16
      %v824 = vpop.permute.xlu0 %823
      %825 = vrot.lane.b32.xlu0 %v820, 16
      %v826 = vpop.permute.xlu0 %825
      %829 = vst.msk [vmem:[#allocation2 + $0x2e] sm:$0xfc] %vm204, %v824
      %830 = vst.msk [vmem:[#allocation2 + $0x36] sm:$0x3] %vm206, %v826
      %v831 = vld [vmem:[%s764] sm:$0xf]
      %v832 = vunpack.c.l.bf16 %v831
      %834 = vrot.lane.b32.xlu0 %v832, 24
      %v835 = vpop.permute.xlu0 %834
      %837 = vst.msk [vmem:[#allocation2 + $0x30] sm:$0xff] %vm215, %v835
      %v838 = vld [vmem:[%s764] sm:$0xf]
      %v839 = vld [vmem:[%s764 + $0x4] sm:$0x1]
      %v840 = vunpack.c.l.bf16 %v838
      %v841 = vunpack.c.l.bf16 %v839
      %844 = vrot.lane.b32.xlu0 %v840, 32
      %v845 = vpop.permute.xlu0 %844
      %846 = vrot.lane.b32.xlu0 %v841, 32
      %v847 = vpop.permute.xlu0 %846
      %850 = vst.msk [vmem:[#allocation2 + $0x2f] sm:$0xfe] %vm229, %v845
      %851 = vst.msk [vmem:[#allocation2 + $0x37] sm:$0x1] %vm231, %v847
      %v852 = vld [vmem:[%s764] sm:$0xe]
      %v853 = vld [vmem:[%s764 + $0x4] sm:$0x1]
      %v854 = vunpack.c.l.bf16 %v852
      %v855 = vunpack.c.l.bf16 %v853
      %858 = vrot.lane.b32.xlu0 %v854, 40
      %v859 = vpop.permute.xlu0 %858
      %860 = vrot.lane.b32.xlu0 %v855, 40
      %v861 = vpop.permute.xlu0 %860
      %864 = vst.msk [vmem:[#allocation2 + $0x2e] sm:$0xfc] %vm245, %v859
      %865 = vst.msk [vmem:[#allocation2 + $0x36] sm:$0x3] %vm247, %v861
      %s866 = scalar_lea.vmem %s165, 64
      %v867 = vld [vmem:[%s866] sm:$0xf]
      %v868 = vunpack.c.l.bf16 %v867
      %870 = vrot.lane.b32.xlu0 %v868, 48
      %v871 = vpop.permute.xlu0 %870
      %873 = vst.msk [vmem:[#allocation2 + $0x30] sm:$0xff] %vm256, %v871
      %v874 = vld [vmem:[%s866] sm:$0xf]
      %v875 = vld [vmem:[%s866 + $0x4] sm:$0x1]
      %v876 = vunpack.c.l.bf16 %v874
      %v877 = vunpack.c.l.bf16 %v875
      %880 = vrot.lane.b32.xlu0 %v876, 56
      %v881 = vpop.permute.xlu0 %880
      %882 = vrot.lane.b32.xlu0 %v877, 56
      %v883 = vpop.permute.xlu0 %882
      %886 = vst.msk [vmem:[#allocation2 + $0x2f] sm:$0xfe] %vm270, %v881
      %887 = vst.msk [vmem:[#allocation2 + $0x37] sm:$0x1] %vm272, %v883
      %v888 = vld [vmem:[%s866] sm:$0xe]
      %v889 = vld [vmem:[%s866 + $0x4] sm:$0x1]
      %v890 = vunpack.c.l.bf16 %v888
      %v891 = vunpack.c.l.bf16 %v889
      %894 = vrot.lane.b32.xlu0 %v890, 64
      %v895 = vpop.permute.xlu0 %894
      %896 = vrot.lane.b32.xlu0 %v891, 64
      %v897 = vpop.permute.xlu0 %896
      %900 = vst.msk [vmem:[#allocation2 + $0x2e] sm:$0xfc] %vm286, %v895
      %901 = vst.msk [vmem:[#allocation2 + $0x36] sm:$0x3] %vm288, %v897
      %v902 = vld [vmem:[%s764] sm:$0xf]
      %v903 = vunpack.c.l.bf16 %v902
      %904 = vst.msk [vmem:[#allocation2 + $0x38] sm:$0xff] %vm174, %v903
      %v905 = vld [vmem:[%s764] sm:$0xf]
      %v906 = vld [vmem:[%s764 + $0x4] sm:$0x1]
      %v907 = vunpack.c.l.bf16 %v905
      %v908 = vunpack.c.l.bf16 %v906
      %911 = vrot.lane.b32.xlu0 %v907, 8
      %v912 = vpop.permute.xlu0 %911
      %913 = vrot.lane.b32.xlu0 %v908, 8
      %v914 = vpop.permute.xlu0 %913
      %917 = vst.msk [vmem:[#allocation2 + $0x37] sm:$0xfe] %vm188, %v912
      %918 = vst.msk [vmem:[#allocation2 + $0x3f] sm:$0x1] %vm190, %v914
      %v919 = vld [vmem:[%s764] sm:$0xe]
      %v920 = vld [vmem:[%s764 + $0x4] sm:$0x1]
      %v921 = vunpack.c.l.bf16 %v919
      %v922 = vunpack.c.l.bf16 %v920
      %925 = vrot.lane.b32.xlu0 %v921, 16
      %v926 = vpop.permute.xlu0 %925
      %927 = vrot.lane.b32.xlu0 %v922, 16
      %v928 = vpop.permute.xlu0 %927
      %931 = vst.msk [vmem:[#allocation2 + $0x36] sm:$0xfc] %vm204, %v926
      %932 = vst.msk [vmem:[#allocation2 + $0x3e] sm:$0x3] %vm206, %v928
      %v933 = vld [vmem:[%s866] sm:$0xf]
      %v934 = vunpack.c.l.bf16 %v933
      %936 = vrot.lane.b32.xlu0 %v934, 24
      %v937 = vpop.permute.xlu0 %936
      %939 = vst.msk [vmem:[#allocation2 + $0x38] sm:$0xff] %vm215, %v937
      %v940 = vld [vmem:[%s866] sm:$0xf]
      %v941 = vld [vmem:[%s866 + $0x4] sm:$0x1]
      %v942 = vunpack.c.l.bf16 %v940
      %v943 = vunpack.c.l.bf16 %v941
      %946 = vrot.lane.b32.xlu0 %v942, 32
      %v947 = vpop.permute.xlu0 %946
      %948 = vrot.lane.b32.xlu0 %v943, 32
      %v949 = vpop.permute.xlu0 %948
      %952 = vst.msk [vmem:[#allocation2 + $0x37] sm:$0xfe] %vm229, %v947
      %953 = vst.msk [vmem:[#allocation2 + $0x3f] sm:$0x1] %vm231, %v949
      %v954 = vld [vmem:[%s866] sm:$0xe]
      %v955 = vld [vmem:[%s866 + $0x4] sm:$0x1]
      %v956 = vunpack.c.l.bf16 %v954
      %v957 = vunpack.c.l.bf16 %v955
      %960 = vrot.lane.b32.xlu0 %v956, 40
      %v961 = vpop.permute.xlu0 %960
      %962 = vrot.lane.b32.xlu0 %v957, 40
      %v963 = vpop.permute.xlu0 %962
      %966 = vst.msk [vmem:[#allocation2 + $0x36] sm:$0xfc] %vm245, %v961
      %967 = vst.msk [vmem:[#allocation2 + $0x3e] sm:$0x3] %vm247, %v963
      %s968 = scalar_lea.vmem %s165, 72
      %v969 = vld [vmem:[%s968] sm:$0xf]
      %v970 = vunpack.c.l.bf16 %v969
      %972 = vrot.lane.b32.xlu0 %v970, 48
      %v973 = vpop.permute.xlu0 %972
      %975 = vst.msk [vmem:[#allocation2 + $0x38] sm:$0xff] %vm256, %v973
      %v976 = vld [vmem:[%s968] sm:$0xf]
      %v977 = vld [vmem:[%s968 + $0x4] sm:$0x1]
      %v978 = vunpack.c.l.bf16 %v976
      %v979 = vunpack.c.l.bf16 %v977
      %982 = vrot.lane.b32.xlu0 %v978, 56
      %v983 = vpop.permute.xlu0 %982
      %984 = vrot.lane.b32.xlu0 %v979, 56
      %v985 = vpop.permute.xlu0 %984
      %988 = vst.msk [vmem:[#allocation2 + $0x37] sm:$0xfe] %vm270, %v983
      %989 = vst.msk [vmem:[#allocation2 + $0x3f] sm:$0x1] %vm272, %v985
      %v990 = vld [vmem:[%s968] sm:$0xe]
      %v991 = vld [vmem:[%s968 + $0x4] sm:$0x1]
      %v992 = vunpack.c.l.bf16 %v990
      %v993 = vunpack.c.l.bf16 %v991
      %996 = vrot.lane.b32.xlu0 %v992, 64
      %v997 = vpop.permute.xlu0 %996
      %998 = vrot.lane.b32.xlu0 %v993, 64
      %v999 = vpop.permute.xlu0 %998
      %1002 = vst.msk [vmem:[#allocation2 + $0x36] sm:$0xfc] %vm286, %v997
      %1003 = vst.msk [vmem:[#allocation2 + $0x3e] sm:$0x3] %vm288, %v999
      %v1004 = vld [vmem:[#allocation2] sm:$0xff]
      %v1005 = vld [vmem:[#allocation2 + $0x8] sm:$0xff]
      %v1006 = vld [vmem:[#allocation2 + $0x10] sm:$0xff]
      %v1007 = vld [vmem:[#allocation2 + $0x18] sm:$0xff]
      %v1008 = vld [vmem:[#allocation2 + $0x20] sm:$0xff]
      %v1009 = vld [vmem:[#allocation2 + $0x28] sm:$0xff]
      %v1010 = vld [vmem:[#allocation2 + $0x30] sm:$0xff]
      %v1011 = vld [vmem:[#allocation2 + $0x38] sm:$0xff]
      %v1012 = vpack.c.bf16 %v1005, %v1004
      %v1013 = vpack.c.bf16 %v1007, %v1006
      %v1014 = vpack.c.bf16 %v1009, %v1008
      %v1015 = vpack.c.bf16 %v1011, %v1010
      %v1016 = vld [vmem:[%s1] sm:$0xf]
      %v1017 = vld [vmem:[%s1 + $0x4] sm:$0xf]
      %v1018 = vld [vmem:[%s1 + $0x8] sm:$0xf]
      %v1019 = vld [vmem:[%s1 + $0xc] sm:$0xf]
      %v1020 = vld [vmem:[%s1 + $0x10] sm:$0xf]
      %v1021 = vld [vmem:[%s1 + $0x14] sm:$0xf]
      %v1022 = vld [vmem:[%s1 + $0x18] sm:$0xf]
      %v1023 = vld [vmem:[%s1 + $0x1c] sm:$0xf]
      %v1024 = vld [vmem:[%s1 + $0x20] sm:$0xf]
      %v1025 = vld [vmem:[%s2] sm:$0x1]
      %v1027 = vlaneseq
      %v1028 = vshrl.u32 %v1027, 7
      %v1029 = vsub.s32 0, %v1028
      %v1030 = vrot.slane %v1025, %v1029
      %v1041 = vunpack.c.l.b16 %v1016
      %v1042 = vunpack.c.l.b16 %v1017
      %v1043 = vunpack.c.l.b16 %v1018
      %v1044 = vunpack.c.l.b16 %v1019
      %v1045 = vunpack.c.l.b16 %v1020
      %v1046 = vunpack.c.l.b16 %v1021
      %v1047 = vunpack.c.l.b16 %v1022
      %v1048 = vunpack.c.l.b16 %v1023
      %v1049 = vunpack.c.l.b16 %v1024
      %v1050 = vpack.c.b16 %v1042, %v1041
      %v1051 = vpack.c.b16 %v1044, %v1043
      %v1052 = vpack.c.b16 %v1046, %v1045
      %v1053 = vpack.c.b16 %v1048, %v1047
      %v1054 = vpack.c.b16 %v1049, %v1049
      %vm1059 = vcmask 588800
      %v1061 = vsel %vm1059, %v1012, 0
      %v1064 = vsel %vm1059, %v1013, 0
      %v1067 = vsel %vm1059, %v1014, 0
      %v1070 = vsel %vm1059, %v1015, 0
      %vm1072 = vcmask 1043456
      %v1074 = vsel %vm1072, %v1054, 0
      %1076 = vmatprep.subr.bf16.mxu0 0
      %1077 = vmatpush1.bf16.msra.mxu0 0
      %1078 = vmatprep.subr.bf16.mxu0 0
      %1079 = vmatpush1.bf16.msra.mxu0 0
      %1080 = vmatprep.subr.bf16.mxu0 0
      %1081 = vmatpush1.bf16.msra.mxu0 0
      %1082 = vmatprep.subr.bf16.mxu0 0
      %1083 = vmatpush1.bf16.msra.mxu0 %v1074
      %1084 = vmatprep.subr.bf16.mxu0 0
      %1085 = vmatpush1.bf16.msra.mxu0 %v1053
      %1086 = vmatprep.subr.bf16.mxu0 0
      %1087 = vmatpush1.bf16.msra.mxu0 %v1052
      %1088 = vmatprep.subr.bf16.mxu0 0
      %1089 = vmatpush1.bf16.msra.mxu0 %v1051
      %1090 = vmatprep.subr.bf16.mxu0 0
      %1091 = vmatpush1.bf16.msra.mxu0 %v1050
      %1092 = vmatprep.subr.bf16.mxu0 0
      %1093 = vmatpush2.bf16.msra.mxu0 0
      %1094 = vmatprep.subr.bf16.mxu0 0
      %1095 = vmatpush2.bf16.msra.mxu0 0
      %1096 = vmatprep.subr.bf16.mxu0 0
      %1097 = vmatpush2.bf16.msra.mxu0 0
      %1098 = vmatprep.subr.bf16.mxu0 0
      %1099 = vmatpush2.bf16.msra.mxu0 0
      %1100 = vmatprep.subr.bf16.mxu0 0
      %1101 = vmatpush2.bf16.msra.mxu0 0
      %1102 = vmatprep.subr.bf16.mxu0 0
      %1103 = vmatpush2.bf16.msra.mxu0 0
      %1104 = vmatprep.subr.bf16.mxu0 0
      %1105 = vmatpush2.bf16.msra.mxu0 0
      %1106 = vmatprep.subr.bf16.mxu0 0
      %1107 = vmatpush2.bf16.msra.mxu0 0
      %1108 = vmatprep.mubr.bf16.mxu0 0
      %1109 = vmatmul.mubr.bf16.gmra.mxu0 %v1061
      %v1110 = vpop.f32.mrf.mxu0
      %v1111 = vadd.f32 %v1030, %v1110
      %v1112 = vpop.f32.mrf.mxu0
      %v1113 = vpop.f32.mrf.mxu0
      %v1114 = vadd.f32 %v1030, %v1113
      %v1115 = vpop.f32.mrf.mxu0
      %1116 = vmatprep.mubr.bf16.mxu0 0
      %1117 = vmatmul.mubr.bf16.gmra.mxu0 %v1064
      %v1118 = vpop.f32.mrf.mxu0
      %v1119 = vadd.f32 %v1030, %v1118
      %v1120 = vpop.f32.mrf.mxu0
      %v1121 = vpop.f32.mrf.mxu0
      %v1122 = vadd.f32 %v1030, %v1121
      %v1123 = vpop.f32.mrf.mxu0
      %1124 = vmatprep.mubr.bf16.mxu0 0
      %1125 = vmatmul.mubr.bf16.gmra.mxu0 %v1067
      %v1126 = vpop.f32.mrf.mxu0
      %v1127 = vadd.f32 %v1030, %v1126
      %v1128 = vpop.f32.mrf.mxu0
      %v1129 = vpop.f32.mrf.mxu0
      %v1130 = vadd.f32 %v1030, %v1129
      %v1131 = vpop.f32.mrf.mxu0
      %1132 = vmatprep.mubr.bf16.mxu0 0
      %1133 = vmatmul.mubr.bf16.gmra.mxu0 %v1070
      %v1134 = vpop.f32.mrf.mxu0
      %v1135 = vadd.f32 %v1030, %v1134
      %v1136 = vpop.f32.mrf.mxu0
      %v1137 = vpop.f32.mrf.mxu0
      %v1138 = vadd.f32 %v1030, %v1137
      %v1139 = vpop.f32.mrf.mxu0
      %1140 = vdwg.mxu0
      %vm1141 = vcmask 31744
      %1142 = vst.msk [vmem:[%s170] sm:$0xff] %vm1141, %v1111
      %1143 = vst.msk [vmem:[%s170 + $0x8] sm:$0xff] %vm1141, %v1114
      %1144 = vst.msk [vmem:[%s170 + $0x10] sm:$0xff] %vm1141, %v1119
      %1145 = vst.msk [vmem:[%s170 + $0x18] sm:$0xff] %vm1141, %v1122
      %1146 = vst.msk [vmem:[%s170 + $0x20] sm:$0xff] %vm1141, %v1127
      %1147 = vst.msk [vmem:[%s170 + $0x28] sm:$0xff] %vm1141, %v1130
      %1148 = vst.msk [vmem:[%s170 + $0x30] sm:$0xff] %vm1141, %v1135
      %1149 = vst.msk [vmem:[%s170 + $0x38] sm:$0xff] %vm1141, %v1138
      %p1150 = scmp.lt.s32.totalorder %s14, 5
      %s1151 = scalar_select %p1150, %s14, 5
      %s1152 = smul.addr %s1151, 8
      %s1153 = smul.addr %s1152, 8
      %s1154 = scalar_lea.vmem %s3, %s1153
      // Predicated region
      $region33: #{generator_forward.15} parent=31 // pred_check
        %p1155 = pneg %p100
      $region34: #{generator_forward.15} parent=31 // pred_check_branch
        %1157 = sbr.rel (%p1155) target = $region36
      $region35: #{generator_forward.15} parent=31 // pred_region
        _
      $region36: #{generator_forward.15} parent=31 // pred_fallthru
        _
    $region32: #{generator_forward.15} parent=5 // pred_fallthru
      _
    %p1158 = scmp.le.s32.totalorder 2, %s9
    // Predicated region
    $region37: #{generator_forward.15} parent=5 // pred_check
      %p1159 = pneg %p1158
    $region38: #{generator_forward.15} parent=5 // pred_check_branch
      %1161 = sbr.rel (%p1159) target = $region40
    $region39: #{generator_forward.15} parent=5 // pred_region
      %s1162 = ssub.s32 %s9, 2
      // Predicated region
      $region41: #{generator_forward.15} parent=39 // pred_check
        %p1163 = pneg %p106
      $region42: #{generator_forward.15} parent=39 // pred_check_branch
        %1165 = sbr.rel (%p1163) target = $region44
      $region43: #{generator_forward.15} parent=39 // pred_region
        %p1166 = scmp.lt.s32.totalorder %s15, 5
        %s1167 = scalar_select %p1166, %s15, 5
        %s1168 = smul.addr %s1167, 8
        %s1169 = smul.addr %s1168, 8
        %s1170 = scalar_lea.vmem %s3, %s1169
      $region44: #{generator_forward.15} parent=39 // pred_fallthru
        _
    $region40: #{generator_forward.15} parent=5 // pred_fallthru
      _
  $region6: #{generator_forward.15} parent=0 // loop_footer
    %s13 = sadd.s32 1, %s9
  $region7: #{generator_forward.15} parent=0 // loop_footer_branch
    %8 = sbr.rel target = $region3
  $region8: #{generator_forward.15} parent=0 // loop_exit
    _

</llo_original>
